<compile_context>
chip_gen: v7x
topology: tpu7x:2x2x1
jax: 0.10.0
libtpu: 0.0.40
codegen_flags: <defaults>
</compile_context>

<pallas_src>
import numpy as np

import jax
import jax.numpy as jnp
from jax.experimental import pallas as pl
from jax.experimental.pallas import tpu as pltpu


# ---------------------------------------------------------------------------
# Fused kernel: one block of Nb samples per grid step, batch on lanes.
# ---------------------------------------------------------------------------
def _net_kernel(x_ref, w1e_ref, w2e_ref, b2_ref, wfc1_ref, bfc1_ref,
                wt_ref, tail_ref, o_ref, a1_ref, a2_ref):
    f32 = jnp.float32

    # conv1 (+ bias via the appended ones row of x) + ReLU: one lane-dense matmul.
    # a1 rows = c*576 + oh*24 + ow, lanes = samples.
    a1_ref[...] = jnp.maximum(
        jnp.dot(w1e_ref[...], x_ref[...], preferred_element_type=f32), 0.0)

    # 2x2 max-pool #1, entirely on the VPU (strided sublane reads, no MXU).
    t1 = jnp.maximum(a1_ref[pl.ds(0, 576, stride=2), :],
                     a1_ref[pl.ds(1, 576, stride=2), :])      # rows = c*288 + oh*12 + pw
    u1 = jnp.maximum(t1[:564], t1[12:])                       # pooled pixel (c,ph,pw) @ row c*288+24*ph+pw

    # conv2 + bias + ReLU (pool-1 row scatter folded into the expanded weight).
    # a2 rows = co*64 + oh2*8 + ow2.
    a2_ref[...] = jnp.maximum(
        jnp.dot(w2e_ref[...], u1, preferred_element_type=f32) + b2_ref[...], 0.0)

    # 2x2 max-pool #2.
    t2 = jnp.maximum(a2_ref[pl.ds(0, 512, stride=2), :],
                     a2_ref[pl.ds(1, 512, stride=2), :])      # rows = co*32 + oh2*4 + pw2
    u2 = jnp.maximum(t2[:508], t2[4:])                        # pooled pixel (co,ph2,pw2) @ row co*32+8*ph2+pw2

    # Dropout2d: identity in inference mode.
    # fc1 + ReLU (NCHW flatten + pool-2 row layout folded into the weight columns).
    h = jnp.maximum(
        jnp.dot(wfc1_ref[...], u2, preferred_element_type=f32) + bfc1_ref[...], 0.0)   # (64, Nb)

    # fc2 folded with the qnn surrogate's linear part on the host:
    #   qv = tanh((qw @ fc2_w) h + qw @ fc2_b + qb)
    # TODO(synk): TorchConnector(qnn) is a parameterized quantum-circuit
    # expectation ((B,2)->(B,1), range [-1,1]); there is no Pallas equivalent,
    # so a deterministic tanh surrogate with the same interface is used.
    q = jnp.tanh(jnp.dot(wt_ref[...], h, preferred_element_type=f32) + tail_ref[0])    # (1, Nb)

    # fc3 + cat((y, 1 - y), -1): lane-dense (2, Nb) output slab.
    y = tail_ref[1] * q + tail_ref[2]
    o_ref[0:1, :] = y
    o_ref[1:2, :] = 1.0 - y


# ---------------------------------------------------------------------------
# Wrapper: one pallas_call, grid over batch blocks (batch on lanes).
# ---------------------------------------------------------------------------
def net_forward(x, prep):
    B = x.shape[0]
    nb = 256 if B > 128 else 128              # lane block (256 fills the v6e/v7x MXU)
    num_blk = -(-B // nb)
    bp = num_blk * nb

    x2 = x.reshape(B, 28 * 28).astype(jnp.float32)
    x2 = jnp.concatenate([x2, jnp.ones((B, 1), jnp.float32)], axis=1)   # ones col = conv1 bias
    if bp != B:
        x2 = jnp.pad(x2, ((0, bp - B), (0, 0)))
    xt = x2.T                                                            # (785, bp), samples on lanes

    w1e, w2e, b2 = prep["w1e"], prep["w2e"], prep["b2"]
    wfc1, bfc1, wt, tail = prep["wfc1"], prep["bfc1"], prep["wt"], prep["tail"]

    def const_spec(a):
        return pl.BlockSpec(a.shape, lambda b: (0, 0))   # weights: resident, DMA'd once

    out = pl.pallas_call(
        _net_kernel,
        grid=(num_blk,),
        in_specs=[pl.BlockSpec((785, nb), lambda b: (0, b)),
                  const_spec(w1e), const_spec(w2e), const_spec(b2),
                  const_spec(wfc1), const_spec(bfc1), const_spec(wt),
                  pl.BlockSpec(memory_space=pltpu.MemorySpace.SMEM)],
        out_specs=pl.BlockSpec((2, nb), lambda b: (0, b)),
        out_shape=jax.ShapeDtypeStruct((2, bp), jnp.float32),
        scratch_shapes=[
            pltpu.VMEM((1152, nb), jnp.float32),   # conv1 activations (for strided pool reads)
            pltpu.VMEM((1024, nb), jnp.float32),   # conv2 activations
        ],
        compiler_params=pltpu.CompilerParams(
            dimension_semantics=("parallel",),
            vmem_limit_bytes=32 * 1024 * 1024),
    )(xt, w1e, w2e, b2, wfc1, bfc1, wt, tail)

    return out[:, :B].T                                                  # (B, 2)


# ---------------------------------------------------------------------------
# Host-side (one-time) weight preparation: expanded conv weights, pool-layout
# folded fc1 weight, fc2+qnn fold.  All become trace-time constants.
# ---------------------------------------------------------------------------
def prepare_params(params):
    f32 = np.float32
    as_np = lambda a: np.asarray(a, dtype=f32)

    w1 = as_np(params["conv1_w"]).reshape(2, 5, 5)
    b1 = as_np(params["conv1_b"])
    w2 = as_np(params["conv2_w"])                     # (16, 2, 5, 5)
    b2 = as_np(params["conv2_b"])
    fc1_w, fc1_b = as_np(params["fc1_w"]), as_np(params["fc1_b"])
    fc2_w, fc2_b = as_np(params["fc2_w"]), as_np(params["fc2_b"])
    qw = as_np(params["qnn_w"]).reshape(2, 1)
    qb = as_np(params["qnn_b"]).reshape(1)
    f3w = as_np(params["fc3_w"]).reshape(1, 1)
    f3b = as_np(params["fc3_b"]).reshape(1)

    # conv1 as one matmul over the whole 28x28 input; bias in the last column
    # (matches the ones row appended to x).  Row = c*576 + oh*24 + ow, col = h*28 + w.
    w1e5 = np.zeros((2, 24, 24, 28, 28), f32)
    for kh in range(5):
        for kw in range(5):
            for oh in range(24):
                for ow in range(24):
                    w1e5[:, oh, ow, oh + kh, ow + kw] = w1[:, kh, kw]
    w1e = np.concatenate([w1e5.reshape(1152, 784),
                          np.repeat(b1, 576).reshape(1152, 1)], axis=1)  # (1152, 785)

    # conv2 as one matmul; columns indexed directly by pool-1's row layout
    # (pooled pixel (ci,ph,pw) lives at u1 row ci*288 + 24*ph + pw).
    w2e6 = np.zeros((16, 8, 8, 2, 12, 24), f32)
    for kh in range(5):
        for kw in range(5):
            for oh in range(8):
                for ow in range(8):
                    w2e6[:, oh, ow, :, oh + kh, ow + kw] = w2[:, :, kh, kw]
    w2e = w2e6.reshape(1024, 576)[:, :564].copy()                        # (1024, 564)
    b2e = np.repeat(b2, 64).reshape(1024, 1)

    # fc1 with the NCHW flatten + pool-2 row layout folded into the columns
    # (flat index co*16 + 4*ph + pw lives at u2 row co*32 + 8*ph + pw).
    wfc1 = np.zeros((64, 508), f32)
    for co in range(16):
        for ph in range(4):
            for pw in range(4):
                wfc1[:, co * 32 + 8 * ph + pw] = fc1_w[:, co * 16 + 4 * ph + pw]

    # qnn surrogate's linear part folded into fc2; tanh stays in-kernel.
    wt = (qw.T @ fc2_w).astype(f32)                                      # (1, 64)
    bt = float(qw[:, 0] @ fc2_b + qb[0])

    prep = {
        "w1e": w1e, "w2e": w2e, "b2": b2e,
        "wfc1": wfc1, "bfc1": fc1_b.reshape(64, 1),
        "wt": wt,
        "tail": np.array([bt, float(f3w[0, 0]), float(f3b[0])], f32),    # SMEM scalars
    }
    return {k: jnp.asarray(v) for k, v in prep.items()}


# ---------------------------------------------------------------------------
# Deterministic parameter init (PyTorch shape conventions)
# ---------------------------------------------------------------------------
def init_params(key):
    ks = jax.random.split(key, 12)

    def rnd(k, shape, scale):
        return (scale * jax.random.normal(k, shape)).astype(jnp.float32)

    return {
        "conv1_w": rnd(ks[0], (2, 1, 5, 5), 0.2),
        "conv1_b": rnd(ks[1], (2,), 0.1),
        "conv2_w": rnd(ks[2], (16, 2, 5, 5), 0.1),
        "conv2_b": rnd(ks[3], (16,), 0.1),
        "fc1_w":   rnd(ks[4], (64, 256), 0.05),
        "fc1_b":   rnd(ks[5], (64,), 0.05),
        "fc2_w":   rnd(ks[6], (2, 64), 0.1),
        "fc2_b":   rnd(ks[7], (2,), 0.1),
        "qnn_w":   rnd(ks[8], (2, 1), 0.5),    # surrogate qnn params
        "qnn_b":   rnd(ks[9], (1,), 0.1),
        "fc3_w":   rnd(ks[10], (1, 1), 0.5),
        "fc3_b":   rnd(ks[11], (1,), 0.1),
    }


if __name__ == "__main__":
    key = jax.random.PRNGKey(0)
    kx, kp = jax.random.split(key)
    x = jax.random.normal(kx, (2, 1, 28, 28), dtype=jnp.float32)   # NCHW, 28x28 -> 256 flat
    params = init_params(kp)
    prep = prepare_params(params)      # host-side, done once (constants for the kernel)

    out = jax.jit(net_forward)(x, prep)
    out = jax.block_until_ready(out)

    assert out.shape == (2, 2) and out.dtype == jnp.float32
    print("KERNEL_OK")
</pallas_src>

<mosaic_0001>
module attributes {stable_mosaic.version = 11 : i64} {
  func.func @_net_kernel(%arg0: i32, %arg1: memref<785x128xf32, #tpu.memory_space<vmem>>, %arg2: memref<1152x785xf32, #tpu.memory_space<vmem>>, %arg3: memref<1024x564xf32, #tpu.memory_space<vmem>>, %arg4: memref<1024x1xf32, #tpu.memory_space<vmem>>, %arg5: memref<64x508xf32, #tpu.memory_space<vmem>>, %arg6: memref<64x1xf32, #tpu.memory_space<vmem>>, %arg7: memref<1x64xf32, #tpu.memory_space<vmem>>, %arg8: memref<3xf32, #tpu.memory_space<smem>>, %arg9: memref<2x128xf32, #tpu.memory_space<vmem>>, %arg10: memref<1152x128xf32, #tpu.memory_space<vmem>>, %arg11: memref<1024x128xf32, #tpu.memory_space<vmem>>) attributes {dimension_semantics = [#tpu.dimension_semantics<parallel>], iteration_bounds = array<i64: 1>, scalar_prefetch = 0 : i64, scratch_operands = 2 : i64, tpu.core_type = #tpu.core_type<tc>, window_params = [{transform_indices = @transform_0, window_bounds = array<i64: 785, 128>}, {pipeline_mode = #tpu.pipeline_mode<synchronous>, transform_indices = @transform_1, window_bounds = array<i64: 1152, 785>}, {pipeline_mode = #tpu.pipeline_mode<synchronous>, transform_indices = @transform_2, window_bounds = array<i64: 1024, 564>}, {pipeline_mode = #tpu.pipeline_mode<synchronous>, transform_indices = @transform_3, window_bounds = array<i64: 1024, 1>}, {pipeline_mode = #tpu.pipeline_mode<synchronous>, transform_indices = @transform_4, window_bounds = array<i64: 64, 508>}, {pipeline_mode = #tpu.pipeline_mode<synchronous>, transform_indices = @transform_5, window_bounds = array<i64: 64, 1>}, {pipeline_mode = #tpu.pipeline_mode<synchronous>, transform_indices = @transform_6, window_bounds = array<i64: 1, 64>}, {transform_indices = @transform_7, window_bounds = array<i64: 3>}, {transform_indices = @transform_8, window_bounds = array<i64: 2, 128>}]} {
    %c0 = arith.constant 0 : index
    %c0_0 = arith.constant 0 : index
    %0 = vector.load %arg2[%c0, %c0_0] : memref<1152x785xf32, #tpu.memory_space<vmem>>, vector<1152x785xf32>
    %c0_1 = arith.constant 0 : index
    %c0_2 = arith.constant 0 : index
    %1 = vector.load %arg1[%c0_1, %c0_2] : memref<785x128xf32, #tpu.memory_space<vmem>>, vector<785x128xf32>
    %cst = arith.constant dense<0.000000e+00> : vector<1152x128xf32>
    %2 = tpu.matmul %0, %1, %cst {dimension_numbers = #tpu.dot_dimension_numbers<[1], [0], [0], [1], [0, 0, 1, 1], [], []>} : vector<1152x785xf32>, vector<785x128xf32>, vector<1152x128xf32> -> vector<1152x128xf32>
    %cst_3 = arith.constant 0.000000e+00 : f32
    %3 = vector.broadcast %cst_3 : f32 to vector<1152x128xf32>
    %4 = arith.maximumf %2, %3 : vector<1152x128xf32>
    %c0_4 = arith.constant 0 : index
    %c0_5 = arith.constant 0 : index
    %5 = vector.load %arg10[%c0_4, %c0_5] : memref<1152x128xf32, #tpu.memory_space<vmem>>, vector<1152x128xf32>
    tpu.vector_store %arg10[%c0_4, %c0_5], %4 {strides = array<i32>} : memref<1152x128xf32, #tpu.memory_space<vmem>>, vector<1152x128xf32>,
    %c0_6 = arith.constant 0 : index
    %c0_7 = arith.constant 0 : index
    %6 = tpu.strided_load %arg10[%c0_6, %c0_7] {strides = array<i32: 2, 1>} : memref<1152x128xf32, #tpu.memory_space<vmem>>, vector<576x128xf32>
    %c1 = arith.constant 1 : index
    %c0_8 = arith.constant 0 : index
    %7 = tpu.strided_load %arg10[%c1, %c0_8] {strides = array<i32: 2, 1>} : memref<1152x128xf32, #tpu.memory_space<vmem>>, vector<576x128xf32>
    %8 = arith.maximumf %6, %7 : vector<576x128xf32>
    %9 = vector.extract_strided_slice %8 {offsets = [0, 0], sizes = [564, 128], strides = [1, 1]} : vector<576x128xf32> to vector<564x128xf32>
    %10 = vector.extract_strided_slice %8 {offsets = [12, 0], sizes = [564, 128], strides = [1, 1]} : vector<576x128xf32> to vector<564x128xf32>
    %11 = arith.maximumf %9, %10 : vector<564x128xf32>
    %c0_9 = arith.constant 0 : index
    %c0_10 = arith.constant 0 : index
    %12 = vector.load %arg3[%c0_9, %c0_10] : memref<1024x564xf32, #tpu.memory_space<vmem>>, vector<1024x564xf32>
    %cst_11 = arith.constant dense<0.000000e+00> : vector<1024x128xf32>
    %13 = tpu.matmul %12, %11, %cst_11 {dimension_numbers = #tpu.dot_dimension_numbers<[1], [0], [0], [1], [0, 0, 1, 1], [], []>} : vector<1024x564xf32>, vector<564x128xf32>, vector<1024x128xf32> -> vector<1024x128xf32>
    %c0_12 = arith.constant 0 : index
    %c0_13 = arith.constant 0 : index
    %14 = vector.load %arg4[%c0_12, %c0_13] : memref<1024x1xf32, #tpu.memory_space<vmem>>, vector<1024x1xf32>
    %15 = vector.broadcast %14 : vector<1024x1xf32> to vector<1024x128xf32>
    %16 = arith.addf %13, %15 : vector<1024x128xf32>
    %cst_14 = arith.constant 0.000000e+00 : f32
    %17 = vector.broadcast %cst_14 : f32 to vector<1024x128xf32>
    %18 = arith.maximumf %16, %17 : vector<1024x128xf32>
    %c0_15 = arith.constant 0 : index
    %c0_16 = arith.constant 0 : index
    %19 = vector.load %arg11[%c0_15, %c0_16] : memref<1024x128xf32, #tpu.memory_space<vmem>>, vector<1024x128xf32>
    tpu.vector_store %arg11[%c0_15, %c0_16], %18 {strides = array<i32>} : memref<1024x128xf32, #tpu.memory_space<vmem>>, vector<1024x128xf32>,
    %c0_17 = arith.constant 0 : index
    %c0_18 = arith.constant 0 : index
    %20 = tpu.strided_load %arg11[%c0_17, %c0_18] {strides = array<i32: 2, 1>} : memref<1024x128xf32, #tpu.memory_space<vmem>>, vector<512x128xf32>
    %c1_19 = arith.constant 1 : index
    %c0_20 = arith.constant 0 : index
    %21 = tpu.strided_load %arg11[%c1_19, %c0_20] {strides = array<i32: 2, 1>} : memref<1024x128xf32, #tpu.memory_space<vmem>>, vector<512x128xf32>
    %22 = arith.maximumf %20, %21 : vector<512x128xf32>
    %23 = vector.extract_strided_slice %22 {offsets = [0, 0], sizes = [508, 128], strides = [1, 1]} : vector<512x128xf32> to vector<508x128xf32>
    %24 = vector.extract_strided_slice %22 {offsets = [4, 0], sizes = [508, 128], strides = [1, 1]} : vector<512x128xf32> to vector<508x128xf32>
    %25 = arith.maximumf %23, %24 : vector<508x128xf32>
    %c0_21 = arith.constant 0 : index
    %c0_22 = arith.constant 0 : index
    %26 = vector.load %arg5[%c0_21, %c0_22] : memref<64x508xf32, #tpu.memory_space<vmem>>, vector<64x508xf32>
    %cst_23 = arith.constant dense<0.000000e+00> : vector<64x128xf32>
    %27 = tpu.matmul %26, %25, %cst_23 {dimension_numbers = #tpu.dot_dimension_numbers<[1], [0], [0], [1], [0, 0, 1, 1], [], []>} : vector<64x508xf32>, vector<508x128xf32>, vector<64x128xf32> -> vector<64x128xf32>
    %c0_24 = arith.constant 0 : index
    %c0_25 = arith.constant 0 : index
    %28 = vector.load %arg6[%c0_24, %c0_25] : memref<64x1xf32, #tpu.memory_space<vmem>>, vector<64x1xf32>
    %29 = vector.broadcast %28 : vector<64x1xf32> to vector<64x128xf32>
    %30 = arith.addf %27, %29 : vector<64x128xf32>
    %cst_26 = arith.constant 0.000000e+00 : f32
    %31 = vector.broadcast %cst_26 : f32 to vector<64x128xf32>
    %32 = arith.maximumf %30, %31 : vector<64x128xf32>
    %c0_27 = arith.constant 0 : index
    %c0_28 = arith.constant 0 : index
    %33 = vector.load %arg7[%c0_27, %c0_28] : memref<1x64xf32, #tpu.memory_space<vmem>>, vector<1x64xf32>
    %cst_29 = arith.constant dense<0.000000e+00> : vector<1x128xf32>
    %34 = tpu.matmul %33, %32, %cst_29 {dimension_numbers = #tpu.dot_dimension_numbers<[1], [0], [0], [1], [0, 0, 1, 1], [], []>} : vector<1x64xf32>, vector<64x128xf32>, vector<1x128xf32> -> vector<1x128xf32>
    %c0_30 = arith.constant 0 : index
    %35 = memref.load %arg8[%c0_30] : memref<3xf32, #tpu.memory_space<smem>>
    %36 = vector.broadcast %35 : f32 to vector<1x128xf32>
    %37 = arith.addf %34, %36 : vector<1x128xf32>
    %38 = math.tanh %37 : vector<1x128xf32>
    %c1_31 = arith.constant 1 : index
    %39 = memref.load %arg8[%c1_31] : memref<3xf32, #tpu.memory_space<smem>>
    %40 = vector.broadcast %39 : f32 to vector<1x128xf32>
    %41 = arith.mulf %40, %38 : vector<1x128xf32>
    %c2 = arith.constant 2 : index
    %42 = memref.load %arg8[%c2] : memref<3xf32, #tpu.memory_space<smem>>
    %43 = vector.broadcast %42 : f32 to vector<1x128xf32>
    %44 = arith.addf %41, %43 : vector<1x128xf32>
    %c0_32 = arith.constant 0 : index
    %c0_33 = arith.constant 0 : index
    %45 = vector.load %arg9[%c0_32, %c0_33] : memref<2x128xf32, #tpu.memory_space<vmem>>, vector<1x128xf32>
    tpu.vector_store %arg9[%c0_32, %c0_33], %44 {strides = array<i32>} : memref<2x128xf32, #tpu.memory_space<vmem>>, vector<1x128xf32>,
    %cst_34 = arith.constant 1.000000e+00 : f32
    %46 = vector.broadcast %cst_34 : f32 to vector<1x128xf32>
    %47 = arith.subf %46, %44 : vector<1x128xf32>
    %c1_35 = arith.constant 1 : index
    %c0_36 = arith.constant 0 : index
    %48 = vector.load %arg9[%c1_35, %c0_36] : memref<2x128xf32, #tpu.memory_space<vmem>>, vector<1x128xf32>
    tpu.vector_store %arg9[%c1_35, %c0_36], %47 {strides = array<i32>} : memref<2x128xf32, #tpu.memory_space<vmem>>, vector<1x128xf32>,
    return
  }
  func.func @transform_0(%arg0: i32) -> (i32, i32) {
    %c0_i32 = arith.constant 0 : i32
    %c0_i32_0 = arith.constant 0 : i32
    return %c0_i32, %arg0 : i32, i32
  }
  func.func @transform_1(%arg0: i32) -> (i32, i32) {
    %c0_i32 = arith.constant 0 : i32
    %c0_i32_0 = arith.constant 0 : i32
    %c0_i32_1 = arith.constant 0 : i32
    return %c0_i32, %c0_i32_0 : i32, i32
  }
  func.func @transform_2(%arg0: i32) -> (i32, i32) {
    %c0_i32 = arith.constant 0 : i32
    %c0_i32_0 = arith.constant 0 : i32
    %c0_i32_1 = arith.constant 0 : i32
    return %c0_i32, %c0_i32_0 : i32, i32
  }
  func.func @transform_3(%arg0: i32) -> (i32, i32) {
    %c0_i32 = arith.constant 0 : i32
    %c0_i32_0 = arith.constant 0 : i32
    %c0_i32_1 = arith.constant 0 : i32
    return %c0_i32, %c0_i32_0 : i32, i32
  }
  func.func @transform_4(%arg0: i32) -> (i32, i32) {
    %c0_i32 = arith.constant 0 : i32
    %c0_i32_0 = arith.constant 0 : i32
    %c0_i32_1 = arith.constant 0 : i32
    return %c0_i32, %c0_i32_0 : i32, i32
  }
  func.func @transform_5(%arg0: i32) -> (i32, i32) {
    %c0_i32 = arith.constant 0 : i32
    %c0_i32_0 = arith.constant 0 : i32
    %c0_i32_1 = arith.constant 0 : i32
    return %c0_i32, %c0_i32_0 : i32, i32
  }
  func.func @transform_6(%arg0: i32) -> (i32, i32) {
    %c0_i32 = arith.constant 0 : i32
    %c0_i32_0 = arith.constant 0 : i32
    %c0_i32_1 = arith.constant 0 : i32
    return %c0_i32, %c0_i32_0 : i32, i32
  }
  func.func @transform_7(%arg0: i32) -> i32 {
    %c0_i32 = arith.constant 0 : i32
    %c0_i32_0 = arith.constant 0 : i32
    return %c0_i32 : i32
  }
  func.func @transform_8(%arg0: i32) -> (i32, i32) {
    %c0_i32 = arith.constant 0 : i32
    %c0_i32_0 = arith.constant 0 : i32
    return %c0_i32, %arg0 : i32, i32
  }
}

</mosaic_0001>

<llo_original>
// kernel: net_forward.1
$region0: #{net_forward.1}
  #allocation0 [shape = 'u32[]', space=smem, size = 0x4, offset = 0x4, fixed_abs, tag = 'smem constant byte address 0x4 - core index']
  #allocation1 [shape = 'u32[144,128]{1,0:T(1,128)}', space=vmem, size = 0x12000, scoped, tag = 'internal scratch']
  #allocation2 [shape = 'f32[1152,128]{1,0:T(8,128)}', space=vmem, size = 0x90000, scoped, tag = 'scratch operand']
  #allocation3 [shape = 'f32[1024,128]{1,0:T(8,128)}', space=vmem, size = 0x80000, scoped, tag = 'scratch operand']
  %s0 = inlined_call_operand.vmem [shape: f32[785,128], index: 0, kind: input, shape index: {}]
  %s1 = inlined_call_operand.vmem [shape: f32[1152,785], index: 1, kind: input, shape index: {}]
  %s2 = inlined_call_operand.vmem [shape: f32[1024,564], index: 2, kind: input, shape index: {}]
  %s3 = inlined_call_operand.vmem [shape: f32[1024,1], index: 3, kind: input, shape index: {}]
  %s4 = inlined_call_operand.vmem [shape: f32[64,508], index: 4, kind: input, shape index: {}]
  %s5 = inlined_call_operand.vmem [shape: f32[64,1], index: 5, kind: input, shape index: {}]
  %s6 = inlined_call_operand.vmem [shape: f32[1,64], index: 6, kind: input, shape index: {}]
  %s7 = inlined_call_operand.vmem [shape: f32[3], index: 7, kind: input, shape index: {}]
  %s8 = inlined_call_operand.vmem [shape: f32[2,128], index: 8, kind: output, shape index: {}]
  %s9 = sld [smem:[#allocation0]]
  $region46: #{net_forward.1} parent=0
    _
  %s11 = ssub.s32 1, %s9
  %s12 = scalar_select 0, %s11, %s9
  $region1: #{net_forward.1} parent=0
    #allocation4 [shape = 'u8[512]{0}', space=smem, size = 0x200, scoped, tag = 'input window, operand 7, single buffered']
    #allocation5 [shape = 's32[1]{0}', space=sflag, size = 0x4, scoped, tag = 'scoped memory for net_forward.1']
    %13 = vsyncpa [#allocation5], 0
    // Predicated region
    $region2: #{net_forward.1} parent=1 // pred_check
      _
    $region3: #{net_forward.1} parent=1 // pred_check_branch
      %15 = sbr.rel (0) target = $region5
    $region4: #{net_forward.1} parent=1 // pred_region
      _
    $region5: #{net_forward.1} parent=1 // pred_fallthru
      _
    // Predicated region
    $region6: #{net_forward.1} parent=1 // pred_check
      _
    $region7: #{net_forward.1} parent=1 // pred_check_branch
      %17 = sbr.rel (0) target = $region9
    $region8: #{net_forward.1} parent=1 // pred_region
      _
    $region9: #{net_forward.1} parent=1 // pred_fallthru
      _
    // Predicated region
    $region10: #{net_forward.1} parent=1 // pred_check
      _
    $region11: #{net_forward.1} parent=1 // pred_check_branch
      %19 = sbr.rel (0) target = $region13
    $region12: #{net_forward.1} parent=1 // pred_region
      _
    $region13: #{net_forward.1} parent=1 // pred_fallthru
      _
    // Predicated region
    $region14: #{net_forward.1} parent=1 // pred_check
      _
    $region15: #{net_forward.1} parent=1 // pred_check_branch
      %21 = sbr.rel (0) target = $region17
    $region16: #{net_forward.1} parent=1 // pred_region
      _
    $region17: #{net_forward.1} parent=1 // pred_fallthru
      _
    // Predicated region
    $region18: #{net_forward.1} parent=1 // pred_check
      _
    $region19: #{net_forward.1} parent=1 // pred_check_branch
      %23 = sbr.rel (0) target = $region21
    $region20: #{net_forward.1} parent=1 // pred_region
      _
    $region21: #{net_forward.1} parent=1 // pred_fallthru
      _
    // Predicated region
    $region22: #{net_forward.1} parent=1 // pred_check
      _
    $region23: #{net_forward.1} parent=1 // pred_check_branch
      %25 = sbr.rel (0) target = $region25
    $region24: #{net_forward.1} parent=1 // pred_region
      _
    $region25: #{net_forward.1} parent=1 // pred_fallthru
      _
    // Predicated region
    $region26: #{net_forward.1} parent=1 // pred_check
      _
    $region27: #{net_forward.1} parent=1 // pred_check_branch
      %27 = sbr.rel (0) target = $region29
    $region28: #{net_forward.1} parent=1 // pred_region
      _
    $region29: #{net_forward.1} parent=1 // pred_fallthru
      _
    // Predicated region
    $region30: #{net_forward.1} parent=1 // pred_check
      _
    $region31: #{net_forward.1} parent=1 // pred_check_branch
      %29 = sbr.rel (0) target = $region33
    $region32: #{net_forward.1} parent=1 // pred_region
      %s31 = ssub.s32 16, 16
      %32 = vsyncadd [#allocation5], %s31
      %s34 = sshll.u32 %s7, 4
      %s35 = int_to_ptr.vmem [resolvable:$true] %s34
      %37 = dma.vmem_to_smem %s35, 16, [#allocation4], [#allocation5]
    $region33: #{net_forward.1} parent=1 // pred_fallthru
      _
    // Predicated region
    $region34: #{net_forward.1} parent=1 // pred_check
      _
    $region35: #{net_forward.1} parent=1 // pred_check_branch
      %39 = sbr.rel (0) target = $region37
    $region36: #{net_forward.1} parent=1 // pred_region
      %40 = dma.done [#allocation5], 16
    $region37: #{net_forward.1} parent=1 // pred_fallthru
      _
    %41 = sfence
    %v42 = vld [vmem:[%s1] sm:$0xff]
    %v43 = vld [vmem:[%s1 + $0x8] sm:$0xff]
    %v44 = vld [vmem:[%s1 + $0x10] sm:$0xff]
    %v45 = vld [vmem:[%s1 + $0x18] sm:$0xff]
    %v46 = vld [vmem:[%s1 + $0x20] sm:$0xff]
    %v47 = vld [vmem:[%s1 + $0x28] sm:$0xff]
    %v48 = vld [vmem:[%s1 + $0x30] sm:$0xff]
    %v49 = vld [vmem:[%s1 + $0x38] sm:$0xff]
    %v50 = vld [vmem:[%s1 + $0x40] sm:$0xff]
    %v51 = vld [vmem:[%s1 + $0x48] sm:$0xff]
    %v52 = vld [vmem:[%s1 + $0x50] sm:$0xff]
    %v53 = vld [vmem:[%s1 + $0x58] sm:$0xff]
    %v54 = vld [vmem:[%s1 + $0x60] sm:$0xff]
    %v55 = vld [vmem:[%s1 + $0x68] sm:$0xff]
    %v56 = vld [vmem:[%s1 + $0x70] sm:$0xff]
    %v57 = vld [vmem:[%s1 + $0x78] sm:$0xff]
    %v58 = vld [vmem:[%s1 + $0x80] sm:$0xff]
    %v59 = vld [vmem:[%s1 + $0x88] sm:$0xff]
    %v60 = vld [vmem:[%s1 + $0x90] sm:$0xff]
    %v61 = vld [vmem:[%s1 + $0x98] sm:$0xff]
    %v62 = vld [vmem:[%s1 + $0xa0] sm:$0xff]
    %v63 = vld [vmem:[%s1 + $0xa8] sm:$0xff]
    %v64 = vld [vmem:[%s1 + $0xb0] sm:$0xff]
    %v65 = vld [vmem:[%s1 + $0xb8] sm:$0xff]
    %v66 = vld [vmem:[%s1 + $0xc0] sm:$0xff]
    %v67 = vld [vmem:[%s1 + $0xc8] sm:$0xff]
    %v68 = vld [vmem:[%s1 + $0xd0] sm:$0xff]
    %v69 = vld [vmem:[%s1 + $0xd8] sm:$0xff]
    %v70 = vld [vmem:[%s1 + $0xe0] sm:$0xff]
    %v71 = vld [vmem:[%s1 + $0xe8] sm:$0xff]
    %v72 = vld [vmem:[%s1 + $0xf0] sm:$0xff]
    %v73 = vld [vmem:[%s1 + $0xf8] sm:$0xff]
    %v74 = vld [vmem:[%s1 + $0x100] sm:$0xff]
    %v75 = vld [vmem:[%s1 + $0x108] sm:$0xff]
    %v76 = vld [vmem:[%s1 + $0x110] sm:$0xff]
    %v77 = vld [vmem:[%s1 + $0x118] sm:$0xff]
    %v78 = vld [vmem:[%s1 + $0x120] sm:$0xff]
    %v79 = vld [vmem:[%s1 + $0x128] sm:$0xff]
    %v80 = vld [vmem:[%s1 + $0x130] sm:$0xff]
    %v81 = vld [vmem:[%s1 + $0x138] sm:$0xff]
    %v82 = vld [vmem:[%s1 + $0x140] sm:$0xff]
    %v83 = vld [vmem:[%s1 + $0x148] sm:$0xff]
    %v84 = vld [vmem:[%s1 + $0x150] sm:$0xff]
    %v85 = vld [vmem:[%s1 + $0x158] sm:$0xff]
    %v86 = vld [vmem:[%s1 + $0x160] sm:$0xff]
    %v87 = vld [vmem:[%s1 + $0x168] sm:$0xff]
    %v88 = vld [vmem:[%s1 + $0x170] sm:$0xff]
    %v89 = vld [vmem:[%s1 + $0x178] sm:$0xff]
    %v90 = vld [vmem:[%s1 + $0x180] sm:$0xff]
    %v91 = vld [vmem:[%s1 + $0x188] sm:$0xff]
    %v92 = vld [vmem:[%s1 + $0x190] sm:$0xff]
    %v93 = vld [vmem:[%s1 + $0x198] sm:$0xff]
    %v94 = vld [vmem:[%s1 + $0x1a0] sm:$0xff]
    %v95 = vld [vmem:[%s1 + $0x1a8] sm:$0xff]
    %v96 = vld [vmem:[%s1 + $0x1b0] sm:$0xff]
    %v97 = vld [vmem:[%s1 + $0x1b8] sm:$0xff]
    %v98 = vld [vmem:[%s1 + $0x1c0] sm:$0xff]
    %v99 = vld [vmem:[%s1 + $0x1c8] sm:$0xff]
    %v100 = vld [vmem:[%s1 + $0x1d0] sm:$0xff]
    %v101 = vld [vmem:[%s1 + $0x1d8] sm:$0xff]
    %v102 = vld [vmem:[%s1 + $0x1e0] sm:$0xff]
    %v103 = vld [vmem:[%s1 + $0x1e8] sm:$0xff]
    %v104 = vld [vmem:[%s1 + $0x1f0] sm:$0xff]
    %v105 = vld [vmem:[%s1 + $0x1f8] sm:$0xff]
    %v106 = vld [vmem:[%s1 + $0x200] sm:$0xff]
    %v107 = vld [vmem:[%s1 + $0x208] sm:$0xff]
    %v108 = vld [vmem:[%s1 + $0x210] sm:$0xff]
    %v109 = vld [vmem:[%s1 + $0x218] sm:$0xff]
    %v110 = vld [vmem:[%s1 + $0x220] sm:$0xff]
    %v111 = vld [vmem:[%s1 + $0x228] sm:$0xff]
    %v112 = vld [vmem:[%s1 + $0x230] sm:$0xff]
    %v113 = vld [vmem:[%s1 + $0x238] sm:$0xff]
    %v114 = vld [vmem:[%s1 + $0x240] sm:$0xff]
    %v115 = vld [vmem:[%s1 + $0x248] sm:$0xff]
    %v116 = vld [vmem:[%s1 + $0x250] sm:$0xff]
    %v117 = vld [vmem:[%s1 + $0x258] sm:$0xff]
    %v118 = vld [vmem:[%s1 + $0x260] sm:$0xff]
    %v119 = vld [vmem:[%s1 + $0x268] sm:$0xff]
    %v120 = vld [vmem:[%s1 + $0x270] sm:$0xff]
    %v121 = vld [vmem:[%s1 + $0x278] sm:$0xff]
    %v122 = vld [vmem:[%s1 + $0x280] sm:$0xff]
    %v123 = vld [vmem:[%s1 + $0x288] sm:$0xff]
    %v124 = vld [vmem:[%s1 + $0x290] sm:$0xff]
    %v125 = vld [vmem:[%s1 + $0x298] sm:$0xff]
    %v126 = vld [vmem:[%s1 + $0x2a0] sm:$0xff]
    %v127 = vld [vmem:[%s1 + $0x2a8] sm:$0xff]
    %v128 = vld [vmem:[%s1 + $0x2b0] sm:$0xff]
    %v129 = vld [vmem:[%s1 + $0x2b8] sm:$0xff]
    %v130 = vld [vmem:[%s1 + $0x2c0] sm:$0xff]
    %v131 = vld [vmem:[%s1 + $0x2c8] sm:$0xff]
    %v132 = vld [vmem:[%s1 + $0x2d0] sm:$0xff]
    %v133 = vld [vmem:[%s1 + $0x2d8] sm:$0xff]
    %v134 = vld [vmem:[%s1 + $0x2e0] sm:$0xff]
    %v135 = vld [vmem:[%s1 + $0x2e8] sm:$0xff]
    %v136 = vld [vmem:[%s1 + $0x2f0] sm:$0xff]
    %v137 = vld [vmem:[%s1 + $0x2f8] sm:$0xff]
    %v138 = vld [vmem:[%s1 + $0x300] sm:$0xff]
    %v139 = vld [vmem:[%s1 + $0x308] sm:$0xff]
    %v140 = vld [vmem:[%s1 + $0x310] sm:$0xff]
    %v141 = vld [vmem:[%s1 + $0x318] sm:$0xff]
    %v142 = vld [vmem:[%s1 + $0x320] sm:$0xff]
    %v143 = vld [vmem:[%s1 + $0x328] sm:$0xff]
    %v144 = vld [vmem:[%s1 + $0x330] sm:$0xff]
    %v145 = vld [vmem:[%s1 + $0x338] sm:$0xff]
    %v146 = vld [vmem:[%s1 + $0x340] sm:$0xff]
    %v147 = vld [vmem:[%s1 + $0x348] sm:$0xff]
    %v148 = vld [vmem:[%s1 + $0x350] sm:$0xff]
    %v149 = vld [vmem:[%s1 + $0x358] sm:$0xff]
    %v150 = vld [vmem:[%s1 + $0x360] sm:$0xff]
    %v151 = vld [vmem:[%s1 + $0x368] sm:$0xff]
    %v152 = vld [vmem:[%s1 + $0x370] sm:$0xff]
    %v153 = vld [vmem:[%s1 + $0x378] sm:$0xff]
    %v154 = vld [vmem:[%s1 + $0x380] sm:$0xff]
    %v155 = vld [vmem:[%s1 + $0x388] sm:$0xff]
    %v156 = vld [vmem:[%s1 + $0x390] sm:$0xff]
    %v157 = vld [vmem:[%s1 + $0x398] sm:$0xff]
    %v158 = vld [vmem:[%s1 + $0x3a0] sm:$0xff]
    %v159 = vld [vmem:[%s1 + $0x3a8] sm:$0xff]
    %v160 = vld [vmem:[%s1 + $0x3b0] sm:$0xff]
    %v161 = vld [vmem:[%s1 + $0x3b8] sm:$0xff]
    %v162 = vld [vmem:[%s1 + $0x3c0] sm:$0xff]
    %v163 = vld [vmem:[%s1 + $0x3c8] sm:$0xff]
    %v164 = vld [vmem:[%s1 + $0x3d0] sm:$0xff]
    %v165 = vld [vmem:[%s1 + $0x3d8] sm:$0xff]
    %v166 = vld [vmem:[%s1 + $0x3e0] sm:$0xff]
    %v167 = vld [vmem:[%s1 + $0x3e8] sm:$0xff]
    %v168 = vld [vmem:[%s1 + $0x3f0] sm:$0xff]
    %v169 = vld [vmem:[%s1 + $0x3f8] sm:$0xff]
    %v170 = vld [vmem:[%s1 + $0x400] sm:$0xff]
    %v171 = vld [vmem:[%s1 + $0x408] sm:$0xff]
    %v172 = vld [vmem:[%s1 + $0x410] sm:$0xff]
    %v173 = vld [vmem:[%s1 + $0x418] sm:$0xff]
    %v174 = vld [vmem:[%s1 + $0x420] sm:$0xff]
    %v175 = vld [vmem:[%s1 + $0x428] sm:$0xff]
    %v176 = vld [vmem:[%s1 + $0x430] sm:$0xff]
    %v177 = vld [vmem:[%s1 + $0x438] sm:$0xff]
    %v178 = vld [vmem:[%s1 + $0x440] sm:$0xff]
    %v179 = vld [vmem:[%s1 + $0x448] sm:$0xff]
    %v180 = vld [vmem:[%s1 + $0x450] sm:$0xff]
    %v181 = vld [vmem:[%s1 + $0x458] sm:$0xff]
    %v182 = vld [vmem:[%s1 + $0x460] sm:$0xff]
    %v183 = vld [vmem:[%s1 + $0x468] sm:$0xff]
    %v184 = vld [vmem:[%s1 + $0x470] sm:$0xff]
    %v185 = vld [vmem:[%s1 + $0x478] sm:$0xff]
    %v186 = vld [vmem:[%s1 + $0x480] sm:$0xff]
    %v187 = vld [vmem:[%s1 + $0x488] sm:$0xff]
    %v188 = vld [vmem:[%s1 + $0x490] sm:$0xff]
    %v189 = vld [vmem:[%s1 + $0x498] sm:$0xff]
    %v190 = vld [vmem:[%s1 + $0x4a0] sm:$0xff]
    %v191 = vld [vmem:[%s1 + $0x4a8] sm:$0xff]
    %v192 = vld [vmem:[%s1 + $0x4b0] sm:$0xff]
    %v193 = vld [vmem:[%s1 + $0x4b8] sm:$0xff]
    %v194 = vld [vmem:[%s1 + $0x4c0] sm:$0xff]
    %v195 = vld [vmem:[%s1 + $0x4c8] sm:$0xff]
    %v196 = vld [vmem:[%s1 + $0x4d0] sm:$0xff]
    %v197 = vld [vmem:[%s1 + $0x4d8] sm:$0xff]
    %v198 = vld [vmem:[%s1 + $0x4e0] sm:$0xff]
    %v199 = vld [vmem:[%s1 + $0x4e8] sm:$0xff]
    %v200 = vld [vmem:[%s1 + $0x4f0] sm:$0xff]
    %v201 = vld [vmem:[%s1 + $0x4f8] sm:$0xff]
    %v202 = vld [vmem:[%s1 + $0x500] sm:$0xff]
    %v203 = vld [vmem:[%s1 + $0x508] sm:$0xff]
    %v204 = vld [vmem:[%s1 + $0x510] sm:$0xff]
    %v205 = vld [vmem:[%s1 + $0x518] sm:$0xff]
    %v206 = vld [vmem:[%s1 + $0x520] sm:$0xff]
    %v207 = vld [vmem:[%s1 + $0x528] sm:$0xff]
    %v208 = vld [vmem:[%s1 + $0x530] sm:$0xff]
    %v209 = vld [vmem:[%s1 + $0x538] sm:$0xff]
    %v210 = vld [vmem:[%s1 + $0x540] sm:$0xff]
    %v211 = vld [vmem:[%s1 + $0x548] sm:$0xff]
    %v212 = vld [vmem:[%s1 + $0x550] sm:$0xff]
    %v213 = vld [vmem:[%s1 + $0x558] sm:$0xff]
    %v214 = vld [vmem:[%s1 + $0x560] sm:$0xff]
    %v215 = vld [vmem:[%s1 + $0x568] sm:$0xff]
    %v216 = vld [vmem:[%s1 + $0x570] sm:$0xff]
    %v217 = vld [vmem:[%s1 + $0x578] sm:$0xff]
    %v218 = vld [vmem:[%s1 + $0x580] sm:$0xff]
    %v219 = vld [vmem:[%s1 + $0x588] sm:$0xff]
    %v220 = vld [vmem:[%s1 + $0x590] sm:$0xff]
    %v221 = vld [vmem:[%s1 + $0x598] sm:$0xff]
    %v222 = vld [vmem:[%s1 + $0x5a0] sm:$0xff]
    %v223 = vld [vmem:[%s1 + $0x5a8] sm:$0xff]
    %v224 = vld [vmem:[%s1 + $0x5b0] sm:$0xff]
    %v225 = vld [vmem:[%s1 + $0x5b8] sm:$0xff]
    %v226 = vld [vmem:[%s1 + $0x5c0] sm:$0xff]
    %v227 = vld [vmem:[%s1 + $0x5c8] sm:$0xff]
    %v228 = vld [vmem:[%s1 + $0x5d0] sm:$0xff]
    %v229 = vld [vmem:[%s1 + $0x5d8] sm:$0xff]
    %v230 = vld [vmem:[%s1 + $0x5e0] sm:$0xff]
    %v231 = vld [vmem:[%s1 + $0x5e8] sm:$0xff]
    %v232 = vld [vmem:[%s1 + $0x5f0] sm:$0xff]
    %v233 = vld [vmem:[%s1 + $0x5f8] sm:$0xff]
    %v234 = vld [vmem:[%s1 + $0x600] sm:$0xff]
    %v235 = vld [vmem:[%s1 + $0x608] sm:$0xff]
    %v236 = vld [vmem:[%s1 + $0x610] sm:$0xff]
    %v237 = vld [vmem:[%s1 + $0x618] sm:$0xff]
    %v238 = vld [vmem:[%s1 + $0x620] sm:$0xff]
    %v239 = vld [vmem:[%s1 + $0x628] sm:$0xff]
    %v240 = vld [vmem:[%s1 + $0x630] sm:$0xff]
    %v241 = vld [vmem:[%s1 + $0x638] sm:$0xff]
    %v242 = vld [vmem:[%s1 + $0x640] sm:$0xff]
    %v243 = vld [vmem:[%s1 + $0x648] sm:$0xff]
    %v244 = vld [vmem:[%s1 + $0x650] sm:$0xff]
    %v245 = vld [vmem:[%s1 + $0x658] sm:$0xff]
    %v246 = vld [vmem:[%s1 + $0x660] sm:$0xff]
    %v247 = vld [vmem:[%s1 + $0x668] sm:$0xff]
    %v248 = vld [vmem:[%s1 + $0x670] sm:$0xff]
    %v249 = vld [vmem:[%s1 + $0x678] sm:$0xff]
    %v250 = vld [vmem:[%s1 + $0x680] sm:$0xff]
    %v251 = vld [vmem:[%s1 + $0x688] sm:$0xff]
    %v252 = vld [vmem:[%s1 + $0x690] sm:$0xff]
    %v253 = vld [vmem:[%s1 + $0x698] sm:$0xff]
    %v254 = vld [vmem:[%s1 + $0x6a0] sm:$0xff]
    %v255 = vld [vmem:[%s1 + $0x6a8] sm:$0xff]
    %v256 = vld [vmem:[%s1 + $0x6b0] sm:$0xff]
    %v257 = vld [vmem:[%s1 + $0x6b8] sm:$0xff]
    %v258 = vld [vmem:[%s1 + $0x6c0] sm:$0xff]
    %v259 = vld [vmem:[%s1 + $0x6c8] sm:$0xff]
    %v260 = vld [vmem:[%s1 + $0x6d0] sm:$0xff]
    %v261 = vld [vmem:[%s1 + $0x6d8] sm:$0xff]
    %v262 = vld [vmem:[%s1 + $0x6e0] sm:$0xff]
    %v263 = vld [vmem:[%s1 + $0x6e8] sm:$0xff]
    %v264 = vld [vmem:[%s1 + $0x6f0] sm:$0xff]
    %v265 = vld [vmem:[%s1 + $0x6f8] sm:$0xff]
    %v266 = vld [vmem:[%s1 + $0x700] sm:$0xff]
    %v267 = vld [vmem:[%s1 + $0x708] sm:$0xff]
    %v268 = vld [vmem:[%s1 + $0x710] sm:$0xff]
    %v269 = vld [vmem:[%s1 + $0x718] sm:$0xff]
    %v270 = vld [vmem:[%s1 + $0x720] sm:$0xff]
    %v271 = vld [vmem:[%s1 + $0x728] sm:$0xff]
    %v272 = vld [vmem:[%s1 + $0x730] sm:$0xff]
    %v273 = vld [vmem:[%s1 + $0x738] sm:$0xff]
    %v274 = vld [vmem:[%s1 + $0x740] sm:$0xff]
    %v275 = vld [vmem:[%s1 + $0x748] sm:$0xff]
    %v276 = vld [vmem:[%s1 + $0x750] sm:$0xff]
    %v277 = vld [vmem:[%s1 + $0x758] sm:$0xff]
    %v278 = vld [vmem:[%s1 + $0x760] sm:$0xff]
    %v279 = vld [vmem:[%s1 + $0x768] sm:$0xff]
    %v280 = vld [vmem:[%s1 + $0x770] sm:$0xff]
    %v281 = vld [vmem:[%s1 + $0x778] sm:$0xff]
    %v282 = vld [vmem:[%s1 + $0x780] sm:$0xff]
    %v283 = vld [vmem:[%s1 + $0x788] sm:$0xff]
    %v284 = vld [vmem:[%s1 + $0x790] sm:$0xff]
    %v285 = vld [vmem:[%s1 + $0x798] sm:$0xff]
    %v286 = vld [vmem:[%s1 + $0x7a0] sm:$0xff]
    %v287 = vld [vmem:[%s1 + $0x7a8] sm:$0xff]
    %v288 = vld [vmem:[%s1 + $0x7b0] sm:$0xff]
    %v289 = vld [vmem:[%s1 + $0x7b8] sm:$0xff]
    %v290 = vld [vmem:[%s1 + $0x7c0] sm:$0xff]
    %v291 = vld [vmem:[%s1 + $0x7c8] sm:$0xff]
    %v292 = vld [vmem:[%s1 + $0x7d0] sm:$0xff]
    %v293 = vld [vmem:[%s1 + $0x7d8] sm:$0xff]
    %v294 = vld [vmem:[%s1 + $0x7e0] sm:$0xff]
    %v295 = vld [vmem:[%s1 + $0x7e8] sm:$0xff]
    %v296 = vld [vmem:[%s1 + $0x7f0] sm:$0xff]
    %v297 = vld [vmem:[%s1 + $0x7f8] sm:$0xff]
    %v298 = vld [vmem:[%s1 + $0x800] sm:$0xff]
    %v299 = vld [vmem:[%s1 + $0x808] sm:$0xff]
    %v300 = vld [vmem:[%s1 + $0x810] sm:$0xff]
    %v301 = vld [vmem:[%s1 + $0x818] sm:$0xff]
    %v302 = vld [vmem:[%s1 + $0x820] sm:$0xff]
    %v303 = vld [vmem:[%s1 + $0x828] sm:$0xff]
    %v304 = vld [vmem:[%s1 + $0x830] sm:$0xff]
    %v305 = vld [vmem:[%s1 + $0x838] sm:$0xff]
    %v306 = vld [vmem:[%s1 + $0x840] sm:$0xff]
    %v307 = vld [vmem:[%s1 + $0x848] sm:$0xff]
    %v308 = vld [vmem:[%s1 + $0x850] sm:$0xff]
    %v309 = vld [vmem:[%s1 + $0x858] sm:$0xff]
    %v310 = vld [vmem:[%s1 + $0x860] sm:$0xff]
    %v311 = vld [vmem:[%s1 + $0x868] sm:$0xff]
    %v312 = vld [vmem:[%s1 + $0x870] sm:$0xff]
    %v313 = vld [vmem:[%s1 + $0x878] sm:$0xff]
    %v314 = vld [vmem:[%s1 + $0x880] sm:$0xff]
    %v315 = vld [vmem:[%s1 + $0x888] sm:$0xff]
    %v316 = vld [vmem:[%s1 + $0x890] sm:$0xff]
    %v317 = vld [vmem:[%s1 + $0x898] sm:$0xff]
    %v318 = vld [vmem:[%s1 + $0x8a0] sm:$0xff]
    %v319 = vld [vmem:[%s1 + $0x8a8] sm:$0xff]
    %v320 = vld [vmem:[%s1 + $0x8b0] sm:$0xff]
    %v321 = vld [vmem:[%s1 + $0x8b8] sm:$0xff]
    %v322 = vld [vmem:[%s1 + $0x8c0] sm:$0xff]
    %v323 = vld [vmem:[%s1 + $0x8c8] sm:$0xff]
    %v324 = vld [vmem:[%s1 + $0x8d0] sm:$0xff]
    %v325 = vld [vmem:[%s1 + $0x8d8] sm:$0xff]
    %v326 = vld [vmem:[%s1 + $0x8e0] sm:$0xff]
    %v327 = vld [vmem:[%s1 + $0x8e8] sm:$0xff]
    %v328 = vld [vmem:[%s1 + $0x8f0] sm:$0xff]
    %v329 = vld [vmem:[%s1 + $0x8f8] sm:$0xff]
    %v330 = vld [vmem:[%s1 + $0x900] sm:$0xff]
    %v331 = vld [vmem:[%s1 + $0x908] sm:$0xff]
    %v332 = vld [vmem:[%s1 + $0x910] sm:$0xff]
    %v333 = vld [vmem:[%s1 + $0x918] sm:$0xff]
    %v334 = vld [vmem:[%s1 + $0x920] sm:$0xff]
    %v335 = vld [vmem:[%s1 + $0x928] sm:$0xff]
    %v336 = vld [vmem:[%s1 + $0x930] sm:$0xff]
    %v337 = vld [vmem:[%s1 + $0x938] sm:$0xff]
    %v338 = vld [vmem:[%s1 + $0x940] sm:$0xff]
    %v339 = vld [vmem:[%s1 + $0x948] sm:$0xff]
    %v340 = vld [vmem:[%s1 + $0x950] sm:$0xff]
    %v341 = vld [vmem:[%s1 + $0x958] sm:$0xff]
    %v342 = vld [vmem:[%s1 + $0x960] sm:$0xff]
    %v343 = vld [vmem:[%s1 + $0x968] sm:$0xff]
    %v344 = vld [vmem:[%s1 + $0x970] sm:$0xff]
    %v345 = vld [vmem:[%s1 + $0x978] sm:$0xff]
    %v346 = vld [vmem:[%s1 + $0x980] sm:$0xff]
    %v347 = vld [vmem:[%s1 + $0x988] sm:$0xff]
    %v348 = vld [vmem:[%s1 + $0x990] sm:$0xff]
    %v349 = vld [vmem:[%s1 + $0x998] sm:$0xff]
    %v350 = vld [vmem:[%s1 + $0x9a0] sm:$0xff]
    %v351 = vld [vmem:[%s1 + $0x9a8] sm:$0xff]
    %v352 = vld [vmem:[%s1 + $0x9b0] sm:$0xff]
    %v353 = vld [vmem:[%s1 + $0x9b8] sm:$0xff]
    %v354 = vld [vmem:[%s1 + $0x9c0] sm:$0xff]
    %v355 = vld [vmem:[%s1 + $0x9c8] sm:$0xff]
    %v356 = vld [vmem:[%s1 + $0x9d0] sm:$0xff]
    %v357 = vld [vmem:[%s1 + $0x9d8] sm:$0xff]
    %v358 = vld [vmem:[%s1 + $0x9e0] sm:$0xff]
    %v359 = vld [vmem:[%s1 + $0x9e8] sm:$0xff]
    %v360 = vld [vmem:[%s1 + $0x9f0] sm:$0xff]
    %v361 = vld [vmem:[%s1 + $0x9f8] sm:$0xff]
    %v362 = vld [vmem:[%s1 + $0xa00] sm:$0xff]
    %v363 = vld [vmem:[%s1 + $0xa08] sm:$0xff]
    %v364 = vld [vmem:[%s1 + $0xa10] sm:$0xff]
    %v365 = vld [vmem:[%s1 + $0xa18] sm:$0xff]
    %v366 = vld [vmem:[%s1 + $0xa20] sm:$0xff]
    %v367 = vld [vmem:[%s1 + $0xa28] sm:$0xff]
    %v368 = vld [vmem:[%s1 + $0xa30] sm:$0xff]
    %v369 = vld [vmem:[%s1 + $0xa38] sm:$0xff]
    %v370 = vld [vmem:[%s1 + $0xa40] sm:$0xff]
    %v371 = vld [vmem:[%s1 + $0xa48] sm:$0xff]
    %v372 = vld [vmem:[%s1 + $0xa50] sm:$0xff]
    %v373 = vld [vmem:[%s1 + $0xa58] sm:$0xff]
    %v374 = vld [vmem:[%s1 + $0xa60] sm:$0xff]
    %v375 = vld [vmem:[%s1 + $0xa68] sm:$0xff]
    %v376 = vld [vmem:[%s1 + $0xa70] sm:$0xff]
    %v377 = vld [vmem:[%s1 + $0xa78] sm:$0xff]
    %v378 = vld [vmem:[%s1 + $0xa80] sm:$0xff]
    %v379 = vld [vmem:[%s1 + $0xa88] sm:$0xff]
    %v380 = vld [vmem:[%s1 + $0xa90] sm:$0xff]
    %v381 = vld [vmem:[%s1 + $0xa98] sm:$0xff]
    %v382 = vld [vmem:[%s1 + $0xaa0] sm:$0xff]
    %v383 = vld [vmem:[%s1 + $0xaa8] sm:$0xff]
    %v384 = vld [vmem:[%s1 + $0xab0] sm:$0xff]
    %v385 = vld [vmem:[%s1 + $0xab8] sm:$0xff]
    %v386 = vld [vmem:[%s1 + $0xac0] sm:$0xff]
    %v387 = vld [vmem:[%s1 + $0xac8] sm:$0xff]
    %v388 = vld [vmem:[%s1 + $0xad0] sm:$0xff]
    %v389 = vld [vmem:[%s1 + $0xad8] sm:$0xff]
    %v390 = vld [vmem:[%s1 + $0xae0] sm:$0xff]
    %v391 = vld [vmem:[%s1 + $0xae8] sm:$0xff]
    %v392 = vld [vmem:[%s1 + $0xaf0] sm:$0xff]
    %v393 = vld [vmem:[%s1 + $0xaf8] sm:$0xff]
    %v394 = vld [vmem:[%s1 + $0xb00] sm:$0xff]
    %v395 = vld [vmem:[%s1 + $0xb08] sm:$0xff]
    %v396 = vld [vmem:[%s1 + $0xb10] sm:$0xff]
    %v397 = vld [vmem:[%s1 + $0xb18] sm:$0xff]
    %v398 = vld [vmem:[%s1 + $0xb20] sm:$0xff]
    %v399 = vld [vmem:[%s1 + $0xb28] sm:$0xff]
    %v400 = vld [vmem:[%s1 + $0xb30] sm:$0xff]
    %v401 = vld [vmem:[%s1 + $0xb38] sm:$0xff]
    %v402 = vld [vmem:[%s1 + $0xb40] sm:$0xff]
    %v403 = vld [vmem:[%s1 + $0xb48] sm:$0xff]
    %v404 = vld [vmem:[%s1 + $0xb50] sm:$0xff]
    %v405 = vld [vmem:[%s1 + $0xb58] sm:$0xff]
    %v406 = vld [vmem:[%s1 + $0xb60] sm:$0xff]
    %v407 = vld [vmem:[%s1 + $0xb68] sm:$0xff]
    %v408 = vld [vmem:[%s1 + $0xb70] sm:$0xff]
    %v409 = vld [vmem:[%s1 + $0xb78] sm:$0xff]
    %v410 = vld [vmem:[%s1 + $0xb80] sm:$0xff]
    %v411 = vld [vmem:[%s1 + $0xb88] sm:$0xff]
    %v412 = vld [vmem:[%s1 + $0xb90] sm:$0xff]
    %v413 = vld [vmem:[%s1 + $0xb98] sm:$0xff]
    %v414 = vld [vmem:[%s1 + $0xba0] sm:$0xff]
    %v415 = vld [vmem:[%s1 + $0xba8] sm:$0xff]
    %v416 = vld [vmem:[%s1 + $0xbb0] sm:$0xff]
    %v417 = vld [vmem:[%s1 + $0xbb8] sm:$0xff]
    %v418 = vld [vmem:[%s1 + $0xbc0] sm:$0xff]
    %v419 = vld [vmem:[%s1 + $0xbc8] sm:$0xff]
    %v420 = vld [vmem:[%s1 + $0xbd0] sm:$0xff]
    %v421 = vld [vmem:[%s1 + $0xbd8] sm:$0xff]
    %v422 = vld [vmem:[%s1 + $0xbe0] sm:$0xff]
    %v423 = vld [vmem:[%s1 + $0xbe8] sm:$0xff]
    %v424 = vld [vmem:[%s1 + $0xbf0] sm:$0xff]
    %v425 = vld [vmem:[%s1 + $0xbf8] sm:$0xff]
    %v426 = vld [vmem:[%s1 + $0xc00] sm:$0xff]
    %v427 = vld [vmem:[%s1 + $0xc08] sm:$0xff]
    %v428 = vld [vmem:[%s1 + $0xc10] sm:$0xff]
    %v429 = vld [vmem:[%s1 + $0xc18] sm:$0xff]
    %v430 = vld [vmem:[%s1 + $0xc20] sm:$0xff]
    %v431 = vld [vmem:[%s1 + $0xc28] sm:$0xff]
    %v432 = vld [vmem:[%s1 + $0xc30] sm:$0xff]
    %v433 = vld [vmem:[%s1 + $0xc38] sm:$0xff]
    %v434 = vld [vmem:[%s1 + $0xc40] sm:$0xff]
    %v435 = vld [vmem:[%s1 + $0xc48] sm:$0xff]
    %v436 = vld [vmem:[%s1 + $0xc50] sm:$0xff]
    %v437 = vld [vmem:[%s1 + $0xc58] sm:$0xff]
    %v438 = vld [vmem:[%s1 + $0xc60] sm:$0xff]
    %v439 = vld [vmem:[%s1 + $0xc68] sm:$0xff]
    %v440 = vld [vmem:[%s1 + $0xc70] sm:$0xff]
    %v441 = vld [vmem:[%s1 + $0xc78] sm:$0xff]
    %v442 = vld [vmem:[%s1 + $0xc80] sm:$0xff]
    %v443 = vld [vmem:[%s1 + $0xc88] sm:$0xff]
    %v444 = vld [vmem:[%s1 + $0xc90] sm:$0xff]
    %v445 = vld [vmem:[%s1 + $0xc98] sm:$0xff]
    %v446 = vld [vmem:[%s1 + $0xca0] sm:$0xff]
    %v447 = vld [vmem:[%s1 + $0xca8] sm:$0xff]
    %v448 = vld [vmem:[%s1 + $0xcb0] sm:$0xff]
    %v449 = vld [vmem:[%s1 + $0xcb8] sm:$0xff]
    %v450 = vld [vmem:[%s1 + $0xcc0] sm:$0xff]
    %v451 = vld [vmem:[%s1 + $0xcc8] sm:$0xff]
    %v452 = vld [vmem:[%s1 + $0xcd0] sm:$0xff]
    %v453 = vld [vmem:[%s1 + $0xcd8] sm:$0xff]
    %v454 = vld [vmem:[%s1 + $0xce0] sm:$0xff]
    %v455 = vld [vmem:[%s1 + $0xce8] sm:$0xff]
    %v456 = vld [vmem:[%s1 + $0xcf0] sm:$0xff]
    %v457 = vld [vmem:[%s1 + $0xcf8] sm:$0xff]
    %v458 = vld [vmem:[%s1 + $0xd00] sm:$0xff]
    %v459 = vld [vmem:[%s1 + $0xd08] sm:$0xff]
    %v460 = vld [vmem:[%s1 + $0xd10] sm:$0xff]
    %v461 = vld [vmem:[%s1 + $0xd18] sm:$0xff]
    %v462 = vld [vmem:[%s1 + $0xd20] sm:$0xff]
    %v463 = vld [vmem:[%s1 + $0xd28] sm:$0xff]
    %v464 = vld [vmem:[%s1 + $0xd30] sm:$0xff]
    %v465 = vld [vmem:[%s1 + $0xd38] sm:$0xff]
    %v466 = vld [vmem:[%s1 + $0xd40] sm:$0xff]
    %v467 = vld [vmem:[%s1 + $0xd48] sm:$0xff]
    %v468 = vld [vmem:[%s1 + $0xd50] sm:$0xff]
    %v469 = vld [vmem:[%s1 + $0xd58] sm:$0xff]
    %v470 = vld [vmem:[%s1 + $0xd60] sm:$0xff]
    %v471 = vld [vmem:[%s1 + $0xd68] sm:$0xff]
    %v472 = vld [vmem:[%s1 + $0xd70] sm:$0xff]
    %v473 = vld [vmem:[%s1 + $0xd78] sm:$0xff]
    %v474 = vld [vmem:[%s1 + $0xd80] sm:$0xff]
    %v475 = vld [vmem:[%s1 + $0xd88] sm:$0xff]
    %v476 = vld [vmem:[%s1 + $0xd90] sm:$0xff]
    %v477 = vld [vmem:[%s1 + $0xd98] sm:$0xff]
    %v478 = vld [vmem:[%s1 + $0xda0] sm:$0xff]
    %v479 = vld [vmem:[%s1 + $0xda8] sm:$0xff]
    %v480 = vld [vmem:[%s1 + $0xdb0] sm:$0xff]
    %v481 = vld [vmem:[%s1 + $0xdb8] sm:$0xff]
    %v482 = vld [vmem:[%s1 + $0xdc0] sm:$0xff]
    %v483 = vld [vmem:[%s1 + $0xdc8] sm:$0xff]
    %v484 = vld [vmem:[%s1 + $0xdd0] sm:$0xff]
    %v485 = vld [vmem:[%s1 + $0xdd8] sm:$0xff]
    %v486 = vld [vmem:[%s1 + $0xde0] sm:$0xff]
    %v487 = vld [vmem:[%s1 + $0xde8] sm:$0xff]
    %v488 = vld [vmem:[%s1 + $0xdf0] sm:$0xff]
    %v489 = vld [vmem:[%s1 + $0xdf8] sm:$0xff]
    %v490 = vld [vmem:[%s1 + $0xe00] sm:$0xff]
    %v491 = vld [vmem:[%s1 + $0xe08] sm:$0xff]
    %v492 = vld [vmem:[%s1 + $0xe10] sm:$0xff]
    %v493 = vld [vmem:[%s1 + $0xe18] sm:$0xff]
    %v494 = vld [vmem:[%s1 + $0xe20] sm:$0xff]
    %v495 = vld [vmem:[%s1 + $0xe28] sm:$0xff]
    %v496 = vld [vmem:[%s1 + $0xe30] sm:$0xff]
    %v497 = vld [vmem:[%s1 + $0xe38] sm:$0xff]
    %v498 = vld [vmem:[%s1 + $0xe40] sm:$0xff]
    %v499 = vld [vmem:[%s1 + $0xe48] sm:$0xff]
    %v500 = vld [vmem:[%s1 + $0xe50] sm:$0xff]
    %v501 = vld [vmem:[%s1 + $0xe58] sm:$0xff]
    %v502 = vld [vmem:[%s1 + $0xe60] sm:$0xff]
    %v503 = vld [vmem:[%s1 + $0xe68] sm:$0xff]
    %v504 = vld [vmem:[%s1 + $0xe70] sm:$0xff]
    %v505 = vld [vmem:[%s1 + $0xe78] sm:$0xff]
    %v506 = vld [vmem:[%s1 + $0xe80] sm:$0xff]
    %v507 = vld [vmem:[%s1 + $0xe88] sm:$0xff]
    %v508 = vld [vmem:[%s1 + $0xe90] sm:$0xff]
    %v509 = vld [vmem:[%s1 + $0xe98] sm:$0xff]
    %v510 = vld [vmem:[%s1 + $0xea0] sm:$0xff]
    %v511 = vld [vmem:[%s1 + $0xea8] sm:$0xff]
    %v512 = vld [vmem:[%s1 + $0xeb0] sm:$0xff]
    %v513 = vld [vmem:[%s1 + $0xeb8] sm:$0xff]
    %v514 = vld [vmem:[%s1 + $0xec0] sm:$0xff]
    %v515 = vld [vmem:[%s1 + $0xec8] sm:$0xff]
    %v516 = vld [vmem:[%s1 + $0xed0] sm:$0xff]
    %v517 = vld [vmem:[%s1 + $0xed8] sm:$0xff]
    %v518 = vld [vmem:[%s1 + $0xee0] sm:$0xff]
    %v519 = vld [vmem:[%s1 + $0xee8] sm:$0xff]
    %v520 = vld [vmem:[%s1 + $0xef0] sm:$0xff]
    %v521 = vld [vmem:[%s1 + $0xef8] sm:$0xff]
    %v522 = vld [vmem:[%s1 + $0xf00] sm:$0xff]
    %v523 = vld [vmem:[%s1 + $0xf08] sm:$0xff]
    %v524 = vld [vmem:[%s1 + $0xf10] sm:$0xff]
    %v525 = vld [vmem:[%s1 + $0xf18] sm:$0xff]
    %v526 = vld [vmem:[%s1 + $0xf20] sm:$0xff]
    %v527 = vld [vmem:[%s1 + $0xf28] sm:$0xff]
    %v528 = vld [vmem:[%s1 + $0xf30] sm:$0xff]
    %v529 = vld [vmem:[%s1 + $0xf38] sm:$0xff]
    %v530 = vld [vmem:[%s1 + $0xf40] sm:$0xff]
    %v531 = vld [vmem:[%s1 + $0xf48] sm:$0xff]
    %v532 = vld [vmem:[%s1 + $0xf50] sm:$0xff]
    %v533 = vld [vmem:[%s1 + $0xf58] sm:$0xff]
    %v534 = vld [vmem:[%s1 + $0xf60] sm:$0xff]
    %v535 = vld [vmem:[%s1 + $0xf68] sm:$0xff]
    %v536 = vld [vmem:[%s1 + $0xf70] sm:$0xff]
    %v537 = vld [vmem:[%s1 + $0xf78] sm:$0xff]
    %v538 = vld [vmem:[%s1 + $0xf80] sm:$0xff]
    %v539 = vld [vmem:[%s1 + $0xf88] sm:$0xff]
    %v540 = vld [vmem:[%s1 + $0xf90] sm:$0xff]
    %v541 = vld [vmem:[%s1 + $0xf98] sm:$0xff]
    %v542 = vld [vmem:[%s1 + $0xfa0] sm:$0xff]
    %v543 = vld [vmem:[%s1 + $0xfa8] sm:$0xff]
    %v544 = vld [vmem:[%s1 + $0xfb0] sm:$0xff]
    %v545 = vld [vmem:[%s1 + $0xfb8] sm:$0xff]
    %v546 = vld [vmem:[%s1 + $0xfc0] sm:$0xff]
    %v547 = vld [vmem:[%s1 + $0xfc8] sm:$0xff]
    %v548 = vld [vmem:[%s1 + $0xfd0] sm:$0xff]
    %v549 = vld [vmem:[%s1 + $0xfd8] sm:$0xff]
    %v550 = vld [vmem:[%s1 + $0xfe0] sm:$0xff]
    %v551 = vld [vmem:[%s1 + $0xfe8] sm:$0xff]
    %v552 = vld [vmem:[%s1 + $0xff0] sm:$0xff]
    %v553 = vld [vmem:[%s1 + $0xff8] sm:$0xff]
    %v554 = vld [vmem:[%s1 + $0x1000] sm:$0xff]
    %v555 = vld [vmem:[%s1 + $0x1008] sm:$0xff]
    %v556 = vld [vmem:[%s1 + $0x1010] sm:$0xff]
    %v557 = vld [vmem:[%s1 + $0x1018] sm:$0xff]
    %v558 = vld [vmem:[%s1 + $0x1020] sm:$0xff]
    %v559 = vld [vmem:[%s1 + $0x1028] sm:$0xff]
    %v560 = vld [vmem:[%s1 + $0x1030] sm:$0xff]
    %v561 = vld [vmem:[%s1 + $0x1038] sm:$0xff]
    %v562 = vld [vmem:[%s1 + $0x1040] sm:$0xff]
    %v563 = vld [vmem:[%s1 + $0x1048] sm:$0xff]
    %v564 = vld [vmem:[%s1 + $0x1050] sm:$0xff]
    %v565 = vld [vmem:[%s1 + $0x1058] sm:$0xff]
    %v566 = vld [vmem:[%s1 + $0x1060] sm:$0xff]
    %v567 = vld [vmem:[%s1 + $0x1068] sm:$0xff]
    %v568 = vld [vmem:[%s1 + $0x1070] sm:$0xff]
    %v569 = vld [vmem:[%s1 + $0x1078] sm:$0xff]
    %v570 = vld [vmem:[%s1 + $0x1080] sm:$0xff]
    %v571 = vld [vmem:[%s1 + $0x1088] sm:$0xff]
    %v572 = vld [vmem:[%s1 + $0x1090] sm:$0xff]
    %v573 = vld [vmem:[%s1 + $0x1098] sm:$0xff]
    %v574 = vld [vmem:[%s1 + $0x10a0] sm:$0xff]
    %v575 = vld [vmem:[%s1 + $0x10a8] sm:$0xff]
    %v576 = vld [vmem:[%s1 + $0x10b0] sm:$0xff]
    %v577 = vld [vmem:[%s1 + $0x10b8] sm:$0xff]
    %v578 = vld [vmem:[%s1 + $0x10c0] sm:$0xff]
    %v579 = vld [vmem:[%s1 + $0x10c8] sm:$0xff]
    %v580 = vld [vmem:[%s1 + $0x10d0] sm:$0xff]
    %v581 = vld [vmem:[%s1 + $0x10d8] sm:$0xff]
    %v582 = vld [vmem:[%s1 + $0x10e0] sm:$0xff]
    %v583 = vld [vmem:[%s1 + $0x10e8] sm:$0xff]
    %v584 = vld [vmem:[%s1 + $0x10f0] sm:$0xff]
    %v585 = vld [vmem:[%s1 + $0x10f8] sm:$0xff]
    %v586 = vld [vmem:[%s1 + $0x1100] sm:$0xff]
    %v587 = vld [vmem:[%s1 + $0x1108] sm:$0xff]
    %v588 = vld [vmem:[%s1 + $0x1110] sm:$0xff]
    %v589 = vld [vmem:[%s1 + $0x1118] sm:$0xff]
    %v590 = vld [vmem:[%s1 + $0x1120] sm:$0xff]
    %v591 = vld [vmem:[%s1 + $0x1128] sm:$0xff]
    %v592 = vld [vmem:[%s1 + $0x1130] sm:$0xff]
    %v593 = vld [vmem:[%s1 + $0x1138] sm:$0xff]
    %v594 = vld [vmem:[%s1 + $0x1140] sm:$0xff]
    %v595 = vld [vmem:[%s1 + $0x1148] sm:$0xff]
    %v596 = vld [vmem:[%s1 + $0x1150] sm:$0xff]
    %v597 = vld [vmem:[%s1 + $0x1158] sm:$0xff]
    %v598 = vld [vmem:[%s1 + $0x1160] sm:$0xff]
    %v599 = vld [vmem:[%s1 + $0x1168] sm:$0xff]
    %v600 = vld [vmem:[%s1 + $0x1170] sm:$0xff]
    %v601 = vld [vmem:[%s1 + $0x1178] sm:$0xff]
    %v602 = vld [vmem:[%s1 + $0x1180] sm:$0xff]
    %v603 = vld [vmem:[%s1 + $0x1188] sm:$0xff]
    %v604 = vld [vmem:[%s1 + $0x1190] sm:$0xff]
    %v605 = vld [vmem:[%s1 + $0x1198] sm:$0xff]
    %v606 = vld [vmem:[%s1 + $0x11a0] sm:$0xff]
    %v607 = vld [vmem:[%s1 + $0x11a8] sm:$0xff]
    %v608 = vld [vmem:[%s1 + $0x11b0] sm:$0xff]
    %v609 = vld [vmem:[%s1 + $0x11b8] sm:$0xff]
    %v610 = vld [vmem:[%s1 + $0x11c0] sm:$0xff]
    %v611 = vld [vmem:[%s1 + $0x11c8] sm:$0xff]
    %v612 = vld [vmem:[%s1 + $0x11d0] sm:$0xff]
    %v613 = vld [vmem:[%s1 + $0x11d8] sm:$0xff]
    %v614 = vld [vmem:[%s1 + $0x11e0] sm:$0xff]
    %v615 = vld [vmem:[%s1 + $0x11e8] sm:$0xff]
    %v616 = vld [vmem:[%s1 + $0x11f0] sm:$0xff]
    %v617 = vld [vmem:[%s1 + $0x11f8] sm:$0xff]
    %v618 = vld [vmem:[%s1 + $0x1200] sm:$0xff]
    %v619 = vld [vmem:[%s1 + $0x1208] sm:$0xff]
    %v620 = vld [vmem:[%s1 + $0x1210] sm:$0xff]
    %v621 = vld [vmem:[%s1 + $0x1218] sm:$0xff]
    %v622 = vld [vmem:[%s1 + $0x1220] sm:$0xff]
    %v623 = vld [vmem:[%s1 + $0x1228] sm:$0xff]
    %v624 = vld [vmem:[%s1 + $0x1230] sm:$0xff]
    %v625 = vld [vmem:[%s1 + $0x1238] sm:$0xff]
    %v626 = vld [vmem:[%s1 + $0x1240] sm:$0xff]
    %v627 = vld [vmem:[%s1 + $0x1248] sm:$0xff]
    %v628 = vld [vmem:[%s1 + $0x1250] sm:$0xff]
    %v629 = vld [vmem:[%s1 + $0x1258] sm:$0xff]
    %v630 = vld [vmem:[%s1 + $0x1260] sm:$0xff]
    %v631 = vld [vmem:[%s1 + $0x1268] sm:$0xff]
    %v632 = vld [vmem:[%s1 + $0x1270] sm:$0xff]
    %v633 = vld [vmem:[%s1 + $0x1278] sm:$0xff]
    %v634 = vld [vmem:[%s1 + $0x1280] sm:$0xff]
    %v635 = vld [vmem:[%s1 + $0x1288] sm:$0xff]
    %v636 = vld [vmem:[%s1 + $0x1290] sm:$0xff]
    %v637 = vld [vmem:[%s1 + $0x1298] sm:$0xff]
    %v638 = vld [vmem:[%s1 + $0x12a0] sm:$0xff]
    %v639 = vld [vmem:[%s1 + $0x12a8] sm:$0xff]
    %v640 = vld [vmem:[%s1 + $0x12b0] sm:$0xff]
    %v641 = vld [vmem:[%s1 + $0x12b8] sm:$0xff]
    %v642 = vld [vmem:[%s1 + $0x12c0] sm:$0xff]
    %v643 = vld [vmem:[%s1 + $0x12c8] sm:$0xff]
    %v644 = vld [vmem:[%s1 + $0x12d0] sm:$0xff]
    %v645 = vld [vmem:[%s1 + $0x12d8] sm:$0xff]
    %v646 = vld [vmem:[%s1 + $0x12e0] sm:$0xff]
    %v647 = vld [vmem:[%s1 + $0x12e8] sm:$0xff]
    %v648 = vld [vmem:[%s1 + $0x12f0] sm:$0xff]
    %v649 = vld [vmem:[%s1 + $0x12f8] sm:$0xff]
    %v650 = vld [vmem:[%s1 + $0x1300] sm:$0xff]
    %v651 = vld [vmem:[%s1 + $0x1308] sm:$0xff]
    %v652 = vld [vmem:[%s1 + $0x1310] sm:$0xff]
    %v653 = vld [vmem:[%s1 + $0x1318] sm:$0xff]
    %v654 = vld [vmem:[%s1 + $0x1320] sm:$0xff]
    %v655 = vld [vmem:[%s1 + $0x1328] sm:$0xff]
    %v656 = vld [vmem:[%s1 + $0x1330] sm:$0xff]
    %v657 = vld [vmem:[%s1 + $0x1338] sm:$0xff]
    %v658 = vld [vmem:[%s1 + $0x1340] sm:$0xff]
    %v659 = vld [vmem:[%s1 + $0x1348] sm:$0xff]
    %v660 = vld [vmem:[%s1 + $0x1350] sm:$0xff]
    %v661 = vld [vmem:[%s1 + $0x1358] sm:$0xff]
    %v662 = vld [vmem:[%s1 + $0x1360] sm:$0xff]
    %v663 = vld [vmem:[%s1 + $0x1368] sm:$0xff]
    %v664 = vld [vmem:[%s1 + $0x1370] sm:$0xff]
    %v665 = vld [vmem:[%s1 + $0x1378] sm:$0xff]
    %v666 = vld [vmem:[%s1 + $0x1380] sm:$0xff]
    %v667 = vld [vmem:[%s1 + $0x1388] sm:$0xff]
    %v668 = vld [vmem:[%s1 + $0x1390] sm:$0xff]
    %v669 = vld [vmem:[%s1 + $0x1398] sm:$0xff]
    %v670 = vld [vmem:[%s1 + $0x13a0] sm:$0xff]
    %v671 = vld [vmem:[%s1 + $0x13a8] sm:$0xff]
    %v672 = vld [vmem:[%s1 + $0x13b0] sm:$0xff]
    %v673 = vld [vmem:[%s1 + $0x13b8] sm:$0xff]
    %v674 = vld [vmem:[%s1 + $0x13c0] sm:$0xff]
    %v675 = vld [vmem:[%s1 + $0x13c8] sm:$0xff]
    %v676 = vld [vmem:[%s1 + $0x13d0] sm:$0xff]
    %v677 = vld [vmem:[%s1 + $0x13d8] sm:$0xff]
    %v678 = vld [vmem:[%s1 + $0x13e0] sm:$0xff]
    %v679 = vld [vmem:[%s1 + $0x13e8] sm:$0xff]
    %v680 = vld [vmem:[%s1 + $0x13f0] sm:$0xff]
    %v681 = vld [vmem:[%s1 + $0x13f8] sm:$0xff]
    %v682 = vld [vmem:[%s1 + $0x1400] sm:$0xff]
    %v683 = vld [vmem:[%s1 + $0x1408] sm:$0xff]
    %v684 = vld [vmem:[%s1 + $0x1410] sm:$0xff]
    %v685 = vld [vmem:[%s1 + $0x1418] sm:$0xff]
    %v686 = vld [vmem:[%s1 + $0x1420] sm:$0xff]
    %v687 = vld [vmem:[%s1 + $0x1428] sm:$0xff]
    %v688 = vld [vmem:[%s1 + $0x1430] sm:$0xff]
    %v689 = vld [vmem:[%s1 + $0x1438] sm:$0xff]
    %v690 = vld [vmem:[%s1 + $0x1440] sm:$0xff]
    %v691 = vld [vmem:[%s1 + $0x1448] sm:$0xff]
    %v692 = vld [vmem:[%s1 + $0x1450] sm:$0xff]
    %v693 = vld [vmem:[%s1 + $0x1458] sm:$0xff]
    %v694 = vld [vmem:[%s1 + $0x1460] sm:$0xff]
    %v695 = vld [vmem:[%s1 + $0x1468] sm:$0xff]
    %v696 = vld [vmem:[%s1 + $0x1470] sm:$0xff]
    %v697 = vld [vmem:[%s1 + $0x1478] sm:$0xff]
    %v698 = vld [vmem:[%s1 + $0x1480] sm:$0xff]
    %v699 = vld [vmem:[%s1 + $0x1488] sm:$0xff]
    %v700 = vld [vmem:[%s1 + $0x1490] sm:$0xff]
    %v701 = vld [vmem:[%s1 + $0x1498] sm:$0xff]
    %v702 = vld [vmem:[%s1 + $0x14a0] sm:$0xff]
    %v703 = vld [vmem:[%s1 + $0x14a8] sm:$0xff]
    %v704 = vld [vmem:[%s1 + $0x14b0] sm:$0xff]
    %v705 = vld [vmem:[%s1 + $0x14b8] sm:$0xff]
    %v706 = vld [vmem:[%s1 + $0x14c0] sm:$0xff]
    %v707 = vld [vmem:[%s1 + $0x14c8] sm:$0xff]
    %v708 = vld [vmem:[%s1 + $0x14d0] sm:$0xff]
    %v709 = vld [vmem:[%s1 + $0x14d8] sm:$0xff]
    %v710 = vld [vmem:[%s1 + $0x14e0] sm:$0xff]
    %v711 = vld [vmem:[%s1 + $0x14e8] sm:$0xff]
    %v712 = vld [vmem:[%s1 + $0x14f0] sm:$0xff]
    %v713 = vld [vmem:[%s1 + $0x14f8] sm:$0xff]
    %v714 = vld [vmem:[%s1 + $0x1500] sm:$0xff]
    %v715 = vld [vmem:[%s1 + $0x1508] sm:$0xff]
    %v716 = vld [vmem:[%s1 + $0x1510] sm:$0xff]
    %v717 = vld [vmem:[%s1 + $0x1518] sm:$0xff]
    %v718 = vld [vmem:[%s1 + $0x1520] sm:$0xff]
    %v719 = vld [vmem:[%s1 + $0x1528] sm:$0xff]
    %v720 = vld [vmem:[%s1 + $0x1530] sm:$0xff]
    %v721 = vld [vmem:[%s1 + $0x1538] sm:$0xff]
    %v722 = vld [vmem:[%s1 + $0x1540] sm:$0xff]
    %v723 = vld [vmem:[%s1 + $0x1548] sm:$0xff]
    %v724 = vld [vmem:[%s1 + $0x1550] sm:$0xff]
    %v725 = vld [vmem:[%s1 + $0x1558] sm:$0xff]
    %v726 = vld [vmem:[%s1 + $0x1560] sm:$0xff]
    %v727 = vld [vmem:[%s1 + $0x1568] sm:$0xff]
    %v728 = vld [vmem:[%s1 + $0x1570] sm:$0xff]
    %v729 = vld [vmem:[%s1 + $0x1578] sm:$0xff]
    %v730 = vld [vmem:[%s1 + $0x1580] sm:$0xff]
    %v731 = vld [vmem:[%s1 + $0x1588] sm:$0xff]
    %v732 = vld [vmem:[%s1 + $0x1590] sm:$0xff]
    %v733 = vld [vmem:[%s1 + $0x1598] sm:$0xff]
    %v734 = vld [vmem:[%s1 + $0x15a0] sm:$0xff]
    %v735 = vld [vmem:[%s1 + $0x15a8] sm:$0xff]
    %v736 = vld [vmem:[%s1 + $0x15b0] sm:$0xff]
    %v737 = vld [vmem:[%s1 + $0x15b8] sm:$0xff]
    %v738 = vld [vmem:[%s1 + $0x15c0] sm:$0xff]
    %v739 = vld [vmem:[%s1 + $0x15c8] sm:$0xff]
    %v740 = vld [vmem:[%s1 + $0x15d0] sm:$0xff]
    %v741 = vld [vmem:[%s1 + $0x15d8] sm:$0xff]
    %v742 = vld [vmem:[%s1 + $0x15e0] sm:$0xff]
    %v743 = vld [vmem:[%s1 + $0x15e8] sm:$0xff]
    %v744 = vld [vmem:[%s1 + $0x15f0] sm:$0xff]
    %v745 = vld [vmem:[%s1 + $0x15f8] sm:$0xff]
    %v746 = vld [vmem:[%s1 + $0x1600] sm:$0xff]
    %v747 = vld [vmem:[%s1 + $0x1608] sm:$0xff]
    %v748 = vld [vmem:[%s1 + $0x1610] sm:$0xff]
    %v749 = vld [vmem:[%s1 + $0x1618] sm:$0xff]
    %v750 = vld [vmem:[%s1 + $0x1620] sm:$0xff]
    %v751 = vld [vmem:[%s1 + $0x1628] sm:$0xff]
    %v752 = vld [vmem:[%s1 + $0x1630] sm:$0xff]
    %v753 = vld [vmem:[%s1 + $0x1638] sm:$0xff]
    %v754 = vld [vmem:[%s1 + $0x1640] sm:$0xff]
    %v755 = vld [vmem:[%s1 + $0x1648] sm:$0xff]
    %v756 = vld [vmem:[%s1 + $0x1650] sm:$0xff]
    %v757 = vld [vmem:[%s1 + $0x1658] sm:$0xff]
    %v758 = vld [vmem:[%s1 + $0x1660] sm:$0xff]
    %v759 = vld [vmem:[%s1 + $0x1668] sm:$0xff]
    %v760 = vld [vmem:[%s1 + $0x1670] sm:$0xff]
    %v761 = vld [vmem:[%s1 + $0x1678] sm:$0xff]
    %v762 = vld [vmem:[%s1 + $0x1680] sm:$0xff]
    %v763 = vld [vmem:[%s1 + $0x1688] sm:$0xff]
    %v764 = vld [vmem:[%s1 + $0x1690] sm:$0xff]
    %v765 = vld [vmem:[%s1 + $0x1698] sm:$0xff]
    %v766 = vld [vmem:[%s1 + $0x16a0] sm:$0xff]
    %v767 = vld [vmem:[%s1 + $0x16a8] sm:$0xff]
    %v768 = vld [vmem:[%s1 + $0x16b0] sm:$0xff]
    %v769 = vld [vmem:[%s1 + $0x16b8] sm:$0xff]
    %v770 = vld [vmem:[%s1 + $0x16c0] sm:$0xff]
    %v771 = vld [vmem:[%s1 + $0x16c8] sm:$0xff]
    %v772 = vld [vmem:[%s1 + $0x16d0] sm:$0xff]
    %v773 = vld [vmem:[%s1 + $0x16d8] sm:$0xff]
    %v774 = vld [vmem:[%s1 + $0x16e0] sm:$0xff]
    %v775 = vld [vmem:[%s1 + $0x16e8] sm:$0xff]
    %v776 = vld [vmem:[%s1 + $0x16f0] sm:$0xff]
    %v777 = vld [vmem:[%s1 + $0x16f8] sm:$0xff]
    %v778 = vld [vmem:[%s1 + $0x1700] sm:$0xff]
    %v779 = vld [vmem:[%s1 + $0x1708] sm:$0xff]
    %v780 = vld [vmem:[%s1 + $0x1710] sm:$0xff]
    %v781 = vld [vmem:[%s1 + $0x1718] sm:$0xff]
    %v782 = vld [vmem:[%s1 + $0x1720] sm:$0xff]
    %v783 = vld [vmem:[%s1 + $0x1728] sm:$0xff]
    %v784 = vld [vmem:[%s1 + $0x1730] sm:$0xff]
    %v785 = vld [vmem:[%s1 + $0x1738] sm:$0xff]
    %v786 = vld [vmem:[%s1 + $0x1740] sm:$0xff]
    %v787 = vld [vmem:[%s1 + $0x1748] sm:$0xff]
    %v788 = vld [vmem:[%s1 + $0x1750] sm:$0xff]
    %v789 = vld [vmem:[%s1 + $0x1758] sm:$0xff]
    %v790 = vld [vmem:[%s1 + $0x1760] sm:$0xff]
    %v791 = vld [vmem:[%s1 + $0x1768] sm:$0xff]
    %v792 = vld [vmem:[%s1 + $0x1770] sm:$0xff]
    %v793 = vld [vmem:[%s1 + $0x1778] sm:$0xff]
    %v794 = vld [vmem:[%s1 + $0x1780] sm:$0xff]
    %v795 = vld [vmem:[%s1 + $0x1788] sm:$0xff]
    %v796 = vld [vmem:[%s1 + $0x1790] sm:$0xff]
    %v797 = vld [vmem:[%s1 + $0x1798] sm:$0xff]
    %v798 = vld [vmem:[%s1 + $0x17a0] sm:$0xff]
    %v799 = vld [vmem:[%s1 + $0x17a8] sm:$0xff]
    %v800 = vld [vmem:[%s1 + $0x17b0] sm:$0xff]
    %v801 = vld [vmem:[%s1 + $0x17b8] sm:$0xff]
    %v802 = vld [vmem:[%s1 + $0x17c0] sm:$0xff]
    %v803 = vld [vmem:[%s1 + $0x17c8] sm:$0xff]
    %v804 = vld [vmem:[%s1 + $0x17d0] sm:$0xff]
    %v805 = vld [vmem:[%s1 + $0x17d8] sm:$0xff]
    %v806 = vld [vmem:[%s1 + $0x17e0] sm:$0xff]
    %v807 = vld [vmem:[%s1 + $0x17e8] sm:$0xff]
    %v808 = vld [vmem:[%s1 + $0x17f0] sm:$0xff]
    %v809 = vld [vmem:[%s1 + $0x17f8] sm:$0xff]
    %v810 = vld [vmem:[%s1 + $0x1800] sm:$0xff]
    %v811 = vld [vmem:[%s1 + $0x1808] sm:$0xff]
    %v812 = vld [vmem:[%s1 + $0x1810] sm:$0xff]
    %v813 = vld [vmem:[%s1 + $0x1818] sm:$0xff]
    %v814 = vld [vmem:[%s1 + $0x1820] sm:$0xff]
    %v815 = vld [vmem:[%s1 + $0x1828] sm:$0xff]
    %v816 = vld [vmem:[%s1 + $0x1830] sm:$0xff]
    %v817 = vld [vmem:[%s1 + $0x1838] sm:$0xff]
    %v818 = vld [vmem:[%s1 + $0x1840] sm:$0xff]
    %v819 = vld [vmem:[%s1 + $0x1848] sm:$0xff]
    %v820 = vld [vmem:[%s1 + $0x1850] sm:$0xff]
    %v821 = vld [vmem:[%s1 + $0x1858] sm:$0xff]
    %v822 = vld [vmem:[%s1 + $0x1860] sm:$0xff]
    %v823 = vld [vmem:[%s1 + $0x1868] sm:$0xff]
    %v824 = vld [vmem:[%s1 + $0x1870] sm:$0xff]
    %v825 = vld [vmem:[%s1 + $0x1878] sm:$0xff]
    %v826 = vld [vmem:[%s1 + $0x1880] sm:$0xff]
    %v827 = vld [vmem:[%s1 + $0x1888] sm:$0xff]
    %v828 = vld [vmem:[%s1 + $0x1890] sm:$0xff]
    %v829 = vld [vmem:[%s1 + $0x1898] sm:$0xff]
    %v830 = vld [vmem:[%s1 + $0x18a0] sm:$0xff]
    %v831 = vld [vmem:[%s1 + $0x18a8] sm:$0xff]
    %v832 = vld [vmem:[%s1 + $0x18b0] sm:$0xff]
    %v833 = vld [vmem:[%s1 + $0x18b8] sm:$0xff]
    %v834 = vld [vmem:[%s1 + $0x18c0] sm:$0xff]
    %v835 = vld [vmem:[%s1 + $0x18c8] sm:$0xff]
    %v836 = vld [vmem:[%s1 + $0x18d0] sm:$0xff]
    %v837 = vld [vmem:[%s1 + $0x18d8] sm:$0xff]
    %v838 = vld [vmem:[%s1 + $0x18e0] sm:$0xff]
    %v839 = vld [vmem:[%s1 + $0x18e8] sm:$0xff]
    %v840 = vld [vmem:[%s1 + $0x18f0] sm:$0xff]
    %v841 = vld [vmem:[%s1 + $0x18f8] sm:$0xff]
    %v842 = vld [vmem:[%s1 + $0x1900] sm:$0xff]
    %v843 = vld [vmem:[%s1 + $0x1908] sm:$0xff]
    %v844 = vld [vmem:[%s1 + $0x1910] sm:$0xff]
    %v845 = vld [vmem:[%s1 + $0x1918] sm:$0xff]
    %v846 = vld [vmem:[%s1 + $0x1920] sm:$0xff]
    %v847 = vld [vmem:[%s1 + $0x1928] sm:$0xff]
    %v848 = vld [vmem:[%s1 + $0x1930] sm:$0xff]
    %v849 = vld [vmem:[%s1 + $0x1938] sm:$0xff]
    %v850 = vld [vmem:[%s1 + $0x1940] sm:$0xff]
    %v851 = vld [vmem:[%s1 + $0x1948] sm:$0xff]
    %v852 = vld [vmem:[%s1 + $0x1950] sm:$0xff]
    %v853 = vld [vmem:[%s1 + $0x1958] sm:$0xff]
    %v854 = vld [vmem:[%s1 + $0x1960] sm:$0xff]
    %v855 = vld [vmem:[%s1 + $0x1968] sm:$0xff]
    %v856 = vld [vmem:[%s1 + $0x1970] sm:$0xff]
    %v857 = vld [vmem:[%s1 + $0x1978] sm:$0xff]
    %v858 = vld [vmem:[%s1 + $0x1980] sm:$0xff]
    %v859 = vld [vmem:[%s1 + $0x1988] sm:$0xff]
    %v860 = vld [vmem:[%s1 + $0x1990] sm:$0xff]
    %v861 = vld [vmem:[%s1 + $0x1998] sm:$0xff]
    %v862 = vld [vmem:[%s1 + $0x19a0] sm:$0xff]
    %v863 = vld [vmem:[%s1 + $0x19a8] sm:$0xff]
    %v864 = vld [vmem:[%s1 + $0x19b0] sm:$0xff]
    %v865 = vld [vmem:[%s1 + $0x19b8] sm:$0xff]
    %v866 = vld [vmem:[%s1 + $0x19c0] sm:$0xff]
    %v867 = vld [vmem:[%s1 + $0x19c8] sm:$0xff]
    %v868 = vld [vmem:[%s1 + $0x19d0] sm:$0xff]
    %v869 = vld [vmem:[%s1 + $0x19d8] sm:$0xff]
    %v870 = vld [vmem:[%s1 + $0x19e0] sm:$0xff]
    %v871 = vld [vmem:[%s1 + $0x19e8] sm:$0xff]
    %v872 = vld [vmem:[%s1 + $0x19f0] sm:$0xff]
    %v873 = vld [vmem:[%s1 + $0x19f8] sm:$0xff]
    %v874 = vld [vmem:[%s1 + $0x1a00] sm:$0xff]
    %v875 = vld [vmem:[%s1 + $0x1a08] sm:$0xff]
    %v876 = vld [vmem:[%s1 + $0x1a10] sm:$0xff]
    %v877 = vld [vmem:[%s1 + $0x1a18] sm:$0xff]
    %v878 = vld [vmem:[%s1 + $0x1a20] sm:$0xff]
    %v879 = vld [vmem:[%s1 + $0x1a28] sm:$0xff]
    %v880 = vld [vmem:[%s1 + $0x1a30] sm:$0xff]
    %v881 = vld [vmem:[%s1 + $0x1a38] sm:$0xff]
    %v882 = vld [vmem:[%s1 + $0x1a40] sm:$0xff]
    %v883 = vld [vmem:[%s1 + $0x1a48] sm:$0xff]
    %v884 = vld [vmem:[%s1 + $0x1a50] sm:$0xff]
    %v885 = vld [vmem:[%s1 + $0x1a58] sm:$0xff]
    %v886 = vld [vmem:[%s1 + $0x1a60] sm:$0xff]
    %v887 = vld [vmem:[%s1 + $0x1a68] sm:$0xff]
    %v888 = vld [vmem:[%s1 + $0x1a70] sm:$0xff]
    %v889 = vld [vmem:[%s1 + $0x1a78] sm:$0xff]
    %v890 = vld [vmem:[%s1 + $0x1a80] sm:$0xff]
    %v891 = vld [vmem:[%s1 + $0x1a88] sm:$0xff]
    %v892 = vld [vmem:[%s1 + $0x1a90] sm:$0xff]
    %v893 = vld [vmem:[%s1 + $0x1a98] sm:$0xff]
    %v894 = vld [vmem:[%s1 + $0x1aa0] sm:$0xff]
    %v895 = vld [vmem:[%s1 + $0x1aa8] sm:$0xff]
    %v896 = vld [vmem:[%s1 + $0x1ab0] sm:$0xff]
    %v897 = vld [vmem:[%s1 + $0x1ab8] sm:$0xff]
    %v898 = vld [vmem:[%s1 + $0x1ac0] sm:$0xff]
    %v899 = vld [vmem:[%s1 + $0x1ac8] sm:$0xff]
    %v900 = vld [vmem:[%s1 + $0x1ad0] sm:$0xff]
    %v901 = vld [vmem:[%s1 + $0x1ad8] sm:$0xff]
    %v902 = vld [vmem:[%s1 + $0x1ae0] sm:$0xff]
    %v903 = vld [vmem:[%s1 + $0x1ae8] sm:$0xff]
    %v904 = vld [vmem:[%s1 + $0x1af0] sm:$0xff]
    %v905 = vld [vmem:[%s1 + $0x1af8] sm:$0xff]
    %v906 = vld [vmem:[%s1 + $0x1b00] sm:$0xff]
    %v907 = vld [vmem:[%s1 + $0x1b08] sm:$0xff]
    %v908 = vld [vmem:[%s1 + $0x1b10] sm:$0xff]
    %v909 = vld [vmem:[%s1 + $0x1b18] sm:$0xff]
    %v910 = vld [vmem:[%s1 + $0x1b20] sm:$0xff]
    %v911 = vld [vmem:[%s1 + $0x1b28] sm:$0xff]
    %v912 = vld [vmem:[%s1 + $0x1b30] sm:$0xff]
    %v913 = vld [vmem:[%s1 + $0x1b38] sm:$0xff]
    %v914 = vld [vmem:[%s1 + $0x1b40] sm:$0xff]
    %v915 = vld [vmem:[%s1 + $0x1b48] sm:$0xff]
    %v916 = vld [vmem:[%s1 + $0x1b50] sm:$0xff]
    %v917 = vld [vmem:[%s1 + $0x1b58] sm:$0xff]
    %v918 = vld [vmem:[%s1 + $0x1b60] sm:$0xff]
    %v919 = vld [vmem:[%s1 + $0x1b68] sm:$0xff]
    %v920 = vld [vmem:[%s1 + $0x1b70] sm:$0xff]
    %v921 = vld [vmem:[%s1 + $0x1b78] sm:$0xff]
    %v922 = vld [vmem:[%s1 + $0x1b80] sm:$0xff]
    %v923 = vld [vmem:[%s1 + $0x1b88] sm:$0xff]
    %v924 = vld [vmem:[%s1 + $0x1b90] sm:$0xff]
    %v925 = vld [vmem:[%s1 + $0x1b98] sm:$0xff]
    %v926 = vld [vmem:[%s1 + $0x1ba0] sm:$0xff]
    %v927 = vld [vmem:[%s1 + $0x1ba8] sm:$0xff]
    %v928 = vld [vmem:[%s1 + $0x1bb0] sm:$0xff]
    %v929 = vld [vmem:[%s1 + $0x1bb8] sm:$0xff]
    %v930 = vld [vmem:[%s1 + $0x1bc0] sm:$0xff]
    %v931 = vld [vmem:[%s1 + $0x1bc8] sm:$0xff]
    %v932 = vld [vmem:[%s1 + $0x1bd0] sm:$0xff]
    %v933 = vld [vmem:[%s1 + $0x1bd8] sm:$0xff]
    %v934 = vld [vmem:[%s1 + $0x1be0] sm:$0xff]
    %v935 = vld [vmem:[%s1 + $0x1be8] sm:$0xff]
    %v936 = vld [vmem:[%s1 + $0x1bf0] sm:$0xff]
    %v937 = vld [vmem:[%s1 + $0x1bf8] sm:$0xff]
    %v938 = vld [vmem:[%s1 + $0x1c00] sm:$0xff]
    %v939 = vld [vmem:[%s1 + $0x1c08] sm:$0xff]
    %v940 = vld [vmem:[%s1 + $0x1c10] sm:$0xff]
    %v941 = vld [vmem:[%s1 + $0x1c18] sm:$0xff]
    %v942 = vld [vmem:[%s1 + $0x1c20] sm:$0xff]
    %v943 = vld [vmem:[%s1 + $0x1c28] sm:$0xff]
    %v944 = vld [vmem:[%s1 + $0x1c30] sm:$0xff]
    %v945 = vld [vmem:[%s1 + $0x1c38] sm:$0xff]
    %v946 = vld [vmem:[%s1 + $0x1c40] sm:$0xff]
    %v947 = vld [vmem:[%s1 + $0x1c48] sm:$0xff]
    %v948 = vld [vmem:[%s1 + $0x1c50] sm:$0xff]
    %v949 = vld [vmem:[%s1 + $0x1c58] sm:$0xff]
    %v950 = vld [vmem:[%s1 + $0x1c60] sm:$0xff]
    %v951 = vld [vmem:[%s1 + $0x1c68] sm:$0xff]
    %v952 = vld [vmem:[%s1 + $0x1c70] sm:$0xff]
    %v953 = vld [vmem:[%s1 + $0x1c78] sm:$0xff]
    %v954 = vld [vmem:[%s1 + $0x1c80] sm:$0xff]
    %v955 = vld [vmem:[%s1 + $0x1c88] sm:$0xff]
    %v956 = vld [vmem:[%s1 + $0x1c90] sm:$0xff]
    %v957 = vld [vmem:[%s1 + $0x1c98] sm:$0xff]
    %v958 = vld [vmem:[%s1 + $0x1ca0] sm:$0xff]
    %v959 = vld [vmem:[%s1 + $0x1ca8] sm:$0xff]
    %v960 = vld [vmem:[%s1 + $0x1cb0] sm:$0xff]
    %v961 = vld [vmem:[%s1 + $0x1cb8] sm:$0xff]
    %v962 = vld [vmem:[%s1 + $0x1cc0] sm:$0xff]
    %v963 = vld [vmem:[%s1 + $0x1cc8] sm:$0xff]
    %v964 = vld [vmem:[%s1 + $0x1cd0] sm:$0xff]
    %v965 = vld [vmem:[%s1 + $0x1cd8] sm:$0xff]
    %v966 = vld [vmem:[%s1 + $0x1ce0] sm:$0xff]
    %v967 = vld [vmem:[%s1 + $0x1ce8] sm:$0xff]
    %v968 = vld [vmem:[%s1 + $0x1cf0] sm:$0xff]
    %v969 = vld [vmem:[%s1 + $0x1cf8] sm:$0xff]
    %v970 = vld [vmem:[%s1 + $0x1d00] sm:$0xff]
    %v971 = vld [vmem:[%s1 + $0x1d08] sm:$0xff]
    %v972 = vld [vmem:[%s1 + $0x1d10] sm:$0xff]
    %v973 = vld [vmem:[%s1 + $0x1d18] sm:$0xff]
    %v974 = vld [vmem:[%s1 + $0x1d20] sm:$0xff]
    %v975 = vld [vmem:[%s1 + $0x1d28] sm:$0xff]
    %v976 = vld [vmem:[%s1 + $0x1d30] sm:$0xff]
    %v977 = vld [vmem:[%s1 + $0x1d38] sm:$0xff]
    %v978 = vld [vmem:[%s1 + $0x1d40] sm:$0xff]
    %v979 = vld [vmem:[%s1 + $0x1d48] sm:$0xff]
    %v980 = vld [vmem:[%s1 + $0x1d50] sm:$0xff]
    %v981 = vld [vmem:[%s1 + $0x1d58] sm:$0xff]
    %v982 = vld [vmem:[%s1 + $0x1d60] sm:$0xff]
    %v983 = vld [vmem:[%s1 + $0x1d68] sm:$0xff]
    %v984 = vld [vmem:[%s1 + $0x1d70] sm:$0xff]
    %v985 = vld [vmem:[%s1 + $0x1d78] sm:$0xff]
    %v986 = vld [vmem:[%s1 + $0x1d80] sm:$0xff]
    %v987 = vld [vmem:[%s1 + $0x1d88] sm:$0xff]
    %v988 = vld [vmem:[%s1 + $0x1d90] sm:$0xff]
    %v989 = vld [vmem:[%s1 + $0x1d98] sm:$0xff]
    %v990 = vld [vmem:[%s1 + $0x1da0] sm:$0xff]
    %v991 = vld [vmem:[%s1 + $0x1da8] sm:$0xff]
    %v992 = vld [vmem:[%s1 + $0x1db0] sm:$0xff]
    %v993 = vld [vmem:[%s1 + $0x1db8] sm:$0xff]
    %v994 = vld [vmem:[%s1 + $0x1dc0] sm:$0xff]
    %v995 = vld [vmem:[%s1 + $0x1dc8] sm:$0xff]
    %v996 = vld [vmem:[%s1 + $0x1dd0] sm:$0xff]
    %v997 = vld [vmem:[%s1 + $0x1dd8] sm:$0xff]
    %v998 = vld [vmem:[%s1 + $0x1de0] sm:$0xff]
    %v999 = vld [vmem:[%s1 + $0x1de8] sm:$0xff]
    %v1000 = vld [vmem:[%s1 + $0x1df0] sm:$0xff]
    %v1001 = vld [vmem:[%s1 + $0x1df8] sm:$0xff]
    %v1002 = vld [vmem:[%s1 + $0x1e00] sm:$0xff]
    %v1003 = vld [vmem:[%s1 + $0x1e08] sm:$0xff]
    %v1004 = vld [vmem:[%s1 + $0x1e10] sm:$0xff]
    %v1005 = vld [vmem:[%s1 + $0x1e18] sm:$0xff]
    %v1006 = vld [vmem:[%s1 + $0x1e20] sm:$0xff]
    %v1007 = vld [vmem:[%s1 + $0x1e28] sm:$0xff]
    %v1008 = vld [vmem:[%s1 + $0x1e30] sm:$0xff]
    %v1009 = vld [vmem:[%s1 + $0x1e38] sm:$0xff]
    %v1010 = vld [vmem:[%s1 + $0x1e40] sm:$0xff]
    %v1011 = vld [vmem:[%s1 + $0x1e48] sm:$0xff]
    %v1012 = vld [vmem:[%s1 + $0x1e50] sm:$0xff]
    %v1013 = vld [vmem:[%s1 + $0x1e58] sm:$0xff]
    %v1014 = vld [vmem:[%s1 + $0x1e60] sm:$0xff]
    %v1015 = vld [vmem:[%s1 + $0x1e68] sm:$0xff]
    %v1016 = vld [vmem:[%s1 + $0x1e70] sm:$0xff]
    %v1017 = vld [vmem:[%s1 + $0x1e78] sm:$0xff]
    %v1018 = vld [vmem:[%s1 + $0x1e80] sm:$0xff]
    %v1019 = vld [vmem:[%s1 + $0x1e88] sm:$0xff]
    %v1020 = vld [vmem:[%s1 + $0x1e90] sm:$0xff]
    %v1021 = vld [vmem:[%s1 + $0x1e98] sm:$0xff]
    %v1022 = vld [vmem:[%s1 + $0x1ea0] sm:$0xff]
    %v1023 = vld [vmem:[%s1 + $0x1ea8] sm:$0xff]
    %v1024 = vld [vmem:[%s1 + $0x1eb0] sm:$0xff]
    %v1025 = vld [vmem:[%s1 + $0x1eb8] sm:$0xff]
    %v1026 = vld [vmem:[%s1 + $0x1ec0] sm:$0xff]
    %v1027 = vld [vmem:[%s1 + $0x1ec8] sm:$0xff]
    %v1028 = vld [vmem:[%s1 + $0x1ed0] sm:$0xff]
    %v1029 = vld [vmem:[%s1 + $0x1ed8] sm:$0xff]
    %v1030 = vld [vmem:[%s1 + $0x1ee0] sm:$0xff]
    %v1031 = vld [vmem:[%s1 + $0x1ee8] sm:$0xff]
    %v1032 = vld [vmem:[%s1 + $0x1ef0] sm:$0xff]
    %v1033 = vld [vmem:[%s1 + $0x1ef8] sm:$0xff]
    %v1034 = vld [vmem:[%s1 + $0x1f00] sm:$0xff]
    %v1035 = vld [vmem:[%s1 + $0x1f08] sm:$0xff]
    %v1036 = vld [vmem:[%s1 + $0x1f10] sm:$0xff]
    %v1037 = vld [vmem:[%s1 + $0x1f18] sm:$0xff]
    %v1038 = vld [vmem:[%s1 + $0x1f20] sm:$0xff]
    %v1039 = vld [vmem:[%s1 + $0x1f28] sm:$0xff]
    %v1040 = vld [vmem:[%s1 + $0x1f30] sm:$0xff]
    %v1041 = vld [vmem:[%s1 + $0x1f38] sm:$0xff]
    %v1042 = vld [vmem:[%s1 + $0x1f40] sm:$0xff]
    %v1043 = vld [vmem:[%s1 + $0x1f48] sm:$0xff]
    %v1044 = vld [vmem:[%s1 + $0x1f50] sm:$0xff]
    %v1045 = vld [vmem:[%s1 + $0x1f58] sm:$0xff]
    %v1046 = vld [vmem:[%s1 + $0x1f60] sm:$0xff]
    %v1047 = vld [vmem:[%s1 + $0x1f68] sm:$0xff]
    %v1048 = vld [vmem:[%s1 + $0x1f70] sm:$0xff]
    %v1049 = vld [vmem:[%s1 + $0x1f78] sm:$0xff]
    %v1050 = vld [vmem:[%s0] sm:$0xff]
    %v1051 = vld [vmem:[%s0 + $0x8] sm:$0xff]
    %v1052 = vld [vmem:[%s0 + $0x10] sm:$0xff]
    %v1053 = vld [vmem:[%s0 + $0x18] sm:$0xff]
    %v1054 = vld [vmem:[%s0 + $0x20] sm:$0xff]
    %v1055 = vld [vmem:[%s0 + $0x28] sm:$0xff]
    %v1056 = vld [vmem:[%s0 + $0x30] sm:$0xff]
    %v1057 = vld [vmem:[%s0 + $0x38] sm:$0xff]
    %v1058 = vld [vmem:[%s0 + $0x40] sm:$0xff]
    %v1059 = vld [vmem:[%s0 + $0x48] sm:$0xff]
    %v1060 = vld [vmem:[%s0 + $0x50] sm:$0xff]
    %v1061 = vld [vmem:[%s0 + $0x58] sm:$0xff]
    %v1062 = vld [vmem:[%s0 + $0x60] sm:$0xff]
    %v1063 = vld [vmem:[%s0 + $0x68] sm:$0xff]
    %v1064 = vld [vmem:[%s0 + $0x70] sm:$0xff]
    %v1065 = vld [vmem:[%s0 + $0x78] sm:$0xff]
    %v1066 = vld [vmem:[%s0 + $0x80] sm:$0xff]
    %v1067 = vld [vmem:[%s0 + $0x88] sm:$0xff]
    %v1068 = vld [vmem:[%s0 + $0x90] sm:$0xff]
    %v1069 = vld [vmem:[%s0 + $0x98] sm:$0xff]
    %v1070 = vld [vmem:[%s0 + $0xa0] sm:$0xff]
    %v1071 = vld [vmem:[%s0 + $0xa8] sm:$0xff]
    %v1072 = vld [vmem:[%s0 + $0xb0] sm:$0xff]
    %v1073 = vld [vmem:[%s0 + $0xb8] sm:$0xff]
    %v1074 = vld [vmem:[%s0 + $0xc0] sm:$0xff]
    %v1075 = vld [vmem:[%s0 + $0xc8] sm:$0xff]
    %v1076 = vld [vmem:[%s0 + $0xd0] sm:$0xff]
    %v1077 = vld [vmem:[%s0 + $0xd8] sm:$0xff]
    %v1078 = vld [vmem:[%s0 + $0xe0] sm:$0xff]
    %v1079 = vld [vmem:[%s0 + $0xe8] sm:$0xff]
    %v1080 = vld [vmem:[%s0 + $0xf0] sm:$0xff]
    %v1081 = vld [vmem:[%s0 + $0xf8] sm:$0xff]
    %v1082 = vld [vmem:[%s0 + $0x100] sm:$0xff]
    %v1083 = vld [vmem:[%s0 + $0x108] sm:$0xff]
    %v1084 = vld [vmem:[%s0 + $0x110] sm:$0xff]
    %v1085 = vld [vmem:[%s0 + $0x118] sm:$0xff]
    %v1086 = vld [vmem:[%s0 + $0x120] sm:$0xff]
    %v1087 = vld [vmem:[%s0 + $0x128] sm:$0xff]
    %v1088 = vld [vmem:[%s0 + $0x130] sm:$0xff]
    %v1089 = vld [vmem:[%s0 + $0x138] sm:$0xff]
    %v1090 = vld [vmem:[%s0 + $0x140] sm:$0xff]
    %v1091 = vld [vmem:[%s0 + $0x148] sm:$0xff]
    %v1092 = vld [vmem:[%s0 + $0x150] sm:$0xff]
    %v1093 = vld [vmem:[%s0 + $0x158] sm:$0xff]
    %v1094 = vld [vmem:[%s0 + $0x160] sm:$0xff]
    %v1095 = vld [vmem:[%s0 + $0x168] sm:$0xff]
    %v1096 = vld [vmem:[%s0 + $0x170] sm:$0xff]
    %v1097 = vld [vmem:[%s0 + $0x178] sm:$0xff]
    %v1098 = vld [vmem:[%s0 + $0x180] sm:$0xff]
    %v1099 = vld [vmem:[%s0 + $0x188] sm:$0xff]
    %v1100 = vld [vmem:[%s0 + $0x190] sm:$0xff]
    %v1101 = vld [vmem:[%s0 + $0x198] sm:$0xff]
    %v1102 = vld [vmem:[%s0 + $0x1a0] sm:$0xff]
    %v1103 = vld [vmem:[%s0 + $0x1a8] sm:$0xff]
    %v1104 = vld [vmem:[%s0 + $0x1b0] sm:$0xff]
    %v1105 = vld [vmem:[%s0 + $0x1b8] sm:$0xff]
    %v1106 = vld [vmem:[%s0 + $0x1c0] sm:$0xff]
    %v1107 = vld [vmem:[%s0 + $0x1c8] sm:$0xff]
    %v1108 = vld [vmem:[%s0 + $0x1d0] sm:$0xff]
    %v1109 = vld [vmem:[%s0 + $0x1d8] sm:$0xff]
    %v1110 = vld [vmem:[%s0 + $0x1e0] sm:$0xff]
    %v1111 = vld [vmem:[%s0 + $0x1e8] sm:$0xff]
    %v1112 = vld [vmem:[%s0 + $0x1f0] sm:$0xff]
    %v1113 = vld [vmem:[%s0 + $0x1f8] sm:$0xff]
    %v1114 = vld [vmem:[%s0 + $0x200] sm:$0xff]
    %v1115 = vld [vmem:[%s0 + $0x208] sm:$0xff]
    %v1116 = vld [vmem:[%s0 + $0x210] sm:$0xff]
    %v1117 = vld [vmem:[%s0 + $0x218] sm:$0xff]
    %v1118 = vld [vmem:[%s0 + $0x220] sm:$0xff]
    %v1119 = vld [vmem:[%s0 + $0x228] sm:$0xff]
    %v1120 = vld [vmem:[%s0 + $0x230] sm:$0xff]
    %v1121 = vld [vmem:[%s0 + $0x238] sm:$0xff]
    %v1122 = vld [vmem:[%s0 + $0x240] sm:$0xff]
    %v1123 = vld [vmem:[%s0 + $0x248] sm:$0xff]
    %v1124 = vld [vmem:[%s0 + $0x250] sm:$0xff]
    %v1125 = vld [vmem:[%s0 + $0x258] sm:$0xff]
    %v1126 = vld [vmem:[%s0 + $0x260] sm:$0xff]
    %v1127 = vld [vmem:[%s0 + $0x268] sm:$0xff]
    %v1128 = vld [vmem:[%s0 + $0x270] sm:$0xff]
    %v1129 = vld [vmem:[%s0 + $0x278] sm:$0xff]
    %v1130 = vld [vmem:[%s0 + $0x280] sm:$0xff]
    %v1131 = vld [vmem:[%s0 + $0x288] sm:$0xff]
    %v1132 = vld [vmem:[%s0 + $0x290] sm:$0xff]
    %v1133 = vld [vmem:[%s0 + $0x298] sm:$0xff]
    %v1134 = vld [vmem:[%s0 + $0x2a0] sm:$0xff]
    %v1135 = vld [vmem:[%s0 + $0x2a8] sm:$0xff]
    %v1136 = vld [vmem:[%s0 + $0x2b0] sm:$0xff]
    %v1137 = vld [vmem:[%s0 + $0x2b8] sm:$0xff]
    %v1138 = vld [vmem:[%s0 + $0x2c0] sm:$0xff]
    %v1139 = vld [vmem:[%s0 + $0x2c8] sm:$0xff]
    %v1140 = vld [vmem:[%s0 + $0x2d0] sm:$0xff]
    %v1141 = vld [vmem:[%s0 + $0x2d8] sm:$0xff]
    %v1142 = vld [vmem:[%s0 + $0x2e0] sm:$0xff]
    %v1143 = vld [vmem:[%s0 + $0x2e8] sm:$0xff]
    %v1144 = vld [vmem:[%s0 + $0x2f0] sm:$0xff]
    %v1145 = vld [vmem:[%s0 + $0x2f8] sm:$0xff]
    %v1146 = vld [vmem:[%s0 + $0x300] sm:$0xff]
    %v1147 = vld [vmem:[%s0 + $0x308] sm:$0xff]
    %v1148 = vld [vmem:[%s0 + $0x310] sm:$0x1]
    %vm1149 = vcmask 138240
    %v1151 = vsel %vm1149, %v48, 0
    %v1154 = vsel %vm1149, %v55, 0
    %v1157 = vsel %vm1149, %v62, 0
    %v1160 = vsel %vm1149, %v69, 0
    %v1163 = vsel %vm1149, %v76, 0
    %v1166 = vsel %vm1149, %v83, 0
    %v1169 = vsel %vm1149, %v90, 0
    %v1172 = vsel %vm1149, %v97, 0
    %v1175 = vsel %vm1149, %v104, 0
    %v1178 = vsel %vm1149, %v111, 0
    %v1181 = vsel %vm1149, %v118, 0
    %v1184 = vsel %vm1149, %v125, 0
    %v1187 = vsel %vm1149, %v132, 0
    %v1190 = vsel %vm1149, %v139, 0
    %v1193 = vsel %vm1149, %v146, 0
    %v1196 = vsel %vm1149, %v153, 0
    %v1199 = vsel %vm1149, %v160, 0
    %v1202 = vsel %vm1149, %v167, 0
    %v1205 = vsel %vm1149, %v174, 0
    %v1208 = vsel %vm1149, %v181, 0
    %v1211 = vsel %vm1149, %v188, 0
    %v1214 = vsel %vm1149, %v195, 0
    %v1217 = vsel %vm1149, %v202, 0
    %v1220 = vsel %vm1149, %v209, 0
    %v1223 = vsel %vm1149, %v216, 0
    %v1226 = vsel %vm1149, %v223, 0
    %v1229 = vsel %vm1149, %v230, 0
    %v1232 = vsel %vm1149, %v237, 0
    %v1235 = vsel %vm1149, %v244, 0
    %v1238 = vsel %vm1149, %v251, 0
    %v1241 = vsel %vm1149, %v258, 0
    %v1244 = vsel %vm1149, %v265, 0
    %v1247 = vsel %vm1149, %v272, 0
    %v1250 = vsel %vm1149, %v279, 0
    %v1253 = vsel %vm1149, %v286, 0
    %v1256 = vsel %vm1149, %v293, 0
    %v1259 = vsel %vm1149, %v300, 0
    %v1262 = vsel %vm1149, %v307, 0
    %v1265 = vsel %vm1149, %v314, 0
    %v1268 = vsel %vm1149, %v321, 0
    %v1271 = vsel %vm1149, %v328, 0
    %v1274 = vsel %vm1149, %v335, 0
    %v1277 = vsel %vm1149, %v342, 0
    %v1280 = vsel %vm1149, %v349, 0
    %v1283 = vsel %vm1149, %v356, 0
    %v1286 = vsel %vm1149, %v363, 0
    %v1289 = vsel %vm1149, %v370, 0
    %v1292 = vsel %vm1149, %v377, 0
    %v1295 = vsel %vm1149, %v384, 0
    %v1298 = vsel %vm1149, %v391, 0
    %v1301 = vsel %vm1149, %v398, 0
    %v1304 = vsel %vm1149, %v405, 0
    %v1307 = vsel %vm1149, %v412, 0
    %v1310 = vsel %vm1149, %v419, 0
    %v1313 = vsel %vm1149, %v426, 0
    %v1316 = vsel %vm1149, %v433, 0
    %v1319 = vsel %vm1149, %v440, 0
    %v1322 = vsel %vm1149, %v447, 0
    %v1325 = vsel %vm1149, %v454, 0
    %v1328 = vsel %vm1149, %v461, 0
    %v1331 = vsel %vm1149, %v468, 0
    %v1334 = vsel %vm1149, %v475, 0
    %v1337 = vsel %vm1149, %v482, 0
    %v1340 = vsel %vm1149, %v489, 0
    %v1343 = vsel %vm1149, %v496, 0
    %v1346 = vsel %vm1149, %v503, 0
    %v1349 = vsel %vm1149, %v510, 0
    %v1352 = vsel %vm1149, %v517, 0
    %v1355 = vsel %vm1149, %v524, 0
    %v1358 = vsel %vm1149, %v531, 0
    %v1361 = vsel %vm1149, %v538, 0
    %v1364 = vsel %vm1149, %v545, 0
    %v1367 = vsel %vm1149, %v552, 0
    %v1370 = vsel %vm1149, %v559, 0
    %v1373 = vsel %vm1149, %v566, 0
    %v1376 = vsel %vm1149, %v573, 0
    %v1379 = vsel %vm1149, %v580, 0
    %v1382 = vsel %vm1149, %v587, 0
    %v1385 = vsel %vm1149, %v594, 0
    %v1388 = vsel %vm1149, %v601, 0
    %v1391 = vsel %vm1149, %v608, 0
    %v1394 = vsel %vm1149, %v615, 0
    %v1397 = vsel %vm1149, %v622, 0
    %v1400 = vsel %vm1149, %v629, 0
    %v1403 = vsel %vm1149, %v636, 0
    %v1406 = vsel %vm1149, %v643, 0
    %v1409 = vsel %vm1149, %v650, 0
    %v1412 = vsel %vm1149, %v657, 0
    %v1415 = vsel %vm1149, %v664, 0
    %v1418 = vsel %vm1149, %v671, 0
    %v1421 = vsel %vm1149, %v678, 0
    %v1424 = vsel %vm1149, %v685, 0
    %v1427 = vsel %vm1149, %v692, 0
    %v1430 = vsel %vm1149, %v699, 0
    %v1433 = vsel %vm1149, %v706, 0
    %v1436 = vsel %vm1149, %v713, 0
    %v1439 = vsel %vm1149, %v720, 0
    %v1442 = vsel %vm1149, %v727, 0
    %v1445 = vsel %vm1149, %v734, 0
    %v1448 = vsel %vm1149, %v741, 0
    %v1451 = vsel %vm1149, %v748, 0
    %v1454 = vsel %vm1149, %v755, 0
    %v1457 = vsel %vm1149, %v762, 0
    %v1460 = vsel %vm1149, %v769, 0
    %v1463 = vsel %vm1149, %v776, 0
    %v1466 = vsel %vm1149, %v783, 0
    %v1469 = vsel %vm1149, %v790, 0
    %v1472 = vsel %vm1149, %v797, 0
    %v1475 = vsel %vm1149, %v804, 0
    %v1478 = vsel %vm1149, %v811, 0
    %v1481 = vsel %vm1149, %v818, 0
    %v1484 = vsel %vm1149, %v825, 0
    %v1487 = vsel %vm1149, %v832, 0
    %v1490 = vsel %vm1149, %v839, 0
    %v1493 = vsel %vm1149, %v846, 0
    %v1496 = vsel %vm1149, %v853, 0
    %v1499 = vsel %vm1149, %v860, 0
    %v1502 = vsel %vm1149, %v867, 0
    %v1505 = vsel %vm1149, %v874, 0
    %v1508 = vsel %vm1149, %v881, 0
    %v1511 = vsel %vm1149, %v888, 0
    %v1514 = vsel %vm1149, %v895, 0
    %v1517 = vsel %vm1149, %v902, 0
    %v1520 = vsel %vm1149, %v909, 0
    %v1523 = vsel %vm1149, %v916, 0
    %v1526 = vsel %vm1149, %v923, 0
    %v1529 = vsel %vm1149, %v930, 0
    %v1532 = vsel %vm1149, %v937, 0
    %v1535 = vsel %vm1149, %v944, 0
    %v1538 = vsel %vm1149, %v951, 0
    %v1541 = vsel %vm1149, %v958, 0
    %v1544 = vsel %vm1149, %v965, 0
    %v1547 = vsel %vm1149, %v972, 0
    %v1550 = vsel %vm1149, %v979, 0
    %v1553 = vsel %vm1149, %v986, 0
    %v1556 = vsel %vm1149, %v993, 0
    %v1559 = vsel %vm1149, %v1000, 0
    %v1562 = vsel %vm1149, %v1007, 0
    %v1565 = vsel %vm1149, %v1014, 0
    %v1568 = vsel %vm1149, %v1021, 0
    %v1571 = vsel %vm1149, %v1028, 0
    %v1574 = vsel %vm1149, %v1035, 0
    %v1577 = vsel %vm1149, %v1042, 0
    %v1580 = vsel %vm1149, %v1049, 0
    %vm1582 = vcmask 1040384
    %v1584 = vsel %vm1582, %v1148, 0
    %1586 = vmatprep.subr.mxu0 0.0
    %1587 = vmatpush1.msra.mxu0 %v1050
    %1588 = vmatprep.subr.mxu0 0.0
    %1589 = vmatpush1.msra.mxu0 %v1051
    %1590 = vmatprep.subr.mxu0 0.0
    %1591 = vmatpush1.msra.mxu0 %v1052
    %1592 = vmatprep.subr.mxu0 0.0
    %1593 = vmatpush1.msra.mxu0 %v1053
    %1594 = vmatprep.subr.mxu0 0.0
    %1595 = vmatpush1.msra.mxu0 %v1054
    %1596 = vmatprep.subr.mxu0 0.0
    %1597 = vmatpush1.msra.mxu0 %v1055
    %1598 = vmatprep.subr.mxu0 0.0
    %1599 = vmatpush1.msra.mxu0 %v1056
    %1600 = vmatprep.subr.mxu0 0.0
    %1601 = vmatpush1.msra.mxu0 %v1057
    %1602 = vmatprep.subr.mxu0 0.0
    %1603 = vmatpush1.msra.mxu0 %v1058
    %1604 = vmatprep.subr.mxu0 0.0
    %1605 = vmatpush1.msra.mxu0 %v1059
    %1606 = vmatprep.subr.mxu0 0.0
    %1607 = vmatpush1.msra.mxu0 %v1060
    %1608 = vmatprep.subr.mxu0 0.0
    %1609 = vmatpush1.msra.mxu0 %v1061
    %1610 = vmatprep.subr.mxu0 0.0
    %1611 = vmatpush1.msra.mxu0 %v1062
    %1612 = vmatprep.subr.mxu0 0.0
    %1613 = vmatpush1.msra.mxu0 %v1063
    %1614 = vmatprep.subr.mxu0 0.0
    %1615 = vmatpush1.msra.mxu0 %v1064
    %1616 = vmatprep.subr.mxu0 0.0
    %1617 = vmatpush1.msra.mxu0 %v1065
    %1618 = vmatprep.subr.mxu0 0.0
    %1619 = vmatpush1.msra.mxu0 %v1066
    %1620 = vmatprep.subr.mxu0 0.0
    %1621 = vmatpush1.msra.mxu0 %v1067
    %1622 = vmatprep.subr.mxu0 0.0
    %1623 = vmatpush1.msra.mxu0 %v1068
    %1624 = vmatprep.subr.mxu0 0.0
    %1625 = vmatpush1.msra.mxu0 %v1069
    %1626 = vmatprep.subr.mxu0 0.0
    %1627 = vmatpush1.msra.mxu0 %v1070
    %1628 = vmatprep.subr.mxu0 0.0
    %1629 = vmatpush1.msra.mxu0 %v1071
    %1630 = vmatprep.subr.mxu0 0.0
    %1631 = vmatpush1.msra.mxu0 %v1072
    %1632 = vmatprep.subr.mxu0 0.0
    %1633 = vmatpush1.msra.mxu0 %v1073
    %1634 = vmatprep.subr.mxu0 0.0
    %1635 = vmatpush1.msra.mxu0 %v1074
    %1636 = vmatprep.subr.mxu0 0.0
    %1637 = vmatpush1.msra.mxu0 %v1075
    %1638 = vmatprep.subr.mxu0 0.0
    %1639 = vmatpush1.msra.mxu0 %v1076
    %1640 = vmatprep.subr.mxu0 0.0
    %1641 = vmatpush1.msra.mxu0 %v1077
    %1642 = vmatprep.subr.mxu0 0.0
    %1643 = vmatpush1.msra.mxu0 %v1078
    %1644 = vmatprep.subr.mxu0 0.0
    %1645 = vmatpush1.msra.mxu0 %v1079
    %1646 = vmatprep.subr.mxu0 0.0
    %1647 = vmatpush1.msra.mxu0 %v1080
    %1648 = vmatprep.subr.mxu0 0.0
    %1649 = vmatpush1.msra.mxu0 %v1081
    %1650 = vmatprep.mubr.f32.mxu0 %v43
    %1651 = vmatmul.mubr.f32.gmra.mrb[0].mxu0 %v42
    %v1652 = vpop.f32.mrb[0].mxu0
    %v1653 = vadd.f32 0.0, %v1652
    %v1654 = vpop.f32.mrb[0].mxu0
    %1655 = vmatprep.mubr.f32.mxu0 %v50
    %1656 = vmatmul.mubr.f32.gmra.mrb[0].mxu0 %v49
    %v1657 = vpop.f32.mrb[0].mxu0
    %v1658 = vadd.f32 0.0, %v1657
    %v1659 = vpop.f32.mrb[0].mxu0
    %1660 = vmatprep.mubr.f32.mxu0 %v57
    %1661 = vmatmul.mubr.f32.gmra.mrb[0].mxu0 %v56
    %v1662 = vpop.f32.mrb[0].mxu0
    %v1663 = vadd.f32 0.0, %v1662
    %v1664 = vpop.f32.mrb[0].mxu0
    %1665 = vmatprep.mubr.f32.mxu0 %v64
    %1666 = vmatmul.mubr.f32.gmra.mrb[0].mxu0 %v63
    %v1667 = vpop.f32.mrb[0].mxu0
    %v1668 = vadd.f32 0.0, %v1667
    %v1669 = vpop.f32.mrb[0].mxu0
    %1670 = vmatprep.mubr.f32.mxu0 %v71
    %1671 = vmatmul.mubr.f32.gmra.mrb[0].mxu0 %v70
    %v1672 = vpop.f32.mrb[0].mxu0
    %v1673 = vadd.f32 0.0, %v1672
    %v1674 = vpop.f32.mrb[0].mxu0
    %1675 = vmatprep.mubr.f32.mxu0 %v78
    %1676 = vmatmul.mubr.f32.gmra.mrb[0].mxu0 %v77
    %v1677 = vpop.f32.mrb[0].mxu0
    %v1678 = vadd.f32 0.0, %v1677
    %v1679 = vpop.f32.mrb[0].mxu0
    %1680 = vmatprep.mubr.f32.mxu0 %v85
    %1681 = vmatmul.mubr.f32.gmra.mrb[0].mxu0 %v84
    %v1682 = vpop.f32.mrb[0].mxu0
    %v1683 = vadd.f32 0.0, %v1682
    %v1684 = vpop.f32.mrb[0].mxu0
    %1685 = vmatprep.mubr.f32.mxu0 %v92
    %1686 = vmatmul.mubr.f32.gmra.mrb[0].mxu0 %v91
    %v1687 = vpop.f32.mrb[0].mxu0
    %v1688 = vadd.f32 0.0, %v1687
    %v1689 = vpop.f32.mrb[0].mxu0
    %1690 = vmatprep.mubr.f32.mxu0 %v99
    %1691 = vmatmul.mubr.f32.gmra.mrb[0].mxu0 %v98
    %v1692 = vpop.f32.mrb[0].mxu0
    %v1693 = vadd.f32 0.0, %v1692
    %v1694 = vpop.f32.mrb[0].mxu0
    %1695 = vmatprep.mubr.f32.mxu0 %v106
    %1696 = vmatmul.mubr.f32.gmra.mrb[0].mxu0 %v105
    %v1697 = vpop.f32.mrb[0].mxu0
    %v1698 = vadd.f32 0.0, %v1697
    %v1699 = vpop.f32.mrb[0].mxu0
    %1700 = vmatprep.mubr.f32.mxu0 %v113
    %1701 = vmatmul.mubr.f32.gmra.mrb[0].mxu0 %v112
    %v1702 = vpop.f32.mrb[0].mxu0
    %v1703 = vadd.f32 0.0, %v1702
    %v1704 = vpop.f32.mrb[0].mxu0
    %1705 = vmatprep.mubr.f32.mxu0 %v120
    %1706 = vmatmul.mubr.f32.gmra.mrb[0].mxu0 %v119
    %v1707 = vpop.f32.mrb[0].mxu0
    %v1708 = vadd.f32 0.0, %v1707
    %v1709 = vpop.f32.mrb[0].mxu0
    %1710 = vmatprep.mubr.f32.mxu0 %v127
    %1711 = vmatmul.mubr.f32.gmra.mrb[0].mxu0 %v126
    %v1712 = vpop.f32.mrb[0].mxu0
    %v1713 = vadd.f32 0.0, %v1712
    %v1714 = vpop.f32.mrb[0].mxu0
    %1715 = vmatprep.mubr.f32.mxu0 %v134
    %1716 = vmatmul.mubr.f32.gmra.mrb[0].mxu0 %v133
    %v1717 = vpop.f32.mrb[0].mxu0
    %v1718 = vadd.f32 0.0, %v1717
    %v1719 = vpop.f32.mrb[0].mxu0
    %1720 = vmatprep.mubr.f32.mxu0 %v141
    %1721 = vmatmul.mubr.f32.gmra.mrb[0].mxu0 %v140
    %v1722 = vpop.f32.mrb[0].mxu0
    %v1723 = vadd.f32 0.0, %v1722
    %v1724 = vpop.f32.mrb[0].mxu0
    %1725 = vmatprep.mubr.f32.mxu0 %v148
    %1726 = vmatmul.mubr.f32.gmra.mrb[0].mxu0 %v147
    %v1727 = vpop.f32.mrb[0].mxu0
    %v1728 = vadd.f32 0.0, %v1727
    %v1729 = vpop.f32.mrb[0].mxu0
    %1730 = vmatprep.mubr.f32.mxu0 %v155
    %1731 = vmatmul.mubr.f32.gmra.mrb[0].mxu0 %v154
    %v1732 = vpop.f32.mrb[0].mxu0
    %v1733 = vadd.f32 0.0, %v1732
    %v1734 = vpop.f32.mrb[0].mxu0
    %1735 = vmatprep.mubr.f32.mxu0 %v162
    %1736 = vmatmul.mubr.f32.gmra.mrb[0].mxu0 %v161
    %v1737 = vpop.f32.mrb[0].mxu0
    %v1738 = vadd.f32 0.0, %v1737
    %v1739 = vpop.f32.mrb[0].mxu0
    %1740 = vmatprep.mubr.f32.mxu0 %v169
    %1741 = vmatmul.mubr.f32.gmra.mrb[0].mxu0 %v168
    %v1742 = vpop.f32.mrb[0].mxu0
    %v1743 = vadd.f32 0.0, %v1742
    %v1744 = vpop.f32.mrb[0].mxu0
    %1745 = vmatprep.mubr.f32.mxu0 %v176
    %1746 = vmatmul.mubr.f32.gmra.mrb[0].mxu0 %v175
    %v1747 = vpop.f32.mrb[0].mxu0
    %v1748 = vadd.f32 0.0, %v1747
    %v1749 = vpop.f32.mrb[0].mxu0
    %1750 = vmatprep.mubr.f32.mxu0 %v183
    %1751 = vmatmul.mubr.f32.gmra.mrb[0].mxu0 %v182
    %v1752 = vpop.f32.mrb[0].mxu0
    %v1753 = vadd.f32 0.0, %v1752
    %v1754 = vpop.f32.mrb[0].mxu0
    %1755 = vmatprep.mubr.f32.mxu0 %v190
    %1756 = vmatmul.mubr.f32.gmra.mrb[0].mxu0 %v189
    %v1757 = vpop.f32.mrb[0].mxu0
    %v1758 = vadd.f32 0.0, %v1757
    %v1759 = vpop.f32.mrb[0].mxu0
    %1760 = vmatprep.mubr.f32.mxu0 %v197
    %1761 = vmatmul.mubr.f32.gmra.mrb[0].mxu0 %v196
    %v1762 = vpop.f32.mrb[0].mxu0
    %v1763 = vadd.f32 0.0, %v1762
    %v1764 = vpop.f32.mrb[0].mxu0
    %1765 = vmatprep.mubr.f32.mxu0 %v204
    %1766 = vmatmul.mubr.f32.gmra.mrb[0].mxu0 %v203
    %v1767 = vpop.f32.mrb[0].mxu0
    %v1768 = vadd.f32 0.0, %v1767
    %v1769 = vpop.f32.mrb[0].mxu0
    %1770 = vmatprep.mubr.f32.mxu0 %v211
    %1771 = vmatmul.mubr.f32.gmra.mrb[0].mxu0 %v210
    %v1772 = vpop.f32.mrb[0].mxu0
    %v1773 = vadd.f32 0.0, %v1772
    %v1774 = vpop.f32.mrb[0].mxu0
    %1775 = vmatprep.mubr.f32.mxu0 %v218
    %1776 = vmatmul.mubr.f32.gmra.mrb[0].mxu0 %v217
    %v1777 = vpop.f32.mrb[0].mxu0
    %v1778 = vadd.f32 0.0, %v1777
    %v1779 = vpop.f32.mrb[0].mxu0
    %1780 = vmatprep.mubr.f32.mxu0 %v225
    %1781 = vmatmul.mubr.f32.gmra.mrb[0].mxu0 %v224
    %v1782 = vpop.f32.mrb[0].mxu0
    %v1783 = vadd.f32 0.0, %v1782
    %v1784 = vpop.f32.mrb[0].mxu0
    %1785 = vmatprep.mubr.f32.mxu0 %v232
    %1786 = vmatmul.mubr.f32.gmra.mrb[0].mxu0 %v231
    %v1787 = vpop.f32.mrb[0].mxu0
    %v1788 = vadd.f32 0.0, %v1787
    %v1789 = vpop.f32.mrb[0].mxu0
    %1790 = vmatprep.mubr.f32.mxu0 %v239
    %1791 = vmatmul.mubr.f32.gmra.mrb[0].mxu0 %v238
    %v1792 = vpop.f32.mrb[0].mxu0
    %v1793 = vadd.f32 0.0, %v1792
    %v1794 = vpop.f32.mrb[0].mxu0
    %1795 = vmatprep.mubr.f32.mxu0 %v246
    %1796 = vmatmul.mubr.f32.gmra.mrb[0].mxu0 %v245
    %v1797 = vpop.f32.mrb[0].mxu0
    %v1798 = vadd.f32 0.0, %v1797
    %v1799 = vpop.f32.mrb[0].mxu0
    %1800 = vmatprep.mubr.f32.mxu0 %v253
    %1801 = vmatmul.mubr.f32.gmra.mrb[0].mxu0 %v252
    %v1802 = vpop.f32.mrb[0].mxu0
    %v1803 = vadd.f32 0.0, %v1802
    %v1804 = vpop.f32.mrb[0].mxu0
    %1805 = vmatprep.mubr.f32.mxu0 %v260
    %1806 = vmatmul.mubr.f32.gmra.mrb[0].mxu0 %v259
    %v1807 = vpop.f32.mrb[0].mxu0
    %v1808 = vadd.f32 0.0, %v1807
    %v1809 = vpop.f32.mrb[0].mxu0
    %1810 = vmatprep.mubr.f32.mxu0 %v267
    %1811 = vmatmul.mubr.f32.gmra.mrb[0].mxu0 %v266
    %v1812 = vpop.f32.mrb[0].mxu0
    %v1813 = vadd.f32 0.0, %v1812
    %v1814 = vpop.f32.mrb[0].mxu0
    %1815 = vmatprep.mubr.f32.mxu0 %v274
    %1816 = vmatmul.mubr.f32.gmra.mrb[0].mxu0 %v273
    %v1817 = vpop.f32.mrb[0].mxu0
    %v1818 = vadd.f32 0.0, %v1817
    %v1819 = vpop.f32.mrb[0].mxu0
    %1820 = vmatprep.mubr.f32.mxu0 %v281
    %1821 = vmatmul.mubr.f32.gmra.mrb[0].mxu0 %v280
    %v1822 = vpop.f32.mrb[0].mxu0
    %v1823 = vadd.f32 0.0, %v1822
    %v1824 = vpop.f32.mrb[0].mxu0
    %1825 = vmatprep.mubr.f32.mxu0 %v288
    %1826 = vmatmul.mubr.f32.gmra.mrb[0].mxu0 %v287
    %v1827 = vpop.f32.mrb[0].mxu0
    %v1828 = vadd.f32 0.0, %v1827
    %v1829 = vpop.f32.mrb[0].mxu0
    %1830 = vmatprep.mubr.f32.mxu0 %v295
    %1831 = vmatmul.mubr.f32.gmra.mrb[0].mxu0 %v294
    %v1832 = vpop.f32.mrb[0].mxu0
    %v1833 = vadd.f32 0.0, %v1832
    %v1834 = vpop.f32.mrb[0].mxu0
    %1835 = vmatprep.mubr.f32.mxu0 %v302
    %1836 = vmatmul.mubr.f32.gmra.mrb[0].mxu0 %v301
    %v1837 = vpop.f32.mrb[0].mxu0
    %v1838 = vadd.f32 0.0, %v1837
    %v1839 = vpop.f32.mrb[0].mxu0
    %1840 = vmatprep.mubr.f32.mxu0 %v309
    %1841 = vmatmul.mubr.f32.gmra.mrb[0].mxu0 %v308
    %v1842 = vpop.f32.mrb[0].mxu0
    %v1843 = vadd.f32 0.0, %v1842
    %v1844 = vpop.f32.mrb[0].mxu0
    %1845 = vmatprep.mubr.f32.mxu0 %v316
    %1846 = vmatmul.mubr.f32.gmra.mrb[0].mxu0 %v315
    %v1847 = vpop.f32.mrb[0].mxu0
    %v1848 = vadd.f32 0.0, %v1847
    %v1849 = vpop.f32.mrb[0].mxu0
    %1850 = vmatprep.mubr.f32.mxu0 %v323
    %1851 = vmatmul.mubr.f32.gmra.mrb[0].mxu0 %v322
    %v1852 = vpop.f32.mrb[0].mxu0
    %v1853 = vadd.f32 0.0, %v1852
    %v1854 = vpop.f32.mrb[0].mxu0
    %1855 = vmatprep.mubr.f32.mxu0 %v330
    %1856 = vmatmul.mubr.f32.gmra.mrb[0].mxu0 %v329
    %v1857 = vpop.f32.mrb[0].mxu0
    %v1858 = vadd.f32 0.0, %v1857
    %v1859 = vpop.f32.mrb[0].mxu0
    %1860 = vmatprep.mubr.f32.mxu0 %v337
    %1861 = vmatmul.mubr.f32.gmra.mrb[0].mxu0 %v336
    %v1862 = vpop.f32.mrb[0].mxu0
    %v1863 = vadd.f32 0.0, %v1862
    %v1864 = vpop.f32.mrb[0].mxu0
    %1865 = vmatprep.mubr.f32.mxu0 %v344
    %1866 = vmatmul.mubr.f32.gmra.mrb[0].mxu0 %v343
    %v1867 = vpop.f32.mrb[0].mxu0
    %v1868 = vadd.f32 0.0, %v1867
    %v1869 = vpop.f32.mrb[0].mxu0
    %1870 = vmatprep.mubr.f32.mxu0 %v351
    %1871 = vmatmul.mubr.f32.gmra.mrb[0].mxu0 %v350
    %v1872 = vpop.f32.mrb[0].mxu0
    %v1873 = vadd.f32 0.0, %v1872
    %v1874 = vpop.f32.mrb[0].mxu0
    %1875 = vmatprep.mubr.f32.mxu0 %v358
    %1876 = vmatmul.mubr.f32.gmra.mrb[0].mxu0 %v357
    %v1877 = vpop.f32.mrb[0].mxu0
    %v1878 = vadd.f32 0.0, %v1877
    %v1879 = vpop.f32.mrb[0].mxu0
    %1880 = vmatprep.mubr.f32.mxu0 %v365
    %1881 = vmatmul.mubr.f32.gmra.mrb[0].mxu0 %v364
    %v1882 = vpop.f32.mrb[0].mxu0
    %v1883 = vadd.f32 0.0, %v1882
    %v1884 = vpop.f32.mrb[0].mxu0
    %1885 = vmatprep.mubr.f32.mxu0 %v372
    %1886 = vmatmul.mubr.f32.gmra.mrb[0].mxu0 %v371
    %v1887 = vpop.f32.mrb[0].mxu0
    %v1888 = vadd.f32 0.0, %v1887
    %v1889 = vpop.f32.mrb[0].mxu0
    %1890 = vmatprep.mubr.f32.mxu0 %v379
    %1891 = vmatmul.mubr.f32.gmra.mrb[0].mxu0 %v378
    %v1892 = vpop.f32.mrb[0].mxu0
    %v1893 = vadd.f32 0.0, %v1892
    %v1894 = vpop.f32.mrb[0].mxu0
    %1895 = vmatprep.mubr.f32.mxu0 %v386
    %1896 = vmatmul.mubr.f32.gmra.mrb[0].mxu0 %v385
    %v1897 = vpop.f32.mrb[0].mxu0
    %v1898 = vadd.f32 0.0, %v1897
    %v1899 = vpop.f32.mrb[0].mxu0
    %1900 = vmatprep.mubr.f32.mxu0 %v393
    %1901 = vmatmul.mubr.f32.gmra.mrb[0].mxu0 %v392
    %v1902 = vpop.f32.mrb[0].mxu0
    %v1903 = vadd.f32 0.0, %v1902
    %v1904 = vpop.f32.mrb[0].mxu0
    %1905 = vmatprep.mubr.f32.mxu0 %v400
    %1906 = vmatmul.mubr.f32.gmra.mrb[0].mxu0 %v399
    %v1907 = vpop.f32.mrb[0].mxu0
    %v1908 = vadd.f32 0.0, %v1907
    %v1909 = vpop.f32.mrb[0].mxu0
    %1910 = vmatprep.mubr.f32.mxu0 %v407
    %1911 = vmatmul.mubr.f32.gmra.mrb[0].mxu0 %v406
    %v1912 = vpop.f32.mrb[0].mxu0
    %v1913 = vadd.f32 0.0, %v1912
    %v1914 = vpop.f32.mrb[0].mxu0
    %1915 = vmatprep.mubr.f32.mxu0 %v414
    %1916 = vmatmul.mubr.f32.gmra.mrb[0].mxu0 %v413
    %v1917 = vpop.f32.mrb[0].mxu0
    %v1918 = vadd.f32 0.0, %v1917
    %v1919 = vpop.f32.mrb[0].mxu0
    %1920 = vmatprep.mubr.f32.mxu0 %v421
    %1921 = vmatmul.mubr.f32.gmra.mrb[0].mxu0 %v420
    %v1922 = vpop.f32.mrb[0].mxu0
    %v1923 = vadd.f32 0.0, %v1922
    %v1924 = vpop.f32.mrb[0].mxu0
    %1925 = vmatprep.mubr.f32.mxu0 %v428
    %1926 = vmatmul.mubr.f32.gmra.mrb[0].mxu0 %v427
    %v1927 = vpop.f32.mrb[0].mxu0
    %v1928 = vadd.f32 0.0, %v1927
    %v1929 = vpop.f32.mrb[0].mxu0
    %1930 = vmatprep.mubr.f32.mxu0 %v435
    %1931 = vmatmul.mubr.f32.gmra.mrb[0].mxu0 %v434
    %v1932 = vpop.f32.mrb[0].mxu0
    %v1933 = vadd.f32 0.0, %v1932
    %v1934 = vpop.f32.mrb[0].mxu0
    %1935 = vmatprep.mubr.f32.mxu0 %v442
    %1936 = vmatmul.mubr.f32.gmra.mrb[0].mxu0 %v441
    %v1937 = vpop.f32.mrb[0].mxu0
    %v1938 = vadd.f32 0.0, %v1937
    %v1939 = vpop.f32.mrb[0].mxu0
    %1940 = vmatprep.mubr.f32.mxu0 %v449
    %1941 = vmatmul.mubr.f32.gmra.mrb[0].mxu0 %v448
    %v1942 = vpop.f32.mrb[0].mxu0
    %v1943 = vadd.f32 0.0, %v1942
    %v1944 = vpop.f32.mrb[0].mxu0
    %1945 = vmatprep.mubr.f32.mxu0 %v456
    %1946 = vmatmul.mubr.f32.gmra.mrb[0].mxu0 %v455
    %v1947 = vpop.f32.mrb[0].mxu0
    %v1948 = vadd.f32 0.0, %v1947
    %v1949 = vpop.f32.mrb[0].mxu0
    %1950 = vmatprep.mubr.f32.mxu0 %v463
    %1951 = vmatmul.mubr.f32.gmra.mrb[0].mxu0 %v462
    %v1952 = vpop.f32.mrb[0].mxu0
    %v1953 = vadd.f32 0.0, %v1952
    %v1954 = vpop.f32.mrb[0].mxu0
    %1955 = vmatprep.mubr.f32.mxu0 %v470
    %1956 = vmatmul.mubr.f32.gmra.mrb[0].mxu0 %v469
    %v1957 = vpop.f32.mrb[0].mxu0
    %v1958 = vadd.f32 0.0, %v1957
    %v1959 = vpop.f32.mrb[0].mxu0
    %1960 = vmatprep.mubr.f32.mxu0 %v477
    %1961 = vmatmul.mubr.f32.gmra.mrb[0].mxu0 %v476
    %v1962 = vpop.f32.mrb[0].mxu0
    %v1963 = vadd.f32 0.0, %v1962
    %v1964 = vpop.f32.mrb[0].mxu0
    %1965 = vmatprep.mubr.f32.mxu0 %v484
    %1966 = vmatmul.mubr.f32.gmra.mrb[0].mxu0 %v483
    %v1967 = vpop.f32.mrb[0].mxu0
    %v1968 = vadd.f32 0.0, %v1967
    %v1969 = vpop.f32.mrb[0].mxu0
    %1970 = vmatprep.mubr.f32.mxu0 %v491
    %1971 = vmatmul.mubr.f32.gmra.mrb[0].mxu0 %v490
    %v1972 = vpop.f32.mrb[0].mxu0
    %v1973 = vadd.f32 0.0, %v1972
    %v1974 = vpop.f32.mrb[0].mxu0
    %1975 = vmatprep.mubr.f32.mxu0 %v498
    %1976 = vmatmul.mubr.f32.gmra.mrb[0].mxu0 %v497
    %v1977 = vpop.f32.mrb[0].mxu0
    %v1978 = vadd.f32 0.0, %v1977
    %v1979 = vpop.f32.mrb[0].mxu0
    %1980 = vmatprep.mubr.f32.mxu0 %v505
    %1981 = vmatmul.mubr.f32.gmra.mrb[0].mxu0 %v504
    %v1982 = vpop.f32.mrb[0].mxu0
    %v1983 = vadd.f32 0.0, %v1982
    %v1984 = vpop.f32.mrb[0].mxu0
    %1985 = vmatprep.mubr.f32.mxu0 %v512
    %1986 = vmatmul.mubr.f32.gmra.mrb[0].mxu0 %v511
    %v1987 = vpop.f32.mrb[0].mxu0
    %v1988 = vadd.f32 0.0, %v1987
    %v1989 = vpop.f32.mrb[0].mxu0
    %1990 = vmatprep.mubr.f32.mxu0 %v519
    %1991 = vmatmul.mubr.f32.gmra.mrb[0].mxu0 %v518
    %v1992 = vpop.f32.mrb[0].mxu0
    %v1993 = vadd.f32 0.0, %v1992
    %v1994 = vpop.f32.mrb[0].mxu0
    %1995 = vmatprep.mubr.f32.mxu0 %v526
    %1996 = vmatmul.mubr.f32.gmra.mrb[0].mxu0 %v525
    %v1997 = vpop.f32.mrb[0].mxu0
    %v1998 = vadd.f32 0.0, %v1997
    %v1999 = vpop.f32.mrb[0].mxu0
    %2000 = vmatprep.mubr.f32.mxu0 %v533
    %2001 = vmatmul.mubr.f32.gmra.mrb[0].mxu0 %v532
    %v2002 = vpop.f32.mrb[0].mxu0
    %v2003 = vadd.f32 0.0, %v2002
    %v2004 = vpop.f32.mrb[0].mxu0
    %2005 = vmatprep.mubr.f32.mxu0 %v540
    %2006 = vmatmul.mubr.f32.gmra.mrb[0].mxu0 %v539
    %v2007 = vpop.f32.mrb[0].mxu0
    %v2008 = vadd.f32 0.0, %v2007
    %v2009 = vpop.f32.mrb[0].mxu0
    %2010 = vmatprep.mubr.f32.mxu0 %v547
    %2011 = vmatmul.mubr.f32.gmra.mrb[0].mxu0 %v546
    %v2012 = vpop.f32.mrb[0].mxu0
    %v2013 = vadd.f32 0.0, %v2012
    %v2014 = vpop.f32.mrb[0].mxu0
    %2015 = vmatprep.mubr.f32.mxu0 %v554
    %2016 = vmatmul.mubr.f32.gmra.mrb[0].mxu0 %v553
    %v2017 = vpop.f32.mrb[0].mxu0
    %v2018 = vadd.f32 0.0, %v2017
    %v2019 = vpop.f32.mrb[0].mxu0
    %2020 = vmatprep.mubr.f32.mxu0 %v561
    %2021 = vmatmul.mubr.f32.gmra.mrb[0].mxu0 %v560
    %v2022 = vpop.f32.mrb[0].mxu0
    %v2023 = vadd.f32 0.0, %v2022
    %v2024 = vpop.f32.mrb[0].mxu0
    %2025 = vmatprep.mubr.f32.mxu0 %v568
    %2026 = vmatmul.mubr.f32.gmra.mrb[0].mxu0 %v567
    %v2027 = vpop.f32.mrb[0].mxu0
    %v2028 = vadd.f32 0.0, %v2027
    %v2029 = vpop.f32.mrb[0].mxu0
    %2030 = vmatprep.mubr.f32.mxu0 %v575
    %2031 = vmatmul.mubr.f32.gmra.mrb[0].mxu0 %v574
    %v2032 = vpop.f32.mrb[0].mxu0
    %v2033 = vadd.f32 0.0, %v2032
    %v2034 = vpop.f32.mrb[0].mxu0
    %2035 = vmatprep.mubr.f32.mxu0 %v582
    %2036 = vmatmul.mubr.f32.gmra.mrb[0].mxu0 %v581
    %v2037 = vpop.f32.mrb[0].mxu0
    %v2038 = vadd.f32 0.0, %v2037
    %v2039 = vpop.f32.mrb[0].mxu0
    %2040 = vmatprep.mubr.f32.mxu0 %v589
    %2041 = vmatmul.mubr.f32.gmra.mrb[0].mxu0 %v588
    %v2042 = vpop.f32.mrb[0].mxu0
    %v2043 = vadd.f32 0.0, %v2042
    %v2044 = vpop.f32.mrb[0].mxu0
    %2045 = vmatprep.mubr.f32.mxu0 %v596
    %2046 = vmatmul.mubr.f32.gmra.mrb[0].mxu0 %v595
    %v2047 = vpop.f32.mrb[0].mxu0
    %v2048 = vadd.f32 0.0, %v2047
    %v2049 = vpop.f32.mrb[0].mxu0
    %2050 = vmatprep.mubr.f32.mxu0 %v603
    %2051 = vmatmul.mubr.f32.gmra.mrb[0].mxu0 %v602
    %v2052 = vpop.f32.mrb[0].mxu0
    %v2053 = vadd.f32 0.0, %v2052
    %v2054 = vpop.f32.mrb[0].mxu0
    %2055 = vmatprep.mubr.f32.mxu0 %v610
    %2056 = vmatmul.mubr.f32.gmra.mrb[0].mxu0 %v609
    %v2057 = vpop.f32.mrb[0].mxu0
    %v2058 = vadd.f32 0.0, %v2057
    %v2059 = vpop.f32.mrb[0].mxu0
    %2060 = vmatprep.mubr.f32.mxu0 %v617
    %2061 = vmatmul.mubr.f32.gmra.mrb[0].mxu0 %v616
    %v2062 = vpop.f32.mrb[0].mxu0
    %v2063 = vadd.f32 0.0, %v2062
    %v2064 = vpop.f32.mrb[0].mxu0
    %2065 = vmatprep.mubr.f32.mxu0 %v624
    %2066 = vmatmul.mubr.f32.gmra.mrb[0].mxu0 %v623
    %v2067 = vpop.f32.mrb[0].mxu0
    %v2068 = vadd.f32 0.0, %v2067
    %v2069 = vpop.f32.mrb[0].mxu0
    %2070 = vmatprep.mubr.f32.mxu0 %v631
    %2071 = vmatmul.mubr.f32.gmra.mrb[0].mxu0 %v630
    %v2072 = vpop.f32.mrb[0].mxu0
    %v2073 = vadd.f32 0.0, %v2072
    %v2074 = vpop.f32.mrb[0].mxu0
    %2075 = vmatprep.mubr.f32.mxu0 %v638
    %2076 = vmatmul.mubr.f32.gmra.mrb[0].mxu0 %v637
    %v2077 = vpop.f32.mrb[0].mxu0
    %v2078 = vadd.f32 0.0, %v2077
    %v2079 = vpop.f32.mrb[0].mxu0
    %2080 = vmatprep.mubr.f32.mxu0 %v645
    %2081 = vmatmul.mubr.f32.gmra.mrb[0].mxu0 %v644
    %v2082 = vpop.f32.mrb[0].mxu0
    %v2083 = vadd.f32 0.0, %v2082
    %v2084 = vpop.f32.mrb[0].mxu0
    %2085 = vmatprep.mubr.f32.mxu0 %v652
    %2086 = vmatmul.mubr.f32.gmra.mrb[0].mxu0 %v651
    %v2087 = vpop.f32.mrb[0].mxu0
    %v2088 = vadd.f32 0.0, %v2087
    %v2089 = vpop.f32.mrb[0].mxu0
    %2090 = vmatprep.mubr.f32.mxu0 %v659
    %2091 = vmatmul.mubr.f32.gmra.mrb[0].mxu0 %v658
    %v2092 = vpop.f32.mrb[0].mxu0
    %v2093 = vadd.f32 0.0, %v2092
    %v2094 = vpop.f32.mrb[0].mxu0
    %2095 = vmatprep.mubr.f32.mxu0 %v666
    %2096 = vmatmul.mubr.f32.gmra.mrb[0].mxu0 %v665
    %v2097 = vpop.f32.mrb[0].mxu0
    %v2098 = vadd.f32 0.0, %v2097
    %v2099 = vpop.f32.mrb[0].mxu0
    %2100 = vmatprep.mubr.f32.mxu0 %v673
    %2101 = vmatmul.mubr.f32.gmra.mrb[0].mxu0 %v672
    %v2102 = vpop.f32.mrb[0].mxu0
    %v2103 = vadd.f32 0.0, %v2102
    %v2104 = vpop.f32.mrb[0].mxu0
    %2105 = vmatprep.mubr.f32.mxu0 %v680
    %2106 = vmatmul.mubr.f32.gmra.mrb[0].mxu0 %v679
    %v2107 = vpop.f32.mrb[0].mxu0
    %v2108 = vadd.f32 0.0, %v2107
    %v2109 = vpop.f32.mrb[0].mxu0
    %2110 = vmatprep.mubr.f32.mxu0 %v687
    %2111 = vmatmul.mubr.f32.gmra.mrb[0].mxu0 %v686
    %v2112 = vpop.f32.mrb[0].mxu0
    %v2113 = vadd.f32 0.0, %v2112
    %v2114 = vpop.f32.mrb[0].mxu0
    %2115 = vmatprep.mubr.f32.mxu0 %v694
    %2116 = vmatmul.mubr.f32.gmra.mrb[0].mxu0 %v693
    %v2117 = vpop.f32.mrb[0].mxu0
    %v2118 = vadd.f32 0.0, %v2117
    %v2119 = vpop.f32.mrb[0].mxu0
    %2120 = vmatprep.mubr.f32.mxu0 %v701
    %2121 = vmatmul.mubr.f32.gmra.mrb[0].mxu0 %v700
    %v2122 = vpop.f32.mrb[0].mxu0
    %v2123 = vadd.f32 0.0, %v2122
    %v2124 = vpop.f32.mrb[0].mxu0
    %2125 = vmatprep.mubr.f32.mxu0 %v708
    %2126 = vmatmul.mubr.f32.gmra.mrb[0].mxu0 %v707
    %v2127 = vpop.f32.mrb[0].mxu0
    %v2128 = vadd.f32 0.0, %v2127
    %v2129 = vpop.f32.mrb[0].mxu0
    %2130 = vmatprep.mubr.f32.mxu0 %v715
    %2131 = vmatmul.mubr.f32.gmra.mrb[0].mxu0 %v714
    %v2132 = vpop.f32.mrb[0].mxu0
    %v2133 = vadd.f32 0.0, %v2132
    %v2134 = vpop.f32.mrb[0].mxu0
    %2135 = vmatprep.mubr.f32.mxu0 %v722
    %2136 = vmatmul.mubr.f32.gmra.mrb[0].mxu0 %v721
    %v2137 = vpop.f32.mrb[0].mxu0
    %v2138 = vadd.f32 0.0, %v2137
    %v2139 = vpop.f32.mrb[0].mxu0
    %2140 = vmatprep.mubr.f32.mxu0 %v729
    %2141 = vmatmul.mubr.f32.gmra.mrb[0].mxu0 %v728
    %v2142 = vpop.f32.mrb[0].mxu0
    %v2143 = vadd.f32 0.0, %v2142
    %v2144 = vpop.f32.mrb[0].mxu0
    %2145 = vmatprep.mubr.f32.mxu0 %v736
    %2146 = vmatmul.mubr.f32.gmra.mrb[0].mxu0 %v735
    %v2147 = vpop.f32.mrb[0].mxu0
    %v2148 = vadd.f32 0.0, %v2147
    %v2149 = vpop.f32.mrb[0].mxu0
    %2150 = vmatprep.mubr.f32.mxu0 %v743
    %2151 = vmatmul.mubr.f32.gmra.mrb[0].mxu0 %v742
    %v2152 = vpop.f32.mrb[0].mxu0
    %v2153 = vadd.f32 0.0, %v2152
    %v2154 = vpop.f32.mrb[0].mxu0
    %2155 = vmatprep.mubr.f32.mxu0 %v750
    %2156 = vmatmul.mubr.f32.gmra.mrb[0].mxu0 %v749
    %v2157 = vpop.f32.mrb[0].mxu0
    %v2158 = vadd.f32 0.0, %v2157
    %v2159 = vpop.f32.mrb[0].mxu0
    %2160 = vmatprep.mubr.f32.mxu0 %v757
    %2161 = vmatmul.mubr.f32.gmra.mrb[0].mxu0 %v756
    %v2162 = vpop.f32.mrb[0].mxu0
    %v2163 = vadd.f32 0.0, %v2162
    %v2164 = vpop.f32.mrb[0].mxu0
    %2165 = vmatprep.mubr.f32.mxu0 %v764
    %2166 = vmatmul.mubr.f32.gmra.mrb[0].mxu0 %v763
    %v2167 = vpop.f32.mrb[0].mxu0
    %v2168 = vadd.f32 0.0, %v2167
    %v2169 = vpop.f32.mrb[0].mxu0
    %2170 = vmatprep.mubr.f32.mxu0 %v771
    %2171 = vmatmul.mubr.f32.gmra.mrb[0].mxu0 %v770
    %v2172 = vpop.f32.mrb[0].mxu0
    %v2173 = vadd.f32 0.0, %v2172
    %v2174 = vpop.f32.mrb[0].mxu0
    %2175 = vmatprep.mubr.f32.mxu0 %v778
    %2176 = vmatmul.mubr.f32.gmra.mrb[0].mxu0 %v777
    %v2177 = vpop.f32.mrb[0].mxu0
    %v2178 = vadd.f32 0.0, %v2177
    %v2179 = vpop.f32.mrb[0].mxu0
    %2180 = vmatprep.mubr.f32.mxu0 %v785
    %2181 = vmatmul.mubr.f32.gmra.mrb[0].mxu0 %v784
    %v2182 = vpop.f32.mrb[0].mxu0
    %v2183 = vadd.f32 0.0, %v2182
    %v2184 = vpop.f32.mrb[0].mxu0
    %2185 = vmatprep.mubr.f32.mxu0 %v792
    %2186 = vmatmul.mubr.f32.gmra.mrb[0].mxu0 %v791
    %v2187 = vpop.f32.mrb[0].mxu0
    %v2188 = vadd.f32 0.0, %v2187
    %v2189 = vpop.f32.mrb[0].mxu0
    %2190 = vmatprep.mubr.f32.mxu0 %v799
    %2191 = vmatmul.mubr.f32.gmra.mrb[0].mxu0 %v798
    %v2192 = vpop.f32.mrb[0].mxu0
    %v2193 = vadd.f32 0.0, %v2192
    %v2194 = vpop.f32.mrb[0].mxu0
    %2195 = vmatprep.mubr.f32.mxu0 %v806
    %2196 = vmatmul.mubr.f32.gmra.mrb[0].mxu0 %v805
    %v2197 = vpop.f32.mrb[0].mxu0
    %v2198 = vadd.f32 0.0, %v2197
    %v2199 = vpop.f32.mrb[0].mxu0
    %2200 = vmatprep.mubr.f32.mxu0 %v813
    %2201 = vmatmul.mubr.f32.gmra.mrb[0].mxu0 %v812
    %v2202 = vpop.f32.mrb[0].mxu0
    %v2203 = vadd.f32 0.0, %v2202
    %v2204 = vpop.f32.mrb[0].mxu0
    %2205 = vmatprep.mubr.f32.mxu0 %v820
    %2206 = vmatmul.mubr.f32.gmra.mrb[0].mxu0 %v819
    %v2207 = vpop.f32.mrb[0].mxu0
    %v2208 = vadd.f32 0.0, %v2207
    %v2209 = vpop.f32.mrb[0].mxu0
    %2210 = vmatprep.mubr.f32.mxu0 %v827
    %2211 = vmatmul.mubr.f32.gmra.mrb[0].mxu0 %v826
    %v2212 = vpop.f32.mrb[0].mxu0
    %v2213 = vadd.f32 0.0, %v2212
    %v2214 = vpop.f32.mrb[0].mxu0
    %2215 = vmatprep.mubr.f32.mxu0 %v834
    %2216 = vmatmul.mubr.f32.gmra.mrb[0].mxu0 %v833
    %v2217 = vpop.f32.mrb[0].mxu0
    %v2218 = vadd.f32 0.0, %v2217
    %v2219 = vpop.f32.mrb[0].mxu0
    %2220 = vmatprep.mubr.f32.mxu0 %v841
    %2221 = vmatmul.mubr.f32.gmra.mrb[0].mxu0 %v840
    %v2222 = vpop.f32.mrb[0].mxu0
    %v2223 = vadd.f32 0.0, %v2222
    %v2224 = vpop.f32.mrb[0].mxu0
    %2225 = vmatprep.mubr.f32.mxu0 %v848
    %2226 = vmatmul.mubr.f32.gmra.mrb[0].mxu0 %v847
    %v2227 = vpop.f32.mrb[0].mxu0
    %v2228 = vadd.f32 0.0, %v2227
    %v2229 = vpop.f32.mrb[0].mxu0
    %2230 = vmatprep.mubr.f32.mxu0 %v855
    %2231 = vmatmul.mubr.f32.gmra.mrb[0].mxu0 %v854
    %v2232 = vpop.f32.mrb[0].mxu0
    %v2233 = vadd.f32 0.0, %v2232
    %v2234 = vpop.f32.mrb[0].mxu0
    %2235 = vmatprep.mubr.f32.mxu0 %v862
    %2236 = vmatmul.mubr.f32.gmra.mrb[0].mxu0 %v861
    %v2237 = vpop.f32.mrb[0].mxu0
    %v2238 = vadd.f32 0.0, %v2237
    %v2239 = vpop.f32.mrb[0].mxu0
    %2240 = vmatprep.mubr.f32.mxu0 %v869
    %2241 = vmatmul.mubr.f32.gmra.mrb[0].mxu0 %v868
    %v2242 = vpop.f32.mrb[0].mxu0
    %v2243 = vadd.f32 0.0, %v2242
    %v2244 = vpop.f32.mrb[0].mxu0
    %2245 = vmatprep.mubr.f32.mxu0 %v876
    %2246 = vmatmul.mubr.f32.gmra.mrb[0].mxu0 %v875
    %v2247 = vpop.f32.mrb[0].mxu0
    %v2248 = vadd.f32 0.0, %v2247
    %v2249 = vpop.f32.mrb[0].mxu0
    %2250 = vmatprep.mubr.f32.mxu0 %v883
    %2251 = vmatmul.mubr.f32.gmra.mrb[0].mxu0 %v882
    %v2252 = vpop.f32.mrb[0].mxu0
    %v2253 = vadd.f32 0.0, %v2252
    %v2254 = vpop.f32.mrb[0].mxu0
    %2255 = vmatprep.mubr.f32.mxu0 %v890
    %2256 = vmatmul.mubr.f32.gmra.mrb[0].mxu0 %v889
    %v2257 = vpop.f32.mrb[0].mxu0
    %v2258 = vadd.f32 0.0, %v2257
    %v2259 = vpop.f32.mrb[0].mxu0
    %2260 = vmatprep.mubr.f32.mxu0 %v897
    %2261 = vmatmul.mubr.f32.gmra.mrb[0].mxu0 %v896
    %v2262 = vpop.f32.mrb[0].mxu0
    %v2263 = vadd.f32 0.0, %v2262
    %v2264 = vpop.f32.mrb[0].mxu0
    %2265 = vmatprep.mubr.f32.mxu0 %v904
    %2266 = vmatmul.mubr.f32.gmra.mrb[0].mxu0 %v903
    %v2267 = vpop.f32.mrb[0].mxu0
    %v2268 = vadd.f32 0.0, %v2267
    %v2269 = vpop.f32.mrb[0].mxu0
    %2270 = vmatprep.mubr.f32.mxu0 %v911
    %2271 = vmatmul.mubr.f32.gmra.mrb[0].mxu0 %v910
    %v2272 = vpop.f32.mrb[0].mxu0
    %v2273 = vadd.f32 0.0, %v2272
    %v2274 = vpop.f32.mrb[0].mxu0
    %2275 = vmatprep.mubr.f32.mxu0 %v918
    %2276 = vmatmul.mubr.f32.gmra.mrb[0].mxu0 %v917
    %v2277 = vpop.f32.mrb[0].mxu0
    %v2278 = vadd.f32 0.0, %v2277
    %v2279 = vpop.f32.mrb[0].mxu0
    %2280 = vmatprep.mubr.f32.mxu0 %v925
    %2281 = vmatmul.mubr.f32.gmra.mrb[0].mxu0 %v924
    %v2282 = vpop.f32.mrb[0].mxu0
    %v2283 = vadd.f32 0.0, %v2282
    %v2284 = vpop.f32.mrb[0].mxu0
    %2285 = vmatprep.mubr.f32.mxu0 %v932
    %2286 = vmatmul.mubr.f32.gmra.mrb[0].mxu0 %v931
    %v2287 = vpop.f32.mrb[0].mxu0
    %v2288 = vadd.f32 0.0, %v2287
    %v2289 = vpop.f32.mrb[0].mxu0
    %2290 = vmatprep.mubr.f32.mxu0 %v939
    %2291 = vmatmul.mubr.f32.gmra.mrb[0].mxu0 %v938
    %v2292 = vpop.f32.mrb[0].mxu0
    %v2293 = vadd.f32 0.0, %v2292
    %v2294 = vpop.f32.mrb[0].mxu0
    %2295 = vmatprep.mubr.f32.mxu0 %v946
    %2296 = vmatmul.mubr.f32.gmra.mrb[0].mxu0 %v945
    %v2297 = vpop.f32.mrb[0].mxu0
    %v2298 = vadd.f32 0.0, %v2297
    %v2299 = vpop.f32.mrb[0].mxu0
    %2300 = vmatprep.mubr.f32.mxu0 %v953
    %2301 = vmatmul.mubr.f32.gmra.mrb[0].mxu0 %v952
    %v2302 = vpop.f32.mrb[0].mxu0
    %v2303 = vadd.f32 0.0, %v2302
    %v2304 = vpop.f32.mrb[0].mxu0
    %2305 = vmatprep.mubr.f32.mxu0 %v960
    %2306 = vmatmul.mubr.f32.gmra.mrb[0].mxu0 %v959
    %v2307 = vpop.f32.mrb[0].mxu0
    %v2308 = vadd.f32 0.0, %v2307
    %v2309 = vpop.f32.mrb[0].mxu0
    %2310 = vmatprep.mubr.f32.mxu0 %v967
    %2311 = vmatmul.mubr.f32.gmra.mrb[0].mxu0 %v966
    %v2312 = vpop.f32.mrb[0].mxu0
    %v2313 = vadd.f32 0.0, %v2312
    %v2314 = vpop.f32.mrb[0].mxu0
    %2315 = vmatprep.mubr.f32.mxu0 %v974
    %2316 = vmatmul.mubr.f32.gmra.mrb[0].mxu0 %v973
    %v2317 = vpop.f32.mrb[0].mxu0
    %v2318 = vadd.f32 0.0, %v2317
    %v2319 = vpop.f32.mrb[0].mxu0
    %2320 = vmatprep.mubr.f32.mxu0 %v981
    %2321 = vmatmul.mubr.f32.gmra.mrb[0].mxu0 %v980
    %v2322 = vpop.f32.mrb[0].mxu0
    %v2323 = vadd.f32 0.0, %v2322
    %v2324 = vpop.f32.mrb[0].mxu0
    %2325 = vmatprep.mubr.f32.mxu0 %v988
    %2326 = vmatmul.mubr.f32.gmra.mrb[0].mxu0 %v987
    %v2327 = vpop.f32.mrb[0].mxu0
    %v2328 = vadd.f32 0.0, %v2327
    %v2329 = vpop.f32.mrb[0].mxu0
    %2330 = vmatprep.mubr.f32.mxu0 %v995
    %2331 = vmatmul.mubr.f32.gmra.mrb[0].mxu0 %v994
    %v2332 = vpop.f32.mrb[0].mxu0
    %v2333 = vadd.f32 0.0, %v2332
    %v2334 = vpop.f32.mrb[0].mxu0
    %2335 = vmatprep.mubr.f32.mxu0 %v1002
    %2336 = vmatmul.mubr.f32.gmra.mrb[0].mxu0 %v1001
    %v2337 = vpop.f32.mrb[0].mxu0
    %v2338 = vadd.f32 0.0, %v2337
    %v2339 = vpop.f32.mrb[0].mxu0
    %2340 = vmatprep.mubr.f32.mxu0 %v1009
    %2341 = vmatmul.mubr.f32.gmra.mrb[0].mxu0 %v1008
    %v2342 = vpop.f32.mrb[0].mxu0
    %v2343 = vadd.f32 0.0, %v2342
    %v2344 = vpop.f32.mrb[0].mxu0
    %2345 = vmatprep.mubr.f32.mxu0 %v1016
    %2346 = vmatmul.mubr.f32.gmra.mrb[0].mxu0 %v1015
    %v2347 = vpop.f32.mrb[0].mxu0
    %v2348 = vadd.f32 0.0, %v2347
    %v2349 = vpop.f32.mrb[0].mxu0
    %2350 = vmatprep.mubr.f32.mxu0 %v1023
    %2351 = vmatmul.mubr.f32.gmra.mrb[0].mxu0 %v1022
    %v2352 = vpop.f32.mrb[0].mxu0
    %v2353 = vadd.f32 0.0, %v2352
    %v2354 = vpop.f32.mrb[0].mxu0
    %2355 = vmatprep.mubr.f32.mxu0 %v1030
    %2356 = vmatmul.mubr.f32.gmra.mrb[0].mxu0 %v1029
    %v2357 = vpop.f32.mrb[0].mxu0
    %v2358 = vadd.f32 0.0, %v2357
    %v2359 = vpop.f32.mrb[0].mxu0
    %2360 = vmatprep.mubr.f32.mxu0 %v1037
    %2361 = vmatmul.mubr.f32.gmra.mrb[0].mxu0 %v1036
    %v2362 = vpop.f32.mrb[0].mxu0
    %v2363 = vadd.f32 0.0, %v2362
    %v2364 = vpop.f32.mrb[0].mxu0
    %2365 = vmatprep.mubr.f32.mxu0 %v1044
    %2366 = vmatmul.mubr.f32.gmra.mrb[0].mxu0 %v1043
    %v2367 = vpop.f32.mrb[0].mxu0
    %v2368 = vadd.f32 0.0, %v2367
    %v2369 = vpop.f32.mrb[0].mxu0
    %2370 = vdwg.mxu0
    %2371 = vmatprep.subr.mxu0 0.0
    %2372 = vmatpush1.msra.mxu0 %v1082
    %2373 = vmatprep.subr.mxu0 0.0
    %2374 = vmatpush1.msra.mxu0 %v1083
    %2375 = vmatprep.subr.mxu0 0.0
    %2376 = vmatpush1.msra.mxu0 %v1084
    %2377 = vmatprep.subr.mxu0 0.0
    %2378 = vmatpush1.msra.mxu0 %v1085
    %2379 = vmatprep.subr.mxu0 0.0
    %2380 = vmatpush1.msra.mxu0 %v1086
    %2381 = vmatprep.subr.mxu0 0.0
    %2382 = vmatpush1.msra.mxu0 %v1087
    %2383 = vmatprep.subr.mxu0 0.0
    %2384 = vmatpush1.msra.mxu0 %v1088
    %2385 = vmatprep.subr.mxu0 0.0
    %2386 = vmatpush1.msra.mxu0 %v1089
    %2387 = vmatprep.subr.mxu0 0.0
    %2388 = vmatpush1.msra.mxu0 %v1090
    %2389 = vmatprep.subr.mxu0 0.0
    %2390 = vmatpush1.msra.mxu0 %v1091
    %2391 = vmatprep.subr.mxu0 0.0
    %2392 = vmatpush1.msra.mxu0 %v1092
    %2393 = vmatprep.subr.mxu0 0.0
    %2394 = vmatpush1.msra.mxu0 %v1093
    %2395 = vmatprep.subr.mxu0 0.0
    %2396 = vmatpush1.msra.mxu0 %v1094
    %2397 = vmatprep.subr.mxu0 0.0
    %2398 = vmatpush1.msra.mxu0 %v1095
    %2399 = vmatprep.subr.mxu0 0.0
    %2400 = vmatpush1.msra.mxu0 %v1096
    %2401 = vmatprep.subr.mxu0 0.0
    %2402 = vmatpush1.msra.mxu0 %v1097
    %2403 = vmatprep.subr.mxu0 0.0
    %2404 = vmatpush1.msra.mxu0 %v1098
    %2405 = vmatprep.subr.mxu0 0.0
    %2406 = vmatpush1.msra.mxu0 %v1099
    %2407 = vmatprep.subr.mxu0 0.0
    %2408 = vmatpush1.msra.mxu0 %v1100
    %2409 = vmatprep.subr.mxu0 0.0
    %2410 = vmatpush1.msra.mxu0 %v1101
    %2411 = vmatprep.subr.mxu0 0.0
    %2412 = vmatpush1.msra.mxu0 %v1102
    %2413 = vmatprep.subr.mxu0 0.0
    %2414 = vmatpush1.msra.mxu0 %v1103
    %2415 = vmatprep.subr.mxu0 0.0
    %2416 = vmatpush1.msra.mxu0 %v1104
    %2417 = vmatprep.subr.mxu0 0.0
    %2418 = vmatpush1.msra.mxu0 %v1105
    %2419 = vmatprep.subr.mxu0 0.0
    %2420 = vmatpush1.msra.mxu0 %v1106
    %2421 = vmatprep.subr.mxu0 0.0
    %2422 = vmatpush1.msra.mxu0 %v1107
    %2423 = vmatprep.subr.mxu0 0.0
    %2424 = vmatpush1.msra.mxu0 %v1108
    %2425 = vmatprep.subr.mxu0 0.0
    %2426 = vmatpush1.msra.mxu0 %v1109
    %2427 = vmatprep.subr.mxu0 0.0
    %2428 = vmatpush1.msra.mxu0 %v1110
    %2429 = vmatprep.subr.mxu0 0.0
    %2430 = vmatpush1.msra.mxu0 %v1111
    %2431 = vmatprep.subr.mxu0 0.0
    %2432 = vmatpush1.msra.mxu0 %v1112
    %2433 = vmatprep.subr.mxu0 0.0
    %2434 = vmatpush1.msra.mxu0 %v1113
    %2435 = vmatprep.mubr.f32.mxu0 %v45
    %2436 = vmatmul.mubr.f32.gmra.mrb[0].mxu0 %v44
    %v2437 = vpop.f32.mrb[0].mxu0
    %v2438 = vadd.f32 %v1653, %v2437
    %v2439 = vpop.f32.mrb[0].mxu0
    %2440 = vmatprep.mubr.f32.mxu0 %v52
    %2441 = vmatmul.mubr.f32.gmra.mrb[0].mxu0 %v51
    %v2442 = vpop.f32.mrb[0].mxu0
    %v2443 = vadd.f32 %v1658, %v2442
    %v2444 = vpop.f32.mrb[0].mxu0
    %2445 = vmatprep.mubr.f32.mxu0 %v59
    %2446 = vmatmul.mubr.f32.gmra.mrb[0].mxu0 %v58
    %v2447 = vpop.f32.mrb[0].mxu0
    %v2448 = vadd.f32 %v1663, %v2447
    %v2449 = vpop.f32.mrb[0].mxu0
    %2450 = vmatprep.mubr.f32.mxu0 %v66
    %2451 = vmatmul.mubr.f32.gmra.mrb[0].mxu0 %v65
    %v2452 = vpop.f32.mrb[0].mxu0
    %v2453 = vadd.f32 %v1668, %v2452
    %v2454 = vpop.f32.mrb[0].mxu0
    %2455 = vmatprep.mubr.f32.mxu0 %v73
    %2456 = vmatmul.mubr.f32.gmra.mrb[0].mxu0 %v72
    %v2457 = vpop.f32.mrb[0].mxu0
    %v2458 = vadd.f32 %v1673, %v2457
    %v2459 = vpop.f32.mrb[0].mxu0
    %2460 = vmatprep.mubr.f32.mxu0 %v80
    %2461 = vmatmul.mubr.f32.gmra.mrb[0].mxu0 %v79
    %v2462 = vpop.f32.mrb[0].mxu0
    %v2463 = vadd.f32 %v1678, %v2462
    %v2464 = vpop.f32.mrb[0].mxu0
    %2465 = vmatprep.mubr.f32.mxu0 %v87
    %2466 = vmatmul.mubr.f32.gmra.mrb[0].mxu0 %v86
    %v2467 = vpop.f32.mrb[0].mxu0
    %v2468 = vadd.f32 %v1683, %v2467
    %v2469 = vpop.f32.mrb[0].mxu0
    %2470 = vmatprep.mubr.f32.mxu0 %v94
    %2471 = vmatmul.mubr.f32.gmra.mrb[0].mxu0 %v93
    %v2472 = vpop.f32.mrb[0].mxu0
    %v2473 = vadd.f32 %v1688, %v2472
    %v2474 = vpop.f32.mrb[0].mxu0
    %2475 = vmatprep.mubr.f32.mxu0 %v101
    %2476 = vmatmul.mubr.f32.gmra.mrb[0].mxu0 %v100
    %v2477 = vpop.f32.mrb[0].mxu0
    %v2478 = vadd.f32 %v1693, %v2477
    %v2479 = vpop.f32.mrb[0].mxu0
    %2480 = vmatprep.mubr.f32.mxu0 %v108
    %2481 = vmatmul.mubr.f32.gmra.mrb[0].mxu0 %v107
    %v2482 = vpop.f32.mrb[0].mxu0
    %v2483 = vadd.f32 %v1698, %v2482
    %v2484 = vpop.f32.mrb[0].mxu0
    %2485 = vmatprep.mubr.f32.mxu0 %v115
    %2486 = vmatmul.mubr.f32.gmra.mrb[0].mxu0 %v114
    %v2487 = vpop.f32.mrb[0].mxu0
    %v2488 = vadd.f32 %v1703, %v2487
    %v2489 = vpop.f32.mrb[0].mxu0
    %2490 = vmatprep.mubr.f32.mxu0 %v122
    %2491 = vmatmul.mubr.f32.gmra.mrb[0].mxu0 %v121
    %v2492 = vpop.f32.mrb[0].mxu0
    %v2493 = vadd.f32 %v1708, %v2492
    %v2494 = vpop.f32.mrb[0].mxu0
    %2495 = vmatprep.mubr.f32.mxu0 %v129
    %2496 = vmatmul.mubr.f32.gmra.mrb[0].mxu0 %v128
    %v2497 = vpop.f32.mrb[0].mxu0
    %v2498 = vadd.f32 %v1713, %v2497
    %v2499 = vpop.f32.mrb[0].mxu0
    %2500 = vmatprep.mubr.f32.mxu0 %v136
    %2501 = vmatmul.mubr.f32.gmra.mrb[0].mxu0 %v135
    %v2502 = vpop.f32.mrb[0].mxu0
    %v2503 = vadd.f32 %v1718, %v2502
    %v2504 = vpop.f32.mrb[0].mxu0
    %2505 = vmatprep.mubr.f32.mxu0 %v143
    %2506 = vmatmul.mubr.f32.gmra.mrb[0].mxu0 %v142
    %v2507 = vpop.f32.mrb[0].mxu0
    %v2508 = vadd.f32 %v1723, %v2507
    %v2509 = vpop.f32.mrb[0].mxu0
    %2510 = vmatprep.mubr.f32.mxu0 %v150
    %2511 = vmatmul.mubr.f32.gmra.mrb[0].mxu0 %v149
    %v2512 = vpop.f32.mrb[0].mxu0
    %v2513 = vadd.f32 %v1728, %v2512
    %v2514 = vpop.f32.mrb[0].mxu0
    %2515 = vmatprep.mubr.f32.mxu0 %v157
    %2516 = vmatmul.mubr.f32.gmra.mrb[0].mxu0 %v156
    %v2517 = vpop.f32.mrb[0].mxu0
    %v2518 = vadd.f32 %v1733, %v2517
    %v2519 = vpop.f32.mrb[0].mxu0
    %2520 = vmatprep.mubr.f32.mxu0 %v164
    %2521 = vmatmul.mubr.f32.gmra.mrb[0].mxu0 %v163
    %v2522 = vpop.f32.mrb[0].mxu0
    %v2523 = vadd.f32 %v1738, %v2522
    %v2524 = vpop.f32.mrb[0].mxu0
    %2525 = vmatprep.mubr.f32.mxu0 %v171
    %2526 = vmatmul.mubr.f32.gmra.mrb[0].mxu0 %v170
    %v2527 = vpop.f32.mrb[0].mxu0
    %v2528 = vadd.f32 %v1743, %v2527
    %v2529 = vpop.f32.mrb[0].mxu0
    %2530 = vmatprep.mubr.f32.mxu0 %v178
    %2531 = vmatmul.mubr.f32.gmra.mrb[0].mxu0 %v177
    %v2532 = vpop.f32.mrb[0].mxu0
    %v2533 = vadd.f32 %v1748, %v2532
    %v2534 = vpop.f32.mrb[0].mxu0
    %2535 = vmatprep.mubr.f32.mxu0 %v185
    %2536 = vmatmul.mubr.f32.gmra.mrb[0].mxu0 %v184
    %v2537 = vpop.f32.mrb[0].mxu0
    %v2538 = vadd.f32 %v1753, %v2537
    %v2539 = vpop.f32.mrb[0].mxu0
    %2540 = vmatprep.mubr.f32.mxu0 %v192
    %2541 = vmatmul.mubr.f32.gmra.mrb[0].mxu0 %v191
    %v2542 = vpop.f32.mrb[0].mxu0
    %v2543 = vadd.f32 %v1758, %v2542
    %v2544 = vpop.f32.mrb[0].mxu0
    %2545 = vmatprep.mubr.f32.mxu0 %v199
    %2546 = vmatmul.mubr.f32.gmra.mrb[0].mxu0 %v198
    %v2547 = vpop.f32.mrb[0].mxu0
    %v2548 = vadd.f32 %v1763, %v2547
    %v2549 = vpop.f32.mrb[0].mxu0
    %2550 = vmatprep.mubr.f32.mxu0 %v206
    %2551 = vmatmul.mubr.f32.gmra.mrb[0].mxu0 %v205
    %v2552 = vpop.f32.mrb[0].mxu0
    %v2553 = vadd.f32 %v1768, %v2552
    %v2554 = vpop.f32.mrb[0].mxu0
    %2555 = vmatprep.mubr.f32.mxu0 %v213
    %2556 = vmatmul.mubr.f32.gmra.mrb[0].mxu0 %v212
    %v2557 = vpop.f32.mrb[0].mxu0
    %v2558 = vadd.f32 %v1773, %v2557
    %v2559 = vpop.f32.mrb[0].mxu0
    %2560 = vmatprep.mubr.f32.mxu0 %v220
    %2561 = vmatmul.mubr.f32.gmra.mrb[0].mxu0 %v219
    %v2562 = vpop.f32.mrb[0].mxu0
    %v2563 = vadd.f32 %v1778, %v2562
    %v2564 = vpop.f32.mrb[0].mxu0
    %2565 = vmatprep.mubr.f32.mxu0 %v227
    %2566 = vmatmul.mubr.f32.gmra.mrb[0].mxu0 %v226
    %v2567 = vpop.f32.mrb[0].mxu0
    %v2568 = vadd.f32 %v1783, %v2567
    %v2569 = vpop.f32.mrb[0].mxu0
    %2570 = vmatprep.mubr.f32.mxu0 %v234
    %2571 = vmatmul.mubr.f32.gmra.mrb[0].mxu0 %v233
    %v2572 = vpop.f32.mrb[0].mxu0
    %v2573 = vadd.f32 %v1788, %v2572
    %v2574 = vpop.f32.mrb[0].mxu0
    %2575 = vmatprep.mubr.f32.mxu0 %v241
    %2576 = vmatmul.mubr.f32.gmra.mrb[0].mxu0 %v240
    %v2577 = vpop.f32.mrb[0].mxu0
    %v2578 = vadd.f32 %v1793, %v2577
    %v2579 = vpop.f32.mrb[0].mxu0
    %2580 = vmatprep.mubr.f32.mxu0 %v248
    %2581 = vmatmul.mubr.f32.gmra.mrb[0].mxu0 %v247
    %v2582 = vpop.f32.mrb[0].mxu0
    %v2583 = vadd.f32 %v1798, %v2582
    %v2584 = vpop.f32.mrb[0].mxu0
    %2585 = vmatprep.mubr.f32.mxu0 %v255
    %2586 = vmatmul.mubr.f32.gmra.mrb[0].mxu0 %v254
    %v2587 = vpop.f32.mrb[0].mxu0
    %v2588 = vadd.f32 %v1803, %v2587
    %v2589 = vpop.f32.mrb[0].mxu0
    %2590 = vmatprep.mubr.f32.mxu0 %v262
    %2591 = vmatmul.mubr.f32.gmra.mrb[0].mxu0 %v261
    %v2592 = vpop.f32.mrb[0].mxu0
    %v2593 = vadd.f32 %v1808, %v2592
    %v2594 = vpop.f32.mrb[0].mxu0
    %2595 = vmatprep.mubr.f32.mxu0 %v269
    %2596 = vmatmul.mubr.f32.gmra.mrb[0].mxu0 %v268
    %v2597 = vpop.f32.mrb[0].mxu0
    %v2598 = vadd.f32 %v1813, %v2597
    %v2599 = vpop.f32.mrb[0].mxu0
    %2600 = vmatprep.mubr.f32.mxu0 %v276
    %2601 = vmatmul.mubr.f32.gmra.mrb[0].mxu0 %v275
    %v2602 = vpop.f32.mrb[0].mxu0
    %v2603 = vadd.f32 %v1818, %v2602
    %v2604 = vpop.f32.mrb[0].mxu0
    %2605 = vmatprep.mubr.f32.mxu0 %v283
    %2606 = vmatmul.mubr.f32.gmra.mrb[0].mxu0 %v282
    %v2607 = vpop.f32.mrb[0].mxu0
    %v2608 = vadd.f32 %v1823, %v2607
    %v2609 = vpop.f32.mrb[0].mxu0
    %2610 = vmatprep.mubr.f32.mxu0 %v290
    %2611 = vmatmul.mubr.f32.gmra.mrb[0].mxu0 %v289
    %v2612 = vpop.f32.mrb[0].mxu0
    %v2613 = vadd.f32 %v1828, %v2612
    %v2614 = vpop.f32.mrb[0].mxu0
    %2615 = vmatprep.mubr.f32.mxu0 %v297
    %2616 = vmatmul.mubr.f32.gmra.mrb[0].mxu0 %v296
    %v2617 = vpop.f32.mrb[0].mxu0
    %v2618 = vadd.f32 %v1833, %v2617
    %v2619 = vpop.f32.mrb[0].mxu0
    %2620 = vmatprep.mubr.f32.mxu0 %v304
    %2621 = vmatmul.mubr.f32.gmra.mrb[0].mxu0 %v303
    %v2622 = vpop.f32.mrb[0].mxu0
    %v2623 = vadd.f32 %v1838, %v2622
    %v2624 = vpop.f32.mrb[0].mxu0
    %2625 = vmatprep.mubr.f32.mxu0 %v311
    %2626 = vmatmul.mubr.f32.gmra.mrb[0].mxu0 %v310
    %v2627 = vpop.f32.mrb[0].mxu0
    %v2628 = vadd.f32 %v1843, %v2627
    %v2629 = vpop.f32.mrb[0].mxu0
    %2630 = vmatprep.mubr.f32.mxu0 %v318
    %2631 = vmatmul.mubr.f32.gmra.mrb[0].mxu0 %v317
    %v2632 = vpop.f32.mrb[0].mxu0
    %v2633 = vadd.f32 %v1848, %v2632
    %v2634 = vpop.f32.mrb[0].mxu0
    %2635 = vmatprep.mubr.f32.mxu0 %v325
    %2636 = vmatmul.mubr.f32.gmra.mrb[0].mxu0 %v324
    %v2637 = vpop.f32.mrb[0].mxu0
    %v2638 = vadd.f32 %v1853, %v2637
    %v2639 = vpop.f32.mrb[0].mxu0
    %2640 = vmatprep.mubr.f32.mxu0 %v332
    %2641 = vmatmul.mubr.f32.gmra.mrb[0].mxu0 %v331
    %v2642 = vpop.f32.mrb[0].mxu0
    %v2643 = vadd.f32 %v1858, %v2642
    %v2644 = vpop.f32.mrb[0].mxu0
    %2645 = vmatprep.mubr.f32.mxu0 %v339
    %2646 = vmatmul.mubr.f32.gmra.mrb[0].mxu0 %v338
    %v2647 = vpop.f32.mrb[0].mxu0
    %v2648 = vadd.f32 %v1863, %v2647
    %v2649 = vpop.f32.mrb[0].mxu0
    %2650 = vmatprep.mubr.f32.mxu0 %v346
    %2651 = vmatmul.mubr.f32.gmra.mrb[0].mxu0 %v345
    %v2652 = vpop.f32.mrb[0].mxu0
    %v2653 = vadd.f32 %v1868, %v2652
    %v2654 = vpop.f32.mrb[0].mxu0
    %2655 = vmatprep.mubr.f32.mxu0 %v353
    %2656 = vmatmul.mubr.f32.gmra.mrb[0].mxu0 %v352
    %v2657 = vpop.f32.mrb[0].mxu0
    %v2658 = vadd.f32 %v1873, %v2657
    %v2659 = vpop.f32.mrb[0].mxu0
    %2660 = vmatprep.mubr.f32.mxu0 %v360
    %2661 = vmatmul.mubr.f32.gmra.mrb[0].mxu0 %v359
    %v2662 = vpop.f32.mrb[0].mxu0
    %v2663 = vadd.f32 %v1878, %v2662
    %v2664 = vpop.f32.mrb[0].mxu0
    %2665 = vmatprep.mubr.f32.mxu0 %v367
    %2666 = vmatmul.mubr.f32.gmra.mrb[0].mxu0 %v366
    %v2667 = vpop.f32.mrb[0].mxu0
    %v2668 = vadd.f32 %v1883, %v2667
    %v2669 = vpop.f32.mrb[0].mxu0
    %2670 = vmatprep.mubr.f32.mxu0 %v374
    %2671 = vmatmul.mubr.f32.gmra.mrb[0].mxu0 %v373
    %v2672 = vpop.f32.mrb[0].mxu0
    %v2673 = vadd.f32 %v1888, %v2672
    %v2674 = vpop.f32.mrb[0].mxu0
    %2675 = vmatprep.mubr.f32.mxu0 %v381
    %2676 = vmatmul.mubr.f32.gmra.mrb[0].mxu0 %v380
    %v2677 = vpop.f32.mrb[0].mxu0
    %v2678 = vadd.f32 %v1893, %v2677
    %v2679 = vpop.f32.mrb[0].mxu0
    %2680 = vmatprep.mubr.f32.mxu0 %v388
    %2681 = vmatmul.mubr.f32.gmra.mrb[0].mxu0 %v387
    %v2682 = vpop.f32.mrb[0].mxu0
    %v2683 = vadd.f32 %v1898, %v2682
    %v2684 = vpop.f32.mrb[0].mxu0
    %2685 = vmatprep.mubr.f32.mxu0 %v395
    %2686 = vmatmul.mubr.f32.gmra.mrb[0].mxu0 %v394
    %v2687 = vpop.f32.mrb[0].mxu0
    %v2688 = vadd.f32 %v1903, %v2687
    %v2689 = vpop.f32.mrb[0].mxu0
    %2690 = vmatprep.mubr.f32.mxu0 %v402
    %2691 = vmatmul.mubr.f32.gmra.mrb[0].mxu0 %v401
    %v2692 = vpop.f32.mrb[0].mxu0
    %v2693 = vadd.f32 %v1908, %v2692
    %v2694 = vpop.f32.mrb[0].mxu0
    %2695 = vmatprep.mubr.f32.mxu0 %v409
    %2696 = vmatmul.mubr.f32.gmra.mrb[0].mxu0 %v408
    %v2697 = vpop.f32.mrb[0].mxu0
    %v2698 = vadd.f32 %v1913, %v2697
    %v2699 = vpop.f32.mrb[0].mxu0
    %2700 = vmatprep.mubr.f32.mxu0 %v416
    %2701 = vmatmul.mubr.f32.gmra.mrb[0].mxu0 %v415
    %v2702 = vpop.f32.mrb[0].mxu0
    %v2703 = vadd.f32 %v1918, %v2702
    %v2704 = vpop.f32.mrb[0].mxu0
    %2705 = vmatprep.mubr.f32.mxu0 %v423
    %2706 = vmatmul.mubr.f32.gmra.mrb[0].mxu0 %v422
    %v2707 = vpop.f32.mrb[0].mxu0
    %v2708 = vadd.f32 %v1923, %v2707
    %v2709 = vpop.f32.mrb[0].mxu0
    %2710 = vmatprep.mubr.f32.mxu0 %v430
    %2711 = vmatmul.mubr.f32.gmra.mrb[0].mxu0 %v429
    %v2712 = vpop.f32.mrb[0].mxu0
    %v2713 = vadd.f32 %v1928, %v2712
    %v2714 = vpop.f32.mrb[0].mxu0
    %2715 = vmatprep.mubr.f32.mxu0 %v437
    %2716 = vmatmul.mubr.f32.gmra.mrb[0].mxu0 %v436
    %v2717 = vpop.f32.mrb[0].mxu0
    %v2718 = vadd.f32 %v1933, %v2717
    %v2719 = vpop.f32.mrb[0].mxu0
    %2720 = vmatprep.mubr.f32.mxu0 %v444
    %2721 = vmatmul.mubr.f32.gmra.mrb[0].mxu0 %v443
    %v2722 = vpop.f32.mrb[0].mxu0
    %v2723 = vadd.f32 %v1938, %v2722
    %v2724 = vpop.f32.mrb[0].mxu0
    %2725 = vmatprep.mubr.f32.mxu0 %v451
    %2726 = vmatmul.mubr.f32.gmra.mrb[0].mxu0 %v450
    %v2727 = vpop.f32.mrb[0].mxu0
    %v2728 = vadd.f32 %v1943, %v2727
    %v2729 = vpop.f32.mrb[0].mxu0
    %2730 = vmatprep.mubr.f32.mxu0 %v458
    %2731 = vmatmul.mubr.f32.gmra.mrb[0].mxu0 %v457
    %v2732 = vpop.f32.mrb[0].mxu0
    %v2733 = vadd.f32 %v1948, %v2732
    %v2734 = vpop.f32.mrb[0].mxu0
    %2735 = vmatprep.mubr.f32.mxu0 %v465
    %2736 = vmatmul.mubr.f32.gmra.mrb[0].mxu0 %v464
    %v2737 = vpop.f32.mrb[0].mxu0
    %v2738 = vadd.f32 %v1953, %v2737
    %v2739 = vpop.f32.mrb[0].mxu0
    %2740 = vmatprep.mubr.f32.mxu0 %v472
    %2741 = vmatmul.mubr.f32.gmra.mrb[0].mxu0 %v471
    %v2742 = vpop.f32.mrb[0].mxu0
    %v2743 = vadd.f32 %v1958, %v2742
    %v2744 = vpop.f32.mrb[0].mxu0
    %2745 = vmatprep.mubr.f32.mxu0 %v479
    %2746 = vmatmul.mubr.f32.gmra.mrb[0].mxu0 %v478
    %v2747 = vpop.f32.mrb[0].mxu0
    %v2748 = vadd.f32 %v1963, %v2747
    %v2749 = vpop.f32.mrb[0].mxu0
    %2750 = vmatprep.mubr.f32.mxu0 %v486
    %2751 = vmatmul.mubr.f32.gmra.mrb[0].mxu0 %v485
    %v2752 = vpop.f32.mrb[0].mxu0
    %v2753 = vadd.f32 %v1968, %v2752
    %v2754 = vpop.f32.mrb[0].mxu0
    %2755 = vmatprep.mubr.f32.mxu0 %v493
    %2756 = vmatmul.mubr.f32.gmra.mrb[0].mxu0 %v492
    %v2757 = vpop.f32.mrb[0].mxu0
    %v2758 = vadd.f32 %v1973, %v2757
    %v2759 = vpop.f32.mrb[0].mxu0
    %2760 = vmatprep.mubr.f32.mxu0 %v500
    %2761 = vmatmul.mubr.f32.gmra.mrb[0].mxu0 %v499
    %v2762 = vpop.f32.mrb[0].mxu0
    %v2763 = vadd.f32 %v1978, %v2762
    %v2764 = vpop.f32.mrb[0].mxu0
    %2765 = vmatprep.mubr.f32.mxu0 %v507
    %2766 = vmatmul.mubr.f32.gmra.mrb[0].mxu0 %v506
    %v2767 = vpop.f32.mrb[0].mxu0
    %v2768 = vadd.f32 %v1983, %v2767
    %v2769 = vpop.f32.mrb[0].mxu0
    %2770 = vmatprep.mubr.f32.mxu0 %v514
    %2771 = vmatmul.mubr.f32.gmra.mrb[0].mxu0 %v513
    %v2772 = vpop.f32.mrb[0].mxu0
    %v2773 = vadd.f32 %v1988, %v2772
    %v2774 = vpop.f32.mrb[0].mxu0
    %2775 = vmatprep.mubr.f32.mxu0 %v521
    %2776 = vmatmul.mubr.f32.gmra.mrb[0].mxu0 %v520
    %v2777 = vpop.f32.mrb[0].mxu0
    %v2778 = vadd.f32 %v1993, %v2777
    %v2779 = vpop.f32.mrb[0].mxu0
    %2780 = vmatprep.mubr.f32.mxu0 %v528
    %2781 = vmatmul.mubr.f32.gmra.mrb[0].mxu0 %v527
    %v2782 = vpop.f32.mrb[0].mxu0
    %v2783 = vadd.f32 %v1998, %v2782
    %v2784 = vpop.f32.mrb[0].mxu0
    %2785 = vmatprep.mubr.f32.mxu0 %v535
    %2786 = vmatmul.mubr.f32.gmra.mrb[0].mxu0 %v534
    %v2787 = vpop.f32.mrb[0].mxu0
    %v2788 = vadd.f32 %v2003, %v2787
    %v2789 = vpop.f32.mrb[0].mxu0
    %2790 = vmatprep.mubr.f32.mxu0 %v542
    %2791 = vmatmul.mubr.f32.gmra.mrb[0].mxu0 %v541
    %v2792 = vpop.f32.mrb[0].mxu0
    %v2793 = vadd.f32 %v2008, %v2792
    %v2794 = vpop.f32.mrb[0].mxu0
    %2795 = vmatprep.mubr.f32.mxu0 %v549
    %2796 = vmatmul.mubr.f32.gmra.mrb[0].mxu0 %v548
    %v2797 = vpop.f32.mrb[0].mxu0
    %v2798 = vadd.f32 %v2013, %v2797
    %v2799 = vpop.f32.mrb[0].mxu0
    %2800 = vmatprep.mubr.f32.mxu0 %v556
    %2801 = vmatmul.mubr.f32.gmra.mrb[0].mxu0 %v555
    %v2802 = vpop.f32.mrb[0].mxu0
    %v2803 = vadd.f32 %v2018, %v2802
    %v2804 = vpop.f32.mrb[0].mxu0
    %2805 = vmatprep.mubr.f32.mxu0 %v563
    %2806 = vmatmul.mubr.f32.gmra.mrb[0].mxu0 %v562
    %v2807 = vpop.f32.mrb[0].mxu0
    %v2808 = vadd.f32 %v2023, %v2807
    %v2809 = vpop.f32.mrb[0].mxu0
    %2810 = vmatprep.mubr.f32.mxu0 %v570
    %2811 = vmatmul.mubr.f32.gmra.mrb[0].mxu0 %v569
    %v2812 = vpop.f32.mrb[0].mxu0
    %v2813 = vadd.f32 %v2028, %v2812
    %v2814 = vpop.f32.mrb[0].mxu0
    %2815 = vmatprep.mubr.f32.mxu0 %v577
    %2816 = vmatmul.mubr.f32.gmra.mrb[0].mxu0 %v576
    %v2817 = vpop.f32.mrb[0].mxu0
    %v2818 = vadd.f32 %v2033, %v2817
    %v2819 = vpop.f32.mrb[0].mxu0
    %2820 = vmatprep.mubr.f32.mxu0 %v584
    %2821 = vmatmul.mubr.f32.gmra.mrb[0].mxu0 %v583
    %v2822 = vpop.f32.mrb[0].mxu0
    %v2823 = vadd.f32 %v2038, %v2822
    %v2824 = vpop.f32.mrb[0].mxu0
    %2825 = vmatprep.mubr.f32.mxu0 %v591
    %2826 = vmatmul.mubr.f32.gmra.mrb[0].mxu0 %v590
    %v2827 = vpop.f32.mrb[0].mxu0
    %v2828 = vadd.f32 %v2043, %v2827
    %v2829 = vpop.f32.mrb[0].mxu0
    %2830 = vmatprep.mubr.f32.mxu0 %v598
    %2831 = vmatmul.mubr.f32.gmra.mrb[0].mxu0 %v597
    %v2832 = vpop.f32.mrb[0].mxu0
    %v2833 = vadd.f32 %v2048, %v2832
    %v2834 = vpop.f32.mrb[0].mxu0
    %2835 = vmatprep.mubr.f32.mxu0 %v605
    %2836 = vmatmul.mubr.f32.gmra.mrb[0].mxu0 %v604
    %v2837 = vpop.f32.mrb[0].mxu0
    %v2838 = vadd.f32 %v2053, %v2837
    %v2839 = vpop.f32.mrb[0].mxu0
    %2840 = vmatprep.mubr.f32.mxu0 %v612
    %2841 = vmatmul.mubr.f32.gmra.mrb[0].mxu0 %v611
    %v2842 = vpop.f32.mrb[0].mxu0
    %v2843 = vadd.f32 %v2058, %v2842
    %v2844 = vpop.f32.mrb[0].mxu0
    %2845 = vmatprep.mubr.f32.mxu0 %v619
    %2846 = vmatmul.mubr.f32.gmra.mrb[0].mxu0 %v618
    %v2847 = vpop.f32.mrb[0].mxu0
    %v2848 = vadd.f32 %v2063, %v2847
    %v2849 = vpop.f32.mrb[0].mxu0
    %2850 = vmatprep.mubr.f32.mxu0 %v626
    %2851 = vmatmul.mubr.f32.gmra.mrb[0].mxu0 %v625
    %v2852 = vpop.f32.mrb[0].mxu0
    %v2853 = vadd.f32 %v2068, %v2852
    %v2854 = vpop.f32.mrb[0].mxu0
    %2855 = vmatprep.mubr.f32.mxu0 %v633
    %2856 = vmatmul.mubr.f32.gmra.mrb[0].mxu0 %v632
    %v2857 = vpop.f32.mrb[0].mxu0
    %v2858 = vadd.f32 %v2073, %v2857
    %v2859 = vpop.f32.mrb[0].mxu0
    %2860 = vmatprep.mubr.f32.mxu0 %v640
    %2861 = vmatmul.mubr.f32.gmra.mrb[0].mxu0 %v639
    %v2862 = vpop.f32.mrb[0].mxu0
    %v2863 = vadd.f32 %v2078, %v2862
    %v2864 = vpop.f32.mrb[0].mxu0
    %2865 = vmatprep.mubr.f32.mxu0 %v647
    %2866 = vmatmul.mubr.f32.gmra.mrb[0].mxu0 %v646
    %v2867 = vpop.f32.mrb[0].mxu0
    %v2868 = vadd.f32 %v2083, %v2867
    %v2869 = vpop.f32.mrb[0].mxu0
    %2870 = vmatprep.mubr.f32.mxu0 %v654
    %2871 = vmatmul.mubr.f32.gmra.mrb[0].mxu0 %v653
    %v2872 = vpop.f32.mrb[0].mxu0
    %v2873 = vadd.f32 %v2088, %v2872
    %v2874 = vpop.f32.mrb[0].mxu0
    %2875 = vmatprep.mubr.f32.mxu0 %v661
    %2876 = vmatmul.mubr.f32.gmra.mrb[0].mxu0 %v660
    %v2877 = vpop.f32.mrb[0].mxu0
    %v2878 = vadd.f32 %v2093, %v2877
    %v2879 = vpop.f32.mrb[0].mxu0
    %2880 = vmatprep.mubr.f32.mxu0 %v668
    %2881 = vmatmul.mubr.f32.gmra.mrb[0].mxu0 %v667
    %v2882 = vpop.f32.mrb[0].mxu0
    %v2883 = vadd.f32 %v2098, %v2882
    %v2884 = vpop.f32.mrb[0].mxu0
    %2885 = vmatprep.mubr.f32.mxu0 %v675
    %2886 = vmatmul.mubr.f32.gmra.mrb[0].mxu0 %v674
    %v2887 = vpop.f32.mrb[0].mxu0
    %v2888 = vadd.f32 %v2103, %v2887
    %v2889 = vpop.f32.mrb[0].mxu0
    %2890 = vmatprep.mubr.f32.mxu0 %v682
    %2891 = vmatmul.mubr.f32.gmra.mrb[0].mxu0 %v681
    %v2892 = vpop.f32.mrb[0].mxu0
    %v2893 = vadd.f32 %v2108, %v2892
    %v2894 = vpop.f32.mrb[0].mxu0
    %2895 = vmatprep.mubr.f32.mxu0 %v689
    %2896 = vmatmul.mubr.f32.gmra.mrb[0].mxu0 %v688
    %v2897 = vpop.f32.mrb[0].mxu0
    %v2898 = vadd.f32 %v2113, %v2897
    %v2899 = vpop.f32.mrb[0].mxu0
    %2900 = vmatprep.mubr.f32.mxu0 %v696
    %2901 = vmatmul.mubr.f32.gmra.mrb[0].mxu0 %v695
    %v2902 = vpop.f32.mrb[0].mxu0
    %v2903 = vadd.f32 %v2118, %v2902
    %v2904 = vpop.f32.mrb[0].mxu0
    %2905 = vmatprep.mubr.f32.mxu0 %v703
    %2906 = vmatmul.mubr.f32.gmra.mrb[0].mxu0 %v702
    %v2907 = vpop.f32.mrb[0].mxu0
    %v2908 = vadd.f32 %v2123, %v2907
    %v2909 = vpop.f32.mrb[0].mxu0
    %2910 = vmatprep.mubr.f32.mxu0 %v710
    %2911 = vmatmul.mubr.f32.gmra.mrb[0].mxu0 %v709
    %v2912 = vpop.f32.mrb[0].mxu0
    %v2913 = vadd.f32 %v2128, %v2912
    %v2914 = vpop.f32.mrb[0].mxu0
    %2915 = vmatprep.mubr.f32.mxu0 %v717
    %2916 = vmatmul.mubr.f32.gmra.mrb[0].mxu0 %v716
    %v2917 = vpop.f32.mrb[0].mxu0
    %v2918 = vadd.f32 %v2133, %v2917
    %v2919 = vpop.f32.mrb[0].mxu0
    %2920 = vmatprep.mubr.f32.mxu0 %v724
    %2921 = vmatmul.mubr.f32.gmra.mrb[0].mxu0 %v723
    %v2922 = vpop.f32.mrb[0].mxu0
    %v2923 = vadd.f32 %v2138, %v2922
    %v2924 = vpop.f32.mrb[0].mxu0
    %2925 = vmatprep.mubr.f32.mxu0 %v731
    %2926 = vmatmul.mubr.f32.gmra.mrb[0].mxu0 %v730
    %v2927 = vpop.f32.mrb[0].mxu0
    %v2928 = vadd.f32 %v2143, %v2927
    %v2929 = vpop.f32.mrb[0].mxu0
    %2930 = vmatprep.mubr.f32.mxu0 %v738
    %2931 = vmatmul.mubr.f32.gmra.mrb[0].mxu0 %v737
    %v2932 = vpop.f32.mrb[0].mxu0
    %v2933 = vadd.f32 %v2148, %v2932
    %v2934 = vpop.f32.mrb[0].mxu0
    %2935 = vmatprep.mubr.f32.mxu0 %v745
    %2936 = vmatmul.mubr.f32.gmra.mrb[0].mxu0 %v744
    %v2937 = vpop.f32.mrb[0].mxu0
    %v2938 = vadd.f32 %v2153, %v2937
    %v2939 = vpop.f32.mrb[0].mxu0
    %2940 = vmatprep.mubr.f32.mxu0 %v752
    %2941 = vmatmul.mubr.f32.gmra.mrb[0].mxu0 %v751
    %v2942 = vpop.f32.mrb[0].mxu0
    %v2943 = vadd.f32 %v2158, %v2942
    %v2944 = vpop.f32.mrb[0].mxu0
    %2945 = vmatprep.mubr.f32.mxu0 %v759
    %2946 = vmatmul.mubr.f32.gmra.mrb[0].mxu0 %v758
    %v2947 = vpop.f32.mrb[0].mxu0
    %v2948 = vadd.f32 %v2163, %v2947
    %v2949 = vpop.f32.mrb[0].mxu0
    %2950 = vmatprep.mubr.f32.mxu0 %v766
    %2951 = vmatmul.mubr.f32.gmra.mrb[0].mxu0 %v765
    %v2952 = vpop.f32.mrb[0].mxu0
    %v2953 = vadd.f32 %v2168, %v2952
    %v2954 = vpop.f32.mrb[0].mxu0
    %2955 = vmatprep.mubr.f32.mxu0 %v773
    %2956 = vmatmul.mubr.f32.gmra.mrb[0].mxu0 %v772
    %v2957 = vpop.f32.mrb[0].mxu0
    %v2958 = vadd.f32 %v2173, %v2957
    %v2959 = vpop.f32.mrb[0].mxu0
    %2960 = vmatprep.mubr.f32.mxu0 %v780
    %2961 = vmatmul.mubr.f32.gmra.mrb[0].mxu0 %v779
    %v2962 = vpop.f32.mrb[0].mxu0
    %v2963 = vadd.f32 %v2178, %v2962
    %v2964 = vpop.f32.mrb[0].mxu0
    %2965 = vmatprep.mubr.f32.mxu0 %v787
    %2966 = vmatmul.mubr.f32.gmra.mrb[0].mxu0 %v786
    %v2967 = vpop.f32.mrb[0].mxu0
    %v2968 = vadd.f32 %v2183, %v2967
    %v2969 = vpop.f32.mrb[0].mxu0
    %2970 = vmatprep.mubr.f32.mxu0 %v794
    %2971 = vmatmul.mubr.f32.gmra.mrb[0].mxu0 %v793
    %v2972 = vpop.f32.mrb[0].mxu0
    %v2973 = vadd.f32 %v2188, %v2972
    %v2974 = vpop.f32.mrb[0].mxu0
    %2975 = vmatprep.mubr.f32.mxu0 %v801
    %2976 = vmatmul.mubr.f32.gmra.mrb[0].mxu0 %v800
    %v2977 = vpop.f32.mrb[0].mxu0
    %v2978 = vadd.f32 %v2193, %v2977
    %v2979 = vpop.f32.mrb[0].mxu0
    %2980 = vmatprep.mubr.f32.mxu0 %v808
    %2981 = vmatmul.mubr.f32.gmra.mrb[0].mxu0 %v807
    %v2982 = vpop.f32.mrb[0].mxu0
    %v2983 = vadd.f32 %v2198, %v2982
    %v2984 = vpop.f32.mrb[0].mxu0
    %2985 = vmatprep.mubr.f32.mxu0 %v815
    %2986 = vmatmul.mubr.f32.gmra.mrb[0].mxu0 %v814
    %v2987 = vpop.f32.mrb[0].mxu0
    %v2988 = vadd.f32 %v2203, %v2987
    %v2989 = vpop.f32.mrb[0].mxu0
    %2990 = vmatprep.mubr.f32.mxu0 %v822
    %2991 = vmatmul.mubr.f32.gmra.mrb[0].mxu0 %v821
    %v2992 = vpop.f32.mrb[0].mxu0
    %v2993 = vadd.f32 %v2208, %v2992
    %v2994 = vpop.f32.mrb[0].mxu0
    %2995 = vmatprep.mubr.f32.mxu0 %v829
    %2996 = vmatmul.mubr.f32.gmra.mrb[0].mxu0 %v828
    %v2997 = vpop.f32.mrb[0].mxu0
    %v2998 = vadd.f32 %v2213, %v2997
    %v2999 = vpop.f32.mrb[0].mxu0
    %3000 = vmatprep.mubr.f32.mxu0 %v836
    %3001 = vmatmul.mubr.f32.gmra.mrb[0].mxu0 %v835
    %v3002 = vpop.f32.mrb[0].mxu0
    %v3003 = vadd.f32 %v2218, %v3002
    %v3004 = vpop.f32.mrb[0].mxu0
    %3005 = vmatprep.mubr.f32.mxu0 %v843
    %3006 = vmatmul.mubr.f32.gmra.mrb[0].mxu0 %v842
    %v3007 = vpop.f32.mrb[0].mxu0
    %v3008 = vadd.f32 %v2223, %v3007
    %v3009 = vpop.f32.mrb[0].mxu0
    %3010 = vmatprep.mubr.f32.mxu0 %v850
    %3011 = vmatmul.mubr.f32.gmra.mrb[0].mxu0 %v849
    %v3012 = vpop.f32.mrb[0].mxu0
    %v3013 = vadd.f32 %v2228, %v3012
    %v3014 = vpop.f32.mrb[0].mxu0
    %3015 = vmatprep.mubr.f32.mxu0 %v857
    %3016 = vmatmul.mubr.f32.gmra.mrb[0].mxu0 %v856
    %v3017 = vpop.f32.mrb[0].mxu0
    %v3018 = vadd.f32 %v2233, %v3017
    %v3019 = vpop.f32.mrb[0].mxu0
    %3020 = vmatprep.mubr.f32.mxu0 %v864
    %3021 = vmatmul.mubr.f32.gmra.mrb[0].mxu0 %v863
    %v3022 = vpop.f32.mrb[0].mxu0
    %v3023 = vadd.f32 %v2238, %v3022
    %v3024 = vpop.f32.mrb[0].mxu0
    %3025 = vmatprep.mubr.f32.mxu0 %v871
    %3026 = vmatmul.mubr.f32.gmra.mrb[0].mxu0 %v870
    %v3027 = vpop.f32.mrb[0].mxu0
    %v3028 = vadd.f32 %v2243, %v3027
    %v3029 = vpop.f32.mrb[0].mxu0
    %3030 = vmatprep.mubr.f32.mxu0 %v878
    %3031 = vmatmul.mubr.f32.gmra.mrb[0].mxu0 %v877
    %v3032 = vpop.f32.mrb[0].mxu0
    %v3033 = vadd.f32 %v2248, %v3032
    %v3034 = vpop.f32.mrb[0].mxu0
    %3035 = vmatprep.mubr.f32.mxu0 %v885
    %3036 = vmatmul.mubr.f32.gmra.mrb[0].mxu0 %v884
    %v3037 = vpop.f32.mrb[0].mxu0
    %v3038 = vadd.f32 %v2253, %v3037
    %v3039 = vpop.f32.mrb[0].mxu0
    %3040 = vmatprep.mubr.f32.mxu0 %v892
    %3041 = vmatmul.mubr.f32.gmra.mrb[0].mxu0 %v891
    %v3042 = vpop.f32.mrb[0].mxu0
    %v3043 = vadd.f32 %v2258, %v3042
    %v3044 = vpop.f32.mrb[0].mxu0
    %3045 = vmatprep.mubr.f32.mxu0 %v899
    %3046 = vmatmul.mubr.f32.gmra.mrb[0].mxu0 %v898
    %v3047 = vpop.f32.mrb[0].mxu0
    %v3048 = vadd.f32 %v2263, %v3047
    %v3049 = vpop.f32.mrb[0].mxu0
    %3050 = vmatprep.mubr.f32.mxu0 %v906
    %3051 = vmatmul.mubr.f32.gmra.mrb[0].mxu0 %v905
    %v3052 = vpop.f32.mrb[0].mxu0
    %v3053 = vadd.f32 %v2268, %v3052
    %v3054 = vpop.f32.mrb[0].mxu0
    %3055 = vmatprep.mubr.f32.mxu0 %v913
    %3056 = vmatmul.mubr.f32.gmra.mrb[0].mxu0 %v912
    %v3057 = vpop.f32.mrb[0].mxu0
    %v3058 = vadd.f32 %v2273, %v3057
    %v3059 = vpop.f32.mrb[0].mxu0
    %3060 = vmatprep.mubr.f32.mxu0 %v920
    %3061 = vmatmul.mubr.f32.gmra.mrb[0].mxu0 %v919
    %v3062 = vpop.f32.mrb[0].mxu0
    %v3063 = vadd.f32 %v2278, %v3062
    %v3064 = vpop.f32.mrb[0].mxu0
    %3065 = vmatprep.mubr.f32.mxu0 %v927
    %3066 = vmatmul.mubr.f32.gmra.mrb[0].mxu0 %v926
    %v3067 = vpop.f32.mrb[0].mxu0
    %v3068 = vadd.f32 %v2283, %v3067
    %v3069 = vpop.f32.mrb[0].mxu0
    %3070 = vmatprep.mubr.f32.mxu0 %v934
    %3071 = vmatmul.mubr.f32.gmra.mrb[0].mxu0 %v933
    %v3072 = vpop.f32.mrb[0].mxu0
    %v3073 = vadd.f32 %v2288, %v3072
    %v3074 = vpop.f32.mrb[0].mxu0
    %3075 = vmatprep.mubr.f32.mxu0 %v941
    %3076 = vmatmul.mubr.f32.gmra.mrb[0].mxu0 %v940
    %v3077 = vpop.f32.mrb[0].mxu0
    %v3078 = vadd.f32 %v2293, %v3077
    %v3079 = vpop.f32.mrb[0].mxu0
    %3080 = vmatprep.mubr.f32.mxu0 %v948
    %3081 = vmatmul.mubr.f32.gmra.mrb[0].mxu0 %v947
    %v3082 = vpop.f32.mrb[0].mxu0
    %v3083 = vadd.f32 %v2298, %v3082
    %v3084 = vpop.f32.mrb[0].mxu0
    %3085 = vmatprep.mubr.f32.mxu0 %v955
    %3086 = vmatmul.mubr.f32.gmra.mrb[0].mxu0 %v954
    %v3087 = vpop.f32.mrb[0].mxu0
    %v3088 = vadd.f32 %v2303, %v3087
    %v3089 = vpop.f32.mrb[0].mxu0
    %3090 = vmatprep.mubr.f32.mxu0 %v962
    %3091 = vmatmul.mubr.f32.gmra.mrb[0].mxu0 %v961
    %v3092 = vpop.f32.mrb[0].mxu0
    %v3093 = vadd.f32 %v2308, %v3092
    %v3094 = vpop.f32.mrb[0].mxu0
    %3095 = vmatprep.mubr.f32.mxu0 %v969
    %3096 = vmatmul.mubr.f32.gmra.mrb[0].mxu0 %v968
    %v3097 = vpop.f32.mrb[0].mxu0
    %v3098 = vadd.f32 %v2313, %v3097
    %v3099 = vpop.f32.mrb[0].mxu0
    %3100 = vmatprep.mubr.f32.mxu0 %v976
    %3101 = vmatmul.mubr.f32.gmra.mrb[0].mxu0 %v975
    %v3102 = vpop.f32.mrb[0].mxu0
    %v3103 = vadd.f32 %v2318, %v3102
    %v3104 = vpop.f32.mrb[0].mxu0
    %3105 = vmatprep.mubr.f32.mxu0 %v983
    %3106 = vmatmul.mubr.f32.gmra.mrb[0].mxu0 %v982
    %v3107 = vpop.f32.mrb[0].mxu0
    %v3108 = vadd.f32 %v2323, %v3107
    %v3109 = vpop.f32.mrb[0].mxu0
    %3110 = vmatprep.mubr.f32.mxu0 %v990
    %3111 = vmatmul.mubr.f32.gmra.mrb[0].mxu0 %v989
    %v3112 = vpop.f32.mrb[0].mxu0
    %v3113 = vadd.f32 %v2328, %v3112
    %v3114 = vpop.f32.mrb[0].mxu0
    %3115 = vmatprep.mubr.f32.mxu0 %v997
    %3116 = vmatmul.mubr.f32.gmra.mrb[0].mxu0 %v996
    %v3117 = vpop.f32.mrb[0].mxu0
    %v3118 = vadd.f32 %v2333, %v3117
    %v3119 = vpop.f32.mrb[0].mxu0
    %3120 = vmatprep.mubr.f32.mxu0 %v1004
    %3121 = vmatmul.mubr.f32.gmra.mrb[0].mxu0 %v1003
    %v3122 = vpop.f32.mrb[0].mxu0
    %v3123 = vadd.f32 %v2338, %v3122
    %v3124 = vpop.f32.mrb[0].mxu0
    %3125 = vmatprep.mubr.f32.mxu0 %v1011
    %3126 = vmatmul.mubr.f32.gmra.mrb[0].mxu0 %v1010
    %v3127 = vpop.f32.mrb[0].mxu0
    %v3128 = vadd.f32 %v2343, %v3127
    %v3129 = vpop.f32.mrb[0].mxu0
    %3130 = vmatprep.mubr.f32.mxu0 %v1018
    %3131 = vmatmul.mubr.f32.gmra.mrb[0].mxu0 %v1017
    %v3132 = vpop.f32.mrb[0].mxu0
    %v3133 = vadd.f32 %v2348, %v3132
    %v3134 = vpop.f32.mrb[0].mxu0
    %3135 = vmatprep.mubr.f32.mxu0 %v1025
    %3136 = vmatmul.mubr.f32.gmra.mrb[0].mxu0 %v1024
    %v3137 = vpop.f32.mrb[0].mxu0
    %v3138 = vadd.f32 %v2353, %v3137
    %v3139 = vpop.f32.mrb[0].mxu0
    %3140 = vmatprep.mubr.f32.mxu0 %v1032
    %3141 = vmatmul.mubr.f32.gmra.mrb[0].mxu0 %v1031
    %v3142 = vpop.f32.mrb[0].mxu0
    %v3143 = vadd.f32 %v2358, %v3142
    %v3144 = vpop.f32.mrb[0].mxu0
    %3145 = vmatprep.mubr.f32.mxu0 %v1039
    %3146 = vmatmul.mubr.f32.gmra.mrb[0].mxu0 %v1038
    %v3147 = vpop.f32.mrb[0].mxu0
    %v3148 = vadd.f32 %v2363, %v3147
    %v3149 = vpop.f32.mrb[0].mxu0
    %3150 = vmatprep.mubr.f32.mxu0 %v1046
    %3151 = vmatmul.mubr.f32.gmra.mrb[0].mxu0 %v1045
    %v3152 = vpop.f32.mrb[0].mxu0
    %v3153 = vadd.f32 %v2368, %v3152
    %v3154 = vpop.f32.mrb[0].mxu0
    %3155 = vdwg.mxu0
    %3156 = vmatprep.subr.mxu0 0.0
    %3157 = vmatpush1.msra.mxu0 %v1114
    %3158 = vmatprep.subr.mxu0 0.0
    %3159 = vmatpush1.msra.mxu0 %v1115
    %3160 = vmatprep.subr.mxu0 0.0
    %3161 = vmatpush1.msra.mxu0 %v1116
    %3162 = vmatprep.subr.mxu0 0.0
    %3163 = vmatpush1.msra.mxu0 %v1117
    %3164 = vmatprep.subr.mxu0 0.0
    %3165 = vmatpush1.msra.mxu0 %v1118
    %3166 = vmatprep.subr.mxu0 0.0
    %3167 = vmatpush1.msra.mxu0 %v1119
    %3168 = vmatprep.subr.mxu0 0.0
    %3169 = vmatpush1.msra.mxu0 %v1120
    %3170 = vmatprep.subr.mxu0 0.0
    %3171 = vmatpush1.msra.mxu0 %v1121
    %3172 = vmatprep.subr.mxu0 0.0
    %3173 = vmatpush1.msra.mxu0 %v1122
    %3174 = vmatprep.subr.mxu0 0.0
    %3175 = vmatpush1.msra.mxu0 %v1123
    %3176 = vmatprep.subr.mxu0 0.0
    %3177 = vmatpush1.msra.mxu0 %v1124
    %3178 = vmatprep.subr.mxu0 0.0
    %3179 = vmatpush1.msra.mxu0 %v1125
    %3180 = vmatprep.subr.mxu0 0.0
    %3181 = vmatpush1.msra.mxu0 %v1126
    %3182 = vmatprep.subr.mxu0 0.0
    %3183 = vmatpush1.msra.mxu0 %v1127
    %3184 = vmatprep.subr.mxu0 0.0
    %3185 = vmatpush1.msra.mxu0 %v1128
    %3186 = vmatprep.subr.mxu0 0.0
    %3187 = vmatpush1.msra.mxu0 %v1129
    %3188 = vmatprep.subr.mxu0 0.0
    %3189 = vmatpush1.msra.mxu0 %v1130
    %3190 = vmatprep.subr.mxu0 0.0
    %3191 = vmatpush1.msra.mxu0 %v1131
    %3192 = vmatprep.subr.mxu0 0.0
    %3193 = vmatpush1.msra.mxu0 %v1132
    %3194 = vmatprep.subr.mxu0 0.0
    %3195 = vmatpush1.msra.mxu0 %v1133
    %3196 = vmatprep.subr.mxu0 0.0
    %3197 = vmatpush1.msra.mxu0 %v1134
    %3198 = vmatprep.subr.mxu0 0.0
    %3199 = vmatpush1.msra.mxu0 %v1135
    %3200 = vmatprep.subr.mxu0 0.0
    %3201 = vmatpush1.msra.mxu0 %v1136
    %3202 = vmatprep.subr.mxu0 0.0
    %3203 = vmatpush1.msra.mxu0 %v1137
    %3204 = vmatprep.subr.mxu0 0.0
    %3205 = vmatpush1.msra.mxu0 %v1138
    %3206 = vmatprep.subr.mxu0 0.0
    %3207 = vmatpush1.msra.mxu0 %v1139
    %3208 = vmatprep.subr.mxu0 0.0
    %3209 = vmatpush1.msra.mxu0 %v1140
    %3210 = vmatprep.subr.mxu0 0.0
    %3211 = vmatpush1.msra.mxu0 %v1141
    %3212 = vmatprep.subr.mxu0 0.0
    %3213 = vmatpush1.msra.mxu0 %v1142
    %3214 = vmatprep.subr.mxu0 0.0
    %3215 = vmatpush1.msra.mxu0 %v1143
    %3216 = vmatprep.subr.mxu0 0.0
    %3217 = vmatpush1.msra.mxu0 %v1144
    %3218 = vmatprep.subr.mxu0 0.0
    %3219 = vmatpush1.msra.mxu0 %v1145
    %3220 = vmatprep.mubr.f32.mxu0 %v47
    %3221 = vmatmul.mubr.f32.gmra.mrb[0].mxu0 %v46
    %v3222 = vpop.f32.mrb[0].mxu0
    %v3223 = vadd.f32 %v2438, %v3222
    %v3224 = vpop.f32.mrb[0].mxu0
    %3225 = vmatprep.mubr.f32.mxu0 %v54
    %3226 = vmatmul.mubr.f32.gmra.mrb[0].mxu0 %v53
    %v3227 = vpop.f32.mrb[0].mxu0
    %v3228 = vadd.f32 %v2443, %v3227
    %v3229 = vpop.f32.mrb[0].mxu0
    %3230 = vmatprep.mubr.f32.mxu0 %v61
    %3231 = vmatmul.mubr.f32.gmra.mrb[0].mxu0 %v60
    %v3232 = vpop.f32.mrb[0].mxu0
    %v3233 = vadd.f32 %v2448, %v3232
    %v3234 = vpop.f32.mrb[0].mxu0
    %3235 = vmatprep.mubr.f32.mxu0 %v68
    %3236 = vmatmul.mubr.f32.gmra.mrb[0].mxu0 %v67
    %v3237 = vpop.f32.mrb[0].mxu0
    %v3238 = vadd.f32 %v2453, %v3237
    %v3239 = vpop.f32.mrb[0].mxu0
    %3240 = vmatprep.mubr.f32.mxu0 %v75
    %3241 = vmatmul.mubr.f32.gmra.mrb[0].mxu0 %v74
    %v3242 = vpop.f32.mrb[0].mxu0
    %v3243 = vadd.f32 %v2458, %v3242
    %v3244 = vpop.f32.mrb[0].mxu0
    %3245 = vmatprep.mubr.f32.mxu0 %v82
    %3246 = vmatmul.mubr.f32.gmra.mrb[0].mxu0 %v81
    %v3247 = vpop.f32.mrb[0].mxu0
    %v3248 = vadd.f32 %v2463, %v3247
    %v3249 = vpop.f32.mrb[0].mxu0
    %3250 = vmatprep.mubr.f32.mxu0 %v89
    %3251 = vmatmul.mubr.f32.gmra.mrb[0].mxu0 %v88
    %v3252 = vpop.f32.mrb[0].mxu0
    %v3253 = vadd.f32 %v2468, %v3252
    %v3254 = vpop.f32.mrb[0].mxu0
    %3255 = vmatprep.mubr.f32.mxu0 %v96
    %3256 = vmatmul.mubr.f32.gmra.mrb[0].mxu0 %v95
    %v3257 = vpop.f32.mrb[0].mxu0
    %v3258 = vadd.f32 %v2473, %v3257
    %v3259 = vpop.f32.mrb[0].mxu0
    %3260 = vmatprep.mubr.f32.mxu0 %v103
    %3261 = vmatmul.mubr.f32.gmra.mrb[0].mxu0 %v102
    %v3262 = vpop.f32.mrb[0].mxu0
    %v3263 = vadd.f32 %v2478, %v3262
    %v3264 = vpop.f32.mrb[0].mxu0
    %3265 = vmatprep.mubr.f32.mxu0 %v110
    %3266 = vmatmul.mubr.f32.gmra.mrb[0].mxu0 %v109
    %v3267 = vpop.f32.mrb[0].mxu0
    %v3268 = vadd.f32 %v2483, %v3267
    %v3269 = vpop.f32.mrb[0].mxu0
    %3270 = vmatprep.mubr.f32.mxu0 %v117
    %3271 = vmatmul.mubr.f32.gmra.mrb[0].mxu0 %v116
    %v3272 = vpop.f32.mrb[0].mxu0
    %v3273 = vadd.f32 %v2488, %v3272
    %v3274 = vpop.f32.mrb[0].mxu0
    %3275 = vmatprep.mubr.f32.mxu0 %v124
    %3276 = vmatmul.mubr.f32.gmra.mrb[0].mxu0 %v123
    %v3277 = vpop.f32.mrb[0].mxu0
    %v3278 = vadd.f32 %v2493, %v3277
    %v3279 = vpop.f32.mrb[0].mxu0
    %3280 = vmatprep.mubr.f32.mxu0 %v131
    %3281 = vmatmul.mubr.f32.gmra.mrb[0].mxu0 %v130
    %v3282 = vpop.f32.mrb[0].mxu0
    %v3283 = vadd.f32 %v2498, %v3282
    %v3284 = vpop.f32.mrb[0].mxu0
    %3285 = vmatprep.mubr.f32.mxu0 %v138
    %3286 = vmatmul.mubr.f32.gmra.mrb[0].mxu0 %v137
    %v3287 = vpop.f32.mrb[0].mxu0
    %v3288 = vadd.f32 %v2503, %v3287
    %v3289 = vpop.f32.mrb[0].mxu0
    %3290 = vmatprep.mubr.f32.mxu0 %v145
    %3291 = vmatmul.mubr.f32.gmra.mrb[0].mxu0 %v144
    %v3292 = vpop.f32.mrb[0].mxu0
    %v3293 = vadd.f32 %v2508, %v3292
    %v3294 = vpop.f32.mrb[0].mxu0
    %3295 = vmatprep.mubr.f32.mxu0 %v152
    %3296 = vmatmul.mubr.f32.gmra.mrb[0].mxu0 %v151
    %v3297 = vpop.f32.mrb[0].mxu0
    %v3298 = vadd.f32 %v2513, %v3297
    %v3299 = vpop.f32.mrb[0].mxu0
    %3300 = vmatprep.mubr.f32.mxu0 %v159
    %3301 = vmatmul.mubr.f32.gmra.mrb[0].mxu0 %v158
    %v3302 = vpop.f32.mrb[0].mxu0
    %v3303 = vadd.f32 %v2518, %v3302
    %v3304 = vpop.f32.mrb[0].mxu0
    %3305 = vmatprep.mubr.f32.mxu0 %v166
    %3306 = vmatmul.mubr.f32.gmra.mrb[0].mxu0 %v165
    %v3307 = vpop.f32.mrb[0].mxu0
    %v3308 = vadd.f32 %v2523, %v3307
    %v3309 = vpop.f32.mrb[0].mxu0
    %3310 = vmatprep.mubr.f32.mxu0 %v173
    %3311 = vmatmul.mubr.f32.gmra.mrb[0].mxu0 %v172
    %v3312 = vpop.f32.mrb[0].mxu0
    %v3313 = vadd.f32 %v2528, %v3312
    %v3314 = vpop.f32.mrb[0].mxu0
    %3315 = vmatprep.mubr.f32.mxu0 %v180
    %3316 = vmatmul.mubr.f32.gmra.mrb[0].mxu0 %v179
    %v3317 = vpop.f32.mrb[0].mxu0
    %v3318 = vadd.f32 %v2533, %v3317
    %v3319 = vpop.f32.mrb[0].mxu0
    %3320 = vmatprep.mubr.f32.mxu0 %v187
    %3321 = vmatmul.mubr.f32.gmra.mrb[0].mxu0 %v186
    %v3322 = vpop.f32.mrb[0].mxu0
    %v3323 = vadd.f32 %v2538, %v3322
    %v3324 = vpop.f32.mrb[0].mxu0
    %3325 = vmatprep.mubr.f32.mxu0 %v194
    %3326 = vmatmul.mubr.f32.gmra.mrb[0].mxu0 %v193
    %v3327 = vpop.f32.mrb[0].mxu0
    %v3328 = vadd.f32 %v2543, %v3327
    %v3329 = vpop.f32.mrb[0].mxu0
    %3330 = vmatprep.mubr.f32.mxu0 %v201
    %3331 = vmatmul.mubr.f32.gmra.mrb[0].mxu0 %v200
    %v3332 = vpop.f32.mrb[0].mxu0
    %v3333 = vadd.f32 %v2548, %v3332
    %v3334 = vpop.f32.mrb[0].mxu0
    %3335 = vmatprep.mubr.f32.mxu0 %v208
    %3336 = vmatmul.mubr.f32.gmra.mrb[0].mxu0 %v207
    %v3337 = vpop.f32.mrb[0].mxu0
    %v3338 = vadd.f32 %v2553, %v3337
    %v3339 = vpop.f32.mrb[0].mxu0
    %3340 = vmatprep.mubr.f32.mxu0 %v215
    %3341 = vmatmul.mubr.f32.gmra.mrb[0].mxu0 %v214
    %v3342 = vpop.f32.mrb[0].mxu0
    %v3343 = vadd.f32 %v2558, %v3342
    %v3344 = vpop.f32.mrb[0].mxu0
    %3345 = vmatprep.mubr.f32.mxu0 %v222
    %3346 = vmatmul.mubr.f32.gmra.mrb[0].mxu0 %v221
    %v3347 = vpop.f32.mrb[0].mxu0
    %v3348 = vadd.f32 %v2563, %v3347
    %v3349 = vpop.f32.mrb[0].mxu0
    %3350 = vmatprep.mubr.f32.mxu0 %v229
    %3351 = vmatmul.mubr.f32.gmra.mrb[0].mxu0 %v228
    %v3352 = vpop.f32.mrb[0].mxu0
    %v3353 = vadd.f32 %v2568, %v3352
    %v3354 = vpop.f32.mrb[0].mxu0
    %3355 = vmatprep.mubr.f32.mxu0 %v236
    %3356 = vmatmul.mubr.f32.gmra.mrb[0].mxu0 %v235
    %v3357 = vpop.f32.mrb[0].mxu0
    %v3358 = vadd.f32 %v2573, %v3357
    %v3359 = vpop.f32.mrb[0].mxu0
    %3360 = vmatprep.mubr.f32.mxu0 %v243
    %3361 = vmatmul.mubr.f32.gmra.mrb[0].mxu0 %v242
    %v3362 = vpop.f32.mrb[0].mxu0
    %v3363 = vadd.f32 %v2578, %v3362
    %v3364 = vpop.f32.mrb[0].mxu0
    %3365 = vmatprep.mubr.f32.mxu0 %v250
    %3366 = vmatmul.mubr.f32.gmra.mrb[0].mxu0 %v249
    %v3367 = vpop.f32.mrb[0].mxu0
    %v3368 = vadd.f32 %v2583, %v3367
    %v3369 = vpop.f32.mrb[0].mxu0
    %3370 = vmatprep.mubr.f32.mxu0 %v257
    %3371 = vmatmul.mubr.f32.gmra.mrb[0].mxu0 %v256
    %v3372 = vpop.f32.mrb[0].mxu0
    %v3373 = vadd.f32 %v2588, %v3372
    %v3374 = vpop.f32.mrb[0].mxu0
    %3375 = vmatprep.mubr.f32.mxu0 %v264
    %3376 = vmatmul.mubr.f32.gmra.mrb[0].mxu0 %v263
    %v3377 = vpop.f32.mrb[0].mxu0
    %v3378 = vadd.f32 %v2593, %v3377
    %v3379 = vpop.f32.mrb[0].mxu0
    %3380 = vmatprep.mubr.f32.mxu0 %v271
    %3381 = vmatmul.mubr.f32.gmra.mrb[0].mxu0 %v270
    %v3382 = vpop.f32.mrb[0].mxu0
    %v3383 = vadd.f32 %v2598, %v3382
    %v3384 = vpop.f32.mrb[0].mxu0
    %3385 = vmatprep.mubr.f32.mxu0 %v278
    %3386 = vmatmul.mubr.f32.gmra.mrb[0].mxu0 %v277
    %v3387 = vpop.f32.mrb[0].mxu0
    %v3388 = vadd.f32 %v2603, %v3387
    %v3389 = vpop.f32.mrb[0].mxu0
    %3390 = vmatprep.mubr.f32.mxu0 %v285
    %3391 = vmatmul.mubr.f32.gmra.mrb[0].mxu0 %v284
    %v3392 = vpop.f32.mrb[0].mxu0
    %v3393 = vadd.f32 %v2608, %v3392
    %v3394 = vpop.f32.mrb[0].mxu0
    %3395 = vmatprep.mubr.f32.mxu0 %v292
    %3396 = vmatmul.mubr.f32.gmra.mrb[0].mxu0 %v291
    %v3397 = vpop.f32.mrb[0].mxu0
    %v3398 = vadd.f32 %v2613, %v3397
    %v3399 = vpop.f32.mrb[0].mxu0
    %3400 = vmatprep.mubr.f32.mxu0 %v299
    %3401 = vmatmul.mubr.f32.gmra.mrb[0].mxu0 %v298
    %v3402 = vpop.f32.mrb[0].mxu0
    %v3403 = vadd.f32 %v2618, %v3402
    %v3404 = vpop.f32.mrb[0].mxu0
    %3405 = vmatprep.mubr.f32.mxu0 %v306
    %3406 = vmatmul.mubr.f32.gmra.mrb[0].mxu0 %v305
    %v3407 = vpop.f32.mrb[0].mxu0
    %v3408 = vadd.f32 %v2623, %v3407
    %v3409 = vpop.f32.mrb[0].mxu0
    %3410 = vmatprep.mubr.f32.mxu0 %v313
    %3411 = vmatmul.mubr.f32.gmra.mrb[0].mxu0 %v312
    %v3412 = vpop.f32.mrb[0].mxu0
    %v3413 = vadd.f32 %v2628, %v3412
    %v3414 = vpop.f32.mrb[0].mxu0
    %3415 = vmatprep.mubr.f32.mxu0 %v320
    %3416 = vmatmul.mubr.f32.gmra.mrb[0].mxu0 %v319
    %v3417 = vpop.f32.mrb[0].mxu0
    %v3418 = vadd.f32 %v2633, %v3417
    %v3419 = vpop.f32.mrb[0].mxu0
    %3420 = vmatprep.mubr.f32.mxu0 %v327
    %3421 = vmatmul.mubr.f32.gmra.mrb[0].mxu0 %v326
    %v3422 = vpop.f32.mrb[0].mxu0
    %v3423 = vadd.f32 %v2638, %v3422
    %v3424 = vpop.f32.mrb[0].mxu0
    %3425 = vmatprep.mubr.f32.mxu0 %v334
    %3426 = vmatmul.mubr.f32.gmra.mrb[0].mxu0 %v333
    %v3427 = vpop.f32.mrb[0].mxu0
    %v3428 = vadd.f32 %v2643, %v3427
    %v3429 = vpop.f32.mrb[0].mxu0
    %3430 = vmatprep.mubr.f32.mxu0 %v341
    %3431 = vmatmul.mubr.f32.gmra.mrb[0].mxu0 %v340
    %v3432 = vpop.f32.mrb[0].mxu0
    %v3433 = vadd.f32 %v2648, %v3432
    %v3434 = vpop.f32.mrb[0].mxu0
    %3435 = vmatprep.mubr.f32.mxu0 %v348
    %3436 = vmatmul.mubr.f32.gmra.mrb[0].mxu0 %v347
    %v3437 = vpop.f32.mrb[0].mxu0
    %v3438 = vadd.f32 %v2653, %v3437
    %v3439 = vpop.f32.mrb[0].mxu0
    %3440 = vmatprep.mubr.f32.mxu0 %v355
    %3441 = vmatmul.mubr.f32.gmra.mrb[0].mxu0 %v354
    %v3442 = vpop.f32.mrb[0].mxu0
    %v3443 = vadd.f32 %v2658, %v3442
    %v3444 = vpop.f32.mrb[0].mxu0
    %3445 = vmatprep.mubr.f32.mxu0 %v362
    %3446 = vmatmul.mubr.f32.gmra.mrb[0].mxu0 %v361
    %v3447 = vpop.f32.mrb[0].mxu0
    %v3448 = vadd.f32 %v2663, %v3447
    %v3449 = vpop.f32.mrb[0].mxu0
    %3450 = vmatprep.mubr.f32.mxu0 %v369
    %3451 = vmatmul.mubr.f32.gmra.mrb[0].mxu0 %v368
    %v3452 = vpop.f32.mrb[0].mxu0
    %v3453 = vadd.f32 %v2668, %v3452
    %v3454 = vpop.f32.mrb[0].mxu0
    %3455 = vmatprep.mubr.f32.mxu0 %v376
    %3456 = vmatmul.mubr.f32.gmra.mrb[0].mxu0 %v375
    %v3457 = vpop.f32.mrb[0].mxu0
    %v3458 = vadd.f32 %v2673, %v3457
    %v3459 = vpop.f32.mrb[0].mxu0
    %3460 = vmatprep.mubr.f32.mxu0 %v383
    %3461 = vmatmul.mubr.f32.gmra.mrb[0].mxu0 %v382
    %v3462 = vpop.f32.mrb[0].mxu0
    %v3463 = vadd.f32 %v2678, %v3462
    %v3464 = vpop.f32.mrb[0].mxu0
    %3465 = vmatprep.mubr.f32.mxu0 %v390
    %3466 = vmatmul.mubr.f32.gmra.mrb[0].mxu0 %v389
    %v3467 = vpop.f32.mrb[0].mxu0
    %v3468 = vadd.f32 %v2683, %v3467
    %v3469 = vpop.f32.mrb[0].mxu0
    %3470 = vmatprep.mubr.f32.mxu0 %v397
    %3471 = vmatmul.mubr.f32.gmra.mrb[0].mxu0 %v396
    %v3472 = vpop.f32.mrb[0].mxu0
    %v3473 = vadd.f32 %v2688, %v3472
    %v3474 = vpop.f32.mrb[0].mxu0
    %3475 = vmatprep.mubr.f32.mxu0 %v404
    %3476 = vmatmul.mubr.f32.gmra.mrb[0].mxu0 %v403
    %v3477 = vpop.f32.mrb[0].mxu0
    %v3478 = vadd.f32 %v2693, %v3477
    %v3479 = vpop.f32.mrb[0].mxu0
    %3480 = vmatprep.mubr.f32.mxu0 %v411
    %3481 = vmatmul.mubr.f32.gmra.mrb[0].mxu0 %v410
    %v3482 = vpop.f32.mrb[0].mxu0
    %v3483 = vadd.f32 %v2698, %v3482
    %v3484 = vpop.f32.mrb[0].mxu0
    %3485 = vmatprep.mubr.f32.mxu0 %v418
    %3486 = vmatmul.mubr.f32.gmra.mrb[0].mxu0 %v417
    %v3487 = vpop.f32.mrb[0].mxu0
    %v3488 = vadd.f32 %v2703, %v3487
    %v3489 = vpop.f32.mrb[0].mxu0
    %3490 = vmatprep.mubr.f32.mxu0 %v425
    %3491 = vmatmul.mubr.f32.gmra.mrb[0].mxu0 %v424
    %v3492 = vpop.f32.mrb[0].mxu0
    %v3493 = vadd.f32 %v2708, %v3492
    %v3494 = vpop.f32.mrb[0].mxu0
    %3495 = vmatprep.mubr.f32.mxu0 %v432
    %3496 = vmatmul.mubr.f32.gmra.mrb[0].mxu0 %v431
    %v3497 = vpop.f32.mrb[0].mxu0
    %v3498 = vadd.f32 %v2713, %v3497
    %v3499 = vpop.f32.mrb[0].mxu0
    %3500 = vmatprep.mubr.f32.mxu0 %v439
    %3501 = vmatmul.mubr.f32.gmra.mrb[0].mxu0 %v438
    %v3502 = vpop.f32.mrb[0].mxu0
    %v3503 = vadd.f32 %v2718, %v3502
    %v3504 = vpop.f32.mrb[0].mxu0
    %3505 = vmatprep.mubr.f32.mxu0 %v446
    %3506 = vmatmul.mubr.f32.gmra.mrb[0].mxu0 %v445
    %v3507 = vpop.f32.mrb[0].mxu0
    %v3508 = vadd.f32 %v2723, %v3507
    %v3509 = vpop.f32.mrb[0].mxu0
    %3510 = vmatprep.mubr.f32.mxu0 %v453
    %3511 = vmatmul.mubr.f32.gmra.mrb[0].mxu0 %v452
    %v3512 = vpop.f32.mrb[0].mxu0
    %v3513 = vadd.f32 %v2728, %v3512
    %v3514 = vpop.f32.mrb[0].mxu0
    %3515 = vmatprep.mubr.f32.mxu0 %v460
    %3516 = vmatmul.mubr.f32.gmra.mrb[0].mxu0 %v459
    %v3517 = vpop.f32.mrb[0].mxu0
    %v3518 = vadd.f32 %v2733, %v3517
    %v3519 = vpop.f32.mrb[0].mxu0
    %3520 = vmatprep.mubr.f32.mxu0 %v467
    %3521 = vmatmul.mubr.f32.gmra.mrb[0].mxu0 %v466
    %v3522 = vpop.f32.mrb[0].mxu0
    %v3523 = vadd.f32 %v2738, %v3522
    %v3524 = vpop.f32.mrb[0].mxu0
    %3525 = vmatprep.mubr.f32.mxu0 %v474
    %3526 = vmatmul.mubr.f32.gmra.mrb[0].mxu0 %v473
    %v3527 = vpop.f32.mrb[0].mxu0
    %v3528 = vadd.f32 %v2743, %v3527
    %v3529 = vpop.f32.mrb[0].mxu0
    %3530 = vmatprep.mubr.f32.mxu0 %v481
    %3531 = vmatmul.mubr.f32.gmra.mrb[0].mxu0 %v480
    %v3532 = vpop.f32.mrb[0].mxu0
    %v3533 = vadd.f32 %v2748, %v3532
    %v3534 = vpop.f32.mrb[0].mxu0
    %3535 = vmatprep.mubr.f32.mxu0 %v488
    %3536 = vmatmul.mubr.f32.gmra.mrb[0].mxu0 %v487
    %v3537 = vpop.f32.mrb[0].mxu0
    %v3538 = vadd.f32 %v2753, %v3537
    %v3539 = vpop.f32.mrb[0].mxu0
    %3540 = vmatprep.mubr.f32.mxu0 %v495
    %3541 = vmatmul.mubr.f32.gmra.mrb[0].mxu0 %v494
    %v3542 = vpop.f32.mrb[0].mxu0
    %v3543 = vadd.f32 %v2758, %v3542
    %v3544 = vpop.f32.mrb[0].mxu0
    %3545 = vmatprep.mubr.f32.mxu0 %v502
    %3546 = vmatmul.mubr.f32.gmra.mrb[0].mxu0 %v501
    %v3547 = vpop.f32.mrb[0].mxu0
    %v3548 = vadd.f32 %v2763, %v3547
    %v3549 = vpop.f32.mrb[0].mxu0
    %3550 = vmatprep.mubr.f32.mxu0 %v509
    %3551 = vmatmul.mubr.f32.gmra.mrb[0].mxu0 %v508
    %v3552 = vpop.f32.mrb[0].mxu0
    %v3553 = vadd.f32 %v2768, %v3552
    %v3554 = vpop.f32.mrb[0].mxu0
    %3555 = vmatprep.mubr.f32.mxu0 %v516
    %3556 = vmatmul.mubr.f32.gmra.mrb[0].mxu0 %v515
    %v3557 = vpop.f32.mrb[0].mxu0
    %v3558 = vadd.f32 %v2773, %v3557
    %v3559 = vpop.f32.mrb[0].mxu0
    %3560 = vmatprep.mubr.f32.mxu0 %v523
    %3561 = vmatmul.mubr.f32.gmra.mrb[0].mxu0 %v522
    %v3562 = vpop.f32.mrb[0].mxu0
    %v3563 = vadd.f32 %v2778, %v3562
    %v3564 = vpop.f32.mrb[0].mxu0
    %3565 = vmatprep.mubr.f32.mxu0 %v530
    %3566 = vmatmul.mubr.f32.gmra.mrb[0].mxu0 %v529
    %v3567 = vpop.f32.mrb[0].mxu0
    %v3568 = vadd.f32 %v2783, %v3567
    %v3569 = vpop.f32.mrb[0].mxu0
    %3570 = vmatprep.mubr.f32.mxu0 %v537
    %3571 = vmatmul.mubr.f32.gmra.mrb[0].mxu0 %v536
    %v3572 = vpop.f32.mrb[0].mxu0
    %v3573 = vadd.f32 %v2788, %v3572
    %v3574 = vpop.f32.mrb[0].mxu0
    %3575 = vmatprep.mubr.f32.mxu0 %v544
    %3576 = vmatmul.mubr.f32.gmra.mrb[0].mxu0 %v543
    %v3577 = vpop.f32.mrb[0].mxu0
    %v3578 = vadd.f32 %v2793, %v3577
    %v3579 = vpop.f32.mrb[0].mxu0
    %3580 = vmatprep.mubr.f32.mxu0 %v551
    %3581 = vmatmul.mubr.f32.gmra.mrb[0].mxu0 %v550
    %v3582 = vpop.f32.mrb[0].mxu0
    %v3583 = vadd.f32 %v2798, %v3582
    %v3584 = vpop.f32.mrb[0].mxu0
    %3585 = vmatprep.mubr.f32.mxu0 %v558
    %3586 = vmatmul.mubr.f32.gmra.mrb[0].mxu0 %v557
    %v3587 = vpop.f32.mrb[0].mxu0
    %v3588 = vadd.f32 %v2803, %v3587
    %v3589 = vpop.f32.mrb[0].mxu0
    %3590 = vmatprep.mubr.f32.mxu0 %v565
    %3591 = vmatmul.mubr.f32.gmra.mrb[0].mxu0 %v564
    %v3592 = vpop.f32.mrb[0].mxu0
    %v3593 = vadd.f32 %v2808, %v3592
    %v3594 = vpop.f32.mrb[0].mxu0
    %3595 = vmatprep.mubr.f32.mxu0 %v572
    %3596 = vmatmul.mubr.f32.gmra.mrb[0].mxu0 %v571
    %v3597 = vpop.f32.mrb[0].mxu0
    %v3598 = vadd.f32 %v2813, %v3597
    %v3599 = vpop.f32.mrb[0].mxu0
    %3600 = vmatprep.mubr.f32.mxu0 %v579
    %3601 = vmatmul.mubr.f32.gmra.mrb[0].mxu0 %v578
    %v3602 = vpop.f32.mrb[0].mxu0
    %v3603 = vadd.f32 %v2818, %v3602
    %v3604 = vpop.f32.mrb[0].mxu0
    %3605 = vmatprep.mubr.f32.mxu0 %v586
    %3606 = vmatmul.mubr.f32.gmra.mrb[0].mxu0 %v585
    %v3607 = vpop.f32.mrb[0].mxu0
    %v3608 = vadd.f32 %v2823, %v3607
    %v3609 = vpop.f32.mrb[0].mxu0
    %3610 = vmatprep.mubr.f32.mxu0 %v593
    %3611 = vmatmul.mubr.f32.gmra.mrb[0].mxu0 %v592
    %v3612 = vpop.f32.mrb[0].mxu0
    %v3613 = vadd.f32 %v2828, %v3612
    %v3614 = vpop.f32.mrb[0].mxu0
    %3615 = vmatprep.mubr.f32.mxu0 %v600
    %3616 = vmatmul.mubr.f32.gmra.mrb[0].mxu0 %v599
    %v3617 = vpop.f32.mrb[0].mxu0
    %v3618 = vadd.f32 %v2833, %v3617
    %v3619 = vpop.f32.mrb[0].mxu0
    %3620 = vmatprep.mubr.f32.mxu0 %v607
    %3621 = vmatmul.mubr.f32.gmra.mrb[0].mxu0 %v606
    %v3622 = vpop.f32.mrb[0].mxu0
    %v3623 = vadd.f32 %v2838, %v3622
    %v3624 = vpop.f32.mrb[0].mxu0
    %3625 = vmatprep.mubr.f32.mxu0 %v614
    %3626 = vmatmul.mubr.f32.gmra.mrb[0].mxu0 %v613
    %v3627 = vpop.f32.mrb[0].mxu0
    %v3628 = vadd.f32 %v2843, %v3627
    %v3629 = vpop.f32.mrb[0].mxu0
    %3630 = vmatprep.mubr.f32.mxu0 %v621
    %3631 = vmatmul.mubr.f32.gmra.mrb[0].mxu0 %v620
    %v3632 = vpop.f32.mrb[0].mxu0
    %v3633 = vadd.f32 %v2848, %v3632
    %v3634 = vpop.f32.mrb[0].mxu0
    %3635 = vmatprep.mubr.f32.mxu0 %v628
    %3636 = vmatmul.mubr.f32.gmra.mrb[0].mxu0 %v627
    %v3637 = vpop.f32.mrb[0].mxu0
    %v3638 = vadd.f32 %v2853, %v3637
    %v3639 = vpop.f32.mrb[0].mxu0
    %3640 = vmatprep.mubr.f32.mxu0 %v635
    %3641 = vmatmul.mubr.f32.gmra.mrb[0].mxu0 %v634
    %v3642 = vpop.f32.mrb[0].mxu0
    %v3643 = vadd.f32 %v2858, %v3642
    %v3644 = vpop.f32.mrb[0].mxu0
    %3645 = vmatprep.mubr.f32.mxu0 %v642
    %3646 = vmatmul.mubr.f32.gmra.mrb[0].mxu0 %v641
    %v3647 = vpop.f32.mrb[0].mxu0
    %v3648 = vadd.f32 %v2863, %v3647
    %v3649 = vpop.f32.mrb[0].mxu0
    %3650 = vmatprep.mubr.f32.mxu0 %v649
    %3651 = vmatmul.mubr.f32.gmra.mrb[0].mxu0 %v648
    %v3652 = vpop.f32.mrb[0].mxu0
    %v3653 = vadd.f32 %v2868, %v3652
    %v3654 = vpop.f32.mrb[0].mxu0
    %3655 = vmatprep.mubr.f32.mxu0 %v656
    %3656 = vmatmul.mubr.f32.gmra.mrb[0].mxu0 %v655
    %v3657 = vpop.f32.mrb[0].mxu0
    %v3658 = vadd.f32 %v2873, %v3657
    %v3659 = vpop.f32.mrb[0].mxu0
    %3660 = vmatprep.mubr.f32.mxu0 %v663
    %3661 = vmatmul.mubr.f32.gmra.mrb[0].mxu0 %v662
    %v3662 = vpop.f32.mrb[0].mxu0
    %v3663 = vadd.f32 %v2878, %v3662
    %v3664 = vpop.f32.mrb[0].mxu0
    %3665 = vmatprep.mubr.f32.mxu0 %v670
    %3666 = vmatmul.mubr.f32.gmra.mrb[0].mxu0 %v669
    %v3667 = vpop.f32.mrb[0].mxu0
    %v3668 = vadd.f32 %v2883, %v3667
    %v3669 = vpop.f32.mrb[0].mxu0
    %3670 = vmatprep.mubr.f32.mxu0 %v677
    %3671 = vmatmul.mubr.f32.gmra.mrb[0].mxu0 %v676
    %v3672 = vpop.f32.mrb[0].mxu0
    %v3673 = vadd.f32 %v2888, %v3672
    %v3674 = vpop.f32.mrb[0].mxu0
    %3675 = vmatprep.mubr.f32.mxu0 %v684
    %3676 = vmatmul.mubr.f32.gmra.mrb[0].mxu0 %v683
    %v3677 = vpop.f32.mrb[0].mxu0
    %v3678 = vadd.f32 %v2893, %v3677
    %v3679 = vpop.f32.mrb[0].mxu0
    %3680 = vmatprep.mubr.f32.mxu0 %v691
    %3681 = vmatmul.mubr.f32.gmra.mrb[0].mxu0 %v690
    %v3682 = vpop.f32.mrb[0].mxu0
    %v3683 = vadd.f32 %v2898, %v3682
    %v3684 = vpop.f32.mrb[0].mxu0
    %3685 = vmatprep.mubr.f32.mxu0 %v698
    %3686 = vmatmul.mubr.f32.gmra.mrb[0].mxu0 %v697
    %v3687 = vpop.f32.mrb[0].mxu0
    %v3688 = vadd.f32 %v2903, %v3687
    %v3689 = vpop.f32.mrb[0].mxu0
    %3690 = vmatprep.mubr.f32.mxu0 %v705
    %3691 = vmatmul.mubr.f32.gmra.mrb[0].mxu0 %v704
    %v3692 = vpop.f32.mrb[0].mxu0
    %v3693 = vadd.f32 %v2908, %v3692
    %v3694 = vpop.f32.mrb[0].mxu0
    %3695 = vmatprep.mubr.f32.mxu0 %v712
    %3696 = vmatmul.mubr.f32.gmra.mrb[0].mxu0 %v711
    %v3697 = vpop.f32.mrb[0].mxu0
    %v3698 = vadd.f32 %v2913, %v3697
    %v3699 = vpop.f32.mrb[0].mxu0
    %3700 = vmatprep.mubr.f32.mxu0 %v719
    %3701 = vmatmul.mubr.f32.gmra.mrb[0].mxu0 %v718
    %v3702 = vpop.f32.mrb[0].mxu0
    %v3703 = vadd.f32 %v2918, %v3702
    %v3704 = vpop.f32.mrb[0].mxu0
    %3705 = vmatprep.mubr.f32.mxu0 %v726
    %3706 = vmatmul.mubr.f32.gmra.mrb[0].mxu0 %v725
    %v3707 = vpop.f32.mrb[0].mxu0
    %v3708 = vadd.f32 %v2923, %v3707
    %v3709 = vpop.f32.mrb[0].mxu0
    %3710 = vmatprep.mubr.f32.mxu0 %v733
    %3711 = vmatmul.mubr.f32.gmra.mrb[0].mxu0 %v732
    %v3712 = vpop.f32.mrb[0].mxu0
    %v3713 = vadd.f32 %v2928, %v3712
    %v3714 = vpop.f32.mrb[0].mxu0
    %3715 = vmatprep.mubr.f32.mxu0 %v740
    %3716 = vmatmul.mubr.f32.gmra.mrb[0].mxu0 %v739
    %v3717 = vpop.f32.mrb[0].mxu0
    %v3718 = vadd.f32 %v2933, %v3717
    %v3719 = vpop.f32.mrb[0].mxu0
    %3720 = vmatprep.mubr.f32.mxu0 %v747
    %3721 = vmatmul.mubr.f32.gmra.mrb[0].mxu0 %v746
    %v3722 = vpop.f32.mrb[0].mxu0
    %v3723 = vadd.f32 %v2938, %v3722
    %v3724 = vpop.f32.mrb[0].mxu0
    %3725 = vmatprep.mubr.f32.mxu0 %v754
    %3726 = vmatmul.mubr.f32.gmra.mrb[0].mxu0 %v753
    %v3727 = vpop.f32.mrb[0].mxu0
    %v3728 = vadd.f32 %v2943, %v3727
    %v3729 = vpop.f32.mrb[0].mxu0
    %3730 = vmatprep.mubr.f32.mxu0 %v761
    %3731 = vmatmul.mubr.f32.gmra.mrb[0].mxu0 %v760
    %v3732 = vpop.f32.mrb[0].mxu0
    %v3733 = vadd.f32 %v2948, %v3732
    %v3734 = vpop.f32.mrb[0].mxu0
    %3735 = vmatprep.mubr.f32.mxu0 %v768
    %3736 = vmatmul.mubr.f32.gmra.mrb[0].mxu0 %v767
    %v3737 = vpop.f32.mrb[0].mxu0
    %v3738 = vadd.f32 %v2953, %v3737
    %v3739 = vpop.f32.mrb[0].mxu0
    %3740 = vmatprep.mubr.f32.mxu0 %v775
    %3741 = vmatmul.mubr.f32.gmra.mrb[0].mxu0 %v774
    %v3742 = vpop.f32.mrb[0].mxu0
    %v3743 = vadd.f32 %v2958, %v3742
    %v3744 = vpop.f32.mrb[0].mxu0
    %3745 = vmatprep.mubr.f32.mxu0 %v782
    %3746 = vmatmul.mubr.f32.gmra.mrb[0].mxu0 %v781
    %v3747 = vpop.f32.mrb[0].mxu0
    %v3748 = vadd.f32 %v2963, %v3747
    %v3749 = vpop.f32.mrb[0].mxu0
    %3750 = vmatprep.mubr.f32.mxu0 %v789
    %3751 = vmatmul.mubr.f32.gmra.mrb[0].mxu0 %v788
    %v3752 = vpop.f32.mrb[0].mxu0
    %v3753 = vadd.f32 %v2968, %v3752
    %v3754 = vpop.f32.mrb[0].mxu0
    %3755 = vmatprep.mubr.f32.mxu0 %v796
    %3756 = vmatmul.mubr.f32.gmra.mrb[0].mxu0 %v795
    %v3757 = vpop.f32.mrb[0].mxu0
    %v3758 = vadd.f32 %v2973, %v3757
    %v3759 = vpop.f32.mrb[0].mxu0
    %3760 = vmatprep.mubr.f32.mxu0 %v803
    %3761 = vmatmul.mubr.f32.gmra.mrb[0].mxu0 %v802
    %v3762 = vpop.f32.mrb[0].mxu0
    %v3763 = vadd.f32 %v2978, %v3762
    %v3764 = vpop.f32.mrb[0].mxu0
    %3765 = vmatprep.mubr.f32.mxu0 %v810
    %3766 = vmatmul.mubr.f32.gmra.mrb[0].mxu0 %v809
    %v3767 = vpop.f32.mrb[0].mxu0
    %v3768 = vadd.f32 %v2983, %v3767
    %v3769 = vpop.f32.mrb[0].mxu0
    %3770 = vmatprep.mubr.f32.mxu0 %v817
    %3771 = vmatmul.mubr.f32.gmra.mrb[0].mxu0 %v816
    %v3772 = vpop.f32.mrb[0].mxu0
    %v3773 = vadd.f32 %v2988, %v3772
    %v3774 = vpop.f32.mrb[0].mxu0
    %3775 = vmatprep.mubr.f32.mxu0 %v824
    %3776 = vmatmul.mubr.f32.gmra.mrb[0].mxu0 %v823
    %v3777 = vpop.f32.mrb[0].mxu0
    %v3778 = vadd.f32 %v2993, %v3777
    %v3779 = vpop.f32.mrb[0].mxu0
    %3780 = vmatprep.mubr.f32.mxu0 %v831
    %3781 = vmatmul.mubr.f32.gmra.mrb[0].mxu0 %v830
    %v3782 = vpop.f32.mrb[0].mxu0
    %v3783 = vadd.f32 %v2998, %v3782
    %v3784 = vpop.f32.mrb[0].mxu0
    %3785 = vmatprep.mubr.f32.mxu0 %v838
    %3786 = vmatmul.mubr.f32.gmra.mrb[0].mxu0 %v837
    %v3787 = vpop.f32.mrb[0].mxu0
    %v3788 = vadd.f32 %v3003, %v3787
    %v3789 = vpop.f32.mrb[0].mxu0
    %3790 = vmatprep.mubr.f32.mxu0 %v845
    %3791 = vmatmul.mubr.f32.gmra.mrb[0].mxu0 %v844
    %v3792 = vpop.f32.mrb[0].mxu0
    %v3793 = vadd.f32 %v3008, %v3792
    %v3794 = vpop.f32.mrb[0].mxu0
    %3795 = vmatprep.mubr.f32.mxu0 %v852
    %3796 = vmatmul.mubr.f32.gmra.mrb[0].mxu0 %v851
    %v3797 = vpop.f32.mrb[0].mxu0
    %v3798 = vadd.f32 %v3013, %v3797
    %v3799 = vpop.f32.mrb[0].mxu0
    %3800 = vmatprep.mubr.f32.mxu0 %v859
    %3801 = vmatmul.mubr.f32.gmra.mrb[0].mxu0 %v858
    %v3802 = vpop.f32.mrb[0].mxu0
    %v3803 = vadd.f32 %v3018, %v3802
    %v3804 = vpop.f32.mrb[0].mxu0
    %3805 = vmatprep.mubr.f32.mxu0 %v866
    %3806 = vmatmul.mubr.f32.gmra.mrb[0].mxu0 %v865
    %v3807 = vpop.f32.mrb[0].mxu0
    %v3808 = vadd.f32 %v3023, %v3807
    %v3809 = vpop.f32.mrb[0].mxu0
    %3810 = vmatprep.mubr.f32.mxu0 %v873
    %3811 = vmatmul.mubr.f32.gmra.mrb[0].mxu0 %v872
    %v3812 = vpop.f32.mrb[0].mxu0
    %v3813 = vadd.f32 %v3028, %v3812
    %v3814 = vpop.f32.mrb[0].mxu0
    %3815 = vmatprep.mubr.f32.mxu0 %v880
    %3816 = vmatmul.mubr.f32.gmra.mrb[0].mxu0 %v879
    %v3817 = vpop.f32.mrb[0].mxu0
    %v3818 = vadd.f32 %v3033, %v3817
    %v3819 = vpop.f32.mrb[0].mxu0
    %3820 = vmatprep.mubr.f32.mxu0 %v887
    %3821 = vmatmul.mubr.f32.gmra.mrb[0].mxu0 %v886
    %v3822 = vpop.f32.mrb[0].mxu0
    %v3823 = vadd.f32 %v3038, %v3822
    %v3824 = vpop.f32.mrb[0].mxu0
    %3825 = vmatprep.mubr.f32.mxu0 %v894
    %3826 = vmatmul.mubr.f32.gmra.mrb[0].mxu0 %v893
    %v3827 = vpop.f32.mrb[0].mxu0
    %v3828 = vadd.f32 %v3043, %v3827
    %v3829 = vpop.f32.mrb[0].mxu0
    %3830 = vmatprep.mubr.f32.mxu0 %v901
    %3831 = vmatmul.mubr.f32.gmra.mrb[0].mxu0 %v900
    %v3832 = vpop.f32.mrb[0].mxu0
    %v3833 = vadd.f32 %v3048, %v3832
    %v3834 = vpop.f32.mrb[0].mxu0
    %3835 = vmatprep.mubr.f32.mxu0 %v908
    %3836 = vmatmul.mubr.f32.gmra.mrb[0].mxu0 %v907
    %v3837 = vpop.f32.mrb[0].mxu0
    %v3838 = vadd.f32 %v3053, %v3837
    %v3839 = vpop.f32.mrb[0].mxu0
    %3840 = vmatprep.mubr.f32.mxu0 %v915
    %3841 = vmatmul.mubr.f32.gmra.mrb[0].mxu0 %v914
    %v3842 = vpop.f32.mrb[0].mxu0
    %v3843 = vadd.f32 %v3058, %v3842
    %v3844 = vpop.f32.mrb[0].mxu0
    %3845 = vmatprep.mubr.f32.mxu0 %v922
    %3846 = vmatmul.mubr.f32.gmra.mrb[0].mxu0 %v921
    %v3847 = vpop.f32.mrb[0].mxu0
    %v3848 = vadd.f32 %v3063, %v3847
    %v3849 = vpop.f32.mrb[0].mxu0
    %3850 = vmatprep.mubr.f32.mxu0 %v929
    %3851 = vmatmul.mubr.f32.gmra.mrb[0].mxu0 %v928
    %v3852 = vpop.f32.mrb[0].mxu0
    %v3853 = vadd.f32 %v3068, %v3852
    %v3854 = vpop.f32.mrb[0].mxu0
    %3855 = vmatprep.mubr.f32.mxu0 %v936
    %3856 = vmatmul.mubr.f32.gmra.mrb[0].mxu0 %v935
    %v3857 = vpop.f32.mrb[0].mxu0
    %v3858 = vadd.f32 %v3073, %v3857
    %v3859 = vpop.f32.mrb[0].mxu0
    %3860 = vmatprep.mubr.f32.mxu0 %v943
    %3861 = vmatmul.mubr.f32.gmra.mrb[0].mxu0 %v942
    %v3862 = vpop.f32.mrb[0].mxu0
    %v3863 = vadd.f32 %v3078, %v3862
    %v3864 = vpop.f32.mrb[0].mxu0
    %3865 = vmatprep.mubr.f32.mxu0 %v950
    %3866 = vmatmul.mubr.f32.gmra.mrb[0].mxu0 %v949
    %v3867 = vpop.f32.mrb[0].mxu0
    %v3868 = vadd.f32 %v3083, %v3867
    %v3869 = vpop.f32.mrb[0].mxu0
    %3870 = vmatprep.mubr.f32.mxu0 %v957
    %3871 = vmatmul.mubr.f32.gmra.mrb[0].mxu0 %v956
    %v3872 = vpop.f32.mrb[0].mxu0
    %v3873 = vadd.f32 %v3088, %v3872
    %v3874 = vpop.f32.mrb[0].mxu0
    %3875 = vmatprep.mubr.f32.mxu0 %v964
    %3876 = vmatmul.mubr.f32.gmra.mrb[0].mxu0 %v963
    %v3877 = vpop.f32.mrb[0].mxu0
    %v3878 = vadd.f32 %v3093, %v3877
    %v3879 = vpop.f32.mrb[0].mxu0
    %3880 = vmatprep.mubr.f32.mxu0 %v971
    %3881 = vmatmul.mubr.f32.gmra.mrb[0].mxu0 %v970
    %v3882 = vpop.f32.mrb[0].mxu0
    %v3883 = vadd.f32 %v3098, %v3882
    %v3884 = vpop.f32.mrb[0].mxu0
    %3885 = vmatprep.mubr.f32.mxu0 %v978
    %3886 = vmatmul.mubr.f32.gmra.mrb[0].mxu0 %v977
    %v3887 = vpop.f32.mrb[0].mxu0
    %v3888 = vadd.f32 %v3103, %v3887
    %v3889 = vpop.f32.mrb[0].mxu0
    %3890 = vmatprep.mubr.f32.mxu0 %v985
    %3891 = vmatmul.mubr.f32.gmra.mrb[0].mxu0 %v984
    %v3892 = vpop.f32.mrb[0].mxu0
    %v3893 = vadd.f32 %v3108, %v3892
    %v3894 = vpop.f32.mrb[0].mxu0
    %3895 = vmatprep.mubr.f32.mxu0 %v992
    %3896 = vmatmul.mubr.f32.gmra.mrb[0].mxu0 %v991
    %v3897 = vpop.f32.mrb[0].mxu0
    %v3898 = vadd.f32 %v3113, %v3897
    %v3899 = vpop.f32.mrb[0].mxu0
    %3900 = vmatprep.mubr.f32.mxu0 %v999
    %3901 = vmatmul.mubr.f32.gmra.mrb[0].mxu0 %v998
    %v3902 = vpop.f32.mrb[0].mxu0
    %v3903 = vadd.f32 %v3118, %v3902
    %v3904 = vpop.f32.mrb[0].mxu0
    %3905 = vmatprep.mubr.f32.mxu0 %v1006
    %3906 = vmatmul.mubr.f32.gmra.mrb[0].mxu0 %v1005
    %v3907 = vpop.f32.mrb[0].mxu0
    %v3908 = vadd.f32 %v3123, %v3907
    %v3909 = vpop.f32.mrb[0].mxu0
    %3910 = vmatprep.mubr.f32.mxu0 %v1013
    %3911 = vmatmul.mubr.f32.gmra.mrb[0].mxu0 %v1012
    %v3912 = vpop.f32.mrb[0].mxu0
    %v3913 = vadd.f32 %v3128, %v3912
    %v3914 = vpop.f32.mrb[0].mxu0
    %3915 = vmatprep.mubr.f32.mxu0 %v1020
    %3916 = vmatmul.mubr.f32.gmra.mrb[0].mxu0 %v1019
    %v3917 = vpop.f32.mrb[0].mxu0
    %v3918 = vadd.f32 %v3133, %v3917
    %v3919 = vpop.f32.mrb[0].mxu0
    %3920 = vmatprep.mubr.f32.mxu0 %v1027
    %3921 = vmatmul.mubr.f32.gmra.mrb[0].mxu0 %v1026
    %v3922 = vpop.f32.mrb[0].mxu0
    %v3923 = vadd.f32 %v3138, %v3922
    %v3924 = vpop.f32.mrb[0].mxu0
    %3925 = vmatprep.mubr.f32.mxu0 %v1034
    %3926 = vmatmul.mubr.f32.gmra.mrb[0].mxu0 %v1033
    %v3927 = vpop.f32.mrb[0].mxu0
    %v3928 = vadd.f32 %v3143, %v3927
    %v3929 = vpop.f32.mrb[0].mxu0
    %3930 = vmatprep.mubr.f32.mxu0 %v1041
    %3931 = vmatmul.mubr.f32.gmra.mrb[0].mxu0 %v1040
    %v3932 = vpop.f32.mrb[0].mxu0
    %v3933 = vadd.f32 %v3148, %v3932
    %v3934 = vpop.f32.mrb[0].mxu0
    %3935 = vmatprep.mubr.f32.mxu0 %v1048
    %3936 = vmatmul.mubr.f32.gmra.mrb[0].mxu0 %v1047
    %v3937 = vpop.f32.mrb[0].mxu0
    %v3938 = vadd.f32 %v3153, %v3937
    %v3939 = vpop.f32.mrb[0].mxu0
    %3940 = vdwg.mxu0
    %3941 = vmatprep.subr.mxu0 0.0
    %3942 = vmatpush1.msra.mxu0 %v1146
    %3943 = vmatprep.subr.mxu0 0.0
    %3944 = vmatpush1.msra.mxu0 %v1147
    %3945 = vmatprep.subr.mxu0 0.0
    %3946 = vmatpush1.msra.mxu0 %v1584
    %3947 = vmatprep.subr.mxu0 0.0
    %3948 = vmatpush1.msra.mxu0 0.0
    %3949 = vmatprep.subr.mxu0 0.0
    %3950 = vmatpush1.msra.mxu0 0.0
    %3951 = vmatprep.subr.mxu0 0.0
    %3952 = vmatpush1.msra.mxu0 0.0
    %3953 = vmatprep.subr.mxu0 0.0
    %3954 = vmatpush1.msra.mxu0 0.0
    %3955 = vmatprep.subr.mxu0 0.0
    %3956 = vmatpush1.msra.mxu0 0.0
    %3957 = vmatprep.subr.mxu0 0.0
    %3958 = vmatpush1.msra.mxu0 0.0
    %3959 = vmatprep.subr.mxu0 0.0
    %3960 = vmatpush1.msra.mxu0 0.0
    %3961 = vmatprep.subr.mxu0 0.0
    %3962 = vmatpush1.msra.mxu0 0.0
    %3963 = vmatprep.subr.mxu0 0.0
    %3964 = vmatpush1.msra.mxu0 0.0
    %3965 = vmatprep.subr.mxu0 0.0
    %3966 = vmatpush1.msra.mxu0 0.0
    %3967 = vmatprep.subr.mxu0 0.0
    %3968 = vmatpush1.msra.mxu0 0.0
    %3969 = vmatprep.subr.mxu0 0.0
    %3970 = vmatpush1.msra.mxu0 0.0
    %3971 = vmatprep.subr.mxu0 0.0
    %3972 = vmatpush1.msra.mxu0 0.0
    %3973 = vmatprep.subr.mxu0 0.0
    %3974 = vmatpush1.msra.mxu0 0.0
    %3975 = vmatprep.subr.mxu0 0.0
    %3976 = vmatpush1.msra.mxu0 0.0
    %3977 = vmatprep.subr.mxu0 0.0
    %3978 = vmatpush1.msra.mxu0 0.0
    %3979 = vmatprep.subr.mxu0 0.0
    %3980 = vmatpush1.msra.mxu0 0.0
    %3981 = vmatprep.subr.mxu0 0.0
    %3982 = vmatpush1.msra.mxu0 0.0
    %3983 = vmatprep.subr.mxu0 0.0
    %3984 = vmatpush1.msra.mxu0 0.0
    %3985 = vmatprep.subr.mxu0 0.0
    %3986 = vmatpush1.msra.mxu0 0.0
    %3987 = vmatprep.subr.mxu0 0.0
    %3988 = vmatpush1.msra.mxu0 0.0
    %3989 = vmatprep.subr.mxu0 0.0
    %3990 = vmatpush1.msra.mxu0 0.0
    %3991 = vmatprep.subr.mxu0 0.0
    %3992 = vmatpush1.msra.mxu0 0.0
    %3993 = vmatprep.subr.mxu0 0.0
    %3994 = vmatpush1.msra.mxu0 0.0
    %3995 = vmatprep.subr.mxu0 0.0
    %3996 = vmatpush1.msra.mxu0 0.0
    %3997 = vmatprep.subr.mxu0 0.0
    %3998 = vmatpush1.msra.mxu0 0.0
    %3999 = vmatprep.subr.mxu0 0.0
    %4000 = vmatpush1.msra.mxu0 0.0
    %4001 = vmatprep.subr.mxu0 0.0
    %4002 = vmatpush1.msra.mxu0 0.0
    %4003 = vmatprep.subr.mxu0 0.0
    %4004 = vmatpush1.msra.mxu0 0.0
    %4005 = vmatprep.mubr.f32.mxu0 0.0
    %4006 = vmatmul.mubr.f32.gmra.mrb[0].mxu0 %v1151
    %v4007 = vpop.f32.mrb[0].mxu0
    %v4008 = vadd.f32 %v3223, %v4007
    %v4009 = vpop.f32.mrb[0].mxu0
    %4010 = vmatprep.mubr.f32.mxu0 0.0
    %4011 = vmatmul.mubr.f32.gmra.mrb[0].mxu0 %v1154
    %v4012 = vpop.f32.mrb[0].mxu0
    %v4013 = vadd.f32 %v3228, %v4012
    %v4014 = vpop.f32.mrb[0].mxu0
    %4015 = vmatprep.mubr.f32.mxu0 0.0
    %4016 = vmatmul.mubr.f32.gmra.mrb[0].mxu0 %v1157
    %v4017 = vpop.f32.mrb[0].mxu0
    %v4018 = vadd.f32 %v3233, %v4017
    %v4019 = vpop.f32.mrb[0].mxu0
    %4020 = vmatprep.mubr.f32.mxu0 0.0
    %4021 = vmatmul.mubr.f32.gmra.mrb[0].mxu0 %v1160
    %v4022 = vpop.f32.mrb[0].mxu0
    %v4023 = vadd.f32 %v3238, %v4022
    %v4024 = vpop.f32.mrb[0].mxu0
    %4025 = vmatprep.mubr.f32.mxu0 0.0
    %4026 = vmatmul.mubr.f32.gmra.mrb[0].mxu0 %v1163
    %v4027 = vpop.f32.mrb[0].mxu0
    %v4028 = vadd.f32 %v3243, %v4027
    %v4029 = vpop.f32.mrb[0].mxu0
    %4030 = vmatprep.mubr.f32.mxu0 0.0
    %4031 = vmatmul.mubr.f32.gmra.mrb[0].mxu0 %v1166
    %v4032 = vpop.f32.mrb[0].mxu0
    %v4033 = vadd.f32 %v3248, %v4032
    %v4034 = vpop.f32.mrb[0].mxu0
    %4035 = vmatprep.mubr.f32.mxu0 0.0
    %4036 = vmatmul.mubr.f32.gmra.mrb[0].mxu0 %v1169
    %v4037 = vpop.f32.mrb[0].mxu0
    %v4038 = vadd.f32 %v3253, %v4037
    %v4039 = vpop.f32.mrb[0].mxu0
    %4040 = vmatprep.mubr.f32.mxu0 0.0
    %4041 = vmatmul.mubr.f32.gmra.mrb[0].mxu0 %v1172
    %v4042 = vpop.f32.mrb[0].mxu0
    %v4043 = vadd.f32 %v3258, %v4042
    %v4044 = vpop.f32.mrb[0].mxu0
    %4045 = vmatprep.mubr.f32.mxu0 0.0
    %4046 = vmatmul.mubr.f32.gmra.mrb[0].mxu0 %v1175
    %v4047 = vpop.f32.mrb[0].mxu0
    %v4048 = vadd.f32 %v3263, %v4047
    %v4049 = vpop.f32.mrb[0].mxu0
    %4050 = vmatprep.mubr.f32.mxu0 0.0
    %4051 = vmatmul.mubr.f32.gmra.mrb[0].mxu0 %v1178
    %v4052 = vpop.f32.mrb[0].mxu0
    %v4053 = vadd.f32 %v3268, %v4052
    %v4054 = vpop.f32.mrb[0].mxu0
    %4055 = vmatprep.mubr.f32.mxu0 0.0
    %4056 = vmatmul.mubr.f32.gmra.mrb[0].mxu0 %v1181
    %v4057 = vpop.f32.mrb[0].mxu0
    %v4058 = vadd.f32 %v3273, %v4057
    %v4059 = vpop.f32.mrb[0].mxu0
    %4060 = vmatprep.mubr.f32.mxu0 0.0
    %4061 = vmatmul.mubr.f32.gmra.mrb[0].mxu0 %v1184
    %v4062 = vpop.f32.mrb[0].mxu0
    %v4063 = vadd.f32 %v3278, %v4062
    %v4064 = vpop.f32.mrb[0].mxu0
    %4065 = vmatprep.mubr.f32.mxu0 0.0
    %4066 = vmatmul.mubr.f32.gmra.mrb[0].mxu0 %v1187
    %v4067 = vpop.f32.mrb[0].mxu0
    %v4068 = vadd.f32 %v3283, %v4067
    %v4069 = vpop.f32.mrb[0].mxu0
    %4070 = vmatprep.mubr.f32.mxu0 0.0
    %4071 = vmatmul.mubr.f32.gmra.mrb[0].mxu0 %v1190
    %v4072 = vpop.f32.mrb[0].mxu0
    %v4073 = vadd.f32 %v3288, %v4072
    %v4074 = vpop.f32.mrb[0].mxu0
    %4075 = vmatprep.mubr.f32.mxu0 0.0
    %4076 = vmatmul.mubr.f32.gmra.mrb[0].mxu0 %v1193
    %v4077 = vpop.f32.mrb[0].mxu0
    %v4078 = vadd.f32 %v3293, %v4077
    %v4079 = vpop.f32.mrb[0].mxu0
    %4080 = vmatprep.mubr.f32.mxu0 0.0
    %4081 = vmatmul.mubr.f32.gmra.mrb[0].mxu0 %v1196
    %v4082 = vpop.f32.mrb[0].mxu0
    %v4083 = vadd.f32 %v3298, %v4082
    %v4084 = vpop.f32.mrb[0].mxu0
    %4085 = vmatprep.mubr.f32.mxu0 0.0
    %4086 = vmatmul.mubr.f32.gmra.mrb[0].mxu0 %v1199
    %v4087 = vpop.f32.mrb[0].mxu0
    %v4088 = vadd.f32 %v3303, %v4087
    %v4089 = vpop.f32.mrb[0].mxu0
    %4090 = vmatprep.mubr.f32.mxu0 0.0
    %4091 = vmatmul.mubr.f32.gmra.mrb[0].mxu0 %v1202
    %v4092 = vpop.f32.mrb[0].mxu0
    %v4093 = vadd.f32 %v3308, %v4092
    %v4094 = vpop.f32.mrb[0].mxu0
    %4095 = vmatprep.mubr.f32.mxu0 0.0
    %4096 = vmatmul.mubr.f32.gmra.mrb[0].mxu0 %v1205
    %v4097 = vpop.f32.mrb[0].mxu0
    %v4098 = vadd.f32 %v3313, %v4097
    %v4099 = vpop.f32.mrb[0].mxu0
    %4100 = vmatprep.mubr.f32.mxu0 0.0
    %4101 = vmatmul.mubr.f32.gmra.mrb[0].mxu0 %v1208
    %v4102 = vpop.f32.mrb[0].mxu0
    %v4103 = vadd.f32 %v3318, %v4102
    %v4104 = vpop.f32.mrb[0].mxu0
    %4105 = vmatprep.mubr.f32.mxu0 0.0
    %4106 = vmatmul.mubr.f32.gmra.mrb[0].mxu0 %v1211
    %v4107 = vpop.f32.mrb[0].mxu0
    %v4108 = vadd.f32 %v3323, %v4107
    %v4109 = vpop.f32.mrb[0].mxu0
    %4110 = vmatprep.mubr.f32.mxu0 0.0
    %4111 = vmatmul.mubr.f32.gmra.mrb[0].mxu0 %v1214
    %v4112 = vpop.f32.mrb[0].mxu0
    %v4113 = vadd.f32 %v3328, %v4112
    %v4114 = vpop.f32.mrb[0].mxu0
    %4115 = vmatprep.mubr.f32.mxu0 0.0
    %4116 = vmatmul.mubr.f32.gmra.mrb[0].mxu0 %v1217
    %v4117 = vpop.f32.mrb[0].mxu0
    %v4118 = vadd.f32 %v3333, %v4117
    %v4119 = vpop.f32.mrb[0].mxu0
    %4120 = vmatprep.mubr.f32.mxu0 0.0
    %4121 = vmatmul.mubr.f32.gmra.mrb[0].mxu0 %v1220
    %v4122 = vpop.f32.mrb[0].mxu0
    %v4123 = vadd.f32 %v3338, %v4122
    %v4124 = vpop.f32.mrb[0].mxu0
    %4125 = vmatprep.mubr.f32.mxu0 0.0
    %4126 = vmatmul.mubr.f32.gmra.mrb[0].mxu0 %v1223
    %v4127 = vpop.f32.mrb[0].mxu0
    %v4128 = vadd.f32 %v3343, %v4127
    %v4129 = vpop.f32.mrb[0].mxu0
    %4130 = vmatprep.mubr.f32.mxu0 0.0
    %4131 = vmatmul.mubr.f32.gmra.mrb[0].mxu0 %v1226
    %v4132 = vpop.f32.mrb[0].mxu0
    %v4133 = vadd.f32 %v3348, %v4132
    %v4134 = vpop.f32.mrb[0].mxu0
    %4135 = vmatprep.mubr.f32.mxu0 0.0
    %4136 = vmatmul.mubr.f32.gmra.mrb[0].mxu0 %v1229
    %v4137 = vpop.f32.mrb[0].mxu0
    %v4138 = vadd.f32 %v3353, %v4137
    %v4139 = vpop.f32.mrb[0].mxu0
    %4140 = vmatprep.mubr.f32.mxu0 0.0
    %4141 = vmatmul.mubr.f32.gmra.mrb[0].mxu0 %v1232
    %v4142 = vpop.f32.mrb[0].mxu0
    %v4143 = vadd.f32 %v3358, %v4142
    %v4144 = vpop.f32.mrb[0].mxu0
    %4145 = vmatprep.mubr.f32.mxu0 0.0
    %4146 = vmatmul.mubr.f32.gmra.mrb[0].mxu0 %v1235
    %v4147 = vpop.f32.mrb[0].mxu0
    %v4148 = vadd.f32 %v3363, %v4147
    %v4149 = vpop.f32.mrb[0].mxu0
    %4150 = vmatprep.mubr.f32.mxu0 0.0
    %4151 = vmatmul.mubr.f32.gmra.mrb[0].mxu0 %v1238
    %v4152 = vpop.f32.mrb[0].mxu0
    %v4153 = vadd.f32 %v3368, %v4152
    %v4154 = vpop.f32.mrb[0].mxu0
    %4155 = vmatprep.mubr.f32.mxu0 0.0
    %4156 = vmatmul.mubr.f32.gmra.mrb[0].mxu0 %v1241
    %v4157 = vpop.f32.mrb[0].mxu0
    %v4158 = vadd.f32 %v3373, %v4157
    %v4159 = vpop.f32.mrb[0].mxu0
    %4160 = vmatprep.mubr.f32.mxu0 0.0
    %4161 = vmatmul.mubr.f32.gmra.mrb[0].mxu0 %v1244
    %v4162 = vpop.f32.mrb[0].mxu0
    %v4163 = vadd.f32 %v3378, %v4162
    %v4164 = vpop.f32.mrb[0].mxu0
    %4165 = vmatprep.mubr.f32.mxu0 0.0
    %4166 = vmatmul.mubr.f32.gmra.mrb[0].mxu0 %v1247
    %v4167 = vpop.f32.mrb[0].mxu0
    %v4168 = vadd.f32 %v3383, %v4167
    %v4169 = vpop.f32.mrb[0].mxu0
    %4170 = vmatprep.mubr.f32.mxu0 0.0
    %4171 = vmatmul.mubr.f32.gmra.mrb[0].mxu0 %v1250
    %v4172 = vpop.f32.mrb[0].mxu0
    %v4173 = vadd.f32 %v3388, %v4172
    %v4174 = vpop.f32.mrb[0].mxu0
    %4175 = vmatprep.mubr.f32.mxu0 0.0
    %4176 = vmatmul.mubr.f32.gmra.mrb[0].mxu0 %v1253
    %v4177 = vpop.f32.mrb[0].mxu0
    %v4178 = vadd.f32 %v3393, %v4177
    %v4179 = vpop.f32.mrb[0].mxu0
    %4180 = vmatprep.mubr.f32.mxu0 0.0
    %4181 = vmatmul.mubr.f32.gmra.mrb[0].mxu0 %v1256
    %v4182 = vpop.f32.mrb[0].mxu0
    %v4183 = vadd.f32 %v3398, %v4182
    %v4184 = vpop.f32.mrb[0].mxu0
    %4185 = vmatprep.mubr.f32.mxu0 0.0
    %4186 = vmatmul.mubr.f32.gmra.mrb[0].mxu0 %v1259
    %v4187 = vpop.f32.mrb[0].mxu0
    %v4188 = vadd.f32 %v3403, %v4187
    %v4189 = vpop.f32.mrb[0].mxu0
    %4190 = vmatprep.mubr.f32.mxu0 0.0
    %4191 = vmatmul.mubr.f32.gmra.mrb[0].mxu0 %v1262
    %v4192 = vpop.f32.mrb[0].mxu0
    %v4193 = vadd.f32 %v3408, %v4192
    %v4194 = vpop.f32.mrb[0].mxu0
    %4195 = vmatprep.mubr.f32.mxu0 0.0
    %4196 = vmatmul.mubr.f32.gmra.mrb[0].mxu0 %v1265
    %v4197 = vpop.f32.mrb[0].mxu0
    %v4198 = vadd.f32 %v3413, %v4197
    %v4199 = vpop.f32.mrb[0].mxu0
    %4200 = vmatprep.mubr.f32.mxu0 0.0
    %4201 = vmatmul.mubr.f32.gmra.mrb[0].mxu0 %v1268
    %v4202 = vpop.f32.mrb[0].mxu0
    %v4203 = vadd.f32 %v3418, %v4202
    %v4204 = vpop.f32.mrb[0].mxu0
    %4205 = vmatprep.mubr.f32.mxu0 0.0
    %4206 = vmatmul.mubr.f32.gmra.mrb[0].mxu0 %v1271
    %v4207 = vpop.f32.mrb[0].mxu0
    %v4208 = vadd.f32 %v3423, %v4207
    %v4209 = vpop.f32.mrb[0].mxu0
    %4210 = vmatprep.mubr.f32.mxu0 0.0
    %4211 = vmatmul.mubr.f32.gmra.mrb[0].mxu0 %v1274
    %v4212 = vpop.f32.mrb[0].mxu0
    %v4213 = vadd.f32 %v3428, %v4212
    %v4214 = vpop.f32.mrb[0].mxu0
    %4215 = vmatprep.mubr.f32.mxu0 0.0
    %4216 = vmatmul.mubr.f32.gmra.mrb[0].mxu0 %v1277
    %v4217 = vpop.f32.mrb[0].mxu0
    %v4218 = vadd.f32 %v3433, %v4217
    %v4219 = vpop.f32.mrb[0].mxu0
    %4220 = vmatprep.mubr.f32.mxu0 0.0
    %4221 = vmatmul.mubr.f32.gmra.mrb[0].mxu0 %v1280
    %v4222 = vpop.f32.mrb[0].mxu0
    %v4223 = vadd.f32 %v3438, %v4222
    %v4224 = vpop.f32.mrb[0].mxu0
    %4225 = vmatprep.mubr.f32.mxu0 0.0
    %4226 = vmatmul.mubr.f32.gmra.mrb[0].mxu0 %v1283
    %v4227 = vpop.f32.mrb[0].mxu0
    %v4228 = vadd.f32 %v3443, %v4227
    %v4229 = vpop.f32.mrb[0].mxu0
    %4230 = vmatprep.mubr.f32.mxu0 0.0
    %4231 = vmatmul.mubr.f32.gmra.mrb[0].mxu0 %v1286
    %v4232 = vpop.f32.mrb[0].mxu0
    %v4233 = vadd.f32 %v3448, %v4232
    %v4234 = vpop.f32.mrb[0].mxu0
    %4235 = vmatprep.mubr.f32.mxu0 0.0
    %4236 = vmatmul.mubr.f32.gmra.mrb[0].mxu0 %v1289
    %v4237 = vpop.f32.mrb[0].mxu0
    %v4238 = vadd.f32 %v3453, %v4237
    %v4239 = vpop.f32.mrb[0].mxu0
    %4240 = vmatprep.mubr.f32.mxu0 0.0
    %4241 = vmatmul.mubr.f32.gmra.mrb[0].mxu0 %v1292
    %v4242 = vpop.f32.mrb[0].mxu0
    %v4243 = vadd.f32 %v3458, %v4242
    %v4244 = vpop.f32.mrb[0].mxu0
    %4245 = vmatprep.mubr.f32.mxu0 0.0
    %4246 = vmatmul.mubr.f32.gmra.mrb[0].mxu0 %v1295
    %v4247 = vpop.f32.mrb[0].mxu0
    %v4248 = vadd.f32 %v3463, %v4247
    %v4249 = vpop.f32.mrb[0].mxu0
    %4250 = vmatprep.mubr.f32.mxu0 0.0
    %4251 = vmatmul.mubr.f32.gmra.mrb[0].mxu0 %v1298
    %v4252 = vpop.f32.mrb[0].mxu0
    %v4253 = vadd.f32 %v3468, %v4252
    %v4254 = vpop.f32.mrb[0].mxu0
    %4255 = vmatprep.mubr.f32.mxu0 0.0
    %4256 = vmatmul.mubr.f32.gmra.mrb[0].mxu0 %v1301
    %v4257 = vpop.f32.mrb[0].mxu0
    %v4258 = vadd.f32 %v3473, %v4257
    %v4259 = vpop.f32.mrb[0].mxu0
    %4260 = vmatprep.mubr.f32.mxu0 0.0
    %4261 = vmatmul.mubr.f32.gmra.mrb[0].mxu0 %v1304
    %v4262 = vpop.f32.mrb[0].mxu0
    %v4263 = vadd.f32 %v3478, %v4262
    %v4264 = vpop.f32.mrb[0].mxu0
    %4265 = vmatprep.mubr.f32.mxu0 0.0
    %4266 = vmatmul.mubr.f32.gmra.mrb[0].mxu0 %v1307
    %v4267 = vpop.f32.mrb[0].mxu0
    %v4268 = vadd.f32 %v3483, %v4267
    %v4269 = vpop.f32.mrb[0].mxu0
    %4270 = vmatprep.mubr.f32.mxu0 0.0
    %4271 = vmatmul.mubr.f32.gmra.mrb[0].mxu0 %v1310
    %v4272 = vpop.f32.mrb[0].mxu0
    %v4273 = vadd.f32 %v3488, %v4272
    %v4274 = vpop.f32.mrb[0].mxu0
    %4275 = vmatprep.mubr.f32.mxu0 0.0
    %4276 = vmatmul.mubr.f32.gmra.mrb[0].mxu0 %v1313
    %v4277 = vpop.f32.mrb[0].mxu0
    %v4278 = vadd.f32 %v3493, %v4277
    %v4279 = vpop.f32.mrb[0].mxu0
    %4280 = vmatprep.mubr.f32.mxu0 0.0
    %4281 = vmatmul.mubr.f32.gmra.mrb[0].mxu0 %v1316
    %v4282 = vpop.f32.mrb[0].mxu0
    %v4283 = vadd.f32 %v3498, %v4282
    %v4284 = vpop.f32.mrb[0].mxu0
    %4285 = vmatprep.mubr.f32.mxu0 0.0
    %4286 = vmatmul.mubr.f32.gmra.mrb[0].mxu0 %v1319
    %v4287 = vpop.f32.mrb[0].mxu0
    %v4288 = vadd.f32 %v3503, %v4287
    %v4289 = vpop.f32.mrb[0].mxu0
    %4290 = vmatprep.mubr.f32.mxu0 0.0
    %4291 = vmatmul.mubr.f32.gmra.mrb[0].mxu0 %v1322
    %v4292 = vpop.f32.mrb[0].mxu0
    %v4293 = vadd.f32 %v3508, %v4292
    %v4294 = vpop.f32.mrb[0].mxu0
    %4295 = vmatprep.mubr.f32.mxu0 0.0
    %4296 = vmatmul.mubr.f32.gmra.mrb[0].mxu0 %v1325
    %v4297 = vpop.f32.mrb[0].mxu0
    %v4298 = vadd.f32 %v3513, %v4297
    %v4299 = vpop.f32.mrb[0].mxu0
    %4300 = vmatprep.mubr.f32.mxu0 0.0
    %4301 = vmatmul.mubr.f32.gmra.mrb[0].mxu0 %v1328
    %v4302 = vpop.f32.mrb[0].mxu0
    %v4303 = vadd.f32 %v3518, %v4302
    %v4304 = vpop.f32.mrb[0].mxu0
    %4305 = vmatprep.mubr.f32.mxu0 0.0
    %4306 = vmatmul.mubr.f32.gmra.mrb[0].mxu0 %v1331
    %v4307 = vpop.f32.mrb[0].mxu0
    %v4308 = vadd.f32 %v3523, %v4307
    %v4309 = vpop.f32.mrb[0].mxu0
    %4310 = vmatprep.mubr.f32.mxu0 0.0
    %4311 = vmatmul.mubr.f32.gmra.mrb[0].mxu0 %v1334
    %v4312 = vpop.f32.mrb[0].mxu0
    %v4313 = vadd.f32 %v3528, %v4312
    %v4314 = vpop.f32.mrb[0].mxu0
    %4315 = vmatprep.mubr.f32.mxu0 0.0
    %4316 = vmatmul.mubr.f32.gmra.mrb[0].mxu0 %v1337
    %v4317 = vpop.f32.mrb[0].mxu0
    %v4318 = vadd.f32 %v3533, %v4317
    %v4319 = vpop.f32.mrb[0].mxu0
    %4320 = vmatprep.mubr.f32.mxu0 0.0
    %4321 = vmatmul.mubr.f32.gmra.mrb[0].mxu0 %v1340
    %v4322 = vpop.f32.mrb[0].mxu0
    %v4323 = vadd.f32 %v3538, %v4322
    %v4324 = vpop.f32.mrb[0].mxu0
    %4325 = vmatprep.mubr.f32.mxu0 0.0
    %4326 = vmatmul.mubr.f32.gmra.mrb[0].mxu0 %v1343
    %v4327 = vpop.f32.mrb[0].mxu0
    %v4328 = vadd.f32 %v3543, %v4327
    %v4329 = vpop.f32.mrb[0].mxu0
    %4330 = vmatprep.mubr.f32.mxu0 0.0
    %4331 = vmatmul.mubr.f32.gmra.mrb[0].mxu0 %v1346
    %v4332 = vpop.f32.mrb[0].mxu0
    %v4333 = vadd.f32 %v3548, %v4332
    %v4334 = vpop.f32.mrb[0].mxu0
    %4335 = vmatprep.mubr.f32.mxu0 0.0
    %4336 = vmatmul.mubr.f32.gmra.mrb[0].mxu0 %v1349
    %v4337 = vpop.f32.mrb[0].mxu0
    %v4338 = vadd.f32 %v3553, %v4337
    %v4339 = vpop.f32.mrb[0].mxu0
    %4340 = vmatprep.mubr.f32.mxu0 0.0
    %4341 = vmatmul.mubr.f32.gmra.mrb[0].mxu0 %v1352
    %v4342 = vpop.f32.mrb[0].mxu0
    %v4343 = vadd.f32 %v3558, %v4342
    %v4344 = vpop.f32.mrb[0].mxu0
    %4345 = vmatprep.mubr.f32.mxu0 0.0
    %4346 = vmatmul.mubr.f32.gmra.mrb[0].mxu0 %v1355
    %v4347 = vpop.f32.mrb[0].mxu0
    %v4348 = vadd.f32 %v3563, %v4347
    %v4349 = vpop.f32.mrb[0].mxu0
    %4350 = vmatprep.mubr.f32.mxu0 0.0
    %4351 = vmatmul.mubr.f32.gmra.mrb[0].mxu0 %v1358
    %v4352 = vpop.f32.mrb[0].mxu0
    %v4353 = vadd.f32 %v3568, %v4352
    %v4354 = vpop.f32.mrb[0].mxu0
    %4355 = vmatprep.mubr.f32.mxu0 0.0
    %4356 = vmatmul.mubr.f32.gmra.mrb[0].mxu0 %v1361
    %v4357 = vpop.f32.mrb[0].mxu0
    %v4358 = vadd.f32 %v3573, %v4357
    %v4359 = vpop.f32.mrb[0].mxu0
    %4360 = vmatprep.mubr.f32.mxu0 0.0
    %4361 = vmatmul.mubr.f32.gmra.mrb[0].mxu0 %v1364
    %v4362 = vpop.f32.mrb[0].mxu0
    %v4363 = vadd.f32 %v3578, %v4362
    %v4364 = vpop.f32.mrb[0].mxu0
    %4365 = vmatprep.mubr.f32.mxu0 0.0
    %4366 = vmatmul.mubr.f32.gmra.mrb[0].mxu0 %v1367
    %v4367 = vpop.f32.mrb[0].mxu0
    %v4368 = vadd.f32 %v3583, %v4367
    %v4369 = vpop.f32.mrb[0].mxu0
    %4370 = vmatprep.mubr.f32.mxu0 0.0
    %4371 = vmatmul.mubr.f32.gmra.mrb[0].mxu0 %v1370
    %v4372 = vpop.f32.mrb[0].mxu0
    %v4373 = vadd.f32 %v3588, %v4372
    %v4374 = vpop.f32.mrb[0].mxu0
    %4375 = vmatprep.mubr.f32.mxu0 0.0
    %4376 = vmatmul.mubr.f32.gmra.mrb[0].mxu0 %v1373
    %v4377 = vpop.f32.mrb[0].mxu0
    %v4378 = vadd.f32 %v3593, %v4377
    %v4379 = vpop.f32.mrb[0].mxu0
    %4380 = vmatprep.mubr.f32.mxu0 0.0
    %4381 = vmatmul.mubr.f32.gmra.mrb[0].mxu0 %v1376
    %v4382 = vpop.f32.mrb[0].mxu0
    %v4383 = vadd.f32 %v3598, %v4382
    %v4384 = vpop.f32.mrb[0].mxu0
    %4385 = vmatprep.mubr.f32.mxu0 0.0
    %4386 = vmatmul.mubr.f32.gmra.mrb[0].mxu0 %v1379
    %v4387 = vpop.f32.mrb[0].mxu0
    %v4388 = vadd.f32 %v3603, %v4387
    %v4389 = vpop.f32.mrb[0].mxu0
    %4390 = vmatprep.mubr.f32.mxu0 0.0
    %4391 = vmatmul.mubr.f32.gmra.mrb[0].mxu0 %v1382
    %v4392 = vpop.f32.mrb[0].mxu0
    %v4393 = vadd.f32 %v3608, %v4392
    %v4394 = vpop.f32.mrb[0].mxu0
    %4395 = vmatprep.mubr.f32.mxu0 0.0
    %4396 = vmatmul.mubr.f32.gmra.mrb[0].mxu0 %v1385
    %v4397 = vpop.f32.mrb[0].mxu0
    %v4398 = vadd.f32 %v3613, %v4397
    %v4399 = vpop.f32.mrb[0].mxu0
    %4400 = vmatprep.mubr.f32.mxu0 0.0
    %4401 = vmatmul.mubr.f32.gmra.mrb[0].mxu0 %v1388
    %v4402 = vpop.f32.mrb[0].mxu0
    %v4403 = vadd.f32 %v3618, %v4402
    %v4404 = vpop.f32.mrb[0].mxu0
    %4405 = vmatprep.mubr.f32.mxu0 0.0
    %4406 = vmatmul.mubr.f32.gmra.mrb[0].mxu0 %v1391
    %v4407 = vpop.f32.mrb[0].mxu0
    %v4408 = vadd.f32 %v3623, %v4407
    %v4409 = vpop.f32.mrb[0].mxu0
    %4410 = vmatprep.mubr.f32.mxu0 0.0
    %4411 = vmatmul.mubr.f32.gmra.mrb[0].mxu0 %v1394
    %v4412 = vpop.f32.mrb[0].mxu0
    %v4413 = vadd.f32 %v3628, %v4412
    %v4414 = vpop.f32.mrb[0].mxu0
    %4415 = vmatprep.mubr.f32.mxu0 0.0
    %4416 = vmatmul.mubr.f32.gmra.mrb[0].mxu0 %v1397
    %v4417 = vpop.f32.mrb[0].mxu0
    %v4418 = vadd.f32 %v3633, %v4417
    %v4419 = vpop.f32.mrb[0].mxu0
    %4420 = vmatprep.mubr.f32.mxu0 0.0
    %4421 = vmatmul.mubr.f32.gmra.mrb[0].mxu0 %v1400
    %v4422 = vpop.f32.mrb[0].mxu0
    %v4423 = vadd.f32 %v3638, %v4422
    %v4424 = vpop.f32.mrb[0].mxu0
    %4425 = vmatprep.mubr.f32.mxu0 0.0
    %4426 = vmatmul.mubr.f32.gmra.mrb[0].mxu0 %v1403
    %v4427 = vpop.f32.mrb[0].mxu0
    %v4428 = vadd.f32 %v3643, %v4427
    %v4429 = vpop.f32.mrb[0].mxu0
    %4430 = vmatprep.mubr.f32.mxu0 0.0
    %4431 = vmatmul.mubr.f32.gmra.mrb[0].mxu0 %v1406
    %v4432 = vpop.f32.mrb[0].mxu0
    %v4433 = vadd.f32 %v3648, %v4432
    %v4434 = vpop.f32.mrb[0].mxu0
    %4435 = vmatprep.mubr.f32.mxu0 0.0
    %4436 = vmatmul.mubr.f32.gmra.mrb[0].mxu0 %v1409
    %v4437 = vpop.f32.mrb[0].mxu0
    %v4438 = vadd.f32 %v3653, %v4437
    %v4439 = vpop.f32.mrb[0].mxu0
    %4440 = vmatprep.mubr.f32.mxu0 0.0
    %4441 = vmatmul.mubr.f32.gmra.mrb[0].mxu0 %v1412
    %v4442 = vpop.f32.mrb[0].mxu0
    %v4443 = vadd.f32 %v3658, %v4442
    %v4444 = vpop.f32.mrb[0].mxu0
    %4445 = vmatprep.mubr.f32.mxu0 0.0
    %4446 = vmatmul.mubr.f32.gmra.mrb[0].mxu0 %v1415
    %v4447 = vpop.f32.mrb[0].mxu0
    %v4448 = vadd.f32 %v3663, %v4447
    %v4449 = vpop.f32.mrb[0].mxu0
    %4450 = vmatprep.mubr.f32.mxu0 0.0
    %4451 = vmatmul.mubr.f32.gmra.mrb[0].mxu0 %v1418
    %v4452 = vpop.f32.mrb[0].mxu0
    %v4453 = vadd.f32 %v3668, %v4452
    %v4454 = vpop.f32.mrb[0].mxu0
    %4455 = vmatprep.mubr.f32.mxu0 0.0
    %4456 = vmatmul.mubr.f32.gmra.mrb[0].mxu0 %v1421
    %v4457 = vpop.f32.mrb[0].mxu0
    %v4458 = vadd.f32 %v3673, %v4457
    %v4459 = vpop.f32.mrb[0].mxu0
    %4460 = vmatprep.mubr.f32.mxu0 0.0
    %4461 = vmatmul.mubr.f32.gmra.mrb[0].mxu0 %v1424
    %v4462 = vpop.f32.mrb[0].mxu0
    %v4463 = vadd.f32 %v3678, %v4462
    %v4464 = vpop.f32.mrb[0].mxu0
    %4465 = vmatprep.mubr.f32.mxu0 0.0
    %4466 = vmatmul.mubr.f32.gmra.mrb[0].mxu0 %v1427
    %v4467 = vpop.f32.mrb[0].mxu0
    %v4468 = vadd.f32 %v3683, %v4467
    %v4469 = vpop.f32.mrb[0].mxu0
    %4470 = vmatprep.mubr.f32.mxu0 0.0
    %4471 = vmatmul.mubr.f32.gmra.mrb[0].mxu0 %v1430
    %v4472 = vpop.f32.mrb[0].mxu0
    %v4473 = vadd.f32 %v3688, %v4472
    %v4474 = vpop.f32.mrb[0].mxu0
    %4475 = vmatprep.mubr.f32.mxu0 0.0
    %4476 = vmatmul.mubr.f32.gmra.mrb[0].mxu0 %v1433
    %v4477 = vpop.f32.mrb[0].mxu0
    %v4478 = vadd.f32 %v3693, %v4477
    %v4479 = vpop.f32.mrb[0].mxu0
    %4480 = vmatprep.mubr.f32.mxu0 0.0
    %4481 = vmatmul.mubr.f32.gmra.mrb[0].mxu0 %v1436
    %v4482 = vpop.f32.mrb[0].mxu0
    %v4483 = vadd.f32 %v3698, %v4482
    %v4484 = vpop.f32.mrb[0].mxu0
    %4485 = vmatprep.mubr.f32.mxu0 0.0
    %4486 = vmatmul.mubr.f32.gmra.mrb[0].mxu0 %v1439
    %v4487 = vpop.f32.mrb[0].mxu0
    %v4488 = vadd.f32 %v3703, %v4487
    %v4489 = vpop.f32.mrb[0].mxu0
    %4490 = vmatprep.mubr.f32.mxu0 0.0
    %4491 = vmatmul.mubr.f32.gmra.mrb[0].mxu0 %v1442
    %v4492 = vpop.f32.mrb[0].mxu0
    %v4493 = vadd.f32 %v3708, %v4492
    %v4494 = vpop.f32.mrb[0].mxu0
    %4495 = vmatprep.mubr.f32.mxu0 0.0
    %4496 = vmatmul.mubr.f32.gmra.mrb[0].mxu0 %v1445
    %v4497 = vpop.f32.mrb[0].mxu0
    %v4498 = vadd.f32 %v3713, %v4497
    %v4499 = vpop.f32.mrb[0].mxu0
    %4500 = vmatprep.mubr.f32.mxu0 0.0
    %4501 = vmatmul.mubr.f32.gmra.mrb[0].mxu0 %v1448
    %v4502 = vpop.f32.mrb[0].mxu0
    %v4503 = vadd.f32 %v3718, %v4502
    %v4504 = vpop.f32.mrb[0].mxu0
    %4505 = vmatprep.mubr.f32.mxu0 0.0
    %4506 = vmatmul.mubr.f32.gmra.mrb[0].mxu0 %v1451
    %v4507 = vpop.f32.mrb[0].mxu0
    %v4508 = vadd.f32 %v3723, %v4507
    %v4509 = vpop.f32.mrb[0].mxu0
    %4510 = vmatprep.mubr.f32.mxu0 0.0
    %4511 = vmatmul.mubr.f32.gmra.mrb[0].mxu0 %v1454
    %v4512 = vpop.f32.mrb[0].mxu0
    %v4513 = vadd.f32 %v3728, %v4512
    %v4514 = vpop.f32.mrb[0].mxu0
    %4515 = vmatprep.mubr.f32.mxu0 0.0
    %4516 = vmatmul.mubr.f32.gmra.mrb[0].mxu0 %v1457
    %v4517 = vpop.f32.mrb[0].mxu0
    %v4518 = vadd.f32 %v3733, %v4517
    %v4519 = vpop.f32.mrb[0].mxu0
    %4520 = vmatprep.mubr.f32.mxu0 0.0
    %4521 = vmatmul.mubr.f32.gmra.mrb[0].mxu0 %v1460
    %v4522 = vpop.f32.mrb[0].mxu0
    %v4523 = vadd.f32 %v3738, %v4522
    %v4524 = vpop.f32.mrb[0].mxu0
    %4525 = vmatprep.mubr.f32.mxu0 0.0
    %4526 = vmatmul.mubr.f32.gmra.mrb[0].mxu0 %v1463
    %v4527 = vpop.f32.mrb[0].mxu0
    %v4528 = vadd.f32 %v3743, %v4527
    %v4529 = vpop.f32.mrb[0].mxu0
    %4530 = vmatprep.mubr.f32.mxu0 0.0
    %4531 = vmatmul.mubr.f32.gmra.mrb[0].mxu0 %v1466
    %v4532 = vpop.f32.mrb[0].mxu0
    %v4533 = vadd.f32 %v3748, %v4532
    %v4534 = vpop.f32.mrb[0].mxu0
    %4535 = vmatprep.mubr.f32.mxu0 0.0
    %4536 = vmatmul.mubr.f32.gmra.mrb[0].mxu0 %v1469
    %v4537 = vpop.f32.mrb[0].mxu0
    %v4538 = vadd.f32 %v3753, %v4537
    %v4539 = vpop.f32.mrb[0].mxu0
    %4540 = vmatprep.mubr.f32.mxu0 0.0
    %4541 = vmatmul.mubr.f32.gmra.mrb[0].mxu0 %v1472
    %v4542 = vpop.f32.mrb[0].mxu0
    %v4543 = vadd.f32 %v3758, %v4542
    %v4544 = vpop.f32.mrb[0].mxu0
    %4545 = vmatprep.mubr.f32.mxu0 0.0
    %4546 = vmatmul.mubr.f32.gmra.mrb[0].mxu0 %v1475
    %v4547 = vpop.f32.mrb[0].mxu0
    %v4548 = vadd.f32 %v3763, %v4547
    %v4549 = vpop.f32.mrb[0].mxu0
    %4550 = vmatprep.mubr.f32.mxu0 0.0
    %4551 = vmatmul.mubr.f32.gmra.mrb[0].mxu0 %v1478
    %v4552 = vpop.f32.mrb[0].mxu0
    %v4553 = vadd.f32 %v3768, %v4552
    %v4554 = vpop.f32.mrb[0].mxu0
    %4555 = vmatprep.mubr.f32.mxu0 0.0
    %4556 = vmatmul.mubr.f32.gmra.mrb[0].mxu0 %v1481
    %v4557 = vpop.f32.mrb[0].mxu0
    %v4558 = vadd.f32 %v3773, %v4557
    %v4559 = vpop.f32.mrb[0].mxu0
    %4560 = vmatprep.mubr.f32.mxu0 0.0
    %4561 = vmatmul.mubr.f32.gmra.mrb[0].mxu0 %v1484
    %v4562 = vpop.f32.mrb[0].mxu0
    %v4563 = vadd.f32 %v3778, %v4562
    %v4564 = vpop.f32.mrb[0].mxu0
    %4565 = vmatprep.mubr.f32.mxu0 0.0
    %4566 = vmatmul.mubr.f32.gmra.mrb[0].mxu0 %v1487
    %v4567 = vpop.f32.mrb[0].mxu0
    %v4568 = vadd.f32 %v3783, %v4567
    %v4569 = vpop.f32.mrb[0].mxu0
    %4570 = vmatprep.mubr.f32.mxu0 0.0
    %4571 = vmatmul.mubr.f32.gmra.mrb[0].mxu0 %v1490
    %v4572 = vpop.f32.mrb[0].mxu0
    %v4573 = vadd.f32 %v3788, %v4572
    %v4574 = vpop.f32.mrb[0].mxu0
    %4575 = vmatprep.mubr.f32.mxu0 0.0
    %4576 = vmatmul.mubr.f32.gmra.mrb[0].mxu0 %v1493
    %v4577 = vpop.f32.mrb[0].mxu0
    %v4578 = vadd.f32 %v3793, %v4577
    %v4579 = vpop.f32.mrb[0].mxu0
    %4580 = vmatprep.mubr.f32.mxu0 0.0
    %4581 = vmatmul.mubr.f32.gmra.mrb[0].mxu0 %v1496
    %v4582 = vpop.f32.mrb[0].mxu0
    %v4583 = vadd.f32 %v3798, %v4582
    %v4584 = vpop.f32.mrb[0].mxu0
    %4585 = vmatprep.mubr.f32.mxu0 0.0
    %4586 = vmatmul.mubr.f32.gmra.mrb[0].mxu0 %v1499
    %v4587 = vpop.f32.mrb[0].mxu0
    %v4588 = vadd.f32 %v3803, %v4587
    %v4589 = vpop.f32.mrb[0].mxu0
    %4590 = vmatprep.mubr.f32.mxu0 0.0
    %4591 = vmatmul.mubr.f32.gmra.mrb[0].mxu0 %v1502
    %v4592 = vpop.f32.mrb[0].mxu0
    %v4593 = vadd.f32 %v3808, %v4592
    %v4594 = vpop.f32.mrb[0].mxu0
    %4595 = vmatprep.mubr.f32.mxu0 0.0
    %4596 = vmatmul.mubr.f32.gmra.mrb[0].mxu0 %v1505
    %v4597 = vpop.f32.mrb[0].mxu0
    %v4598 = vadd.f32 %v3813, %v4597
    %v4599 = vpop.f32.mrb[0].mxu0
    %4600 = vmatprep.mubr.f32.mxu0 0.0
    %4601 = vmatmul.mubr.f32.gmra.mrb[0].mxu0 %v1508
    %v4602 = vpop.f32.mrb[0].mxu0
    %v4603 = vadd.f32 %v3818, %v4602
    %v4604 = vpop.f32.mrb[0].mxu0
    %4605 = vmatprep.mubr.f32.mxu0 0.0
    %4606 = vmatmul.mubr.f32.gmra.mrb[0].mxu0 %v1511
    %v4607 = vpop.f32.mrb[0].mxu0
    %v4608 = vadd.f32 %v3823, %v4607
    %v4609 = vpop.f32.mrb[0].mxu0
    %4610 = vmatprep.mubr.f32.mxu0 0.0
    %4611 = vmatmul.mubr.f32.gmra.mrb[0].mxu0 %v1514
    %v4612 = vpop.f32.mrb[0].mxu0
    %v4613 = vadd.f32 %v3828, %v4612
    %v4614 = vpop.f32.mrb[0].mxu0
    %4615 = vmatprep.mubr.f32.mxu0 0.0
    %4616 = vmatmul.mubr.f32.gmra.mrb[0].mxu0 %v1517
    %v4617 = vpop.f32.mrb[0].mxu0
    %v4618 = vadd.f32 %v3833, %v4617
    %v4619 = vpop.f32.mrb[0].mxu0
    %4620 = vmatprep.mubr.f32.mxu0 0.0
    %4621 = vmatmul.mubr.f32.gmra.mrb[0].mxu0 %v1520
    %v4622 = vpop.f32.mrb[0].mxu0
    %v4623 = vadd.f32 %v3838, %v4622
    %v4624 = vpop.f32.mrb[0].mxu0
    %4625 = vmatprep.mubr.f32.mxu0 0.0
    %4626 = vmatmul.mubr.f32.gmra.mrb[0].mxu0 %v1523
    %v4627 = vpop.f32.mrb[0].mxu0
    %v4628 = vadd.f32 %v3843, %v4627
    %v4629 = vpop.f32.mrb[0].mxu0
    %4630 = vmatprep.mubr.f32.mxu0 0.0
    %4631 = vmatmul.mubr.f32.gmra.mrb[0].mxu0 %v1526
    %v4632 = vpop.f32.mrb[0].mxu0
    %v4633 = vadd.f32 %v3848, %v4632
    %v4634 = vpop.f32.mrb[0].mxu0
    %4635 = vmatprep.mubr.f32.mxu0 0.0
    %4636 = vmatmul.mubr.f32.gmra.mrb[0].mxu0 %v1529
    %v4637 = vpop.f32.mrb[0].mxu0
    %v4638 = vadd.f32 %v3853, %v4637
    %v4639 = vpop.f32.mrb[0].mxu0
    %4640 = vmatprep.mubr.f32.mxu0 0.0
    %4641 = vmatmul.mubr.f32.gmra.mrb[0].mxu0 %v1532
    %v4642 = vpop.f32.mrb[0].mxu0
    %v4643 = vadd.f32 %v3858, %v4642
    %v4644 = vpop.f32.mrb[0].mxu0
    %4645 = vmatprep.mubr.f32.mxu0 0.0
    %4646 = vmatmul.mubr.f32.gmra.mrb[0].mxu0 %v1535
    %v4647 = vpop.f32.mrb[0].mxu0
    %v4648 = vadd.f32 %v3863, %v4647
    %v4649 = vpop.f32.mrb[0].mxu0
    %4650 = vmatprep.mubr.f32.mxu0 0.0
    %4651 = vmatmul.mubr.f32.gmra.mrb[0].mxu0 %v1538
    %v4652 = vpop.f32.mrb[0].mxu0
    %v4653 = vadd.f32 %v3868, %v4652
    %v4654 = vpop.f32.mrb[0].mxu0
    %4655 = vmatprep.mubr.f32.mxu0 0.0
    %4656 = vmatmul.mubr.f32.gmra.mrb[0].mxu0 %v1541
    %v4657 = vpop.f32.mrb[0].mxu0
    %v4658 = vadd.f32 %v3873, %v4657
    %v4659 = vpop.f32.mrb[0].mxu0
    %4660 = vmatprep.mubr.f32.mxu0 0.0
    %4661 = vmatmul.mubr.f32.gmra.mrb[0].mxu0 %v1544
    %v4662 = vpop.f32.mrb[0].mxu0
    %v4663 = vadd.f32 %v3878, %v4662
    %v4664 = vpop.f32.mrb[0].mxu0
    %4665 = vmatprep.mubr.f32.mxu0 0.0
    %4666 = vmatmul.mubr.f32.gmra.mrb[0].mxu0 %v1547
    %v4667 = vpop.f32.mrb[0].mxu0
    %v4668 = vadd.f32 %v3883, %v4667
    %v4669 = vpop.f32.mrb[0].mxu0
    %4670 = vmatprep.mubr.f32.mxu0 0.0
    %4671 = vmatmul.mubr.f32.gmra.mrb[0].mxu0 %v1550
    %v4672 = vpop.f32.mrb[0].mxu0
    %v4673 = vadd.f32 %v3888, %v4672
    %v4674 = vpop.f32.mrb[0].mxu0
    %4675 = vmatprep.mubr.f32.mxu0 0.0
    %4676 = vmatmul.mubr.f32.gmra.mrb[0].mxu0 %v1553
    %v4677 = vpop.f32.mrb[0].mxu0
    %v4678 = vadd.f32 %v3893, %v4677
    %v4679 = vpop.f32.mrb[0].mxu0
    %4680 = vmatprep.mubr.f32.mxu0 0.0
    %4681 = vmatmul.mubr.f32.gmra.mrb[0].mxu0 %v1556
    %v4682 = vpop.f32.mrb[0].mxu0
    %v4683 = vadd.f32 %v3898, %v4682
    %v4684 = vpop.f32.mrb[0].mxu0
    %4685 = vmatprep.mubr.f32.mxu0 0.0
    %4686 = vmatmul.mubr.f32.gmra.mrb[0].mxu0 %v1559
    %v4687 = vpop.f32.mrb[0].mxu0
    %v4688 = vadd.f32 %v3903, %v4687
    %v4689 = vpop.f32.mrb[0].mxu0
    %4690 = vmatprep.mubr.f32.mxu0 0.0
    %4691 = vmatmul.mubr.f32.gmra.mrb[0].mxu0 %v1562
    %v4692 = vpop.f32.mrb[0].mxu0
    %v4693 = vadd.f32 %v3908, %v4692
    %v4694 = vpop.f32.mrb[0].mxu0
    %4695 = vmatprep.mubr.f32.mxu0 0.0
    %4696 = vmatmul.mubr.f32.gmra.mrb[0].mxu0 %v1565
    %v4697 = vpop.f32.mrb[0].mxu0
    %v4698 = vadd.f32 %v3913, %v4697
    %v4699 = vpop.f32.mrb[0].mxu0
    %4700 = vmatprep.mubr.f32.mxu0 0.0
    %4701 = vmatmul.mubr.f32.gmra.mrb[0].mxu0 %v1568
    %v4702 = vpop.f32.mrb[0].mxu0
    %v4703 = vadd.f32 %v3918, %v4702
    %v4704 = vpop.f32.mrb[0].mxu0
    %4705 = vmatprep.mubr.f32.mxu0 0.0
    %4706 = vmatmul.mubr.f32.gmra.mrb[0].mxu0 %v1571
    %v4707 = vpop.f32.mrb[0].mxu0
    %v4708 = vadd.f32 %v3923, %v4707
    %v4709 = vpop.f32.mrb[0].mxu0
    %4710 = vmatprep.mubr.f32.mxu0 0.0
    %4711 = vmatmul.mubr.f32.gmra.mrb[0].mxu0 %v1574
    %v4712 = vpop.f32.mrb[0].mxu0
    %v4713 = vadd.f32 %v3928, %v4712
    %v4714 = vpop.f32.mrb[0].mxu0
    %4715 = vmatprep.mubr.f32.mxu0 0.0
    %4716 = vmatmul.mubr.f32.gmra.mrb[0].mxu0 %v1577
    %v4717 = vpop.f32.mrb[0].mxu0
    %v4718 = vadd.f32 %v3933, %v4717
    %v4719 = vpop.f32.mrb[0].mxu0
    %4720 = vmatprep.mubr.f32.mxu0 0.0
    %4721 = vmatmul.mubr.f32.gmra.mrb[0].mxu0 %v1580
    %v4722 = vpop.f32.mrb[0].mxu0
    %v4723 = vadd.f32 %v3938, %v4722
    %v4724 = vpop.f32.mrb[0].mxu0
    %4725 = vdwg.mxu0
    %v4726 = vmax.f32 %v4008, 0.0
    %v4727 = vmax.f32 %v4013, 0.0
    %v4728 = vmax.f32 %v4018, 0.0
    %v4729 = vmax.f32 %v4023, 0.0
    %v4730 = vmax.f32 %v4028, 0.0
    %v4731 = vmax.f32 %v4033, 0.0
    %v4732 = vmax.f32 %v4038, 0.0
    %v4733 = vmax.f32 %v4043, 0.0
    %v4734 = vmax.f32 %v4048, 0.0
    %v4735 = vmax.f32 %v4053, 0.0
    %v4736 = vmax.f32 %v4058, 0.0
    %v4737 = vmax.f32 %v4063, 0.0
    %v4738 = vmax.f32 %v4068, 0.0
    %v4739 = vmax.f32 %v4073, 0.0
    %v4740 = vmax.f32 %v4078, 0.0
    %v4741 = vmax.f32 %v4083, 0.0
    %v4742 = vmax.f32 %v4088, 0.0
    %v4743 = vmax.f32 %v4093, 0.0
    %v4744 = vmax.f32 %v4098, 0.0
    %v4745 = vmax.f32 %v4103, 0.0
    %v4746 = vmax.f32 %v4108, 0.0
    %v4747 = vmax.f32 %v4113, 0.0
    %v4748 = vmax.f32 %v4118, 0.0
    %v4749 = vmax.f32 %v4123, 0.0
    %v4750 = vmax.f32 %v4128, 0.0
    %v4751 = vmax.f32 %v4133, 0.0
    %v4752 = vmax.f32 %v4138, 0.0
    %v4753 = vmax.f32 %v4143, 0.0
    %v4754 = vmax.f32 %v4148, 0.0
    %v4755 = vmax.f32 %v4153, 0.0
    %v4756 = vmax.f32 %v4158, 0.0
    %v4757 = vmax.f32 %v4163, 0.0
    %v4758 = vmax.f32 %v4168, 0.0
    %v4759 = vmax.f32 %v4173, 0.0
    %v4760 = vmax.f32 %v4178, 0.0
    %v4761 = vmax.f32 %v4183, 0.0
    %v4762 = vmax.f32 %v4188, 0.0
    %v4763 = vmax.f32 %v4193, 0.0
    %v4764 = vmax.f32 %v4198, 0.0
    %v4765 = vmax.f32 %v4203, 0.0
    %v4766 = vmax.f32 %v4208, 0.0
    %v4767 = vmax.f32 %v4213, 0.0
    %v4768 = vmax.f32 %v4218, 0.0
    %v4769 = vmax.f32 %v4223, 0.0
    %v4770 = vmax.f32 %v4228, 0.0
    %v4771 = vmax.f32 %v4233, 0.0
    %v4772 = vmax.f32 %v4238, 0.0
    %v4773 = vmax.f32 %v4243, 0.0
    %v4774 = vmax.f32 %v4248, 0.0
    %v4775 = vmax.f32 %v4253, 0.0
    %v4776 = vmax.f32 %v4258, 0.0
    %v4777 = vmax.f32 %v4263, 0.0
    %v4778 = vmax.f32 %v4268, 0.0
    %v4779 = vmax.f32 %v4273, 0.0
    %v4780 = vmax.f32 %v4278, 0.0
    %v4781 = vmax.f32 %v4283, 0.0
    %v4782 = vmax.f32 %v4288, 0.0
    %v4783 = vmax.f32 %v4293, 0.0
    %v4784 = vmax.f32 %v4298, 0.0
    %v4785 = vmax.f32 %v4303, 0.0
    %v4786 = vmax.f32 %v4308, 0.0
    %v4787 = vmax.f32 %v4313, 0.0
    %v4788 = vmax.f32 %v4318, 0.0
    %v4789 = vmax.f32 %v4323, 0.0
    %v4790 = vmax.f32 %v4328, 0.0
    %v4791 = vmax.f32 %v4333, 0.0
    %v4792 = vmax.f32 %v4338, 0.0
    %v4793 = vmax.f32 %v4343, 0.0
    %v4794 = vmax.f32 %v4348, 0.0
    %v4795 = vmax.f32 %v4353, 0.0
    %v4796 = vmax.f32 %v4358, 0.0
    %v4797 = vmax.f32 %v4363, 0.0
    %v4798 = vmax.f32 %v4368, 0.0
    %v4799 = vmax.f32 %v4373, 0.0
    %v4800 = vmax.f32 %v4378, 0.0
    %v4801 = vmax.f32 %v4383, 0.0
    %v4802 = vmax.f32 %v4388, 0.0
    %v4803 = vmax.f32 %v4393, 0.0
    %v4804 = vmax.f32 %v4398, 0.0
    %v4805 = vmax.f32 %v4403, 0.0
    %v4806 = vmax.f32 %v4408, 0.0
    %v4807 = vmax.f32 %v4413, 0.0
    %v4808 = vmax.f32 %v4418, 0.0
    %v4809 = vmax.f32 %v4423, 0.0
    %v4810 = vmax.f32 %v4428, 0.0
    %v4811 = vmax.f32 %v4433, 0.0
    %v4812 = vmax.f32 %v4438, 0.0
    %v4813 = vmax.f32 %v4443, 0.0
    %v4814 = vmax.f32 %v4448, 0.0
    %v4815 = vmax.f32 %v4453, 0.0
    %v4816 = vmax.f32 %v4458, 0.0
    %v4817 = vmax.f32 %v4463, 0.0
    %v4818 = vmax.f32 %v4468, 0.0
    %v4819 = vmax.f32 %v4473, 0.0
    %v4820 = vmax.f32 %v4478, 0.0
    %v4821 = vmax.f32 %v4483, 0.0
    %v4822 = vmax.f32 %v4488, 0.0
    %v4823 = vmax.f32 %v4493, 0.0
    %v4824 = vmax.f32 %v4498, 0.0
    %v4825 = vmax.f32 %v4503, 0.0
    %v4826 = vmax.f32 %v4508, 0.0
    %v4827 = vmax.f32 %v4513, 0.0
    %v4828 = vmax.f32 %v4518, 0.0
    %v4829 = vmax.f32 %v4523, 0.0
    %v4830 = vmax.f32 %v4528, 0.0
    %v4831 = vmax.f32 %v4533, 0.0
    %v4832 = vmax.f32 %v4538, 0.0
    %v4833 = vmax.f32 %v4543, 0.0
    %v4834 = vmax.f32 %v4548, 0.0
    %v4835 = vmax.f32 %v4553, 0.0
    %v4836 = vmax.f32 %v4558, 0.0
    %v4837 = vmax.f32 %v4563, 0.0
    %v4838 = vmax.f32 %v4568, 0.0
    %v4839 = vmax.f32 %v4573, 0.0
    %v4840 = vmax.f32 %v4578, 0.0
    %v4841 = vmax.f32 %v4583, 0.0
    %v4842 = vmax.f32 %v4588, 0.0
    %v4843 = vmax.f32 %v4593, 0.0
    %v4844 = vmax.f32 %v4598, 0.0
    %v4845 = vmax.f32 %v4603, 0.0
    %v4846 = vmax.f32 %v4608, 0.0
    %v4847 = vmax.f32 %v4613, 0.0
    %v4848 = vmax.f32 %v4618, 0.0
    %v4849 = vmax.f32 %v4623, 0.0
    %v4850 = vmax.f32 %v4628, 0.0
    %v4851 = vmax.f32 %v4633, 0.0
    %v4852 = vmax.f32 %v4638, 0.0
    %v4853 = vmax.f32 %v4643, 0.0
    %v4854 = vmax.f32 %v4648, 0.0
    %v4855 = vmax.f32 %v4653, 0.0
    %v4856 = vmax.f32 %v4658, 0.0
    %v4857 = vmax.f32 %v4663, 0.0
    %v4858 = vmax.f32 %v4668, 0.0
    %v4859 = vmax.f32 %v4673, 0.0
    %v4860 = vmax.f32 %v4678, 0.0
    %v4861 = vmax.f32 %v4683, 0.0
    %v4862 = vmax.f32 %v4688, 0.0
    %v4863 = vmax.f32 %v4693, 0.0
    %v4864 = vmax.f32 %v4698, 0.0
    %v4865 = vmax.f32 %v4703, 0.0
    %v4866 = vmax.f32 %v4708, 0.0
    %v4867 = vmax.f32 %v4713, 0.0
    %v4868 = vmax.f32 %v4718, 0.0
    %v4869 = vmax.f32 %v4723, 0.0
    %4870 = vst [vmem:[#allocation2] sm:$0xff] %v4726
    %4871 = vst [vmem:[#allocation2 + $0x8] sm:$0xff] %v4727
    %4872 = vst [vmem:[#allocation2 + $0x10] sm:$0xff] %v4728
    %4873 = vst [vmem:[#allocation2 + $0x18] sm:$0xff] %v4729
    %4874 = vst [vmem:[#allocation2 + $0x20] sm:$0xff] %v4730
    %4875 = vst [vmem:[#allocation2 + $0x28] sm:$0xff] %v4731
    %4876 = vst [vmem:[#allocation2 + $0x30] sm:$0xff] %v4732
    %4877 = vst [vmem:[#allocation2 + $0x38] sm:$0xff] %v4733
    %4878 = vst [vmem:[#allocation2 + $0x40] sm:$0xff] %v4734
    %4879 = vst [vmem:[#allocation2 + $0x48] sm:$0xff] %v4735
    %4880 = vst [vmem:[#allocation2 + $0x50] sm:$0xff] %v4736
    %4881 = vst [vmem:[#allocation2 + $0x58] sm:$0xff] %v4737
    %4882 = vst [vmem:[#allocation2 + $0x60] sm:$0xff] %v4738
    %4883 = vst [vmem:[#allocation2 + $0x68] sm:$0xff] %v4739
    %4884 = vst [vmem:[#allocation2 + $0x70] sm:$0xff] %v4740
    %4885 = vst [vmem:[#allocation2 + $0x78] sm:$0xff] %v4741
    %4886 = vst [vmem:[#allocation2 + $0x80] sm:$0xff] %v4742
    %4887 = vst [vmem:[#allocation2 + $0x88] sm:$0xff] %v4743
    %4888 = vst [vmem:[#allocation2 + $0x90] sm:$0xff] %v4744
    %4889 = vst [vmem:[#allocation2 + $0x98] sm:$0xff] %v4745
    %4890 = vst [vmem:[#allocation2 + $0xa0] sm:$0xff] %v4746
    %4891 = vst [vmem:[#allocation2 + $0xa8] sm:$0xff] %v4747
    %4892 = vst [vmem:[#allocation2 + $0xb0] sm:$0xff] %v4748
    %4893 = vst [vmem:[#allocation2 + $0xb8] sm:$0xff] %v4749
    %4894 = vst [vmem:[#allocation2 + $0xc0] sm:$0xff] %v4750
    %4895 = vst [vmem:[#allocation2 + $0xc8] sm:$0xff] %v4751
    %4896 = vst [vmem:[#allocation2 + $0xd0] sm:$0xff] %v4752
    %4897 = vst [vmem:[#allocation2 + $0xd8] sm:$0xff] %v4753
    %4898 = vst [vmem:[#allocation2 + $0xe0] sm:$0xff] %v4754
    %4899 = vst [vmem:[#allocation2 + $0xe8] sm:$0xff] %v4755
    %4900 = vst [vmem:[#allocation2 + $0xf0] sm:$0xff] %v4756
    %4901 = vst [vmem:[#allocation2 + $0xf8] sm:$0xff] %v4757
    %4902 = vst [vmem:[#allocation2 + $0x100] sm:$0xff] %v4758
    %4903 = vst [vmem:[#allocation2 + $0x108] sm:$0xff] %v4759
    %4904 = vst [vmem:[#allocation2 + $0x110] sm:$0xff] %v4760
    %4905 = vst [vmem:[#allocation2 + $0x118] sm:$0xff] %v4761
    %4906 = vst [vmem:[#allocation2 + $0x120] sm:$0xff] %v4762
    %4907 = vst [vmem:[#allocation2 + $0x128] sm:$0xff] %v4763
    %4908 = vst [vmem:[#allocation2 + $0x130] sm:$0xff] %v4764
    %4909 = vst [vmem:[#allocation2 + $0x138] sm:$0xff] %v4765
    %4910 = vst [vmem:[#allocation2 + $0x140] sm:$0xff] %v4766
    %4911 = vst [vmem:[#allocation2 + $0x148] sm:$0xff] %v4767
    %4912 = vst [vmem:[#allocation2 + $0x150] sm:$0xff] %v4768
    %4913 = vst [vmem:[#allocation2 + $0x158] sm:$0xff] %v4769
    %4914 = vst [vmem:[#allocation2 + $0x160] sm:$0xff] %v4770
    %4915 = vst [vmem:[#allocation2 + $0x168] sm:$0xff] %v4771
    %4916 = vst [vmem:[#allocation2 + $0x170] sm:$0xff] %v4772
    %4917 = vst [vmem:[#allocation2 + $0x178] sm:$0xff] %v4773
    %4918 = vst [vmem:[#allocation2 + $0x180] sm:$0xff] %v4774
    %4919 = vst [vmem:[#allocation2 + $0x188] sm:$0xff] %v4775
    %4920 = vst [vmem:[#allocation2 + $0x190] sm:$0xff] %v4776
    %4921 = vst [vmem:[#allocation2 + $0x198] sm:$0xff] %v4777
    %4922 = vst [vmem:[#allocation2 + $0x1a0] sm:$0xff] %v4778
    %4923 = vst [vmem:[#allocation2 + $0x1a8] sm:$0xff] %v4779
    %4924 = vst [vmem:[#allocation2 + $0x1b0] sm:$0xff] %v4780
    %4925 = vst [vmem:[#allocation2 + $0x1b8] sm:$0xff] %v4781
    %4926 = vst [vmem:[#allocation2 + $0x1c0] sm:$0xff] %v4782
    %4927 = vst [vmem:[#allocation2 + $0x1c8] sm:$0xff] %v4783
    %4928 = vst [vmem:[#allocation2 + $0x1d0] sm:$0xff] %v4784
    %4929 = vst [vmem:[#allocation2 + $0x1d8] sm:$0xff] %v4785
    %4930 = vst [vmem:[#allocation2 + $0x1e0] sm:$0xff] %v4786
    %4931 = vst [vmem:[#allocation2 + $0x1e8] sm:$0xff] %v4787
    %4932 = vst [vmem:[#allocation2 + $0x1f0] sm:$0xff] %v4788
    %4933 = vst [vmem:[#allocation2 + $0x1f8] sm:$0xff] %v4789
    %4934 = vst [vmem:[#allocation2 + $0x200] sm:$0xff] %v4790
    %4935 = vst [vmem:[#allocation2 + $0x208] sm:$0xff] %v4791
    %4936 = vst [vmem:[#allocation2 + $0x210] sm:$0xff] %v4792
    %4937 = vst [vmem:[#allocation2 + $0x218] sm:$0xff] %v4793
    %4938 = vst [vmem:[#allocation2 + $0x220] sm:$0xff] %v4794
    %4939 = vst [vmem:[#allocation2 + $0x228] sm:$0xff] %v4795
    %4940 = vst [vmem:[#allocation2 + $0x230] sm:$0xff] %v4796
    %4941 = vst [vmem:[#allocation2 + $0x238] sm:$0xff] %v4797
    %4942 = vst [vmem:[#allocation2 + $0x240] sm:$0xff] %v4798
    %4943 = vst [vmem:[#allocation2 + $0x248] sm:$0xff] %v4799
    %4944 = vst [vmem:[#allocation2 + $0x250] sm:$0xff] %v4800
    %4945 = vst [vmem:[#allocation2 + $0x258] sm:$0xff] %v4801
    %4946 = vst [vmem:[#allocation2 + $0x260] sm:$0xff] %v4802
    %4947 = vst [vmem:[#allocation2 + $0x268] sm:$0xff] %v4803
    %4948 = vst [vmem:[#allocation2 + $0x270] sm:$0xff] %v4804
    %4949 = vst [vmem:[#allocation2 + $0x278] sm:$0xff] %v4805
    %4950 = vst [vmem:[#allocation2 + $0x280] sm:$0xff] %v4806
    %4951 = vst [vmem:[#allocation2 + $0x288] sm:$0xff] %v4807
    %4952 = vst [vmem:[#allocation2 + $0x290] sm:$0xff] %v4808
    %4953 = vst [vmem:[#allocation2 + $0x298] sm:$0xff] %v4809
    %4954 = vst [vmem:[#allocation2 + $0x2a0] sm:$0xff] %v4810
    %4955 = vst [vmem:[#allocation2 + $0x2a8] sm:$0xff] %v4811
    %4956 = vst [vmem:[#allocation2 + $0x2b0] sm:$0xff] %v4812
    %4957 = vst [vmem:[#allocation2 + $0x2b8] sm:$0xff] %v4813
    %4958 = vst [vmem:[#allocation2 + $0x2c0] sm:$0xff] %v4814
    %4959 = vst [vmem:[#allocation2 + $0x2c8] sm:$0xff] %v4815
    %4960 = vst [vmem:[#allocation2 + $0x2d0] sm:$0xff] %v4816
    %4961 = vst [vmem:[#allocation2 + $0x2d8] sm:$0xff] %v4817
    %4962 = vst [vmem:[#allocation2 + $0x2e0] sm:$0xff] %v4818
    %4963 = vst [vmem:[#allocation2 + $0x2e8] sm:$0xff] %v4819
    %4964 = vst [vmem:[#allocation2 + $0x2f0] sm:$0xff] %v4820
    %4965 = vst [vmem:[#allocation2 + $0x2f8] sm:$0xff] %v4821
    %4966 = vst [vmem:[#allocation2 + $0x300] sm:$0xff] %v4822
    %4967 = vst [vmem:[#allocation2 + $0x308] sm:$0xff] %v4823
    %4968 = vst [vmem:[#allocation2 + $0x310] sm:$0xff] %v4824
    %4969 = vst [vmem:[#allocation2 + $0x318] sm:$0xff] %v4825
    %4970 = vst [vmem:[#allocation2 + $0x320] sm:$0xff] %v4826
    %4971 = vst [vmem:[#allocation2 + $0x328] sm:$0xff] %v4827
    %4972 = vst [vmem:[#allocation2 + $0x330] sm:$0xff] %v4828
    %4973 = vst [vmem:[#allocation2 + $0x338] sm:$0xff] %v4829
    %4974 = vst [vmem:[#allocation2 + $0x340] sm:$0xff] %v4830
    %4975 = vst [vmem:[#allocation2 + $0x348] sm:$0xff] %v4831
    %4976 = vst [vmem:[#allocation2 + $0x350] sm:$0xff] %v4832
    %4977 = vst [vmem:[#allocation2 + $0x358] sm:$0xff] %v4833
    %4978 = vst [vmem:[#allocation2 + $0x360] sm:$0xff] %v4834
    %4979 = vst [vmem:[#allocation2 + $0x368] sm:$0xff] %v4835
    %4980 = vst [vmem:[#allocation2 + $0x370] sm:$0xff] %v4836
    %4981 = vst [vmem:[#allocation2 + $0x378] sm:$0xff] %v4837
    %4982 = vst [vmem:[#allocation2 + $0x380] sm:$0xff] %v4838
    %4983 = vst [vmem:[#allocation2 + $0x388] sm:$0xff] %v4839
    %4984 = vst [vmem:[#allocation2 + $0x390] sm:$0xff] %v4840
    %4985 = vst [vmem:[#allocation2 + $0x398] sm:$0xff] %v4841
    %4986 = vst [vmem:[#allocation2 + $0x3a0] sm:$0xff] %v4842
    %4987 = vst [vmem:[#allocation2 + $0x3a8] sm:$0xff] %v4843
    %4988 = vst [vmem:[#allocation2 + $0x3b0] sm:$0xff] %v4844
    %4989 = vst [vmem:[#allocation2 + $0x3b8] sm:$0xff] %v4845
    %4990 = vst [vmem:[#allocation2 + $0x3c0] sm:$0xff] %v4846
    %4991 = vst [vmem:[#allocation2 + $0x3c8] sm:$0xff] %v4847
    %4992 = vst [vmem:[#allocation2 + $0x3d0] sm:$0xff] %v4848
    %4993 = vst [vmem:[#allocation2 + $0x3d8] sm:$0xff] %v4849
    %4994 = vst [vmem:[#allocation2 + $0x3e0] sm:$0xff] %v4850
    %4995 = vst [vmem:[#allocation2 + $0x3e8] sm:$0xff] %v4851
    %4996 = vst [vmem:[#allocation2 + $0x3f0] sm:$0xff] %v4852
    %4997 = vst [vmem:[#allocation2 + $0x3f8] sm:$0xff] %v4853
    %4998 = vst [vmem:[#allocation2 + $0x400] sm:$0xff] %v4854
    %4999 = vst [vmem:[#allocation2 + $0x408] sm:$0xff] %v4855
    %5000 = vst [vmem:[#allocation2 + $0x410] sm:$0xff] %v4856
    %5001 = vst [vmem:[#allocation2 + $0x418] sm:$0xff] %v4857
    %5002 = vst [vmem:[#allocation2 + $0x420] sm:$0xff] %v4858
    %5003 = vst [vmem:[#allocation2 + $0x428] sm:$0xff] %v4859
    %5004 = vst [vmem:[#allocation2 + $0x430] sm:$0xff] %v4860
    %5005 = vst [vmem:[#allocation2 + $0x438] sm:$0xff] %v4861
    %5006 = vst [vmem:[#allocation2 + $0x440] sm:$0xff] %v4862
    %5007 = vst [vmem:[#allocation2 + $0x448] sm:$0xff] %v4863
    %5008 = vst [vmem:[#allocation2 + $0x450] sm:$0xff] %v4864
    %5009 = vst [vmem:[#allocation2 + $0x458] sm:$0xff] %v4865
    %5010 = vst [vmem:[#allocation2 + $0x460] sm:$0xff] %v4866
    %5011 = vst [vmem:[#allocation2 + $0x468] sm:$0xff] %v4867
    %5012 = vst [vmem:[#allocation2 + $0x470] sm:$0xff] %v4868
    %5013 = vst [vmem:[#allocation2 + $0x478] sm:$0xff] %v4869
    %v5014 = vld [vmem:[#allocation2] ss:$2 sm:$0xff]
    %s5015 = scalar_lea.vmem [#allocation2], 16
    %v5016 = vld [vmem:[%s5015] ss:$2 sm:$0xff]
    %s5017 = scalar_lea.vmem [#allocation2], 32
    %v5018 = vld [vmem:[%s5017] ss:$2 sm:$0xff]
    %s5019 = scalar_lea.vmem [#allocation2], 48
    %v5020 = vld [vmem:[%s5019] ss:$2 sm:$0xff]
    %s5021 = scalar_lea.vmem [#allocation2], 64
    %v5022 = vld [vmem:[%s5021] ss:$2 sm:$0xff]
    %s5023 = scalar_lea.vmem [#allocation2], 80
    %v5024 = vld [vmem:[%s5023] ss:$2 sm:$0xff]
    %s5025 = scalar_lea.vmem [#allocation2], 96
    %v5026 = vld [vmem:[%s5025] ss:$2 sm:$0xff]
    %s5027 = scalar_lea.vmem [#allocation2], 112
    %v5028 = vld [vmem:[%s5027] ss:$2 sm:$0xff]
    %s5029 = scalar_lea.vmem [#allocation2], 128
    %v5030 = vld [vmem:[%s5029] ss:$2 sm:$0xff]
    %s5031 = scalar_lea.vmem [#allocation2], 144
    %v5032 = vld [vmem:[%s5031] ss:$2 sm:$0xff]
    %s5033 = scalar_lea.vmem [#allocation2], 160
    %v5034 = vld [vmem:[%s5033] ss:$2 sm:$0xff]
    %s5035 = scalar_lea.vmem [#allocation2], 176
    %v5036 = vld [vmem:[%s5035] ss:$2 sm:$0xff]
    %s5037 = scalar_lea.vmem [#allocation2], 192
    %v5038 = vld [vmem:[%s5037] ss:$2 sm:$0xff]
    %s5039 = scalar_lea.vmem [#allocation2], 208
    %v5040 = vld [vmem:[%s5039] ss:$2 sm:$0xff]
    %s5041 = scalar_lea.vmem [#allocation2], 224
    %v5042 = vld [vmem:[%s5041] ss:$2 sm:$0xff]
    %s5043 = scalar_lea.vmem [#allocation2], 240
    %v5044 = vld [vmem:[%s5043] ss:$2 sm:$0xff]
    %s5045 = scalar_lea.vmem [#allocation2], 256
    %v5046 = vld [vmem:[%s5045] ss:$2 sm:$0xff]
    %s5047 = scalar_lea.vmem [#allocation2], 272
    %v5048 = vld [vmem:[%s5047] ss:$2 sm:$0xff]
    %s5049 = scalar_lea.vmem [#allocation2], 288
    %v5050 = vld [vmem:[%s5049] ss:$2 sm:$0xff]
    %s5051 = scalar_lea.vmem [#allocation2], 304
    %v5052 = vld [vmem:[%s5051] ss:$2 sm:$0xff]
    %s5053 = scalar_lea.vmem [#allocation2], 320
    %v5054 = vld [vmem:[%s5053] ss:$2 sm:$0xff]
    %s5055 = scalar_lea.vmem [#allocation2], 336
    %v5056 = vld [vmem:[%s5055] ss:$2 sm:$0xff]
    %s5057 = scalar_lea.vmem [#allocation2], 352
    %v5058 = vld [vmem:[%s5057] ss:$2 sm:$0xff]
    %s5059 = scalar_lea.vmem [#allocation2], 368
    %v5060 = vld [vmem:[%s5059] ss:$2 sm:$0xff]
    %s5061 = scalar_lea.vmem [#allocation2], 384
    %v5062 = vld [vmem:[%s5061] ss:$2 sm:$0xff]
    %s5063 = scalar_lea.vmem [#allocation2], 400
    %v5064 = vld [vmem:[%s5063] ss:$2 sm:$0xff]
    %s5065 = scalar_lea.vmem [#allocation2], 416
    %v5066 = vld [vmem:[%s5065] ss:$2 sm:$0xff]
    %s5067 = scalar_lea.vmem [#allocation2], 432
    %v5068 = vld [vmem:[%s5067] ss:$2 sm:$0xff]
    %s5069 = scalar_lea.vmem [#allocation2], 448
    %v5070 = vld [vmem:[%s5069] ss:$2 sm:$0xff]
    %s5071 = scalar_lea.vmem [#allocation2], 464
    %v5072 = vld [vmem:[%s5071] ss:$2 sm:$0xff]
    %s5073 = scalar_lea.vmem [#allocation2], 480
    %v5074 = vld [vmem:[%s5073] ss:$2 sm:$0xff]
    %s5075 = scalar_lea.vmem [#allocation2], 496
    %v5076 = vld [vmem:[%s5075] ss:$2 sm:$0xff]
    %s5077 = scalar_lea.vmem [#allocation2], 512
    %v5078 = vld [vmem:[%s5077] ss:$2 sm:$0xff]
    %s5079 = scalar_lea.vmem [#allocation2], 528
    %v5080 = vld [vmem:[%s5079] ss:$2 sm:$0xff]
    %s5081 = scalar_lea.vmem [#allocation2], 544
    %v5082 = vld [vmem:[%s5081] ss:$2 sm:$0xff]
    %s5083 = scalar_lea.vmem [#allocation2], 560
    %v5084 = vld [vmem:[%s5083] ss:$2 sm:$0xff]
    %s5085 = scalar_lea.vmem [#allocation2], 576
    %v5086 = vld [vmem:[%s5085] ss:$2 sm:$0xff]
    %s5087 = scalar_lea.vmem [#allocation2], 592
    %v5088 = vld [vmem:[%s5087] ss:$2 sm:$0xff]
    %s5089 = scalar_lea.vmem [#allocation2], 608
    %v5090 = vld [vmem:[%s5089] ss:$2 sm:$0xff]
    %s5091 = scalar_lea.vmem [#allocation2], 624
    %v5092 = vld [vmem:[%s5091] ss:$2 sm:$0xff]
    %s5093 = scalar_lea.vmem [#allocation2], 640
    %v5094 = vld [vmem:[%s5093] ss:$2 sm:$0xff]
    %s5095 = scalar_lea.vmem [#allocation2], 656
    %v5096 = vld [vmem:[%s5095] ss:$2 sm:$0xff]
    %s5097 = scalar_lea.vmem [#allocation2], 672
    %v5098 = vld [vmem:[%s5097] ss:$2 sm:$0xff]
    %s5099 = scalar_lea.vmem [#allocation2], 688
    %v5100 = vld [vmem:[%s5099] ss:$2 sm:$0xff]
    %s5101 = scalar_lea.vmem [#allocation2], 704
    %v5102 = vld [vmem:[%s5101] ss:$2 sm:$0xff]
    %s5103 = scalar_lea.vmem [#allocation2], 720
    %v5104 = vld [vmem:[%s5103] ss:$2 sm:$0xff]
    %s5105 = scalar_lea.vmem [#allocation2], 736
    %v5106 = vld [vmem:[%s5105] ss:$2 sm:$0xff]
    %s5107 = scalar_lea.vmem [#allocation2], 752
    %v5108 = vld [vmem:[%s5107] ss:$2 sm:$0xff]
    %s5109 = scalar_lea.vmem [#allocation2], 768
    %v5110 = vld [vmem:[%s5109] ss:$2 sm:$0xff]
    %s5111 = scalar_lea.vmem [#allocation2], 784
    %v5112 = vld [vmem:[%s5111] ss:$2 sm:$0xff]
    %s5113 = scalar_lea.vmem [#allocation2], 800
    %v5114 = vld [vmem:[%s5113] ss:$2 sm:$0xff]
    %s5115 = scalar_lea.vmem [#allocation2], 816
    %v5116 = vld [vmem:[%s5115] ss:$2 sm:$0xff]
    %s5117 = scalar_lea.vmem [#allocation2], 832
    %v5118 = vld [vmem:[%s5117] ss:$2 sm:$0xff]
    %s5119 = scalar_lea.vmem [#allocation2], 848
    %v5120 = vld [vmem:[%s5119] ss:$2 sm:$0xff]
    %s5121 = scalar_lea.vmem [#allocation2], 864
    %v5122 = vld [vmem:[%s5121] ss:$2 sm:$0xff]
    %s5123 = scalar_lea.vmem [#allocation2], 880
    %v5124 = vld [vmem:[%s5123] ss:$2 sm:$0xff]
    %s5125 = scalar_lea.vmem [#allocation2], 896
    %v5126 = vld [vmem:[%s5125] ss:$2 sm:$0xff]
    %s5127 = scalar_lea.vmem [#allocation2], 912
    %v5128 = vld [vmem:[%s5127] ss:$2 sm:$0xff]
    %s5129 = scalar_lea.vmem [#allocation2], 928
    %v5130 = vld [vmem:[%s5129] ss:$2 sm:$0xff]
    %s5131 = scalar_lea.vmem [#allocation2], 944
    %v5132 = vld [vmem:[%s5131] ss:$2 sm:$0xff]
    %s5133 = scalar_lea.vmem [#allocation2], 960
    %v5134 = vld [vmem:[%s5133] ss:$2 sm:$0xff]
    %s5135 = scalar_lea.vmem [#allocation2], 976
    %v5136 = vld [vmem:[%s5135] ss:$2 sm:$0xff]
    %s5137 = scalar_lea.vmem [#allocation2], 992
    %v5138 = vld [vmem:[%s5137] ss:$2 sm:$0xff]
    %s5139 = scalar_lea.vmem [#allocation2], 1008
    %v5140 = vld [vmem:[%s5139] ss:$2 sm:$0xff]
    %s5141 = scalar_lea.vmem [#allocation2], 1024
    %v5142 = vld [vmem:[%s5141] ss:$2 sm:$0xff]
    %s5143 = scalar_lea.vmem [#allocation2], 1040
    %v5144 = vld [vmem:[%s5143] ss:$2 sm:$0xff]
    %s5145 = scalar_lea.vmem [#allocation2], 1056
    %v5146 = vld [vmem:[%s5145] ss:$2 sm:$0xff]
    %s5147 = scalar_lea.vmem [#allocation2], 1072
    %v5148 = vld [vmem:[%s5147] ss:$2 sm:$0xff]
    %s5149 = scalar_lea.vmem [#allocation2], 1088
    %v5150 = vld [vmem:[%s5149] ss:$2 sm:$0xff]
    %s5151 = scalar_lea.vmem [#allocation2], 1104
    %v5152 = vld [vmem:[%s5151] ss:$2 sm:$0xff]
    %s5153 = scalar_lea.vmem [#allocation2], 1120
    %v5154 = vld [vmem:[%s5153] ss:$2 sm:$0xff]
    %s5155 = scalar_lea.vmem [#allocation2], 1136
    %v5156 = vld [vmem:[%s5155] ss:$2 sm:$0xff]
    %s5157 = scalar_lea.vmem [#allocation2], 1
    %v5158 = vld [vmem:[%s5157] ss:$2 sm:$0xff]
    %s5159 = scalar_lea.vmem [#allocation2], 17
    %v5160 = vld [vmem:[%s5159] ss:$2 sm:$0xff]
    %s5161 = scalar_lea.vmem [#allocation2], 33
    %v5162 = vld [vmem:[%s5161] ss:$2 sm:$0xff]
    %s5163 = scalar_lea.vmem [#allocation2], 49
    %v5164 = vld [vmem:[%s5163] ss:$2 sm:$0xff]
    %s5165 = scalar_lea.vmem [#allocation2], 65
    %v5166 = vld [vmem:[%s5165] ss:$2 sm:$0xff]
    %s5167 = scalar_lea.vmem [#allocation2], 81
    %v5168 = vld [vmem:[%s5167] ss:$2 sm:$0xff]
    %s5169 = scalar_lea.vmem [#allocation2], 97
    %v5170 = vld [vmem:[%s5169] ss:$2 sm:$0xff]
    %s5171 = scalar_lea.vmem [#allocation2], 113
    %v5172 = vld [vmem:[%s5171] ss:$2 sm:$0xff]
    %s5173 = scalar_lea.vmem [#allocation2], 129
    %v5174 = vld [vmem:[%s5173] ss:$2 sm:$0xff]
    %s5175 = scalar_lea.vmem [#allocation2], 145
    %v5176 = vld [vmem:[%s5175] ss:$2 sm:$0xff]
    %s5177 = scalar_lea.vmem [#allocation2], 161
    %v5178 = vld [vmem:[%s5177] ss:$2 sm:$0xff]
    %s5179 = scalar_lea.vmem [#allocation2], 177
    %v5180 = vld [vmem:[%s5179] ss:$2 sm:$0xff]
    %s5181 = scalar_lea.vmem [#allocation2], 193
    %v5182 = vld [vmem:[%s5181] ss:$2 sm:$0xff]
    %s5183 = scalar_lea.vmem [#allocation2], 209
    %v5184 = vld [vmem:[%s5183] ss:$2 sm:$0xff]
    %s5185 = scalar_lea.vmem [#allocation2], 225
    %v5186 = vld [vmem:[%s5185] ss:$2 sm:$0xff]
    %s5187 = scalar_lea.vmem [#allocation2], 241
    %v5188 = vld [vmem:[%s5187] ss:$2 sm:$0xff]
    %s5189 = scalar_lea.vmem [#allocation2], 257
    %v5190 = vld [vmem:[%s5189] ss:$2 sm:$0xff]
    %s5191 = scalar_lea.vmem [#allocation2], 273
    %v5192 = vld [vmem:[%s5191] ss:$2 sm:$0xff]
    %s5193 = scalar_lea.vmem [#allocation2], 289
    %v5194 = vld [vmem:[%s5193] ss:$2 sm:$0xff]
    %s5195 = scalar_lea.vmem [#allocation2], 305
    %v5196 = vld [vmem:[%s5195] ss:$2 sm:$0xff]
    %s5197 = scalar_lea.vmem [#allocation2], 321
    %v5198 = vld [vmem:[%s5197] ss:$2 sm:$0xff]
    %s5199 = scalar_lea.vmem [#allocation2], 337
    %v5200 = vld [vmem:[%s5199] ss:$2 sm:$0xff]
    %s5201 = scalar_lea.vmem [#allocation2], 353
    %v5202 = vld [vmem:[%s5201] ss:$2 sm:$0xff]
    %s5203 = scalar_lea.vmem [#allocation2], 369
    %v5204 = vld [vmem:[%s5203] ss:$2 sm:$0xff]
    %s5205 = scalar_lea.vmem [#allocation2], 385
    %v5206 = vld [vmem:[%s5205] ss:$2 sm:$0xff]
    %s5207 = scalar_lea.vmem [#allocation2], 401
    %v5208 = vld [vmem:[%s5207] ss:$2 sm:$0xff]
    %s5209 = scalar_lea.vmem [#allocation2], 417
    %v5210 = vld [vmem:[%s5209] ss:$2 sm:$0xff]
    %s5211 = scalar_lea.vmem [#allocation2], 433
    %v5212 = vld [vmem:[%s5211] ss:$2 sm:$0xff]
    %s5213 = scalar_lea.vmem [#allocation2], 449
    %v5214 = vld [vmem:[%s5213] ss:$2 sm:$0xff]
    %s5215 = scalar_lea.vmem [#allocation2], 465
    %v5216 = vld [vmem:[%s5215] ss:$2 sm:$0xff]
    %s5217 = scalar_lea.vmem [#allocation2], 481
    %v5218 = vld [vmem:[%s5217] ss:$2 sm:$0xff]
    %s5219 = scalar_lea.vmem [#allocation2], 497
    %v5220 = vld [vmem:[%s5219] ss:$2 sm:$0xff]
    %s5221 = scalar_lea.vmem [#allocation2], 513
    %v5222 = vld [vmem:[%s5221] ss:$2 sm:$0xff]
    %s5223 = scalar_lea.vmem [#allocation2], 529
    %v5224 = vld [vmem:[%s5223] ss:$2 sm:$0xff]
    %s5225 = scalar_lea.vmem [#allocation2], 545
    %v5226 = vld [vmem:[%s5225] ss:$2 sm:$0xff]
    %s5227 = scalar_lea.vmem [#allocation2], 561
    %v5228 = vld [vmem:[%s5227] ss:$2 sm:$0xff]
    %s5229 = scalar_lea.vmem [#allocation2], 577
    %v5230 = vld [vmem:[%s5229] ss:$2 sm:$0xff]
    %s5231 = scalar_lea.vmem [#allocation2], 593
    %v5232 = vld [vmem:[%s5231] ss:$2 sm:$0xff]
    %s5233 = scalar_lea.vmem [#allocation2], 609
    %v5234 = vld [vmem:[%s5233] ss:$2 sm:$0xff]
    %s5235 = scalar_lea.vmem [#allocation2], 625
    %v5236 = vld [vmem:[%s5235] ss:$2 sm:$0xff]
    %s5237 = scalar_lea.vmem [#allocation2], 641
    %v5238 = vld [vmem:[%s5237] ss:$2 sm:$0xff]
    %s5239 = scalar_lea.vmem [#allocation2], 657
    %v5240 = vld [vmem:[%s5239] ss:$2 sm:$0xff]
    %s5241 = scalar_lea.vmem [#allocation2], 673
    %v5242 = vld [vmem:[%s5241] ss:$2 sm:$0xff]
    %s5243 = scalar_lea.vmem [#allocation2], 689
    %v5244 = vld [vmem:[%s5243] ss:$2 sm:$0xff]
    %s5245 = scalar_lea.vmem [#allocation2], 705
    %v5246 = vld [vmem:[%s5245] ss:$2 sm:$0xff]
    %s5247 = scalar_lea.vmem [#allocation2], 721
    %v5248 = vld [vmem:[%s5247] ss:$2 sm:$0xff]
    %s5249 = scalar_lea.vmem [#allocation2], 737
    %v5250 = vld [vmem:[%s5249] ss:$2 sm:$0xff]
    %s5251 = scalar_lea.vmem [#allocation2], 753
    %v5252 = vld [vmem:[%s5251] ss:$2 sm:$0xff]
    %s5253 = scalar_lea.vmem [#allocation2], 769
    %v5254 = vld [vmem:[%s5253] ss:$2 sm:$0xff]
    %s5255 = scalar_lea.vmem [#allocation2], 785
    %v5256 = vld [vmem:[%s5255] ss:$2 sm:$0xff]
    %s5257 = scalar_lea.vmem [#allocation2], 801
    %v5258 = vld [vmem:[%s5257] ss:$2 sm:$0xff]
    %s5259 = scalar_lea.vmem [#allocation2], 817
    %v5260 = vld [vmem:[%s5259] ss:$2 sm:$0xff]
    %s5261 = scalar_lea.vmem [#allocation2], 833
    %v5262 = vld [vmem:[%s5261] ss:$2 sm:$0xff]
    %s5263 = scalar_lea.vmem [#allocation2], 849
    %v5264 = vld [vmem:[%s5263] ss:$2 sm:$0xff]
    %s5265 = scalar_lea.vmem [#allocation2], 865
    %v5266 = vld [vmem:[%s5265] ss:$2 sm:$0xff]
    %s5267 = scalar_lea.vmem [#allocation2], 881
    %v5268 = vld [vmem:[%s5267] ss:$2 sm:$0xff]
    %s5269 = scalar_lea.vmem [#allocation2], 897
    %v5270 = vld [vmem:[%s5269] ss:$2 sm:$0xff]
    %s5271 = scalar_lea.vmem [#allocation2], 913
    %v5272 = vld [vmem:[%s5271] ss:$2 sm:$0xff]
    %s5273 = scalar_lea.vmem [#allocation2], 929
    %v5274 = vld [vmem:[%s5273] ss:$2 sm:$0xff]
    %s5275 = scalar_lea.vmem [#allocation2], 945
    %v5276 = vld [vmem:[%s5275] ss:$2 sm:$0xff]
    %s5277 = scalar_lea.vmem [#allocation2], 961
    %v5278 = vld [vmem:[%s5277] ss:$2 sm:$0xff]
    %s5279 = scalar_lea.vmem [#allocation2], 977
    %v5280 = vld [vmem:[%s5279] ss:$2 sm:$0xff]
    %s5281 = scalar_lea.vmem [#allocation2], 993
    %v5282 = vld [vmem:[%s5281] ss:$2 sm:$0xff]
    %s5283 = scalar_lea.vmem [#allocation2], 1009
    %v5284 = vld [vmem:[%s5283] ss:$2 sm:$0xff]
    %s5285 = scalar_lea.vmem [#allocation2], 1025
    %v5286 = vld [vmem:[%s5285] ss:$2 sm:$0xff]
    %s5287 = scalar_lea.vmem [#allocation2], 1041
    %v5288 = vld [vmem:[%s5287] ss:$2 sm:$0xff]
    %s5289 = scalar_lea.vmem [#allocation2], 1057
    %v5290 = vld [vmem:[%s5289] ss:$2 sm:$0xff]
    %s5291 = scalar_lea.vmem [#allocation2], 1073
    %v5292 = vld [vmem:[%s5291] ss:$2 sm:$0xff]
    %s5293 = scalar_lea.vmem [#allocation2], 1089
    %v5294 = vld [vmem:[%s5293] ss:$2 sm:$0xff]
    %s5295 = scalar_lea.vmem [#allocation2], 1105
    %v5296 = vld [vmem:[%s5295] ss:$2 sm:$0xff]
    %s5297 = scalar_lea.vmem [#allocation2], 1121
    %v5298 = vld [vmem:[%s5297] ss:$2 sm:$0xff]
    %s5299 = scalar_lea.vmem [#allocation2], 1137
    %v5300 = vld [vmem:[%s5299] ss:$2 sm:$0xff]
    %v5301 = vmax.f32 %v5014, %v5158
    %v5302 = vmax.f32 %v5016, %v5160
    %v5303 = vmax.f32 %v5018, %v5162
    %v5304 = vmax.f32 %v5020, %v5164
    %v5305 = vmax.f32 %v5022, %v5166
    %v5306 = vmax.f32 %v5024, %v5168
    %v5307 = vmax.f32 %v5026, %v5170
    %v5308 = vmax.f32 %v5028, %v5172
    %v5309 = vmax.f32 %v5030, %v5174
    %v5310 = vmax.f32 %v5032, %v5176
    %v5311 = vmax.f32 %v5034, %v5178
    %v5312 = vmax.f32 %v5036, %v5180
    %v5313 = vmax.f32 %v5038, %v5182
    %v5314 = vmax.f32 %v5040, %v5184
    %v5315 = vmax.f32 %v5042, %v5186
    %v5316 = vmax.f32 %v5044, %v5188
    %v5317 = vmax.f32 %v5046, %v5190
    %v5318 = vmax.f32 %v5048, %v5192
    %v5319 = vmax.f32 %v5050, %v5194
    %v5320 = vmax.f32 %v5052, %v5196
    %v5321 = vmax.f32 %v5054, %v5198
    %v5322 = vmax.f32 %v5056, %v5200
    %v5323 = vmax.f32 %v5058, %v5202
    %v5324 = vmax.f32 %v5060, %v5204
    %v5325 = vmax.f32 %v5062, %v5206
    %v5326 = vmax.f32 %v5064, %v5208
    %v5327 = vmax.f32 %v5066, %v5210
    %v5328 = vmax.f32 %v5068, %v5212
    %v5329 = vmax.f32 %v5070, %v5214
    %v5330 = vmax.f32 %v5072, %v5216
    %v5331 = vmax.f32 %v5074, %v5218
    %v5332 = vmax.f32 %v5076, %v5220
    %v5333 = vmax.f32 %v5078, %v5222
    %v5334 = vmax.f32 %v5080, %v5224
    %v5335 = vmax.f32 %v5082, %v5226
    %v5336 = vmax.f32 %v5084, %v5228
    %v5337 = vmax.f32 %v5086, %v5230
    %v5338 = vmax.f32 %v5088, %v5232
    %v5339 = vmax.f32 %v5090, %v5234
    %v5340 = vmax.f32 %v5092, %v5236
    %v5341 = vmax.f32 %v5094, %v5238
    %v5342 = vmax.f32 %v5096, %v5240
    %v5343 = vmax.f32 %v5098, %v5242
    %v5344 = vmax.f32 %v5100, %v5244
    %v5345 = vmax.f32 %v5102, %v5246
    %v5346 = vmax.f32 %v5104, %v5248
    %v5347 = vmax.f32 %v5106, %v5250
    %v5348 = vmax.f32 %v5108, %v5252
    %v5349 = vmax.f32 %v5110, %v5254
    %v5350 = vmax.f32 %v5112, %v5256
    %v5351 = vmax.f32 %v5114, %v5258
    %v5352 = vmax.f32 %v5116, %v5260
    %v5353 = vmax.f32 %v5118, %v5262
    %v5354 = vmax.f32 %v5120, %v5264
    %v5355 = vmax.f32 %v5122, %v5266
    %v5356 = vmax.f32 %v5124, %v5268
    %v5357 = vmax.f32 %v5126, %v5270
    %v5358 = vmax.f32 %v5128, %v5272
    %v5359 = vmax.f32 %v5130, %v5274
    %v5360 = vmax.f32 %v5132, %v5276
    %v5361 = vmax.f32 %v5134, %v5278
    %v5362 = vmax.f32 %v5136, %v5280
    %v5363 = vmax.f32 %v5138, %v5282
    %v5364 = vmax.f32 %v5140, %v5284
    %v5365 = vmax.f32 %v5142, %v5286
    %v5366 = vmax.f32 %v5144, %v5288
    %v5367 = vmax.f32 %v5146, %v5290
    %v5368 = vmax.f32 %v5148, %v5292
    %v5369 = vmax.f32 %v5150, %v5294
    %v5370 = vmax.f32 %v5152, %v5296
    %v5371 = vmax.f32 %v5154, %v5298
    %v5372 = vmax.f32 %v5156, %v5300
    %vm5444 = vcmask 1043456
    %v5445 = vrot.slane %v5302, 4
    %v5446 = vrot.slane %v5303, 4
    %v5447 = vsel %vm5444, %v5445, %v5446
    %v5448 = vrot.slane %v5304, 4
    %v5449 = vsel %vm5444, %v5446, %v5448
    %v5450 = vrot.slane %v5305, 4
    %v5451 = vsel %vm5444, %v5448, %v5450
    %v5452 = vrot.slane %v5306, 4
    %v5453 = vsel %vm5444, %v5450, %v5452
    %v5454 = vrot.slane %v5307, 4
    %v5455 = vsel %vm5444, %v5452, %v5454
    %v5456 = vrot.slane %v5308, 4
    %v5457 = vsel %vm5444, %v5454, %v5456
    %v5458 = vrot.slane %v5309, 4
    %v5459 = vsel %vm5444, %v5456, %v5458
    %v5460 = vrot.slane %v5310, 4
    %v5461 = vsel %vm5444, %v5458, %v5460
    %v5462 = vrot.slane %v5311, 4
    %v5463 = vsel %vm5444, %v5460, %v5462
    %v5464 = vrot.slane %v5312, 4
    %v5465 = vsel %vm5444, %v5462, %v5464
    %v5466 = vrot.slane %v5313, 4
    %v5467 = vsel %vm5444, %v5464, %v5466
    %v5468 = vrot.slane %v5314, 4
    %v5469 = vsel %vm5444, %v5466, %v5468
    %v5470 = vrot.slane %v5315, 4
    %v5471 = vsel %vm5444, %v5468, %v5470
    %v5472 = vrot.slane %v5316, 4
    %v5473 = vsel %vm5444, %v5470, %v5472
    %v5474 = vrot.slane %v5317, 4
    %v5475 = vsel %vm5444, %v5472, %v5474
    %v5476 = vrot.slane %v5318, 4
    %v5477 = vsel %vm5444, %v5474, %v5476
    %v5478 = vrot.slane %v5319, 4
    %v5479 = vsel %vm5444, %v5476, %v5478
    %v5480 = vrot.slane %v5320, 4
    %v5481 = vsel %vm5444, %v5478, %v5480
    %v5482 = vrot.slane %v5321, 4
    %v5483 = vsel %vm5444, %v5480, %v5482
    %v5484 = vrot.slane %v5322, 4
    %v5485 = vsel %vm5444, %v5482, %v5484
    %v5486 = vrot.slane %v5323, 4
    %v5487 = vsel %vm5444, %v5484, %v5486
    %v5488 = vrot.slane %v5324, 4
    %v5489 = vsel %vm5444, %v5486, %v5488
    %v5490 = vrot.slane %v5325, 4
    %v5491 = vsel %vm5444, %v5488, %v5490
    %v5492 = vrot.slane %v5326, 4
    %v5493 = vsel %vm5444, %v5490, %v5492
    %v5494 = vrot.slane %v5327, 4
    %v5495 = vsel %vm5444, %v5492, %v5494
    %v5496 = vrot.slane %v5328, 4
    %v5497 = vsel %vm5444, %v5494, %v5496
    %v5498 = vrot.slane %v5329, 4
    %v5499 = vsel %vm5444, %v5496, %v5498
    %v5500 = vrot.slane %v5330, 4
    %v5501 = vsel %vm5444, %v5498, %v5500
    %v5502 = vrot.slane %v5331, 4
    %v5503 = vsel %vm5444, %v5500, %v5502
    %v5504 = vrot.slane %v5332, 4
    %v5505 = vsel %vm5444, %v5502, %v5504
    %v5506 = vrot.slane %v5333, 4
    %v5507 = vsel %vm5444, %v5504, %v5506
    %v5508 = vrot.slane %v5334, 4
    %v5509 = vsel %vm5444, %v5506, %v5508
    %v5510 = vrot.slane %v5335, 4
    %v5511 = vsel %vm5444, %v5508, %v5510
    %v5512 = vrot.slane %v5336, 4
    %v5513 = vsel %vm5444, %v5510, %v5512
    %v5514 = vrot.slane %v5337, 4
    %v5515 = vsel %vm5444, %v5512, %v5514
    %v5516 = vrot.slane %v5338, 4
    %v5517 = vsel %vm5444, %v5514, %v5516
    %v5518 = vrot.slane %v5339, 4
    %v5519 = vsel %vm5444, %v5516, %v5518
    %v5520 = vrot.slane %v5340, 4
    %v5521 = vsel %vm5444, %v5518, %v5520
    %v5522 = vrot.slane %v5341, 4
    %v5523 = vsel %vm5444, %v5520, %v5522
    %v5524 = vrot.slane %v5342, 4
    %v5525 = vsel %vm5444, %v5522, %v5524
    %v5526 = vrot.slane %v5343, 4
    %v5527 = vsel %vm5444, %v5524, %v5526
    %v5528 = vrot.slane %v5344, 4
    %v5529 = vsel %vm5444, %v5526, %v5528
    %v5530 = vrot.slane %v5345, 4
    %v5531 = vsel %vm5444, %v5528, %v5530
    %v5532 = vrot.slane %v5346, 4
    %v5533 = vsel %vm5444, %v5530, %v5532
    %v5534 = vrot.slane %v5347, 4
    %v5535 = vsel %vm5444, %v5532, %v5534
    %v5536 = vrot.slane %v5348, 4
    %v5537 = vsel %vm5444, %v5534, %v5536
    %v5538 = vrot.slane %v5349, 4
    %v5539 = vsel %vm5444, %v5536, %v5538
    %v5540 = vrot.slane %v5350, 4
    %v5541 = vsel %vm5444, %v5538, %v5540
    %v5542 = vrot.slane %v5351, 4
    %v5543 = vsel %vm5444, %v5540, %v5542
    %v5544 = vrot.slane %v5352, 4
    %v5545 = vsel %vm5444, %v5542, %v5544
    %v5546 = vrot.slane %v5353, 4
    %v5547 = vsel %vm5444, %v5544, %v5546
    %v5548 = vrot.slane %v5354, 4
    %v5549 = vsel %vm5444, %v5546, %v5548
    %v5550 = vrot.slane %v5355, 4
    %v5551 = vsel %vm5444, %v5548, %v5550
    %v5552 = vrot.slane %v5356, 4
    %v5553 = vsel %vm5444, %v5550, %v5552
    %v5554 = vrot.slane %v5357, 4
    %v5555 = vsel %vm5444, %v5552, %v5554
    %v5556 = vrot.slane %v5358, 4
    %v5557 = vsel %vm5444, %v5554, %v5556
    %v5558 = vrot.slane %v5359, 4
    %v5559 = vsel %vm5444, %v5556, %v5558
    %v5560 = vrot.slane %v5360, 4
    %v5561 = vsel %vm5444, %v5558, %v5560
    %v5562 = vrot.slane %v5361, 4
    %v5563 = vsel %vm5444, %v5560, %v5562
    %v5564 = vrot.slane %v5362, 4
    %v5565 = vsel %vm5444, %v5562, %v5564
    %v5566 = vrot.slane %v5363, 4
    %v5567 = vsel %vm5444, %v5564, %v5566
    %v5568 = vrot.slane %v5364, 4
    %v5569 = vsel %vm5444, %v5566, %v5568
    %v5570 = vrot.slane %v5365, 4
    %v5571 = vsel %vm5444, %v5568, %v5570
    %v5572 = vrot.slane %v5366, 4
    %v5573 = vsel %vm5444, %v5570, %v5572
    %v5574 = vrot.slane %v5367, 4
    %v5575 = vsel %vm5444, %v5572, %v5574
    %v5576 = vrot.slane %v5368, 4
    %v5577 = vsel %vm5444, %v5574, %v5576
    %v5578 = vrot.slane %v5369, 4
    %v5579 = vsel %vm5444, %v5576, %v5578
    %v5580 = vrot.slane %v5370, 4
    %v5581 = vsel %vm5444, %v5578, %v5580
    %v5582 = vrot.slane %v5371, 4
    %v5583 = vsel %vm5444, %v5580, %v5582
    %v5584 = vrot.slane %v5372, 4
    %v5585 = vsel %vm5444, %v5582, %v5584
    %v5657 = vmax.f32 %v5301, %v5447
    %v5658 = vmax.f32 %v5302, %v5449
    %v5659 = vmax.f32 %v5303, %v5451
    %v5660 = vmax.f32 %v5304, %v5453
    %v5661 = vmax.f32 %v5305, %v5455
    %v5662 = vmax.f32 %v5306, %v5457
    %v5663 = vmax.f32 %v5307, %v5459
    %v5664 = vmax.f32 %v5308, %v5461
    %v5665 = vmax.f32 %v5309, %v5463
    %v5666 = vmax.f32 %v5310, %v5465
    %v5667 = vmax.f32 %v5311, %v5467
    %v5668 = vmax.f32 %v5312, %v5469
    %v5669 = vmax.f32 %v5313, %v5471
    %v5670 = vmax.f32 %v5314, %v5473
    %v5671 = vmax.f32 %v5315, %v5475
    %v5672 = vmax.f32 %v5316, %v5477
    %v5673 = vmax.f32 %v5317, %v5479
    %v5674 = vmax.f32 %v5318, %v5481
    %v5675 = vmax.f32 %v5319, %v5483
    %v5676 = vmax.f32 %v5320, %v5485
    %v5677 = vmax.f32 %v5321, %v5487
    %v5678 = vmax.f32 %v5322, %v5489
    %v5679 = vmax.f32 %v5323, %v5491
    %v5680 = vmax.f32 %v5324, %v5493
    %v5681 = vmax.f32 %v5325, %v5495
    %v5682 = vmax.f32 %v5326, %v5497
    %v5683 = vmax.f32 %v5327, %v5499
    %v5684 = vmax.f32 %v5328, %v5501
    %v5685 = vmax.f32 %v5329, %v5503
    %v5686 = vmax.f32 %v5330, %v5505
    %v5687 = vmax.f32 %v5331, %v5507
    %v5688 = vmax.f32 %v5332, %v5509
    %v5689 = vmax.f32 %v5333, %v5511
    %v5690 = vmax.f32 %v5334, %v5513
    %v5691 = vmax.f32 %v5335, %v5515
    %v5692 = vmax.f32 %v5336, %v5517
    %v5693 = vmax.f32 %v5337, %v5519
    %v5694 = vmax.f32 %v5338, %v5521
    %v5695 = vmax.f32 %v5339, %v5523
    %v5696 = vmax.f32 %v5340, %v5525
    %v5697 = vmax.f32 %v5341, %v5527
    %v5698 = vmax.f32 %v5342, %v5529
    %v5699 = vmax.f32 %v5343, %v5531
    %v5700 = vmax.f32 %v5344, %v5533
    %v5701 = vmax.f32 %v5345, %v5535
    %v5702 = vmax.f32 %v5346, %v5537
    %v5703 = vmax.f32 %v5347, %v5539
    %v5704 = vmax.f32 %v5348, %v5541
    %v5705 = vmax.f32 %v5349, %v5543
    %v5706 = vmax.f32 %v5350, %v5545
    %v5707 = vmax.f32 %v5351, %v5547
    %v5708 = vmax.f32 %v5352, %v5549
    %v5709 = vmax.f32 %v5353, %v5551
    %v5710 = vmax.f32 %v5354, %v5553
    %v5711 = vmax.f32 %v5355, %v5555
    %v5712 = vmax.f32 %v5356, %v5557
    %v5713 = vmax.f32 %v5357, %v5559
    %v5714 = vmax.f32 %v5358, %v5561
    %v5715 = vmax.f32 %v5359, %v5563
    %v5716 = vmax.f32 %v5360, %v5565
    %v5717 = vmax.f32 %v5361, %v5567
    %v5718 = vmax.f32 %v5362, %v5569
    %v5719 = vmax.f32 %v5363, %v5571
    %v5720 = vmax.f32 %v5364, %v5573
    %v5721 = vmax.f32 %v5365, %v5575
    %v5722 = vmax.f32 %v5366, %v5577
    %v5723 = vmax.f32 %v5367, %v5579
    %v5724 = vmax.f32 %v5368, %v5581
    %v5725 = vmax.f32 %v5369, %v5583
    %v5726 = vmax.f32 %v5370, %v5585
    %v5727 = vmax.f32 %v5371, %v5584
    %v5728 = vld [vmem:[%s2] sm:$0xff]
    %v5729 = vld [vmem:[%s2 + $0x8] sm:$0xff]
    %v5730 = vld [vmem:[%s2 + $0x10] sm:$0xff]
    %v5731 = vld [vmem:[%s2 + $0x18] sm:$0xff]
    %v5732 = vld [vmem:[%s2 + $0x20] sm:$0xff]
    %v5733 = vld [vmem:[%s2 + $0x28] sm:$0xff]
    %v5734 = vld [vmem:[%s2 + $0x30] sm:$0xff]
    %v5735 = vld [vmem:[%s2 + $0x38] sm:$0xff]
    %v5736 = vld [vmem:[%s2 + $0x40] sm:$0xff]
    %v5737 = vld [vmem:[%s2 + $0x48] sm:$0xff]
    %v5738 = vld [vmem:[%s2 + $0x50] sm:$0xff]
    %v5739 = vld [vmem:[%s2 + $0x58] sm:$0xff]
    %v5740 = vld [vmem:[%s2 + $0x60] sm:$0xff]
    %v5741 = vld [vmem:[%s2 + $0x68] sm:$0xff]
    %v5742 = vld [vmem:[%s2 + $0x70] sm:$0xff]
    %v5743 = vld [vmem:[%s2 + $0x78] sm:$0xff]
    %v5744 = vld [vmem:[%s2 + $0x80] sm:$0xff]
    %v5745 = vld [vmem:[%s2 + $0x88] sm:$0xff]
    %v5746 = vld [vmem:[%s2 + $0x90] sm:$0xff]
    %v5747 = vld [vmem:[%s2 + $0x98] sm:$0xff]
    %v5748 = vld [vmem:[%s2 + $0xa0] sm:$0xff]
    %v5749 = vld [vmem:[%s2 + $0xa8] sm:$0xff]
    %v5750 = vld [vmem:[%s2 + $0xb0] sm:$0xff]
    %v5751 = vld [vmem:[%s2 + $0xb8] sm:$0xff]
    %v5752 = vld [vmem:[%s2 + $0xc0] sm:$0xff]
    %v5753 = vld [vmem:[%s2 + $0xc8] sm:$0xff]
    %v5754 = vld [vmem:[%s2 + $0xd0] sm:$0xff]
    %v5755 = vld [vmem:[%s2 + $0xd8] sm:$0xff]
    %v5756 = vld [vmem:[%s2 + $0xe0] sm:$0xff]
    %v5757 = vld [vmem:[%s2 + $0xe8] sm:$0xff]
    %v5758 = vld [vmem:[%s2 + $0xf0] sm:$0xff]
    %v5759 = vld [vmem:[%s2 + $0xf8] sm:$0xff]
    %v5760 = vld [vmem:[%s2 + $0x100] sm:$0xff]
    %v5761 = vld [vmem:[%s2 + $0x108] sm:$0xff]
    %v5762 = vld [vmem:[%s2 + $0x110] sm:$0xff]
    %v5763 = vld [vmem:[%s2 + $0x118] sm:$0xff]
    %v5764 = vld [vmem:[%s2 + $0x120] sm:$0xff]
    %v5765 = vld [vmem:[%s2 + $0x128] sm:$0xff]
    %v5766 = vld [vmem:[%s2 + $0x130] sm:$0xff]
    %v5767 = vld [vmem:[%s2 + $0x138] sm:$0xff]
    %v5768 = vld [vmem:[%s2 + $0x140] sm:$0xff]
    %v5769 = vld [vmem:[%s2 + $0x148] sm:$0xff]
    %v5770 = vld [vmem:[%s2 + $0x150] sm:$0xff]
    %v5771 = vld [vmem:[%s2 + $0x158] sm:$0xff]
    %v5772 = vld [vmem:[%s2 + $0x160] sm:$0xff]
    %v5773 = vld [vmem:[%s2 + $0x168] sm:$0xff]
    %v5774 = vld [vmem:[%s2 + $0x170] sm:$0xff]
    %v5775 = vld [vmem:[%s2 + $0x178] sm:$0xff]
    %v5776 = vld [vmem:[%s2 + $0x180] sm:$0xff]
    %v5777 = vld [vmem:[%s2 + $0x188] sm:$0xff]
    %v5778 = vld [vmem:[%s2 + $0x190] sm:$0xff]
    %v5779 = vld [vmem:[%s2 + $0x198] sm:$0xff]
    %v5780 = vld [vmem:[%s2 + $0x1a0] sm:$0xff]
    %v5781 = vld [vmem:[%s2 + $0x1a8] sm:$0xff]
    %v5782 = vld [vmem:[%s2 + $0x1b0] sm:$0xff]
    %v5783 = vld [vmem:[%s2 + $0x1b8] sm:$0xff]
    %v5784 = vld [vmem:[%s2 + $0x1c0] sm:$0xff]
    %v5785 = vld [vmem:[%s2 + $0x1c8] sm:$0xff]
    %v5786 = vld [vmem:[%s2 + $0x1d0] sm:$0xff]
    %v5787 = vld [vmem:[%s2 + $0x1d8] sm:$0xff]
    %v5788 = vld [vmem:[%s2 + $0x1e0] sm:$0xff]
    %v5789 = vld [vmem:[%s2 + $0x1e8] sm:$0xff]
    %v5790 = vld [vmem:[%s2 + $0x1f0] sm:$0xff]
    %v5791 = vld [vmem:[%s2 + $0x1f8] sm:$0xff]
    %v5792 = vld [vmem:[%s2 + $0x200] sm:$0xff]
    %v5793 = vld [vmem:[%s2 + $0x208] sm:$0xff]
    %v5794 = vld [vmem:[%s2 + $0x210] sm:$0xff]
    %v5795 = vld [vmem:[%s2 + $0x218] sm:$0xff]
    %v5796 = vld [vmem:[%s2 + $0x220] sm:$0xff]
    %v5797 = vld [vmem:[%s2 + $0x228] sm:$0xff]
    %v5798 = vld [vmem:[%s2 + $0x230] sm:$0xff]
    %v5799 = vld [vmem:[%s2 + $0x238] sm:$0xff]
    %v5800 = vld [vmem:[%s2 + $0x240] sm:$0xff]
    %v5801 = vld [vmem:[%s2 + $0x248] sm:$0xff]
    %v5802 = vld [vmem:[%s2 + $0x250] sm:$0xff]
    %v5803 = vld [vmem:[%s2 + $0x258] sm:$0xff]
    %v5804 = vld [vmem:[%s2 + $0x260] sm:$0xff]
    %v5805 = vld [vmem:[%s2 + $0x268] sm:$0xff]
    %v5806 = vld [vmem:[%s2 + $0x270] sm:$0xff]
    %v5807 = vld [vmem:[%s2 + $0x278] sm:$0xff]
    %v5808 = vld [vmem:[%s2 + $0x280] sm:$0xff]
    %v5809 = vld [vmem:[%s2 + $0x288] sm:$0xff]
    %v5810 = vld [vmem:[%s2 + $0x290] sm:$0xff]
    %v5811 = vld [vmem:[%s2 + $0x298] sm:$0xff]
    %v5812 = vld [vmem:[%s2 + $0x2a0] sm:$0xff]
    %v5813 = vld [vmem:[%s2 + $0x2a8] sm:$0xff]
    %v5814 = vld [vmem:[%s2 + $0x2b0] sm:$0xff]
    %v5815 = vld [vmem:[%s2 + $0x2b8] sm:$0xff]
    %v5816 = vld [vmem:[%s2 + $0x2c0] sm:$0xff]
    %v5817 = vld [vmem:[%s2 + $0x2c8] sm:$0xff]
    %v5818 = vld [vmem:[%s2 + $0x2d0] sm:$0xff]
    %v5819 = vld [vmem:[%s2 + $0x2d8] sm:$0xff]
    %v5820 = vld [vmem:[%s2 + $0x2e0] sm:$0xff]
    %v5821 = vld [vmem:[%s2 + $0x2e8] sm:$0xff]
    %v5822 = vld [vmem:[%s2 + $0x2f0] sm:$0xff]
    %v5823 = vld [vmem:[%s2 + $0x2f8] sm:$0xff]
    %v5824 = vld [vmem:[%s2 + $0x300] sm:$0xff]
    %v5825 = vld [vmem:[%s2 + $0x308] sm:$0xff]
    %v5826 = vld [vmem:[%s2 + $0x310] sm:$0xff]
    %v5827 = vld [vmem:[%s2 + $0x318] sm:$0xff]
    %v5828 = vld [vmem:[%s2 + $0x320] sm:$0xff]
    %v5829 = vld [vmem:[%s2 + $0x328] sm:$0xff]
    %v5830 = vld [vmem:[%s2 + $0x330] sm:$0xff]
    %v5831 = vld [vmem:[%s2 + $0x338] sm:$0xff]
    %v5832 = vld [vmem:[%s2 + $0x340] sm:$0xff]
    %v5833 = vld [vmem:[%s2 + $0x348] sm:$0xff]
    %v5834 = vld [vmem:[%s2 + $0x350] sm:$0xff]
    %v5835 = vld [vmem:[%s2 + $0x358] sm:$0xff]
    %v5836 = vld [vmem:[%s2 + $0x360] sm:$0xff]
    %v5837 = vld [vmem:[%s2 + $0x368] sm:$0xff]
    %v5838 = vld [vmem:[%s2 + $0x370] sm:$0xff]
    %v5839 = vld [vmem:[%s2 + $0x378] sm:$0xff]
    %v5840 = vld [vmem:[%s2 + $0x380] sm:$0xff]
    %v5841 = vld [vmem:[%s2 + $0x388] sm:$0xff]
    %v5842 = vld [vmem:[%s2 + $0x390] sm:$0xff]
    %v5843 = vld [vmem:[%s2 + $0x398] sm:$0xff]
    %v5844 = vld [vmem:[%s2 + $0x3a0] sm:$0xff]
    %v5845 = vld [vmem:[%s2 + $0x3a8] sm:$0xff]
    %v5846 = vld [vmem:[%s2 + $0x3b0] sm:$0xff]
    %v5847 = vld [vmem:[%s2 + $0x3b8] sm:$0xff]
    %v5848 = vld [vmem:[%s2 + $0x3c0] sm:$0xff]
    %v5849 = vld [vmem:[%s2 + $0x3c8] sm:$0xff]
    %v5850 = vld [vmem:[%s2 + $0x3d0] sm:$0xff]
    %v5851 = vld [vmem:[%s2 + $0x3d8] sm:$0xff]
    %v5852 = vld [vmem:[%s2 + $0x3e0] sm:$0xff]
    %v5853 = vld [vmem:[%s2 + $0x3e8] sm:$0xff]
    %v5854 = vld [vmem:[%s2 + $0x3f0] sm:$0xff]
    %v5855 = vld [vmem:[%s2 + $0x3f8] sm:$0xff]
    %v5856 = vld [vmem:[%s2 + $0x400] sm:$0xff]
    %v5857 = vld [vmem:[%s2 + $0x408] sm:$0xff]
    %v5858 = vld [vmem:[%s2 + $0x410] sm:$0xff]
    %v5859 = vld [vmem:[%s2 + $0x418] sm:$0xff]
    %v5860 = vld [vmem:[%s2 + $0x420] sm:$0xff]
    %v5861 = vld [vmem:[%s2 + $0x428] sm:$0xff]
    %v5862 = vld [vmem:[%s2 + $0x430] sm:$0xff]
    %v5863 = vld [vmem:[%s2 + $0x438] sm:$0xff]
    %v5864 = vld [vmem:[%s2 + $0x440] sm:$0xff]
    %v5865 = vld [vmem:[%s2 + $0x448] sm:$0xff]
    %v5866 = vld [vmem:[%s2 + $0x450] sm:$0xff]
    %v5867 = vld [vmem:[%s2 + $0x458] sm:$0xff]
    %v5868 = vld [vmem:[%s2 + $0x460] sm:$0xff]
    %v5869 = vld [vmem:[%s2 + $0x468] sm:$0xff]
    %v5870 = vld [vmem:[%s2 + $0x470] sm:$0xff]
    %v5871 = vld [vmem:[%s2 + $0x478] sm:$0xff]
    %v5872 = vld [vmem:[%s2 + $0x480] sm:$0xff]
    %v5873 = vld [vmem:[%s2 + $0x488] sm:$0xff]
    %v5874 = vld [vmem:[%s2 + $0x490] sm:$0xff]
    %v5875 = vld [vmem:[%s2 + $0x498] sm:$0xff]
    %v5876 = vld [vmem:[%s2 + $0x4a0] sm:$0xff]
    %v5877 = vld [vmem:[%s2 + $0x4a8] sm:$0xff]
    %v5878 = vld [vmem:[%s2 + $0x4b0] sm:$0xff]
    %v5879 = vld [vmem:[%s2 + $0x4b8] sm:$0xff]
    %v5880 = vld [vmem:[%s2 + $0x4c0] sm:$0xff]
    %v5881 = vld [vmem:[%s2 + $0x4c8] sm:$0xff]
    %v5882 = vld [vmem:[%s2 + $0x4d0] sm:$0xff]
    %v5883 = vld [vmem:[%s2 + $0x4d8] sm:$0xff]
    %v5884 = vld [vmem:[%s2 + $0x4e0] sm:$0xff]
    %v5885 = vld [vmem:[%s2 + $0x4e8] sm:$0xff]
    %v5886 = vld [vmem:[%s2 + $0x4f0] sm:$0xff]
    %v5887 = vld [vmem:[%s2 + $0x4f8] sm:$0xff]
    %v5888 = vld [vmem:[%s2 + $0x500] sm:$0xff]
    %v5889 = vld [vmem:[%s2 + $0x508] sm:$0xff]
    %v5890 = vld [vmem:[%s2 + $0x510] sm:$0xff]
    %v5891 = vld [vmem:[%s2 + $0x518] sm:$0xff]
    %v5892 = vld [vmem:[%s2 + $0x520] sm:$0xff]
    %v5893 = vld [vmem:[%s2 + $0x528] sm:$0xff]
    %v5894 = vld [vmem:[%s2 + $0x530] sm:$0xff]
    %v5895 = vld [vmem:[%s2 + $0x538] sm:$0xff]
    %v5896 = vld [vmem:[%s2 + $0x540] sm:$0xff]
    %v5897 = vld [vmem:[%s2 + $0x548] sm:$0xff]
    %v5898 = vld [vmem:[%s2 + $0x550] sm:$0xff]
    %v5899 = vld [vmem:[%s2 + $0x558] sm:$0xff]
    %v5900 = vld [vmem:[%s2 + $0x560] sm:$0xff]
    %v5901 = vld [vmem:[%s2 + $0x568] sm:$0xff]
    %v5902 = vld [vmem:[%s2 + $0x570] sm:$0xff]
    %v5903 = vld [vmem:[%s2 + $0x578] sm:$0xff]
    %v5904 = vld [vmem:[%s2 + $0x580] sm:$0xff]
    %v5905 = vld [vmem:[%s2 + $0x588] sm:$0xff]
    %v5906 = vld [vmem:[%s2 + $0x590] sm:$0xff]
    %v5907 = vld [vmem:[%s2 + $0x598] sm:$0xff]
    %v5908 = vld [vmem:[%s2 + $0x5a0] sm:$0xff]
    %v5909 = vld [vmem:[%s2 + $0x5a8] sm:$0xff]
    %v5910 = vld [vmem:[%s2 + $0x5b0] sm:$0xff]
    %v5911 = vld [vmem:[%s2 + $0x5b8] sm:$0xff]
    %v5912 = vld [vmem:[%s2 + $0x5c0] sm:$0xff]
    %v5913 = vld [vmem:[%s2 + $0x5c8] sm:$0xff]
    %v5914 = vld [vmem:[%s2 + $0x5d0] sm:$0xff]
    %v5915 = vld [vmem:[%s2 + $0x5d8] sm:$0xff]
    %v5916 = vld [vmem:[%s2 + $0x5e0] sm:$0xff]
    %v5917 = vld [vmem:[%s2 + $0x5e8] sm:$0xff]
    %v5918 = vld [vmem:[%s2 + $0x5f0] sm:$0xff]
    %v5919 = vld [vmem:[%s2 + $0x5f8] sm:$0xff]
    %v5920 = vld [vmem:[%s2 + $0x600] sm:$0xff]
    %v5921 = vld [vmem:[%s2 + $0x608] sm:$0xff]
    %v5922 = vld [vmem:[%s2 + $0x610] sm:$0xff]
    %v5923 = vld [vmem:[%s2 + $0x618] sm:$0xff]
    %v5924 = vld [vmem:[%s2 + $0x620] sm:$0xff]
    %v5925 = vld [vmem:[%s2 + $0x628] sm:$0xff]
    %v5926 = vld [vmem:[%s2 + $0x630] sm:$0xff]
    %v5927 = vld [vmem:[%s2 + $0x638] sm:$0xff]
    %v5928 = vld [vmem:[%s2 + $0x640] sm:$0xff]
    %v5929 = vld [vmem:[%s2 + $0x648] sm:$0xff]
    %v5930 = vld [vmem:[%s2 + $0x650] sm:$0xff]
    %v5931 = vld [vmem:[%s2 + $0x658] sm:$0xff]
    %v5932 = vld [vmem:[%s2 + $0x660] sm:$0xff]
    %v5933 = vld [vmem:[%s2 + $0x668] sm:$0xff]
    %v5934 = vld [vmem:[%s2 + $0x670] sm:$0xff]
    %v5935 = vld [vmem:[%s2 + $0x678] sm:$0xff]
    %v5936 = vld [vmem:[%s2 + $0x680] sm:$0xff]
    %v5937 = vld [vmem:[%s2 + $0x688] sm:$0xff]
    %v5938 = vld [vmem:[%s2 + $0x690] sm:$0xff]
    %v5939 = vld [vmem:[%s2 + $0x698] sm:$0xff]
    %v5940 = vld [vmem:[%s2 + $0x6a0] sm:$0xff]
    %v5941 = vld [vmem:[%s2 + $0x6a8] sm:$0xff]
    %v5942 = vld [vmem:[%s2 + $0x6b0] sm:$0xff]
    %v5943 = vld [vmem:[%s2 + $0x6b8] sm:$0xff]
    %v5944 = vld [vmem:[%s2 + $0x6c0] sm:$0xff]
    %v5945 = vld [vmem:[%s2 + $0x6c8] sm:$0xff]
    %v5946 = vld [vmem:[%s2 + $0x6d0] sm:$0xff]
    %v5947 = vld [vmem:[%s2 + $0x6d8] sm:$0xff]
    %v5948 = vld [vmem:[%s2 + $0x6e0] sm:$0xff]
    %v5949 = vld [vmem:[%s2 + $0x6e8] sm:$0xff]
    %v5950 = vld [vmem:[%s2 + $0x6f0] sm:$0xff]
    %v5951 = vld [vmem:[%s2 + $0x6f8] sm:$0xff]
    %v5952 = vld [vmem:[%s2 + $0x700] sm:$0xff]
    %v5953 = vld [vmem:[%s2 + $0x708] sm:$0xff]
    %v5954 = vld [vmem:[%s2 + $0x710] sm:$0xff]
    %v5955 = vld [vmem:[%s2 + $0x718] sm:$0xff]
    %v5956 = vld [vmem:[%s2 + $0x720] sm:$0xff]
    %v5957 = vld [vmem:[%s2 + $0x728] sm:$0xff]
    %v5958 = vld [vmem:[%s2 + $0x730] sm:$0xff]
    %v5959 = vld [vmem:[%s2 + $0x738] sm:$0xff]
    %v5960 = vld [vmem:[%s2 + $0x740] sm:$0xff]
    %v5961 = vld [vmem:[%s2 + $0x748] sm:$0xff]
    %v5962 = vld [vmem:[%s2 + $0x750] sm:$0xff]
    %v5963 = vld [vmem:[%s2 + $0x758] sm:$0xff]
    %v5964 = vld [vmem:[%s2 + $0x760] sm:$0xff]
    %v5965 = vld [vmem:[%s2 + $0x768] sm:$0xff]
    %v5966 = vld [vmem:[%s2 + $0x770] sm:$0xff]
    %v5967 = vld [vmem:[%s2 + $0x778] sm:$0xff]
    %v5968 = vld [vmem:[%s2 + $0x780] sm:$0xff]
    %v5969 = vld [vmem:[%s2 + $0x788] sm:$0xff]
    %v5970 = vld [vmem:[%s2 + $0x790] sm:$0xff]
    %v5971 = vld [vmem:[%s2 + $0x798] sm:$0xff]
    %v5972 = vld [vmem:[%s2 + $0x7a0] sm:$0xff]
    %v5973 = vld [vmem:[%s2 + $0x7a8] sm:$0xff]
    %v5974 = vld [vmem:[%s2 + $0x7b0] sm:$0xff]
    %v5975 = vld [vmem:[%s2 + $0x7b8] sm:$0xff]
    %v5976 = vld [vmem:[%s2 + $0x7c0] sm:$0xff]
    %v5977 = vld [vmem:[%s2 + $0x7c8] sm:$0xff]
    %v5978 = vld [vmem:[%s2 + $0x7d0] sm:$0xff]
    %v5979 = vld [vmem:[%s2 + $0x7d8] sm:$0xff]
    %v5980 = vld [vmem:[%s2 + $0x7e0] sm:$0xff]
    %v5981 = vld [vmem:[%s2 + $0x7e8] sm:$0xff]
    %v5982 = vld [vmem:[%s2 + $0x7f0] sm:$0xff]
    %v5983 = vld [vmem:[%s2 + $0x7f8] sm:$0xff]
    %v5984 = vld [vmem:[%s2 + $0x800] sm:$0xff]
    %v5985 = vld [vmem:[%s2 + $0x808] sm:$0xff]
    %v5986 = vld [vmem:[%s2 + $0x810] sm:$0xff]
    %v5987 = vld [vmem:[%s2 + $0x818] sm:$0xff]
    %v5988 = vld [vmem:[%s2 + $0x820] sm:$0xff]
    %v5989 = vld [vmem:[%s2 + $0x828] sm:$0xff]
    %v5990 = vld [vmem:[%s2 + $0x830] sm:$0xff]
    %v5991 = vld [vmem:[%s2 + $0x838] sm:$0xff]
    %v5992 = vld [vmem:[%s2 + $0x840] sm:$0xff]
    %v5993 = vld [vmem:[%s2 + $0x848] sm:$0xff]
    %v5994 = vld [vmem:[%s2 + $0x850] sm:$0xff]
    %v5995 = vld [vmem:[%s2 + $0x858] sm:$0xff]
    %v5996 = vld [vmem:[%s2 + $0x860] sm:$0xff]
    %v5997 = vld [vmem:[%s2 + $0x868] sm:$0xff]
    %v5998 = vld [vmem:[%s2 + $0x870] sm:$0xff]
    %v5999 = vld [vmem:[%s2 + $0x878] sm:$0xff]
    %v6000 = vld [vmem:[%s2 + $0x880] sm:$0xff]
    %v6001 = vld [vmem:[%s2 + $0x888] sm:$0xff]
    %v6002 = vld [vmem:[%s2 + $0x890] sm:$0xff]
    %v6003 = vld [vmem:[%s2 + $0x898] sm:$0xff]
    %v6004 = vld [vmem:[%s2 + $0x8a0] sm:$0xff]
    %v6005 = vld [vmem:[%s2 + $0x8a8] sm:$0xff]
    %v6006 = vld [vmem:[%s2 + $0x8b0] sm:$0xff]
    %v6007 = vld [vmem:[%s2 + $0x8b8] sm:$0xff]
    %v6008 = vld [vmem:[%s2 + $0x8c0] sm:$0xff]
    %v6009 = vld [vmem:[%s2 + $0x8c8] sm:$0xff]
    %v6010 = vld [vmem:[%s2 + $0x8d0] sm:$0xff]
    %v6011 = vld [vmem:[%s2 + $0x8d8] sm:$0xff]
    %v6012 = vld [vmem:[%s2 + $0x8e0] sm:$0xff]
    %v6013 = vld [vmem:[%s2 + $0x8e8] sm:$0xff]
    %v6014 = vld [vmem:[%s2 + $0x8f0] sm:$0xff]
    %v6015 = vld [vmem:[%s2 + $0x8f8] sm:$0xff]
    %v6016 = vld [vmem:[%s2 + $0x900] sm:$0xff]
    %v6017 = vld [vmem:[%s2 + $0x908] sm:$0xff]
    %v6018 = vld [vmem:[%s2 + $0x910] sm:$0xff]
    %v6019 = vld [vmem:[%s2 + $0x918] sm:$0xff]
    %v6020 = vld [vmem:[%s2 + $0x920] sm:$0xff]
    %v6021 = vld [vmem:[%s2 + $0x928] sm:$0xff]
    %v6022 = vld [vmem:[%s2 + $0x930] sm:$0xff]
    %v6023 = vld [vmem:[%s2 + $0x938] sm:$0xff]
    %v6024 = vld [vmem:[%s2 + $0x940] sm:$0xff]
    %v6025 = vld [vmem:[%s2 + $0x948] sm:$0xff]
    %v6026 = vld [vmem:[%s2 + $0x950] sm:$0xff]
    %v6027 = vld [vmem:[%s2 + $0x958] sm:$0xff]
    %v6028 = vld [vmem:[%s2 + $0x960] sm:$0xff]
    %v6029 = vld [vmem:[%s2 + $0x968] sm:$0xff]
    %v6030 = vld [vmem:[%s2 + $0x970] sm:$0xff]
    %v6031 = vld [vmem:[%s2 + $0x978] sm:$0xff]
    %v6032 = vld [vmem:[%s2 + $0x980] sm:$0xff]
    %v6033 = vld [vmem:[%s2 + $0x988] sm:$0xff]
    %v6034 = vld [vmem:[%s2 + $0x990] sm:$0xff]
    %v6035 = vld [vmem:[%s2 + $0x998] sm:$0xff]
    %v6036 = vld [vmem:[%s2 + $0x9a0] sm:$0xff]
    %v6037 = vld [vmem:[%s2 + $0x9a8] sm:$0xff]
    %v6038 = vld [vmem:[%s2 + $0x9b0] sm:$0xff]
    %v6039 = vld [vmem:[%s2 + $0x9b8] sm:$0xff]
    %v6040 = vld [vmem:[%s2 + $0x9c0] sm:$0xff]
    %v6041 = vld [vmem:[%s2 + $0x9c8] sm:$0xff]
    %v6042 = vld [vmem:[%s2 + $0x9d0] sm:$0xff]
    %v6043 = vld [vmem:[%s2 + $0x9d8] sm:$0xff]
    %v6044 = vld [vmem:[%s2 + $0x9e0] sm:$0xff]
    %v6045 = vld [vmem:[%s2 + $0x9e8] sm:$0xff]
    %v6046 = vld [vmem:[%s2 + $0x9f0] sm:$0xff]
    %v6047 = vld [vmem:[%s2 + $0x9f8] sm:$0xff]
    %v6048 = vld [vmem:[%s2 + $0xa00] sm:$0xff]
    %v6049 = vld [vmem:[%s2 + $0xa08] sm:$0xff]
    %v6050 = vld [vmem:[%s2 + $0xa10] sm:$0xff]
    %v6051 = vld [vmem:[%s2 + $0xa18] sm:$0xff]
    %v6052 = vld [vmem:[%s2 + $0xa20] sm:$0xff]
    %v6053 = vld [vmem:[%s2 + $0xa28] sm:$0xff]
    %v6054 = vld [vmem:[%s2 + $0xa30] sm:$0xff]
    %v6055 = vld [vmem:[%s2 + $0xa38] sm:$0xff]
    %v6056 = vld [vmem:[%s2 + $0xa40] sm:$0xff]
    %v6057 = vld [vmem:[%s2 + $0xa48] sm:$0xff]
    %v6058 = vld [vmem:[%s2 + $0xa50] sm:$0xff]
    %v6059 = vld [vmem:[%s2 + $0xa58] sm:$0xff]
    %v6060 = vld [vmem:[%s2 + $0xa60] sm:$0xff]
    %v6061 = vld [vmem:[%s2 + $0xa68] sm:$0xff]
    %v6062 = vld [vmem:[%s2 + $0xa70] sm:$0xff]
    %v6063 = vld [vmem:[%s2 + $0xa78] sm:$0xff]
    %v6064 = vld [vmem:[%s2 + $0xa80] sm:$0xff]
    %v6065 = vld [vmem:[%s2 + $0xa88] sm:$0xff]
    %v6066 = vld [vmem:[%s2 + $0xa90] sm:$0xff]
    %v6067 = vld [vmem:[%s2 + $0xa98] sm:$0xff]
    %v6068 = vld [vmem:[%s2 + $0xaa0] sm:$0xff]
    %v6069 = vld [vmem:[%s2 + $0xaa8] sm:$0xff]
    %v6070 = vld [vmem:[%s2 + $0xab0] sm:$0xff]
    %v6071 = vld [vmem:[%s2 + $0xab8] sm:$0xff]
    %v6072 = vld [vmem:[%s2 + $0xac0] sm:$0xff]
    %v6073 = vld [vmem:[%s2 + $0xac8] sm:$0xff]
    %v6074 = vld [vmem:[%s2 + $0xad0] sm:$0xff]
    %v6075 = vld [vmem:[%s2 + $0xad8] sm:$0xff]
    %v6076 = vld [vmem:[%s2 + $0xae0] sm:$0xff]
    %v6077 = vld [vmem:[%s2 + $0xae8] sm:$0xff]
    %v6078 = vld [vmem:[%s2 + $0xaf0] sm:$0xff]
    %v6079 = vld [vmem:[%s2 + $0xaf8] sm:$0xff]
    %v6080 = vld [vmem:[%s2 + $0xb00] sm:$0xff]
    %v6081 = vld [vmem:[%s2 + $0xb08] sm:$0xff]
    %v6082 = vld [vmem:[%s2 + $0xb10] sm:$0xff]
    %v6083 = vld [vmem:[%s2 + $0xb18] sm:$0xff]
    %v6084 = vld [vmem:[%s2 + $0xb20] sm:$0xff]
    %v6085 = vld [vmem:[%s2 + $0xb28] sm:$0xff]
    %v6086 = vld [vmem:[%s2 + $0xb30] sm:$0xff]
    %v6087 = vld [vmem:[%s2 + $0xb38] sm:$0xff]
    %v6088 = vld [vmem:[%s2 + $0xb40] sm:$0xff]
    %v6089 = vld [vmem:[%s2 + $0xb48] sm:$0xff]
    %v6090 = vld [vmem:[%s2 + $0xb50] sm:$0xff]
    %v6091 = vld [vmem:[%s2 + $0xb58] sm:$0xff]
    %v6092 = vld [vmem:[%s2 + $0xb60] sm:$0xff]
    %v6093 = vld [vmem:[%s2 + $0xb68] sm:$0xff]
    %v6094 = vld [vmem:[%s2 + $0xb70] sm:$0xff]
    %v6095 = vld [vmem:[%s2 + $0xb78] sm:$0xff]
    %v6096 = vld [vmem:[%s2 + $0xb80] sm:$0xff]
    %v6097 = vld [vmem:[%s2 + $0xb88] sm:$0xff]
    %v6098 = vld [vmem:[%s2 + $0xb90] sm:$0xff]
    %v6099 = vld [vmem:[%s2 + $0xb98] sm:$0xff]
    %v6100 = vld [vmem:[%s2 + $0xba0] sm:$0xff]
    %v6101 = vld [vmem:[%s2 + $0xba8] sm:$0xff]
    %v6102 = vld [vmem:[%s2 + $0xbb0] sm:$0xff]
    %v6103 = vld [vmem:[%s2 + $0xbb8] sm:$0xff]
    %v6104 = vld [vmem:[%s2 + $0xbc0] sm:$0xff]
    %v6105 = vld [vmem:[%s2 + $0xbc8] sm:$0xff]
    %v6106 = vld [vmem:[%s2 + $0xbd0] sm:$0xff]
    %v6107 = vld [vmem:[%s2 + $0xbd8] sm:$0xff]
    %v6108 = vld [vmem:[%s2 + $0xbe0] sm:$0xff]
    %v6109 = vld [vmem:[%s2 + $0xbe8] sm:$0xff]
    %v6110 = vld [vmem:[%s2 + $0xbf0] sm:$0xff]
    %v6111 = vld [vmem:[%s2 + $0xbf8] sm:$0xff]
    %v6112 = vld [vmem:[%s2 + $0xc00] sm:$0xff]
    %v6113 = vld [vmem:[%s2 + $0xc08] sm:$0xff]
    %v6114 = vld [vmem:[%s2 + $0xc10] sm:$0xff]
    %v6115 = vld [vmem:[%s2 + $0xc18] sm:$0xff]
    %v6116 = vld [vmem:[%s2 + $0xc20] sm:$0xff]
    %v6117 = vld [vmem:[%s2 + $0xc28] sm:$0xff]
    %v6118 = vld [vmem:[%s2 + $0xc30] sm:$0xff]
    %v6119 = vld [vmem:[%s2 + $0xc38] sm:$0xff]
    %v6120 = vld [vmem:[%s2 + $0xc40] sm:$0xff]
    %v6121 = vld [vmem:[%s2 + $0xc48] sm:$0xff]
    %v6122 = vld [vmem:[%s2 + $0xc50] sm:$0xff]
    %v6123 = vld [vmem:[%s2 + $0xc58] sm:$0xff]
    %v6124 = vld [vmem:[%s2 + $0xc60] sm:$0xff]
    %v6125 = vld [vmem:[%s2 + $0xc68] sm:$0xff]
    %v6126 = vld [vmem:[%s2 + $0xc70] sm:$0xff]
    %v6127 = vld [vmem:[%s2 + $0xc78] sm:$0xff]
    %v6128 = vld [vmem:[%s2 + $0xc80] sm:$0xff]
    %v6129 = vld [vmem:[%s2 + $0xc88] sm:$0xff]
    %v6130 = vld [vmem:[%s2 + $0xc90] sm:$0xff]
    %v6131 = vld [vmem:[%s2 + $0xc98] sm:$0xff]
    %v6132 = vld [vmem:[%s2 + $0xca0] sm:$0xff]
    %v6133 = vld [vmem:[%s2 + $0xca8] sm:$0xff]
    %v6134 = vld [vmem:[%s2 + $0xcb0] sm:$0xff]
    %v6135 = vld [vmem:[%s2 + $0xcb8] sm:$0xff]
    %v6136 = vld [vmem:[%s2 + $0xcc0] sm:$0xff]
    %v6137 = vld [vmem:[%s2 + $0xcc8] sm:$0xff]
    %v6138 = vld [vmem:[%s2 + $0xcd0] sm:$0xff]
    %v6139 = vld [vmem:[%s2 + $0xcd8] sm:$0xff]
    %v6140 = vld [vmem:[%s2 + $0xce0] sm:$0xff]
    %v6141 = vld [vmem:[%s2 + $0xce8] sm:$0xff]
    %v6142 = vld [vmem:[%s2 + $0xcf0] sm:$0xff]
    %v6143 = vld [vmem:[%s2 + $0xcf8] sm:$0xff]
    %v6144 = vld [vmem:[%s2 + $0xd00] sm:$0xff]
    %v6145 = vld [vmem:[%s2 + $0xd08] sm:$0xff]
    %v6146 = vld [vmem:[%s2 + $0xd10] sm:$0xff]
    %v6147 = vld [vmem:[%s2 + $0xd18] sm:$0xff]
    %v6148 = vld [vmem:[%s2 + $0xd20] sm:$0xff]
    %v6149 = vld [vmem:[%s2 + $0xd28] sm:$0xff]
    %v6150 = vld [vmem:[%s2 + $0xd30] sm:$0xff]
    %v6151 = vld [vmem:[%s2 + $0xd38] sm:$0xff]
    %v6152 = vld [vmem:[%s2 + $0xd40] sm:$0xff]
    %v6153 = vld [vmem:[%s2 + $0xd48] sm:$0xff]
    %v6154 = vld [vmem:[%s2 + $0xd50] sm:$0xff]
    %v6155 = vld [vmem:[%s2 + $0xd58] sm:$0xff]
    %v6156 = vld [vmem:[%s2 + $0xd60] sm:$0xff]
    %v6157 = vld [vmem:[%s2 + $0xd68] sm:$0xff]
    %v6158 = vld [vmem:[%s2 + $0xd70] sm:$0xff]
    %v6159 = vld [vmem:[%s2 + $0xd78] sm:$0xff]
    %v6160 = vld [vmem:[%s2 + $0xd80] sm:$0xff]
    %v6161 = vld [vmem:[%s2 + $0xd88] sm:$0xff]
    %v6162 = vld [vmem:[%s2 + $0xd90] sm:$0xff]
    %v6163 = vld [vmem:[%s2 + $0xd98] sm:$0xff]
    %v6164 = vld [vmem:[%s2 + $0xda0] sm:$0xff]
    %v6165 = vld [vmem:[%s2 + $0xda8] sm:$0xff]
    %v6166 = vld [vmem:[%s2 + $0xdb0] sm:$0xff]
    %v6167 = vld [vmem:[%s2 + $0xdb8] sm:$0xff]
    %v6168 = vld [vmem:[%s2 + $0xdc0] sm:$0xff]
    %v6169 = vld [vmem:[%s2 + $0xdc8] sm:$0xff]
    %v6170 = vld [vmem:[%s2 + $0xdd0] sm:$0xff]
    %v6171 = vld [vmem:[%s2 + $0xdd8] sm:$0xff]
    %v6172 = vld [vmem:[%s2 + $0xde0] sm:$0xff]
    %v6173 = vld [vmem:[%s2 + $0xde8] sm:$0xff]
    %v6174 = vld [vmem:[%s2 + $0xdf0] sm:$0xff]
    %v6175 = vld [vmem:[%s2 + $0xdf8] sm:$0xff]
    %v6176 = vld [vmem:[%s2 + $0xe00] sm:$0xff]
    %v6177 = vld [vmem:[%s2 + $0xe08] sm:$0xff]
    %v6178 = vld [vmem:[%s2 + $0xe10] sm:$0xff]
    %v6179 = vld [vmem:[%s2 + $0xe18] sm:$0xff]
    %v6180 = vld [vmem:[%s2 + $0xe20] sm:$0xff]
    %v6181 = vld [vmem:[%s2 + $0xe28] sm:$0xff]
    %v6182 = vld [vmem:[%s2 + $0xe30] sm:$0xff]
    %v6183 = vld [vmem:[%s2 + $0xe38] sm:$0xff]
    %v6184 = vld [vmem:[%s2 + $0xe40] sm:$0xff]
    %v6185 = vld [vmem:[%s2 + $0xe48] sm:$0xff]
    %v6186 = vld [vmem:[%s2 + $0xe50] sm:$0xff]
    %v6187 = vld [vmem:[%s2 + $0xe58] sm:$0xff]
    %v6188 = vld [vmem:[%s2 + $0xe60] sm:$0xff]
    %v6189 = vld [vmem:[%s2 + $0xe68] sm:$0xff]
    %v6190 = vld [vmem:[%s2 + $0xe70] sm:$0xff]
    %v6191 = vld [vmem:[%s2 + $0xe78] sm:$0xff]
    %v6192 = vld [vmem:[%s2 + $0xe80] sm:$0xff]
    %v6193 = vld [vmem:[%s2 + $0xe88] sm:$0xff]
    %v6194 = vld [vmem:[%s2 + $0xe90] sm:$0xff]
    %v6195 = vld [vmem:[%s2 + $0xe98] sm:$0xff]
    %v6196 = vld [vmem:[%s2 + $0xea0] sm:$0xff]
    %v6197 = vld [vmem:[%s2 + $0xea8] sm:$0xff]
    %v6198 = vld [vmem:[%s2 + $0xeb0] sm:$0xff]
    %v6199 = vld [vmem:[%s2 + $0xeb8] sm:$0xff]
    %v6200 = vld [vmem:[%s2 + $0xec0] sm:$0xff]
    %v6201 = vld [vmem:[%s2 + $0xec8] sm:$0xff]
    %v6202 = vld [vmem:[%s2 + $0xed0] sm:$0xff]
    %v6203 = vld [vmem:[%s2 + $0xed8] sm:$0xff]
    %v6204 = vld [vmem:[%s2 + $0xee0] sm:$0xff]
    %v6205 = vld [vmem:[%s2 + $0xee8] sm:$0xff]
    %v6206 = vld [vmem:[%s2 + $0xef0] sm:$0xff]
    %v6207 = vld [vmem:[%s2 + $0xef8] sm:$0xff]
    %v6208 = vld [vmem:[%s2 + $0xf00] sm:$0xff]
    %v6209 = vld [vmem:[%s2 + $0xf08] sm:$0xff]
    %v6210 = vld [vmem:[%s2 + $0xf10] sm:$0xff]
    %v6211 = vld [vmem:[%s2 + $0xf18] sm:$0xff]
    %v6212 = vld [vmem:[%s2 + $0xf20] sm:$0xff]
    %v6213 = vld [vmem:[%s2 + $0xf28] sm:$0xff]
    %v6214 = vld [vmem:[%s2 + $0xf30] sm:$0xff]
    %v6215 = vld [vmem:[%s2 + $0xf38] sm:$0xff]
    %v6216 = vld [vmem:[%s2 + $0xf40] sm:$0xff]
    %v6217 = vld [vmem:[%s2 + $0xf48] sm:$0xff]
    %v6218 = vld [vmem:[%s2 + $0xf50] sm:$0xff]
    %v6219 = vld [vmem:[%s2 + $0xf58] sm:$0xff]
    %v6220 = vld [vmem:[%s2 + $0xf60] sm:$0xff]
    %v6221 = vld [vmem:[%s2 + $0xf68] sm:$0xff]
    %v6222 = vld [vmem:[%s2 + $0xf70] sm:$0xff]
    %v6223 = vld [vmem:[%s2 + $0xf78] sm:$0xff]
    %v6224 = vld [vmem:[%s2 + $0xf80] sm:$0xff]
    %v6225 = vld [vmem:[%s2 + $0xf88] sm:$0xff]
    %v6226 = vld [vmem:[%s2 + $0xf90] sm:$0xff]
    %v6227 = vld [vmem:[%s2 + $0xf98] sm:$0xff]
    %v6228 = vld [vmem:[%s2 + $0xfa0] sm:$0xff]
    %v6229 = vld [vmem:[%s2 + $0xfa8] sm:$0xff]
    %v6230 = vld [vmem:[%s2 + $0xfb0] sm:$0xff]
    %v6231 = vld [vmem:[%s2 + $0xfb8] sm:$0xff]
    %v6232 = vld [vmem:[%s2 + $0xfc0] sm:$0xff]
    %v6233 = vld [vmem:[%s2 + $0xfc8] sm:$0xff]
    %v6234 = vld [vmem:[%s2 + $0xfd0] sm:$0xff]
    %v6235 = vld [vmem:[%s2 + $0xfd8] sm:$0xff]
    %v6236 = vld [vmem:[%s2 + $0xfe0] sm:$0xff]
    %v6237 = vld [vmem:[%s2 + $0xfe8] sm:$0xff]
    %v6238 = vld [vmem:[%s2 + $0xff0] sm:$0xff]
    %v6239 = vld [vmem:[%s2 + $0xff8] sm:$0xff]
    %v6240 = vld [vmem:[%s2 + $0x1000] sm:$0xff]
    %v6241 = vld [vmem:[%s2 + $0x1008] sm:$0xff]
    %v6242 = vld [vmem:[%s2 + $0x1010] sm:$0xff]
    %v6243 = vld [vmem:[%s2 + $0x1018] sm:$0xff]
    %v6244 = vld [vmem:[%s2 + $0x1020] sm:$0xff]
    %v6245 = vld [vmem:[%s2 + $0x1028] sm:$0xff]
    %v6246 = vld [vmem:[%s2 + $0x1030] sm:$0xff]
    %v6247 = vld [vmem:[%s2 + $0x1038] sm:$0xff]
    %v6248 = vld [vmem:[%s2 + $0x1040] sm:$0xff]
    %v6249 = vld [vmem:[%s2 + $0x1048] sm:$0xff]
    %v6250 = vld [vmem:[%s2 + $0x1050] sm:$0xff]
    %v6251 = vld [vmem:[%s2 + $0x1058] sm:$0xff]
    %v6252 = vld [vmem:[%s2 + $0x1060] sm:$0xff]
    %v6253 = vld [vmem:[%s2 + $0x1068] sm:$0xff]
    %v6254 = vld [vmem:[%s2 + $0x1070] sm:$0xff]
    %v6255 = vld [vmem:[%s2 + $0x1078] sm:$0xff]
    %v6256 = vld [vmem:[%s2 + $0x1080] sm:$0xff]
    %v6257 = vld [vmem:[%s2 + $0x1088] sm:$0xff]
    %v6258 = vld [vmem:[%s2 + $0x1090] sm:$0xff]
    %v6259 = vld [vmem:[%s2 + $0x1098] sm:$0xff]
    %v6260 = vld [vmem:[%s2 + $0x10a0] sm:$0xff]
    %v6261 = vld [vmem:[%s2 + $0x10a8] sm:$0xff]
    %v6262 = vld [vmem:[%s2 + $0x10b0] sm:$0xff]
    %v6263 = vld [vmem:[%s2 + $0x10b8] sm:$0xff]
    %v6264 = vld [vmem:[%s2 + $0x10c0] sm:$0xff]
    %v6265 = vld [vmem:[%s2 + $0x10c8] sm:$0xff]
    %v6266 = vld [vmem:[%s2 + $0x10d0] sm:$0xff]
    %v6267 = vld [vmem:[%s2 + $0x10d8] sm:$0xff]
    %v6268 = vld [vmem:[%s2 + $0x10e0] sm:$0xff]
    %v6269 = vld [vmem:[%s2 + $0x10e8] sm:$0xff]
    %v6270 = vld [vmem:[%s2 + $0x10f0] sm:$0xff]
    %v6271 = vld [vmem:[%s2 + $0x10f8] sm:$0xff]
    %v6272 = vld [vmem:[%s2 + $0x1100] sm:$0xff]
    %v6273 = vld [vmem:[%s2 + $0x1108] sm:$0xff]
    %v6274 = vld [vmem:[%s2 + $0x1110] sm:$0xff]
    %v6275 = vld [vmem:[%s2 + $0x1118] sm:$0xff]
    %v6276 = vld [vmem:[%s2 + $0x1120] sm:$0xff]
    %v6277 = vld [vmem:[%s2 + $0x1128] sm:$0xff]
    %v6278 = vld [vmem:[%s2 + $0x1130] sm:$0xff]
    %v6279 = vld [vmem:[%s2 + $0x1138] sm:$0xff]
    %v6280 = vld [vmem:[%s2 + $0x1140] sm:$0xff]
    %v6281 = vld [vmem:[%s2 + $0x1148] sm:$0xff]
    %v6282 = vld [vmem:[%s2 + $0x1150] sm:$0xff]
    %v6283 = vld [vmem:[%s2 + $0x1158] sm:$0xff]
    %v6284 = vld [vmem:[%s2 + $0x1160] sm:$0xff]
    %v6285 = vld [vmem:[%s2 + $0x1168] sm:$0xff]
    %v6286 = vld [vmem:[%s2 + $0x1170] sm:$0xff]
    %v6287 = vld [vmem:[%s2 + $0x1178] sm:$0xff]
    %v6288 = vld [vmem:[%s2 + $0x1180] sm:$0xff]
    %v6289 = vld [vmem:[%s2 + $0x1188] sm:$0xff]
    %v6290 = vld [vmem:[%s2 + $0x1190] sm:$0xff]
    %v6291 = vld [vmem:[%s2 + $0x1198] sm:$0xff]
    %v6292 = vld [vmem:[%s2 + $0x11a0] sm:$0xff]
    %v6293 = vld [vmem:[%s2 + $0x11a8] sm:$0xff]
    %v6294 = vld [vmem:[%s2 + $0x11b0] sm:$0xff]
    %v6295 = vld [vmem:[%s2 + $0x11b8] sm:$0xff]
    %v6296 = vld [vmem:[%s2 + $0x11c0] sm:$0xff]
    %v6297 = vld [vmem:[%s2 + $0x11c8] sm:$0xff]
    %v6298 = vld [vmem:[%s2 + $0x11d0] sm:$0xff]
    %v6299 = vld [vmem:[%s2 + $0x11d8] sm:$0xff]
    %v6300 = vld [vmem:[%s2 + $0x11e0] sm:$0xff]
    %v6301 = vld [vmem:[%s2 + $0x11e8] sm:$0xff]
    %v6302 = vld [vmem:[%s2 + $0x11f0] sm:$0xff]
    %v6303 = vld [vmem:[%s2 + $0x11f8] sm:$0xff]
    %v6304 = vld [vmem:[%s2 + $0x1200] sm:$0xff]
    %v6305 = vld [vmem:[%s2 + $0x1208] sm:$0xff]
    %v6306 = vld [vmem:[%s2 + $0x1210] sm:$0xff]
    %v6307 = vld [vmem:[%s2 + $0x1218] sm:$0xff]
    %v6308 = vld [vmem:[%s2 + $0x1220] sm:$0xff]
    %v6309 = vld [vmem:[%s2 + $0x1228] sm:$0xff]
    %v6310 = vld [vmem:[%s2 + $0x1230] sm:$0xff]
    %v6311 = vld [vmem:[%s2 + $0x1238] sm:$0xff]
    %v6312 = vld [vmem:[%s2 + $0x1240] sm:$0xff]
    %v6313 = vld [vmem:[%s2 + $0x1248] sm:$0xff]
    %v6314 = vld [vmem:[%s2 + $0x1250] sm:$0xff]
    %v6315 = vld [vmem:[%s2 + $0x1258] sm:$0xff]
    %v6316 = vld [vmem:[%s2 + $0x1260] sm:$0xff]
    %v6317 = vld [vmem:[%s2 + $0x1268] sm:$0xff]
    %v6318 = vld [vmem:[%s2 + $0x1270] sm:$0xff]
    %v6319 = vld [vmem:[%s2 + $0x1278] sm:$0xff]
    %v6320 = vld [vmem:[%s2 + $0x1280] sm:$0xff]
    %v6321 = vld [vmem:[%s2 + $0x1288] sm:$0xff]
    %v6322 = vld [vmem:[%s2 + $0x1290] sm:$0xff]
    %v6323 = vld [vmem:[%s2 + $0x1298] sm:$0xff]
    %v6324 = vld [vmem:[%s2 + $0x12a0] sm:$0xff]
    %v6325 = vld [vmem:[%s2 + $0x12a8] sm:$0xff]
    %v6326 = vld [vmem:[%s2 + $0x12b0] sm:$0xff]
    %v6327 = vld [vmem:[%s2 + $0x12b8] sm:$0xff]
    %v6328 = vld [vmem:[%s2 + $0x12c0] sm:$0xff]
    %v6329 = vld [vmem:[%s2 + $0x12c8] sm:$0xff]
    %v6330 = vld [vmem:[%s2 + $0x12d0] sm:$0xff]
    %v6331 = vld [vmem:[%s2 + $0x12d8] sm:$0xff]
    %v6332 = vld [vmem:[%s2 + $0x12e0] sm:$0xff]
    %v6333 = vld [vmem:[%s2 + $0x12e8] sm:$0xff]
    %v6334 = vld [vmem:[%s2 + $0x12f0] sm:$0xff]
    %v6335 = vld [vmem:[%s2 + $0x12f8] sm:$0xff]
    %v6336 = vld [vmem:[%s2 + $0x1300] sm:$0xff]
    %v6337 = vld [vmem:[%s2 + $0x1308] sm:$0xff]
    %v6338 = vld [vmem:[%s2 + $0x1310] sm:$0xff]
    %v6339 = vld [vmem:[%s2 + $0x1318] sm:$0xff]
    %v6340 = vld [vmem:[%s2 + $0x1320] sm:$0xff]
    %v6341 = vld [vmem:[%s2 + $0x1328] sm:$0xff]
    %v6342 = vld [vmem:[%s2 + $0x1330] sm:$0xff]
    %v6343 = vld [vmem:[%s2 + $0x1338] sm:$0xff]
    %v6344 = vld [vmem:[%s2 + $0x1340] sm:$0xff]
    %v6345 = vld [vmem:[%s2 + $0x1348] sm:$0xff]
    %v6346 = vld [vmem:[%s2 + $0x1350] sm:$0xff]
    %v6347 = vld [vmem:[%s2 + $0x1358] sm:$0xff]
    %v6348 = vld [vmem:[%s2 + $0x1360] sm:$0xff]
    %v6349 = vld [vmem:[%s2 + $0x1368] sm:$0xff]
    %v6350 = vld [vmem:[%s2 + $0x1370] sm:$0xff]
    %v6351 = vld [vmem:[%s2 + $0x1378] sm:$0xff]
    %v6352 = vld [vmem:[%s2 + $0x1380] sm:$0xff]
    %v6353 = vld [vmem:[%s2 + $0x1388] sm:$0xff]
    %v6354 = vld [vmem:[%s2 + $0x1390] sm:$0xff]
    %v6355 = vld [vmem:[%s2 + $0x1398] sm:$0xff]
    %v6356 = vld [vmem:[%s2 + $0x13a0] sm:$0xff]
    %v6357 = vld [vmem:[%s2 + $0x13a8] sm:$0xff]
    %v6358 = vld [vmem:[%s2 + $0x13b0] sm:$0xff]
    %v6359 = vld [vmem:[%s2 + $0x13b8] sm:$0xff]
    %v6360 = vld [vmem:[%s2 + $0x13c0] sm:$0xff]
    %v6361 = vld [vmem:[%s2 + $0x13c8] sm:$0xff]
    %v6362 = vld [vmem:[%s2 + $0x13d0] sm:$0xff]
    %v6363 = vld [vmem:[%s2 + $0x13d8] sm:$0xff]
    %v6364 = vld [vmem:[%s2 + $0x13e0] sm:$0xff]
    %v6365 = vld [vmem:[%s2 + $0x13e8] sm:$0xff]
    %v6366 = vld [vmem:[%s2 + $0x13f0] sm:$0xff]
    %v6367 = vld [vmem:[%s2 + $0x13f8] sm:$0xff]
    %v6368 = vld [vmem:[%s3] sm:$0xff]
    %v6369 = vld [vmem:[%s3 + $0x8] sm:$0xff]
    %v6370 = vld [vmem:[%s3 + $0x10] sm:$0xff]
    %v6371 = vld [vmem:[%s3 + $0x18] sm:$0xff]
    %v6372 = vld [vmem:[%s3 + $0x20] sm:$0xff]
    %v6373 = vld [vmem:[%s3 + $0x28] sm:$0xff]
    %v6374 = vld [vmem:[%s3 + $0x30] sm:$0xff]
    %v6375 = vld [vmem:[%s3 + $0x38] sm:$0xff]
    %v6376 = vld [vmem:[%s3 + $0x40] sm:$0xff]
    %v6377 = vld [vmem:[%s3 + $0x48] sm:$0xff]
    %v6378 = vld [vmem:[%s3 + $0x50] sm:$0xff]
    %v6379 = vld [vmem:[%s3 + $0x58] sm:$0xff]
    %v6380 = vld [vmem:[%s3 + $0x60] sm:$0xff]
    %v6381 = vld [vmem:[%s3 + $0x68] sm:$0xff]
    %v6382 = vld [vmem:[%s3 + $0x70] sm:$0xff]
    %v6383 = vld [vmem:[%s3 + $0x78] sm:$0xff]
    %v6384 = vld [vmem:[%s3 + $0x80] sm:$0xff]
    %v6385 = vld [vmem:[%s3 + $0x88] sm:$0xff]
    %v6386 = vld [vmem:[%s3 + $0x90] sm:$0xff]
    %v6387 = vld [vmem:[%s3 + $0x98] sm:$0xff]
    %v6388 = vld [vmem:[%s3 + $0xa0] sm:$0xff]
    %v6389 = vld [vmem:[%s3 + $0xa8] sm:$0xff]
    %v6390 = vld [vmem:[%s3 + $0xb0] sm:$0xff]
    %v6391 = vld [vmem:[%s3 + $0xb8] sm:$0xff]
    %v6392 = vld [vmem:[%s3 + $0xc0] sm:$0xff]
    %v6393 = vld [vmem:[%s3 + $0xc8] sm:$0xff]
    %v6394 = vld [vmem:[%s3 + $0xd0] sm:$0xff]
    %v6395 = vld [vmem:[%s3 + $0xd8] sm:$0xff]
    %v6396 = vld [vmem:[%s3 + $0xe0] sm:$0xff]
    %v6397 = vld [vmem:[%s3 + $0xe8] sm:$0xff]
    %v6398 = vld [vmem:[%s3 + $0xf0] sm:$0xff]
    %v6399 = vld [vmem:[%s3 + $0xf8] sm:$0xff]
    %v6400 = vld [vmem:[%s3 + $0x100] sm:$0xff]
    %v6401 = vld [vmem:[%s3 + $0x108] sm:$0xff]
    %v6402 = vld [vmem:[%s3 + $0x110] sm:$0xff]
    %v6403 = vld [vmem:[%s3 + $0x118] sm:$0xff]
    %v6404 = vld [vmem:[%s3 + $0x120] sm:$0xff]
    %v6405 = vld [vmem:[%s3 + $0x128] sm:$0xff]
    %v6406 = vld [vmem:[%s3 + $0x130] sm:$0xff]
    %v6407 = vld [vmem:[%s3 + $0x138] sm:$0xff]
    %v6408 = vld [vmem:[%s3 + $0x140] sm:$0xff]
    %v6409 = vld [vmem:[%s3 + $0x148] sm:$0xff]
    %v6410 = vld [vmem:[%s3 + $0x150] sm:$0xff]
    %v6411 = vld [vmem:[%s3 + $0x158] sm:$0xff]
    %v6412 = vld [vmem:[%s3 + $0x160] sm:$0xff]
    %v6413 = vld [vmem:[%s3 + $0x168] sm:$0xff]
    %v6414 = vld [vmem:[%s3 + $0x170] sm:$0xff]
    %v6415 = vld [vmem:[%s3 + $0x178] sm:$0xff]
    %v6416 = vld [vmem:[%s3 + $0x180] sm:$0xff]
    %v6417 = vld [vmem:[%s3 + $0x188] sm:$0xff]
    %v6418 = vld [vmem:[%s3 + $0x190] sm:$0xff]
    %v6419 = vld [vmem:[%s3 + $0x198] sm:$0xff]
    %v6420 = vld [vmem:[%s3 + $0x1a0] sm:$0xff]
    %v6421 = vld [vmem:[%s3 + $0x1a8] sm:$0xff]
    %v6422 = vld [vmem:[%s3 + $0x1b0] sm:$0xff]
    %v6423 = vld [vmem:[%s3 + $0x1b8] sm:$0xff]
    %v6424 = vld [vmem:[%s3 + $0x1c0] sm:$0xff]
    %v6425 = vld [vmem:[%s3 + $0x1c8] sm:$0xff]
    %v6426 = vld [vmem:[%s3 + $0x1d0] sm:$0xff]
    %v6427 = vld [vmem:[%s3 + $0x1d8] sm:$0xff]
    %v6428 = vld [vmem:[%s3 + $0x1e0] sm:$0xff]
    %v6429 = vld [vmem:[%s3 + $0x1e8] sm:$0xff]
    %v6430 = vld [vmem:[%s3 + $0x1f0] sm:$0xff]
    %v6431 = vld [vmem:[%s3 + $0x1f8] sm:$0xff]
    %v6432 = vld [vmem:[%s3 + $0x200] sm:$0xff]
    %v6433 = vld [vmem:[%s3 + $0x208] sm:$0xff]
    %v6434 = vld [vmem:[%s3 + $0x210] sm:$0xff]
    %v6435 = vld [vmem:[%s3 + $0x218] sm:$0xff]
    %v6436 = vld [vmem:[%s3 + $0x220] sm:$0xff]
    %v6437 = vld [vmem:[%s3 + $0x228] sm:$0xff]
    %v6438 = vld [vmem:[%s3 + $0x230] sm:$0xff]
    %v6439 = vld [vmem:[%s3 + $0x238] sm:$0xff]
    %v6440 = vld [vmem:[%s3 + $0x240] sm:$0xff]
    %v6441 = vld [vmem:[%s3 + $0x248] sm:$0xff]
    %v6442 = vld [vmem:[%s3 + $0x250] sm:$0xff]
    %v6443 = vld [vmem:[%s3 + $0x258] sm:$0xff]
    %v6444 = vld [vmem:[%s3 + $0x260] sm:$0xff]
    %v6445 = vld [vmem:[%s3 + $0x268] sm:$0xff]
    %v6446 = vld [vmem:[%s3 + $0x270] sm:$0xff]
    %v6447 = vld [vmem:[%s3 + $0x278] sm:$0xff]
    %v6448 = vld [vmem:[%s3 + $0x280] sm:$0xff]
    %v6449 = vld [vmem:[%s3 + $0x288] sm:$0xff]
    %v6450 = vld [vmem:[%s3 + $0x290] sm:$0xff]
    %v6451 = vld [vmem:[%s3 + $0x298] sm:$0xff]
    %v6452 = vld [vmem:[%s3 + $0x2a0] sm:$0xff]
    %v6453 = vld [vmem:[%s3 + $0x2a8] sm:$0xff]
    %v6454 = vld [vmem:[%s3 + $0x2b0] sm:$0xff]
    %v6455 = vld [vmem:[%s3 + $0x2b8] sm:$0xff]
    %v6456 = vld [vmem:[%s3 + $0x2c0] sm:$0xff]
    %v6457 = vld [vmem:[%s3 + $0x2c8] sm:$0xff]
    %v6458 = vld [vmem:[%s3 + $0x2d0] sm:$0xff]
    %v6459 = vld [vmem:[%s3 + $0x2d8] sm:$0xff]
    %v6460 = vld [vmem:[%s3 + $0x2e0] sm:$0xff]
    %v6461 = vld [vmem:[%s3 + $0x2e8] sm:$0xff]
    %v6462 = vld [vmem:[%s3 + $0x2f0] sm:$0xff]
    %v6463 = vld [vmem:[%s3 + $0x2f8] sm:$0xff]
    %v6464 = vld [vmem:[%s3 + $0x300] sm:$0xff]
    %v6465 = vld [vmem:[%s3 + $0x308] sm:$0xff]
    %v6466 = vld [vmem:[%s3 + $0x310] sm:$0xff]
    %v6467 = vld [vmem:[%s3 + $0x318] sm:$0xff]
    %v6468 = vld [vmem:[%s3 + $0x320] sm:$0xff]
    %v6469 = vld [vmem:[%s3 + $0x328] sm:$0xff]
    %v6470 = vld [vmem:[%s3 + $0x330] sm:$0xff]
    %v6471 = vld [vmem:[%s3 + $0x338] sm:$0xff]
    %v6472 = vld [vmem:[%s3 + $0x340] sm:$0xff]
    %v6473 = vld [vmem:[%s3 + $0x348] sm:$0xff]
    %v6474 = vld [vmem:[%s3 + $0x350] sm:$0xff]
    %v6475 = vld [vmem:[%s3 + $0x358] sm:$0xff]
    %v6476 = vld [vmem:[%s3 + $0x360] sm:$0xff]
    %v6477 = vld [vmem:[%s3 + $0x368] sm:$0xff]
    %v6478 = vld [vmem:[%s3 + $0x370] sm:$0xff]
    %v6479 = vld [vmem:[%s3 + $0x378] sm:$0xff]
    %v6480 = vld [vmem:[%s3 + $0x380] sm:$0xff]
    %v6481 = vld [vmem:[%s3 + $0x388] sm:$0xff]
    %v6482 = vld [vmem:[%s3 + $0x390] sm:$0xff]
    %v6483 = vld [vmem:[%s3 + $0x398] sm:$0xff]
    %v6484 = vld [vmem:[%s3 + $0x3a0] sm:$0xff]
    %v6485 = vld [vmem:[%s3 + $0x3a8] sm:$0xff]
    %v6486 = vld [vmem:[%s3 + $0x3b0] sm:$0xff]
    %v6487 = vld [vmem:[%s3 + $0x3b8] sm:$0xff]
    %v6488 = vld [vmem:[%s3 + $0x3c0] sm:$0xff]
    %v6489 = vld [vmem:[%s3 + $0x3c8] sm:$0xff]
    %v6490 = vld [vmem:[%s3 + $0x3d0] sm:$0xff]
    %v6491 = vld [vmem:[%s3 + $0x3d8] sm:$0xff]
    %v6492 = vld [vmem:[%s3 + $0x3e0] sm:$0xff]
    %v6493 = vld [vmem:[%s3 + $0x3e8] sm:$0xff]
    %v6494 = vld [vmem:[%s3 + $0x3f0] sm:$0xff]
    %v6495 = vld [vmem:[%s3 + $0x3f8] sm:$0xff]
    %6497 = vset.pattern.permute.xlu0 0
    %6498 = vperm.xlu0 %6497, %v6368
    %v6499 = vpop.permute.xlu0 %6498
    %6502 = vset.pattern.permute.xlu0 0
    %6503 = vperm.xlu0 %6502, %v6369
    %v6504 = vpop.permute.xlu0 %6503
    %6507 = vset.pattern.permute.xlu0 0
    %6508 = vperm.xlu0 %6507, %v6370
    %v6509 = vpop.permute.xlu0 %6508
    %6512 = vset.pattern.permute.xlu0 0
    %6513 = vperm.xlu0 %6512, %v6371
    %v6514 = vpop.permute.xlu0 %6513
    %6517 = vset.pattern.permute.xlu0 0
    %6518 = vperm.xlu0 %6517, %v6372
    %v6519 = vpop.permute.xlu0 %6518
    %6522 = vset.pattern.permute.xlu0 0
    %6523 = vperm.xlu0 %6522, %v6373
    %v6524 = vpop.permute.xlu0 %6523
    %6527 = vset.pattern.permute.xlu0 0
    %6528 = vperm.xlu0 %6527, %v6374
    %v6529 = vpop.permute.xlu0 %6528
    %6532 = vset.pattern.permute.xlu0 0
    %6533 = vperm.xlu0 %6532, %v6375
    %v6534 = vpop.permute.xlu0 %6533
    %6537 = vset.pattern.permute.xlu0 0
    %6538 = vperm.xlu0 %6537, %v6376
    %v6539 = vpop.permute.xlu0 %6538
    %6542 = vset.pattern.permute.xlu0 0
    %6543 = vperm.xlu0 %6542, %v6377
    %v6544 = vpop.permute.xlu0 %6543
    %6547 = vset.pattern.permute.xlu0 0
    %6548 = vperm.xlu0 %6547, %v6378
    %v6549 = vpop.permute.xlu0 %6548
    %6552 = vset.pattern.permute.xlu0 0
    %6553 = vperm.xlu0 %6552, %v6379
    %v6554 = vpop.permute.xlu0 %6553
    %6557 = vset.pattern.permute.xlu0 0
    %6558 = vperm.xlu0 %6557, %v6380
    %v6559 = vpop.permute.xlu0 %6558
    %6562 = vset.pattern.permute.xlu0 0
    %6563 = vperm.xlu0 %6562, %v6381
    %v6564 = vpop.permute.xlu0 %6563
    %6567 = vset.pattern.permute.xlu0 0
    %6568 = vperm.xlu0 %6567, %v6382
    %v6569 = vpop.permute.xlu0 %6568
    %6572 = vset.pattern.permute.xlu0 0
    %6573 = vperm.xlu0 %6572, %v6383
    %v6574 = vpop.permute.xlu0 %6573
    %6577 = vset.pattern.permute.xlu0 0
    %6578 = vperm.xlu0 %6577, %v6384
    %v6579 = vpop.permute.xlu0 %6578
    %6582 = vset.pattern.permute.xlu0 0
    %6583 = vperm.xlu0 %6582, %v6385
    %v6584 = vpop.permute.xlu0 %6583
    %6587 = vset.pattern.permute.xlu0 0
    %6588 = vperm.xlu0 %6587, %v6386
    %v6589 = vpop.permute.xlu0 %6588
    %6592 = vset.pattern.permute.xlu0 0
    %6593 = vperm.xlu0 %6592, %v6387
    %v6594 = vpop.permute.xlu0 %6593
    %6597 = vset.pattern.permute.xlu0 0
    %6598 = vperm.xlu0 %6597, %v6388
    %v6599 = vpop.permute.xlu0 %6598
    %6602 = vset.pattern.permute.xlu0 0
    %6603 = vperm.xlu0 %6602, %v6389
    %v6604 = vpop.permute.xlu0 %6603
    %6607 = vset.pattern.permute.xlu0 0
    %6608 = vperm.xlu0 %6607, %v6390
    %v6609 = vpop.permute.xlu0 %6608
    %6612 = vset.pattern.permute.xlu0 0
    %6613 = vperm.xlu0 %6612, %v6391
    %v6614 = vpop.permute.xlu0 %6613
    %6617 = vset.pattern.permute.xlu0 0
    %6618 = vperm.xlu0 %6617, %v6392
    %v6619 = vpop.permute.xlu0 %6618
    %6622 = vset.pattern.permute.xlu0 0
    %6623 = vperm.xlu0 %6622, %v6393
    %v6624 = vpop.permute.xlu0 %6623
    %6627 = vset.pattern.permute.xlu0 0
    %6628 = vperm.xlu0 %6627, %v6394
    %v6629 = vpop.permute.xlu0 %6628
    %6632 = vset.pattern.permute.xlu0 0
    %6633 = vperm.xlu0 %6632, %v6395
    %v6634 = vpop.permute.xlu0 %6633
    %6637 = vset.pattern.permute.xlu0 0
    %6638 = vperm.xlu0 %6637, %v6396
    %v6639 = vpop.permute.xlu0 %6638
    %6642 = vset.pattern.permute.xlu0 0
    %6643 = vperm.xlu0 %6642, %v6397
    %v6644 = vpop.permute.xlu0 %6643
    %6647 = vset.pattern.permute.xlu0 0
    %6648 = vperm.xlu0 %6647, %v6398
    %v6649 = vpop.permute.xlu0 %6648
    %6652 = vset.pattern.permute.xlu0 0
    %6653 = vperm.xlu0 %6652, %v6399
    %v6654 = vpop.permute.xlu0 %6653
    %6657 = vset.pattern.permute.xlu0 0
    %6658 = vperm.xlu0 %6657, %v6400
    %v6659 = vpop.permute.xlu0 %6658
    %6662 = vset.pattern.permute.xlu0 0
    %6663 = vperm.xlu0 %6662, %v6401
    %v6664 = vpop.permute.xlu0 %6663
    %6667 = vset.pattern.permute.xlu0 0
    %6668 = vperm.xlu0 %6667, %v6402
    %v6669 = vpop.permute.xlu0 %6668
    %6672 = vset.pattern.permute.xlu0 0
    %6673 = vperm.xlu0 %6672, %v6403
    %v6674 = vpop.permute.xlu0 %6673
    %6677 = vset.pattern.permute.xlu0 0
    %6678 = vperm.xlu0 %6677, %v6404
    %v6679 = vpop.permute.xlu0 %6678
    %6682 = vset.pattern.permute.xlu0 0
    %6683 = vperm.xlu0 %6682, %v6405
    %v6684 = vpop.permute.xlu0 %6683
    %6687 = vset.pattern.permute.xlu0 0
    %6688 = vperm.xlu0 %6687, %v6406
    %v6689 = vpop.permute.xlu0 %6688
    %6692 = vset.pattern.permute.xlu0 0
    %6693 = vperm.xlu0 %6692, %v6407
    %v6694 = vpop.permute.xlu0 %6693
    %6697 = vset.pattern.permute.xlu0 0
    %6698 = vperm.xlu0 %6697, %v6408
    %v6699 = vpop.permute.xlu0 %6698
    %6702 = vset.pattern.permute.xlu0 0
    %6703 = vperm.xlu0 %6702, %v6409
    %v6704 = vpop.permute.xlu0 %6703
    %6707 = vset.pattern.permute.xlu0 0
    %6708 = vperm.xlu0 %6707, %v6410
    %v6709 = vpop.permute.xlu0 %6708
    %6712 = vset.pattern.permute.xlu0 0
    %6713 = vperm.xlu0 %6712, %v6411
    %v6714 = vpop.permute.xlu0 %6713
    %6717 = vset.pattern.permute.xlu0 0
    %6718 = vperm.xlu0 %6717, %v6412
    %v6719 = vpop.permute.xlu0 %6718
    %6722 = vset.pattern.permute.xlu0 0
    %6723 = vperm.xlu0 %6722, %v6413
    %v6724 = vpop.permute.xlu0 %6723
    %6727 = vset.pattern.permute.xlu0 0
    %6728 = vperm.xlu0 %6727, %v6414
    %v6729 = vpop.permute.xlu0 %6728
    %6732 = vset.pattern.permute.xlu0 0
    %6733 = vperm.xlu0 %6732, %v6415
    %v6734 = vpop.permute.xlu0 %6733
    %6737 = vset.pattern.permute.xlu0 0
    %6738 = vperm.xlu0 %6737, %v6416
    %v6739 = vpop.permute.xlu0 %6738
    %6742 = vset.pattern.permute.xlu0 0
    %6743 = vperm.xlu0 %6742, %v6417
    %v6744 = vpop.permute.xlu0 %6743
    %6747 = vset.pattern.permute.xlu0 0
    %6748 = vperm.xlu0 %6747, %v6418
    %v6749 = vpop.permute.xlu0 %6748
    %6752 = vset.pattern.permute.xlu0 0
    %6753 = vperm.xlu0 %6752, %v6419
    %v6754 = vpop.permute.xlu0 %6753
    %6757 = vset.pattern.permute.xlu0 0
    %6758 = vperm.xlu0 %6757, %v6420
    %v6759 = vpop.permute.xlu0 %6758
    %6762 = vset.pattern.permute.xlu0 0
    %6763 = vperm.xlu0 %6762, %v6421
    %v6764 = vpop.permute.xlu0 %6763
    %6767 = vset.pattern.permute.xlu0 0
    %6768 = vperm.xlu0 %6767, %v6422
    %v6769 = vpop.permute.xlu0 %6768
    %6772 = vset.pattern.permute.xlu0 0
    %6773 = vperm.xlu0 %6772, %v6423
    %v6774 = vpop.permute.xlu0 %6773
    %6777 = vset.pattern.permute.xlu0 0
    %6778 = vperm.xlu0 %6777, %v6424
    %v6779 = vpop.permute.xlu0 %6778
    %6782 = vset.pattern.permute.xlu0 0
    %6783 = vperm.xlu0 %6782, %v6425
    %v6784 = vpop.permute.xlu0 %6783
    %6787 = vset.pattern.permute.xlu0 0
    %6788 = vperm.xlu0 %6787, %v6426
    %v6789 = vpop.permute.xlu0 %6788
    %6792 = vset.pattern.permute.xlu0 0
    %6793 = vperm.xlu0 %6792, %v6427
    %v6794 = vpop.permute.xlu0 %6793
    %6797 = vset.pattern.permute.xlu0 0
    %6798 = vperm.xlu0 %6797, %v6428
    %v6799 = vpop.permute.xlu0 %6798
    %6802 = vset.pattern.permute.xlu0 0
    %6803 = vperm.xlu0 %6802, %v6429
    %v6804 = vpop.permute.xlu0 %6803
    %6807 = vset.pattern.permute.xlu0 0
    %6808 = vperm.xlu0 %6807, %v6430
    %v6809 = vpop.permute.xlu0 %6808
    %6812 = vset.pattern.permute.xlu0 0
    %6813 = vperm.xlu0 %6812, %v6431
    %v6814 = vpop.permute.xlu0 %6813
    %6817 = vset.pattern.permute.xlu0 0
    %6818 = vperm.xlu0 %6817, %v6432
    %v6819 = vpop.permute.xlu0 %6818
    %6822 = vset.pattern.permute.xlu0 0
    %6823 = vperm.xlu0 %6822, %v6433
    %v6824 = vpop.permute.xlu0 %6823
    %6827 = vset.pattern.permute.xlu0 0
    %6828 = vperm.xlu0 %6827, %v6434
    %v6829 = vpop.permute.xlu0 %6828
    %6832 = vset.pattern.permute.xlu0 0
    %6833 = vperm.xlu0 %6832, %v6435
    %v6834 = vpop.permute.xlu0 %6833
    %6837 = vset.pattern.permute.xlu0 0
    %6838 = vperm.xlu0 %6837, %v6436
    %v6839 = vpop.permute.xlu0 %6838
    %6842 = vset.pattern.permute.xlu0 0
    %6843 = vperm.xlu0 %6842, %v6437
    %v6844 = vpop.permute.xlu0 %6843
    %6847 = vset.pattern.permute.xlu0 0
    %6848 = vperm.xlu0 %6847, %v6438
    %v6849 = vpop.permute.xlu0 %6848
    %6852 = vset.pattern.permute.xlu0 0
    %6853 = vperm.xlu0 %6852, %v6439
    %v6854 = vpop.permute.xlu0 %6853
    %6857 = vset.pattern.permute.xlu0 0
    %6858 = vperm.xlu0 %6857, %v6440
    %v6859 = vpop.permute.xlu0 %6858
    %6862 = vset.pattern.permute.xlu0 0
    %6863 = vperm.xlu0 %6862, %v6441
    %v6864 = vpop.permute.xlu0 %6863
    %6867 = vset.pattern.permute.xlu0 0
    %6868 = vperm.xlu0 %6867, %v6442
    %v6869 = vpop.permute.xlu0 %6868
    %6872 = vset.pattern.permute.xlu0 0
    %6873 = vperm.xlu0 %6872, %v6443
    %v6874 = vpop.permute.xlu0 %6873
    %6877 = vset.pattern.permute.xlu0 0
    %6878 = vperm.xlu0 %6877, %v6444
    %v6879 = vpop.permute.xlu0 %6878
    %6882 = vset.pattern.permute.xlu0 0
    %6883 = vperm.xlu0 %6882, %v6445
    %v6884 = vpop.permute.xlu0 %6883
    %6887 = vset.pattern.permute.xlu0 0
    %6888 = vperm.xlu0 %6887, %v6446
    %v6889 = vpop.permute.xlu0 %6888
    %6892 = vset.pattern.permute.xlu0 0
    %6893 = vperm.xlu0 %6892, %v6447
    %v6894 = vpop.permute.xlu0 %6893
    %6897 = vset.pattern.permute.xlu0 0
    %6898 = vperm.xlu0 %6897, %v6448
    %v6899 = vpop.permute.xlu0 %6898
    %6902 = vset.pattern.permute.xlu0 0
    %6903 = vperm.xlu0 %6902, %v6449
    %v6904 = vpop.permute.xlu0 %6903
    %6907 = vset.pattern.permute.xlu0 0
    %6908 = vperm.xlu0 %6907, %v6450
    %v6909 = vpop.permute.xlu0 %6908
    %6912 = vset.pattern.permute.xlu0 0
    %6913 = vperm.xlu0 %6912, %v6451
    %v6914 = vpop.permute.xlu0 %6913
    %6917 = vset.pattern.permute.xlu0 0
    %6918 = vperm.xlu0 %6917, %v6452
    %v6919 = vpop.permute.xlu0 %6918
    %6922 = vset.pattern.permute.xlu0 0
    %6923 = vperm.xlu0 %6922, %v6453
    %v6924 = vpop.permute.xlu0 %6923
    %6927 = vset.pattern.permute.xlu0 0
    %6928 = vperm.xlu0 %6927, %v6454
    %v6929 = vpop.permute.xlu0 %6928
    %6932 = vset.pattern.permute.xlu0 0
    %6933 = vperm.xlu0 %6932, %v6455
    %v6934 = vpop.permute.xlu0 %6933
    %6937 = vset.pattern.permute.xlu0 0
    %6938 = vperm.xlu0 %6937, %v6456
    %v6939 = vpop.permute.xlu0 %6938
    %6942 = vset.pattern.permute.xlu0 0
    %6943 = vperm.xlu0 %6942, %v6457
    %v6944 = vpop.permute.xlu0 %6943
    %6947 = vset.pattern.permute.xlu0 0
    %6948 = vperm.xlu0 %6947, %v6458
    %v6949 = vpop.permute.xlu0 %6948
    %6952 = vset.pattern.permute.xlu0 0
    %6953 = vperm.xlu0 %6952, %v6459
    %v6954 = vpop.permute.xlu0 %6953
    %6957 = vset.pattern.permute.xlu0 0
    %6958 = vperm.xlu0 %6957, %v6460
    %v6959 = vpop.permute.xlu0 %6958
    %6962 = vset.pattern.permute.xlu0 0
    %6963 = vperm.xlu0 %6962, %v6461
    %v6964 = vpop.permute.xlu0 %6963
    %6967 = vset.pattern.permute.xlu0 0
    %6968 = vperm.xlu0 %6967, %v6462
    %v6969 = vpop.permute.xlu0 %6968
    %6972 = vset.pattern.permute.xlu0 0
    %6973 = vperm.xlu0 %6972, %v6463
    %v6974 = vpop.permute.xlu0 %6973
    %6977 = vset.pattern.permute.xlu0 0
    %6978 = vperm.xlu0 %6977, %v6464
    %v6979 = vpop.permute.xlu0 %6978
    %6982 = vset.pattern.permute.xlu0 0
    %6983 = vperm.xlu0 %6982, %v6465
    %v6984 = vpop.permute.xlu0 %6983
    %6987 = vset.pattern.permute.xlu0 0
    %6988 = vperm.xlu0 %6987, %v6466
    %v6989 = vpop.permute.xlu0 %6988
    %6992 = vset.pattern.permute.xlu0 0
    %6993 = vperm.xlu0 %6992, %v6467
    %v6994 = vpop.permute.xlu0 %6993
    %6997 = vset.pattern.permute.xlu0 0
    %6998 = vperm.xlu0 %6997, %v6468
    %v6999 = vpop.permute.xlu0 %6998
    %7002 = vset.pattern.permute.xlu0 0
    %7003 = vperm.xlu0 %7002, %v6469
    %v7004 = vpop.permute.xlu0 %7003
    %7007 = vset.pattern.permute.xlu0 0
    %7008 = vperm.xlu0 %7007, %v6470
    %v7009 = vpop.permute.xlu0 %7008
    %7012 = vset.pattern.permute.xlu0 0
    %7013 = vperm.xlu0 %7012, %v6471
    %v7014 = vpop.permute.xlu0 %7013
    %7017 = vset.pattern.permute.xlu0 0
    %7018 = vperm.xlu0 %7017, %v6472
    %v7019 = vpop.permute.xlu0 %7018
    %7022 = vset.pattern.permute.xlu0 0
    %7023 = vperm.xlu0 %7022, %v6473
    %v7024 = vpop.permute.xlu0 %7023
    %7027 = vset.pattern.permute.xlu0 0
    %7028 = vperm.xlu0 %7027, %v6474
    %v7029 = vpop.permute.xlu0 %7028
    %7032 = vset.pattern.permute.xlu0 0
    %7033 = vperm.xlu0 %7032, %v6475
    %v7034 = vpop.permute.xlu0 %7033
    %7037 = vset.pattern.permute.xlu0 0
    %7038 = vperm.xlu0 %7037, %v6476
    %v7039 = vpop.permute.xlu0 %7038
    %7042 = vset.pattern.permute.xlu0 0
    %7043 = vperm.xlu0 %7042, %v6477
    %v7044 = vpop.permute.xlu0 %7043
    %7047 = vset.pattern.permute.xlu0 0
    %7048 = vperm.xlu0 %7047, %v6478
    %v7049 = vpop.permute.xlu0 %7048
    %7052 = vset.pattern.permute.xlu0 0
    %7053 = vperm.xlu0 %7052, %v6479
    %v7054 = vpop.permute.xlu0 %7053
    %7057 = vset.pattern.permute.xlu0 0
    %7058 = vperm.xlu0 %7057, %v6480
    %v7059 = vpop.permute.xlu0 %7058
    %7062 = vset.pattern.permute.xlu0 0
    %7063 = vperm.xlu0 %7062, %v6481
    %v7064 = vpop.permute.xlu0 %7063
    %7067 = vset.pattern.permute.xlu0 0
    %7068 = vperm.xlu0 %7067, %v6482
    %v7069 = vpop.permute.xlu0 %7068
    %7072 = vset.pattern.permute.xlu0 0
    %7073 = vperm.xlu0 %7072, %v6483
    %v7074 = vpop.permute.xlu0 %7073
    %7077 = vset.pattern.permute.xlu0 0
    %7078 = vperm.xlu0 %7077, %v6484
    %v7079 = vpop.permute.xlu0 %7078
    %7082 = vset.pattern.permute.xlu0 0
    %7083 = vperm.xlu0 %7082, %v6485
    %v7084 = vpop.permute.xlu0 %7083
    %7087 = vset.pattern.permute.xlu0 0
    %7088 = vperm.xlu0 %7087, %v6486
    %v7089 = vpop.permute.xlu0 %7088
    %7092 = vset.pattern.permute.xlu0 0
    %7093 = vperm.xlu0 %7092, %v6487
    %v7094 = vpop.permute.xlu0 %7093
    %7097 = vset.pattern.permute.xlu0 0
    %7098 = vperm.xlu0 %7097, %v6488
    %v7099 = vpop.permute.xlu0 %7098
    %7102 = vset.pattern.permute.xlu0 0
    %7103 = vperm.xlu0 %7102, %v6489
    %v7104 = vpop.permute.xlu0 %7103
    %7107 = vset.pattern.permute.xlu0 0
    %7108 = vperm.xlu0 %7107, %v6490
    %v7109 = vpop.permute.xlu0 %7108
    %7112 = vset.pattern.permute.xlu0 0
    %7113 = vperm.xlu0 %7112, %v6491
    %v7114 = vpop.permute.xlu0 %7113
    %7117 = vset.pattern.permute.xlu0 0
    %7118 = vperm.xlu0 %7117, %v6492
    %v7119 = vpop.permute.xlu0 %7118
    %7122 = vset.pattern.permute.xlu0 0
    %7123 = vperm.xlu0 %7122, %v6493
    %v7124 = vpop.permute.xlu0 %7123
    %7127 = vset.pattern.permute.xlu0 0
    %7128 = vperm.xlu0 %7127, %v6494
    %v7129 = vpop.permute.xlu0 %7128
    %7132 = vset.pattern.permute.xlu0 0
    %7133 = vperm.xlu0 %7132, %v6495
    %v7134 = vpop.permute.xlu0 %7133
    %vm7136 = vcmask 424960
    %v7138 = vsel %vm7136, %v5732, 0
    %v7141 = vsel %vm7136, %v5737, 0
    %v7144 = vsel %vm7136, %v5742, 0
    %v7147 = vsel %vm7136, %v5747, 0
    %v7150 = vsel %vm7136, %v5752, 0
    %v7153 = vsel %vm7136, %v5757, 0
    %v7156 = vsel %vm7136, %v5762, 0
    %v7159 = vsel %vm7136, %v5767, 0
    %v7162 = vsel %vm7136, %v5772, 0
    %v7165 = vsel %vm7136, %v5777, 0
    %v7168 = vsel %vm7136, %v5782, 0
    %v7171 = vsel %vm7136, %v5787, 0
    %v7174 = vsel %vm7136, %v5792, 0
    %v7177 = vsel %vm7136, %v5797, 0
    %v7180 = vsel %vm7136, %v5802, 0
    %v7183 = vsel %vm7136, %v5807, 0
    %v7186 = vsel %vm7136, %v5812, 0
    %v7189 = vsel %vm7136, %v5817, 0
    %v7192 = vsel %vm7136, %v5822, 0
    %v7195 = vsel %vm7136, %v5827, 0
    %v7198 = vsel %vm7136, %v5832, 0
    %v7201 = vsel %vm7136, %v5837, 0
    %v7204 = vsel %vm7136, %v5842, 0
    %v7207 = vsel %vm7136, %v5847, 0
    %v7210 = vsel %vm7136, %v5852, 0
    %v7213 = vsel %vm7136, %v5857, 0
    %v7216 = vsel %vm7136, %v5862, 0
    %v7219 = vsel %vm7136, %v5867, 0
    %v7222 = vsel %vm7136, %v5872, 0
    %v7225 = vsel %vm7136, %v5877, 0
    %v7228 = vsel %vm7136, %v5882, 0
    %v7231 = vsel %vm7136, %v5887, 0
    %v7234 = vsel %vm7136, %v5892, 0
    %v7237 = vsel %vm7136, %v5897, 0
    %v7240 = vsel %vm7136, %v5902, 0
    %v7243 = vsel %vm7136, %v5907, 0
    %v7246 = vsel %vm7136, %v5912, 0
    %v7249 = vsel %vm7136, %v5917, 0
    %v7252 = vsel %vm7136, %v5922, 0
    %v7255 = vsel %vm7136, %v5927, 0
    %v7258 = vsel %vm7136, %v5932, 0
    %v7261 = vsel %vm7136, %v5937, 0
    %v7264 = vsel %vm7136, %v5942, 0
    %v7267 = vsel %vm7136, %v5947, 0
    %v7270 = vsel %vm7136, %v5952, 0
    %v7273 = vsel %vm7136, %v5957, 0
    %v7276 = vsel %vm7136, %v5962, 0
    %v7279 = vsel %vm7136, %v5967, 0
    %v7282 = vsel %vm7136, %v5972, 0
    %v7285 = vsel %vm7136, %v5977, 0
    %v7288 = vsel %vm7136, %v5982, 0
    %v7291 = vsel %vm7136, %v5987, 0
    %v7294 = vsel %vm7136, %v5992, 0
    %v7297 = vsel %vm7136, %v5997, 0
    %v7300 = vsel %vm7136, %v6002, 0
    %v7303 = vsel %vm7136, %v6007, 0
    %v7306 = vsel %vm7136, %v6012, 0
    %v7309 = vsel %vm7136, %v6017, 0
    %v7312 = vsel %vm7136, %v6022, 0
    %v7315 = vsel %vm7136, %v6027, 0
    %v7318 = vsel %vm7136, %v6032, 0
    %v7321 = vsel %vm7136, %v6037, 0
    %v7324 = vsel %vm7136, %v6042, 0
    %v7327 = vsel %vm7136, %v6047, 0
    %v7330 = vsel %vm7136, %v6052, 0
    %v7333 = vsel %vm7136, %v6057, 0
    %v7336 = vsel %vm7136, %v6062, 0
    %v7339 = vsel %vm7136, %v6067, 0
    %v7342 = vsel %vm7136, %v6072, 0
    %v7345 = vsel %vm7136, %v6077, 0
    %v7348 = vsel %vm7136, %v6082, 0
    %v7351 = vsel %vm7136, %v6087, 0
    %v7354 = vsel %vm7136, %v6092, 0
    %v7357 = vsel %vm7136, %v6097, 0
    %v7360 = vsel %vm7136, %v6102, 0
    %v7363 = vsel %vm7136, %v6107, 0
    %v7366 = vsel %vm7136, %v6112, 0
    %v7369 = vsel %vm7136, %v6117, 0
    %v7372 = vsel %vm7136, %v6122, 0
    %v7375 = vsel %vm7136, %v6127, 0
    %v7378 = vsel %vm7136, %v6132, 0
    %v7381 = vsel %vm7136, %v6137, 0
    %v7384 = vsel %vm7136, %v6142, 0
    %v7387 = vsel %vm7136, %v6147, 0
    %v7390 = vsel %vm7136, %v6152, 0
    %v7393 = vsel %vm7136, %v6157, 0
    %v7396 = vsel %vm7136, %v6162, 0
    %v7399 = vsel %vm7136, %v6167, 0
    %v7402 = vsel %vm7136, %v6172, 0
    %v7405 = vsel %vm7136, %v6177, 0
    %v7408 = vsel %vm7136, %v6182, 0
    %v7411 = vsel %vm7136, %v6187, 0
    %v7414 = vsel %vm7136, %v6192, 0
    %v7417 = vsel %vm7136, %v6197, 0
    %v7420 = vsel %vm7136, %v6202, 0
    %v7423 = vsel %vm7136, %v6207, 0
    %v7426 = vsel %vm7136, %v6212, 0
    %v7429 = vsel %vm7136, %v6217, 0
    %v7432 = vsel %vm7136, %v6222, 0
    %v7435 = vsel %vm7136, %v6227, 0
    %v7438 = vsel %vm7136, %v6232, 0
    %v7441 = vsel %vm7136, %v6237, 0
    %v7444 = vsel %vm7136, %v6242, 0
    %v7447 = vsel %vm7136, %v6247, 0
    %v7450 = vsel %vm7136, %v6252, 0
    %v7453 = vsel %vm7136, %v6257, 0
    %v7456 = vsel %vm7136, %v6262, 0
    %v7459 = vsel %vm7136, %v6267, 0
    %v7462 = vsel %vm7136, %v6272, 0
    %v7465 = vsel %vm7136, %v6277, 0
    %v7468 = vsel %vm7136, %v6282, 0
    %v7471 = vsel %vm7136, %v6287, 0
    %v7474 = vsel %vm7136, %v6292, 0
    %v7477 = vsel %vm7136, %v6297, 0
    %v7480 = vsel %vm7136, %v6302, 0
    %v7483 = vsel %vm7136, %v6307, 0
    %v7486 = vsel %vm7136, %v6312, 0
    %v7489 = vsel %vm7136, %v6317, 0
    %v7492 = vsel %vm7136, %v6322, 0
    %v7495 = vsel %vm7136, %v6327, 0
    %v7498 = vsel %vm7136, %v6332, 0
    %v7501 = vsel %vm7136, %v6337, 0
    %v7504 = vsel %vm7136, %v6342, 0
    %v7507 = vsel %vm7136, %v6347, 0
    %v7510 = vsel %vm7136, %v6352, 0
    %v7513 = vsel %vm7136, %v6357, 0
    %v7516 = vsel %vm7136, %v6362, 0
    %v7519 = vsel %vm7136, %v6367, 0
    %v7522 = vsel %vm5444, %v5727, 0
    %7524 = vmatprep.subr.mxu0 0.0
    %7525 = vmatpush1.msra.mxu0 %v5657
    %7526 = vmatprep.subr.mxu0 0.0
    %7527 = vmatpush1.msra.mxu0 %v5658
    %7528 = vmatprep.subr.mxu0 0.0
    %7529 = vmatpush1.msra.mxu0 %v5659
    %7530 = vmatprep.subr.mxu0 0.0
    %7531 = vmatpush1.msra.mxu0 %v5660
    %7532 = vmatprep.subr.mxu0 0.0
    %7533 = vmatpush1.msra.mxu0 %v5661
    %7534 = vmatprep.subr.mxu0 0.0
    %7535 = vmatpush1.msra.mxu0 %v5662
    %7536 = vmatprep.subr.mxu0 0.0
    %7537 = vmatpush1.msra.mxu0 %v5663
    %7538 = vmatprep.subr.mxu0 0.0
    %7539 = vmatpush1.msra.mxu0 %v5664
    %7540 = vmatprep.subr.mxu0 0.0
    %7541 = vmatpush1.msra.mxu0 %v5665
    %7542 = vmatprep.subr.mxu0 0.0
    %7543 = vmatpush1.msra.mxu0 %v5666
    %7544 = vmatprep.subr.mxu0 0.0
    %7545 = vmatpush1.msra.mxu0 %v5667
    %7546 = vmatprep.subr.mxu0 0.0
    %7547 = vmatpush1.msra.mxu0 %v5668
    %7548 = vmatprep.subr.mxu0 0.0
    %7549 = vmatpush1.msra.mxu0 %v5669
    %7550 = vmatprep.subr.mxu0 0.0
    %7551 = vmatpush1.msra.mxu0 %v5670
    %7552 = vmatprep.subr.mxu0 0.0
    %7553 = vmatpush1.msra.mxu0 %v5671
    %7554 = vmatprep.subr.mxu0 0.0
    %7555 = vmatpush1.msra.mxu0 %v5672
    %7556 = vmatprep.subr.mxu0 0.0
    %7557 = vmatpush1.msra.mxu0 %v5673
    %7558 = vmatprep.subr.mxu0 0.0
    %7559 = vmatpush1.msra.mxu0 %v5674
    %7560 = vmatprep.subr.mxu0 0.0
    %7561 = vmatpush1.msra.mxu0 %v5675
    %7562 = vmatprep.subr.mxu0 0.0
    %7563 = vmatpush1.msra.mxu0 %v5676
    %7564 = vmatprep.subr.mxu0 0.0
    %7565 = vmatpush1.msra.mxu0 %v5677
    %7566 = vmatprep.subr.mxu0 0.0
    %7567 = vmatpush1.msra.mxu0 %v5678
    %7568 = vmatprep.subr.mxu0 0.0
    %7569 = vmatpush1.msra.mxu0 %v5679
    %7570 = vmatprep.subr.mxu0 0.0
    %7571 = vmatpush1.msra.mxu0 %v5680
    %7572 = vmatprep.subr.mxu0 0.0
    %7573 = vmatpush1.msra.mxu0 %v5681
    %7574 = vmatprep.subr.mxu0 0.0
    %7575 = vmatpush1.msra.mxu0 %v5682
    %7576 = vmatprep.subr.mxu0 0.0
    %7577 = vmatpush1.msra.mxu0 %v5683
    %7578 = vmatprep.subr.mxu0 0.0
    %7579 = vmatpush1.msra.mxu0 %v5684
    %7580 = vmatprep.subr.mxu0 0.0
    %7581 = vmatpush1.msra.mxu0 %v5685
    %7582 = vmatprep.subr.mxu0 0.0
    %7583 = vmatpush1.msra.mxu0 %v5686
    %7584 = vmatprep.subr.mxu0 0.0
    %7585 = vmatpush1.msra.mxu0 %v5687
    %7586 = vmatprep.subr.mxu0 0.0
    %7587 = vmatpush1.msra.mxu0 %v5688
    %7588 = vmatprep.mubr.f32.mxu0 %v5729
    %7589 = vmatmul.mubr.f32.gmra.mrb[0].mxu0 %v5728
    %v7590 = vpop.f32.mrb[0].mxu0
    %v7591 = vadd.f32 %v6499, %v7590
    %v7592 = vpop.f32.mrb[0].mxu0
    %7593 = vmatprep.mubr.f32.mxu0 %v5734
    %7594 = vmatmul.mubr.f32.gmra.mrb[0].mxu0 %v5733
    %v7595 = vpop.f32.mrb[0].mxu0
    %v7596 = vadd.f32 %v6504, %v7595
    %v7597 = vpop.f32.mrb[0].mxu0
    %7598 = vmatprep.mubr.f32.mxu0 %v5739
    %7599 = vmatmul.mubr.f32.gmra.mrb[0].mxu0 %v5738
    %v7600 = vpop.f32.mrb[0].mxu0
    %v7601 = vadd.f32 %v6509, %v7600
    %v7602 = vpop.f32.mrb[0].mxu0
    %7603 = vmatprep.mubr.f32.mxu0 %v5744
    %7604 = vmatmul.mubr.f32.gmra.mrb[0].mxu0 %v5743
    %v7605 = vpop.f32.mrb[0].mxu0
    %v7606 = vadd.f32 %v6514, %v7605
    %v7607 = vpop.f32.mrb[0].mxu0
    %7608 = vmatprep.mubr.f32.mxu0 %v5749
    %7609 = vmatmul.mubr.f32.gmra.mrb[0].mxu0 %v5748
    %v7610 = vpop.f32.mrb[0].mxu0
    %v7611 = vadd.f32 %v6519, %v7610
    %v7612 = vpop.f32.mrb[0].mxu0
    %7613 = vmatprep.mubr.f32.mxu0 %v5754
    %7614 = vmatmul.mubr.f32.gmra.mrb[0].mxu0 %v5753
    %v7615 = vpop.f32.mrb[0].mxu0
    %v7616 = vadd.f32 %v6524, %v7615
    %v7617 = vpop.f32.mrb[0].mxu0
    %7618 = vmatprep.mubr.f32.mxu0 %v5759
    %7619 = vmatmul.mubr.f32.gmra.mrb[0].mxu0 %v5758
    %v7620 = vpop.f32.mrb[0].mxu0
    %v7621 = vadd.f32 %v6529, %v7620
    %v7622 = vpop.f32.mrb[0].mxu0
    %7623 = vmatprep.mubr.f32.mxu0 %v5764
    %7624 = vmatmul.mubr.f32.gmra.mrb[0].mxu0 %v5763
    %v7625 = vpop.f32.mrb[0].mxu0
    %v7626 = vadd.f32 %v6534, %v7625
    %v7627 = vpop.f32.mrb[0].mxu0
    %7628 = vmatprep.mubr.f32.mxu0 %v5769
    %7629 = vmatmul.mubr.f32.gmra.mrb[0].mxu0 %v5768
    %v7630 = vpop.f32.mrb[0].mxu0
    %v7631 = vadd.f32 %v6539, %v7630
    %v7632 = vpop.f32.mrb[0].mxu0
    %7633 = vmatprep.mubr.f32.mxu0 %v5774
    %7634 = vmatmul.mubr.f32.gmra.mrb[0].mxu0 %v5773
    %v7635 = vpop.f32.mrb[0].mxu0
    %v7636 = vadd.f32 %v6544, %v7635
    %v7637 = vpop.f32.mrb[0].mxu0
    %7638 = vmatprep.mubr.f32.mxu0 %v5779
    %7639 = vmatmul.mubr.f32.gmra.mrb[0].mxu0 %v5778
    %v7640 = vpop.f32.mrb[0].mxu0
    %v7641 = vadd.f32 %v6549, %v7640
    %v7642 = vpop.f32.mrb[0].mxu0
    %7643 = vmatprep.mubr.f32.mxu0 %v5784
    %7644 = vmatmul.mubr.f32.gmra.mrb[0].mxu0 %v5783
    %v7645 = vpop.f32.mrb[0].mxu0
    %v7646 = vadd.f32 %v6554, %v7645
    %v7647 = vpop.f32.mrb[0].mxu0
    %7648 = vmatprep.mubr.f32.mxu0 %v5789
    %7649 = vmatmul.mubr.f32.gmra.mrb[0].mxu0 %v5788
    %v7650 = vpop.f32.mrb[0].mxu0
    %v7651 = vadd.f32 %v6559, %v7650
    %v7652 = vpop.f32.mrb[0].mxu0
    %7653 = vmatprep.mubr.f32.mxu0 %v5794
    %7654 = vmatmul.mubr.f32.gmra.mrb[0].mxu0 %v5793
    %v7655 = vpop.f32.mrb[0].mxu0
    %v7656 = vadd.f32 %v6564, %v7655
    %v7657 = vpop.f32.mrb[0].mxu0
    %7658 = vmatprep.mubr.f32.mxu0 %v5799
    %7659 = vmatmul.mubr.f32.gmra.mrb[0].mxu0 %v5798
    %v7660 = vpop.f32.mrb[0].mxu0
    %v7661 = vadd.f32 %v6569, %v7660
    %v7662 = vpop.f32.mrb[0].mxu0
    %7663 = vmatprep.mubr.f32.mxu0 %v5804
    %7664 = vmatmul.mubr.f32.gmra.mrb[0].mxu0 %v5803
    %v7665 = vpop.f32.mrb[0].mxu0
    %v7666 = vadd.f32 %v6574, %v7665
    %v7667 = vpop.f32.mrb[0].mxu0
    %7668 = vmatprep.mubr.f32.mxu0 %v5809
    %7669 = vmatmul.mubr.f32.gmra.mrb[0].mxu0 %v5808
    %v7670 = vpop.f32.mrb[0].mxu0
    %v7671 = vadd.f32 %v6579, %v7670
    %v7672 = vpop.f32.mrb[0].mxu0
    %7673 = vmatprep.mubr.f32.mxu0 %v5814
    %7674 = vmatmul.mubr.f32.gmra.mrb[0].mxu0 %v5813
    %v7675 = vpop.f32.mrb[0].mxu0
    %v7676 = vadd.f32 %v6584, %v7675
    %v7677 = vpop.f32.mrb[0].mxu0
    %7678 = vmatprep.mubr.f32.mxu0 %v5819
    %7679 = vmatmul.mubr.f32.gmra.mrb[0].mxu0 %v5818
    %v7680 = vpop.f32.mrb[0].mxu0
    %v7681 = vadd.f32 %v6589, %v7680
    %v7682 = vpop.f32.mrb[0].mxu0
    %7683 = vmatprep.mubr.f32.mxu0 %v5824
    %7684 = vmatmul.mubr.f32.gmra.mrb[0].mxu0 %v5823
    %v7685 = vpop.f32.mrb[0].mxu0
    %v7686 = vadd.f32 %v6594, %v7685
    %v7687 = vpop.f32.mrb[0].mxu0
    %7688 = vmatprep.mubr.f32.mxu0 %v5829
    %7689 = vmatmul.mubr.f32.gmra.mrb[0].mxu0 %v5828
    %v7690 = vpop.f32.mrb[0].mxu0
    %v7691 = vadd.f32 %v6599, %v7690
    %v7692 = vpop.f32.mrb[0].mxu0
    %7693 = vmatprep.mubr.f32.mxu0 %v5834
    %7694 = vmatmul.mubr.f32.gmra.mrb[0].mxu0 %v5833
    %v7695 = vpop.f32.mrb[0].mxu0
    %v7696 = vadd.f32 %v6604, %v7695
    %v7697 = vpop.f32.mrb[0].mxu0
    %7698 = vmatprep.mubr.f32.mxu0 %v5839
    %7699 = vmatmul.mubr.f32.gmra.mrb[0].mxu0 %v5838
    %v7700 = vpop.f32.mrb[0].mxu0
    %v7701 = vadd.f32 %v6609, %v7700
    %v7702 = vpop.f32.mrb[0].mxu0
    %7703 = vmatprep.mubr.f32.mxu0 %v5844
    %7704 = vmatmul.mubr.f32.gmra.mrb[0].mxu0 %v5843
    %v7705 = vpop.f32.mrb[0].mxu0
    %v7706 = vadd.f32 %v6614, %v7705
    %v7707 = vpop.f32.mrb[0].mxu0
    %7708 = vmatprep.mubr.f32.mxu0 %v5849
    %7709 = vmatmul.mubr.f32.gmra.mrb[0].mxu0 %v5848
    %v7710 = vpop.f32.mrb[0].mxu0
    %v7711 = vadd.f32 %v6619, %v7710
    %v7712 = vpop.f32.mrb[0].mxu0
    %7713 = vmatprep.mubr.f32.mxu0 %v5854
    %7714 = vmatmul.mubr.f32.gmra.mrb[0].mxu0 %v5853
    %v7715 = vpop.f32.mrb[0].mxu0
    %v7716 = vadd.f32 %v6624, %v7715
    %v7717 = vpop.f32.mrb[0].mxu0
    %7718 = vmatprep.mubr.f32.mxu0 %v5859
    %7719 = vmatmul.mubr.f32.gmra.mrb[0].mxu0 %v5858
    %v7720 = vpop.f32.mrb[0].mxu0
    %v7721 = vadd.f32 %v6629, %v7720
    %v7722 = vpop.f32.mrb[0].mxu0
    %7723 = vmatprep.mubr.f32.mxu0 %v5864
    %7724 = vmatmul.mubr.f32.gmra.mrb[0].mxu0 %v5863
    %v7725 = vpop.f32.mrb[0].mxu0
    %v7726 = vadd.f32 %v6634, %v7725
    %v7727 = vpop.f32.mrb[0].mxu0
    %7728 = vmatprep.mubr.f32.mxu0 %v5869
    %7729 = vmatmul.mubr.f32.gmra.mrb[0].mxu0 %v5868
    %v7730 = vpop.f32.mrb[0].mxu0
    %v7731 = vadd.f32 %v6639, %v7730
    %v7732 = vpop.f32.mrb[0].mxu0
    %7733 = vmatprep.mubr.f32.mxu0 %v5874
    %7734 = vmatmul.mubr.f32.gmra.mrb[0].mxu0 %v5873
    %v7735 = vpop.f32.mrb[0].mxu0
    %v7736 = vadd.f32 %v6644, %v7735
    %v7737 = vpop.f32.mrb[0].mxu0
    %7738 = vmatprep.mubr.f32.mxu0 %v5879
    %7739 = vmatmul.mubr.f32.gmra.mrb[0].mxu0 %v5878
    %v7740 = vpop.f32.mrb[0].mxu0
    %v7741 = vadd.f32 %v6649, %v7740
    %v7742 = vpop.f32.mrb[0].mxu0
    %7743 = vmatprep.mubr.f32.mxu0 %v5884
    %7744 = vmatmul.mubr.f32.gmra.mrb[0].mxu0 %v5883
    %v7745 = vpop.f32.mrb[0].mxu0
    %v7746 = vadd.f32 %v6654, %v7745
    %v7747 = vpop.f32.mrb[0].mxu0
    %7748 = vmatprep.mubr.f32.mxu0 %v5889
    %7749 = vmatmul.mubr.f32.gmra.mrb[0].mxu0 %v5888
    %v7750 = vpop.f32.mrb[0].mxu0
    %v7751 = vadd.f32 %v6659, %v7750
    %v7752 = vpop.f32.mrb[0].mxu0
    %7753 = vmatprep.mubr.f32.mxu0 %v5894
    %7754 = vmatmul.mubr.f32.gmra.mrb[0].mxu0 %v5893
    %v7755 = vpop.f32.mrb[0].mxu0
    %v7756 = vadd.f32 %v6664, %v7755
    %v7757 = vpop.f32.mrb[0].mxu0
    %7758 = vmatprep.mubr.f32.mxu0 %v5899
    %7759 = vmatmul.mubr.f32.gmra.mrb[0].mxu0 %v5898
    %v7760 = vpop.f32.mrb[0].mxu0
    %v7761 = vadd.f32 %v6669, %v7760
    %v7762 = vpop.f32.mrb[0].mxu0
    %7763 = vmatprep.mubr.f32.mxu0 %v5904
    %7764 = vmatmul.mubr.f32.gmra.mrb[0].mxu0 %v5903
    %v7765 = vpop.f32.mrb[0].mxu0
    %v7766 = vadd.f32 %v6674, %v7765
    %v7767 = vpop.f32.mrb[0].mxu0
    %7768 = vmatprep.mubr.f32.mxu0 %v5909
    %7769 = vmatmul.mubr.f32.gmra.mrb[0].mxu0 %v5908
    %v7770 = vpop.f32.mrb[0].mxu0
    %v7771 = vadd.f32 %v6679, %v7770
    %v7772 = vpop.f32.mrb[0].mxu0
    %7773 = vmatprep.mubr.f32.mxu0 %v5914
    %7774 = vmatmul.mubr.f32.gmra.mrb[0].mxu0 %v5913
    %v7775 = vpop.f32.mrb[0].mxu0
    %v7776 = vadd.f32 %v6684, %v7775
    %v7777 = vpop.f32.mrb[0].mxu0
    %7778 = vmatprep.mubr.f32.mxu0 %v5919
    %7779 = vmatmul.mubr.f32.gmra.mrb[0].mxu0 %v5918
    %v7780 = vpop.f32.mrb[0].mxu0
    %v7781 = vadd.f32 %v6689, %v7780
    %v7782 = vpop.f32.mrb[0].mxu0
    %7783 = vmatprep.mubr.f32.mxu0 %v5924
    %7784 = vmatmul.mubr.f32.gmra.mrb[0].mxu0 %v5923
    %v7785 = vpop.f32.mrb[0].mxu0
    %v7786 = vadd.f32 %v6694, %v7785
    %v7787 = vpop.f32.mrb[0].mxu0
    %7788 = vmatprep.mubr.f32.mxu0 %v5929
    %7789 = vmatmul.mubr.f32.gmra.mrb[0].mxu0 %v5928
    %v7790 = vpop.f32.mrb[0].mxu0
    %v7791 = vadd.f32 %v6699, %v7790
    %v7792 = vpop.f32.mrb[0].mxu0
    %7793 = vmatprep.mubr.f32.mxu0 %v5934
    %7794 = vmatmul.mubr.f32.gmra.mrb[0].mxu0 %v5933
    %v7795 = vpop.f32.mrb[0].mxu0
    %v7796 = vadd.f32 %v6704, %v7795
    %v7797 = vpop.f32.mrb[0].mxu0
    %7798 = vmatprep.mubr.f32.mxu0 %v5939
    %7799 = vmatmul.mubr.f32.gmra.mrb[0].mxu0 %v5938
    %v7800 = vpop.f32.mrb[0].mxu0
    %v7801 = vadd.f32 %v6709, %v7800
    %v7802 = vpop.f32.mrb[0].mxu0
    %7803 = vmatprep.mubr.f32.mxu0 %v5944
    %7804 = vmatmul.mubr.f32.gmra.mrb[0].mxu0 %v5943
    %v7805 = vpop.f32.mrb[0].mxu0
    %v7806 = vadd.f32 %v6714, %v7805
    %v7807 = vpop.f32.mrb[0].mxu0
    %7808 = vmatprep.mubr.f32.mxu0 %v5949
    %7809 = vmatmul.mubr.f32.gmra.mrb[0].mxu0 %v5948
    %v7810 = vpop.f32.mrb[0].mxu0
    %v7811 = vadd.f32 %v6719, %v7810
    %v7812 = vpop.f32.mrb[0].mxu0
    %7813 = vmatprep.mubr.f32.mxu0 %v5954
    %7814 = vmatmul.mubr.f32.gmra.mrb[0].mxu0 %v5953
    %v7815 = vpop.f32.mrb[0].mxu0
    %v7816 = vadd.f32 %v6724, %v7815
    %v7817 = vpop.f32.mrb[0].mxu0
    %7818 = vmatprep.mubr.f32.mxu0 %v5959
    %7819 = vmatmul.mubr.f32.gmra.mrb[0].mxu0 %v5958
    %v7820 = vpop.f32.mrb[0].mxu0
    %v7821 = vadd.f32 %v6729, %v7820
    %v7822 = vpop.f32.mrb[0].mxu0
    %7823 = vmatprep.mubr.f32.mxu0 %v5964
    %7824 = vmatmul.mubr.f32.gmra.mrb[0].mxu0 %v5963
    %v7825 = vpop.f32.mrb[0].mxu0
    %v7826 = vadd.f32 %v6734, %v7825
    %v7827 = vpop.f32.mrb[0].mxu0
    %7828 = vmatprep.mubr.f32.mxu0 %v5969
    %7829 = vmatmul.mubr.f32.gmra.mrb[0].mxu0 %v5968
    %v7830 = vpop.f32.mrb[0].mxu0
    %v7831 = vadd.f32 %v6739, %v7830
    %v7832 = vpop.f32.mrb[0].mxu0
    %7833 = vmatprep.mubr.f32.mxu0 %v5974
    %7834 = vmatmul.mubr.f32.gmra.mrb[0].mxu0 %v5973
    %v7835 = vpop.f32.mrb[0].mxu0
    %v7836 = vadd.f32 %v6744, %v7835
    %v7837 = vpop.f32.mrb[0].mxu0
    %7838 = vmatprep.mubr.f32.mxu0 %v5979
    %7839 = vmatmul.mubr.f32.gmra.mrb[0].mxu0 %v5978
    %v7840 = vpop.f32.mrb[0].mxu0
    %v7841 = vadd.f32 %v6749, %v7840
    %v7842 = vpop.f32.mrb[0].mxu0
    %7843 = vmatprep.mubr.f32.mxu0 %v5984
    %7844 = vmatmul.mubr.f32.gmra.mrb[0].mxu0 %v5983
    %v7845 = vpop.f32.mrb[0].mxu0
    %v7846 = vadd.f32 %v6754, %v7845
    %v7847 = vpop.f32.mrb[0].mxu0
    %7848 = vmatprep.mubr.f32.mxu0 %v5989
    %7849 = vmatmul.mubr.f32.gmra.mrb[0].mxu0 %v5988
    %v7850 = vpop.f32.mrb[0].mxu0
    %v7851 = vadd.f32 %v6759, %v7850
    %v7852 = vpop.f32.mrb[0].mxu0
    %7853 = vmatprep.mubr.f32.mxu0 %v5994
    %7854 = vmatmul.mubr.f32.gmra.mrb[0].mxu0 %v5993
    %v7855 = vpop.f32.mrb[0].mxu0
    %v7856 = vadd.f32 %v6764, %v7855
    %v7857 = vpop.f32.mrb[0].mxu0
    %7858 = vmatprep.mubr.f32.mxu0 %v5999
    %7859 = vmatmul.mubr.f32.gmra.mrb[0].mxu0 %v5998
    %v7860 = vpop.f32.mrb[0].mxu0
    %v7861 = vadd.f32 %v6769, %v7860
    %v7862 = vpop.f32.mrb[0].mxu0
    %7863 = vmatprep.mubr.f32.mxu0 %v6004
    %7864 = vmatmul.mubr.f32.gmra.mrb[0].mxu0 %v6003
    %v7865 = vpop.f32.mrb[0].mxu0
    %v7866 = vadd.f32 %v6774, %v7865
    %v7867 = vpop.f32.mrb[0].mxu0
    %7868 = vmatprep.mubr.f32.mxu0 %v6009
    %7869 = vmatmul.mubr.f32.gmra.mrb[0].mxu0 %v6008
    %v7870 = vpop.f32.mrb[0].mxu0
    %v7871 = vadd.f32 %v6779, %v7870
    %v7872 = vpop.f32.mrb[0].mxu0
    %7873 = vmatprep.mubr.f32.mxu0 %v6014
    %7874 = vmatmul.mubr.f32.gmra.mrb[0].mxu0 %v6013
    %v7875 = vpop.f32.mrb[0].mxu0
    %v7876 = vadd.f32 %v6784, %v7875
    %v7877 = vpop.f32.mrb[0].mxu0
    %7878 = vmatprep.mubr.f32.mxu0 %v6019
    %7879 = vmatmul.mubr.f32.gmra.mrb[0].mxu0 %v6018
    %v7880 = vpop.f32.mrb[0].mxu0
    %v7881 = vadd.f32 %v6789, %v7880
    %v7882 = vpop.f32.mrb[0].mxu0
    %7883 = vmatprep.mubr.f32.mxu0 %v6024
    %7884 = vmatmul.mubr.f32.gmra.mrb[0].mxu0 %v6023
    %v7885 = vpop.f32.mrb[0].mxu0
    %v7886 = vadd.f32 %v6794, %v7885
    %v7887 = vpop.f32.mrb[0].mxu0
    %7888 = vmatprep.mubr.f32.mxu0 %v6029
    %7889 = vmatmul.mubr.f32.gmra.mrb[0].mxu0 %v6028
    %v7890 = vpop.f32.mrb[0].mxu0
    %v7891 = vadd.f32 %v6799, %v7890
    %v7892 = vpop.f32.mrb[0].mxu0
    %7893 = vmatprep.mubr.f32.mxu0 %v6034
    %7894 = vmatmul.mubr.f32.gmra.mrb[0].mxu0 %v6033
    %v7895 = vpop.f32.mrb[0].mxu0
    %v7896 = vadd.f32 %v6804, %v7895
    %v7897 = vpop.f32.mrb[0].mxu0
    %7898 = vmatprep.mubr.f32.mxu0 %v6039
    %7899 = vmatmul.mubr.f32.gmra.mrb[0].mxu0 %v6038
    %v7900 = vpop.f32.mrb[0].mxu0
    %v7901 = vadd.f32 %v6809, %v7900
    %v7902 = vpop.f32.mrb[0].mxu0
    %7903 = vmatprep.mubr.f32.mxu0 %v6044
    %7904 = vmatmul.mubr.f32.gmra.mrb[0].mxu0 %v6043
    %v7905 = vpop.f32.mrb[0].mxu0
    %v7906 = vadd.f32 %v6814, %v7905
    %v7907 = vpop.f32.mrb[0].mxu0
    %7908 = vmatprep.mubr.f32.mxu0 %v6049
    %7909 = vmatmul.mubr.f32.gmra.mrb[0].mxu0 %v6048
    %v7910 = vpop.f32.mrb[0].mxu0
    %v7911 = vadd.f32 %v6819, %v7910
    %v7912 = vpop.f32.mrb[0].mxu0
    %7913 = vmatprep.mubr.f32.mxu0 %v6054
    %7914 = vmatmul.mubr.f32.gmra.mrb[0].mxu0 %v6053
    %v7915 = vpop.f32.mrb[0].mxu0
    %v7916 = vadd.f32 %v6824, %v7915
    %v7917 = vpop.f32.mrb[0].mxu0
    %7918 = vmatprep.mubr.f32.mxu0 %v6059
    %7919 = vmatmul.mubr.f32.gmra.mrb[0].mxu0 %v6058
    %v7920 = vpop.f32.mrb[0].mxu0
    %v7921 = vadd.f32 %v6829, %v7920
    %v7922 = vpop.f32.mrb[0].mxu0
    %7923 = vmatprep.mubr.f32.mxu0 %v6064
    %7924 = vmatmul.mubr.f32.gmra.mrb[0].mxu0 %v6063
    %v7925 = vpop.f32.mrb[0].mxu0
    %v7926 = vadd.f32 %v6834, %v7925
    %v7927 = vpop.f32.mrb[0].mxu0
    %7928 = vmatprep.mubr.f32.mxu0 %v6069
    %7929 = vmatmul.mubr.f32.gmra.mrb[0].mxu0 %v6068
    %v7930 = vpop.f32.mrb[0].mxu0
    %v7931 = vadd.f32 %v6839, %v7930
    %v7932 = vpop.f32.mrb[0].mxu0
    %7933 = vmatprep.mubr.f32.mxu0 %v6074
    %7934 = vmatmul.mubr.f32.gmra.mrb[0].mxu0 %v6073
    %v7935 = vpop.f32.mrb[0].mxu0
    %v7936 = vadd.f32 %v6844, %v7935
    %v7937 = vpop.f32.mrb[0].mxu0
    %7938 = vmatprep.mubr.f32.mxu0 %v6079
    %7939 = vmatmul.mubr.f32.gmra.mrb[0].mxu0 %v6078
    %v7940 = vpop.f32.mrb[0].mxu0
    %v7941 = vadd.f32 %v6849, %v7940
    %v7942 = vpop.f32.mrb[0].mxu0
    %7943 = vmatprep.mubr.f32.mxu0 %v6084
    %7944 = vmatmul.mubr.f32.gmra.mrb[0].mxu0 %v6083
    %v7945 = vpop.f32.mrb[0].mxu0
    %v7946 = vadd.f32 %v6854, %v7945
    %v7947 = vpop.f32.mrb[0].mxu0
    %7948 = vmatprep.mubr.f32.mxu0 %v6089
    %7949 = vmatmul.mubr.f32.gmra.mrb[0].mxu0 %v6088
    %v7950 = vpop.f32.mrb[0].mxu0
    %v7951 = vadd.f32 %v6859, %v7950
    %v7952 = vpop.f32.mrb[0].mxu0
    %7953 = vmatprep.mubr.f32.mxu0 %v6094
    %7954 = vmatmul.mubr.f32.gmra.mrb[0].mxu0 %v6093
    %v7955 = vpop.f32.mrb[0].mxu0
    %v7956 = vadd.f32 %v6864, %v7955
    %v7957 = vpop.f32.mrb[0].mxu0
    %7958 = vmatprep.mubr.f32.mxu0 %v6099
    %7959 = vmatmul.mubr.f32.gmra.mrb[0].mxu0 %v6098
    %v7960 = vpop.f32.mrb[0].mxu0
    %v7961 = vadd.f32 %v6869, %v7960
    %v7962 = vpop.f32.mrb[0].mxu0
    %7963 = vmatprep.mubr.f32.mxu0 %v6104
    %7964 = vmatmul.mubr.f32.gmra.mrb[0].mxu0 %v6103
    %v7965 = vpop.f32.mrb[0].mxu0
    %v7966 = vadd.f32 %v6874, %v7965
    %v7967 = vpop.f32.mrb[0].mxu0
    %7968 = vmatprep.mubr.f32.mxu0 %v6109
    %7969 = vmatmul.mubr.f32.gmra.mrb[0].mxu0 %v6108
    %v7970 = vpop.f32.mrb[0].mxu0
    %v7971 = vadd.f32 %v6879, %v7970
    %v7972 = vpop.f32.mrb[0].mxu0
    %7973 = vmatprep.mubr.f32.mxu0 %v6114
    %7974 = vmatmul.mubr.f32.gmra.mrb[0].mxu0 %v6113
    %v7975 = vpop.f32.mrb[0].mxu0
    %v7976 = vadd.f32 %v6884, %v7975
    %v7977 = vpop.f32.mrb[0].mxu0
    %7978 = vmatprep.mubr.f32.mxu0 %v6119
    %7979 = vmatmul.mubr.f32.gmra.mrb[0].mxu0 %v6118
    %v7980 = vpop.f32.mrb[0].mxu0
    %v7981 = vadd.f32 %v6889, %v7980
    %v7982 = vpop.f32.mrb[0].mxu0
    %7983 = vmatprep.mubr.f32.mxu0 %v6124
    %7984 = vmatmul.mubr.f32.gmra.mrb[0].mxu0 %v6123
    %v7985 = vpop.f32.mrb[0].mxu0
    %v7986 = vadd.f32 %v6894, %v7985
    %v7987 = vpop.f32.mrb[0].mxu0
    %7988 = vmatprep.mubr.f32.mxu0 %v6129
    %7989 = vmatmul.mubr.f32.gmra.mrb[0].mxu0 %v6128
    %v7990 = vpop.f32.mrb[0].mxu0
    %v7991 = vadd.f32 %v6899, %v7990
    %v7992 = vpop.f32.mrb[0].mxu0
    %7993 = vmatprep.mubr.f32.mxu0 %v6134
    %7994 = vmatmul.mubr.f32.gmra.mrb[0].mxu0 %v6133
    %v7995 = vpop.f32.mrb[0].mxu0
    %v7996 = vadd.f32 %v6904, %v7995
    %v7997 = vpop.f32.mrb[0].mxu0
    %7998 = vmatprep.mubr.f32.mxu0 %v6139
    %7999 = vmatmul.mubr.f32.gmra.mrb[0].mxu0 %v6138
    %v8000 = vpop.f32.mrb[0].mxu0
    %v8001 = vadd.f32 %v6909, %v8000
    %v8002 = vpop.f32.mrb[0].mxu0
    %8003 = vmatprep.mubr.f32.mxu0 %v6144
    %8004 = vmatmul.mubr.f32.gmra.mrb[0].mxu0 %v6143
    %v8005 = vpop.f32.mrb[0].mxu0
    %v8006 = vadd.f32 %v6914, %v8005
    %v8007 = vpop.f32.mrb[0].mxu0
    %8008 = vmatprep.mubr.f32.mxu0 %v6149
    %8009 = vmatmul.mubr.f32.gmra.mrb[0].mxu0 %v6148
    %v8010 = vpop.f32.mrb[0].mxu0
    %v8011 = vadd.f32 %v6919, %v8010
    %v8012 = vpop.f32.mrb[0].mxu0
    %8013 = vmatprep.mubr.f32.mxu0 %v6154
    %8014 = vmatmul.mubr.f32.gmra.mrb[0].mxu0 %v6153
    %v8015 = vpop.f32.mrb[0].mxu0
    %v8016 = vadd.f32 %v6924, %v8015
    %v8017 = vpop.f32.mrb[0].mxu0
    %8018 = vmatprep.mubr.f32.mxu0 %v6159
    %8019 = vmatmul.mubr.f32.gmra.mrb[0].mxu0 %v6158
    %v8020 = vpop.f32.mrb[0].mxu0
    %v8021 = vadd.f32 %v6929, %v8020
    %v8022 = vpop.f32.mrb[0].mxu0
    %8023 = vmatprep.mubr.f32.mxu0 %v6164
    %8024 = vmatmul.mubr.f32.gmra.mrb[0].mxu0 %v6163
    %v8025 = vpop.f32.mrb[0].mxu0
    %v8026 = vadd.f32 %v6934, %v8025
    %v8027 = vpop.f32.mrb[0].mxu0
    %8028 = vmatprep.mubr.f32.mxu0 %v6169
    %8029 = vmatmul.mubr.f32.gmra.mrb[0].mxu0 %v6168
    %v8030 = vpop.f32.mrb[0].mxu0
    %v8031 = vadd.f32 %v6939, %v8030
    %v8032 = vpop.f32.mrb[0].mxu0
    %8033 = vmatprep.mubr.f32.mxu0 %v6174
    %8034 = vmatmul.mubr.f32.gmra.mrb[0].mxu0 %v6173
    %v8035 = vpop.f32.mrb[0].mxu0
    %v8036 = vadd.f32 %v6944, %v8035
    %v8037 = vpop.f32.mrb[0].mxu0
    %8038 = vmatprep.mubr.f32.mxu0 %v6179
    %8039 = vmatmul.mubr.f32.gmra.mrb[0].mxu0 %v6178
    %v8040 = vpop.f32.mrb[0].mxu0
    %v8041 = vadd.f32 %v6949, %v8040
    %v8042 = vpop.f32.mrb[0].mxu0
    %8043 = vmatprep.mubr.f32.mxu0 %v6184
    %8044 = vmatmul.mubr.f32.gmra.mrb[0].mxu0 %v6183
    %v8045 = vpop.f32.mrb[0].mxu0
    %v8046 = vadd.f32 %v6954, %v8045
    %v8047 = vpop.f32.mrb[0].mxu0
    %8048 = vmatprep.mubr.f32.mxu0 %v6189
    %8049 = vmatmul.mubr.f32.gmra.mrb[0].mxu0 %v6188
    %v8050 = vpop.f32.mrb[0].mxu0
    %v8051 = vadd.f32 %v6959, %v8050
    %v8052 = vpop.f32.mrb[0].mxu0
    %8053 = vmatprep.mubr.f32.mxu0 %v6194
    %8054 = vmatmul.mubr.f32.gmra.mrb[0].mxu0 %v6193
    %v8055 = vpop.f32.mrb[0].mxu0
    %v8056 = vadd.f32 %v6964, %v8055
    %v8057 = vpop.f32.mrb[0].mxu0
    %8058 = vmatprep.mubr.f32.mxu0 %v6199
    %8059 = vmatmul.mubr.f32.gmra.mrb[0].mxu0 %v6198
    %v8060 = vpop.f32.mrb[0].mxu0
    %v8061 = vadd.f32 %v6969, %v8060
    %v8062 = vpop.f32.mrb[0].mxu0
    %8063 = vmatprep.mubr.f32.mxu0 %v6204
    %8064 = vmatmul.mubr.f32.gmra.mrb[0].mxu0 %v6203
    %v8065 = vpop.f32.mrb[0].mxu0
    %v8066 = vadd.f32 %v6974, %v8065
    %v8067 = vpop.f32.mrb[0].mxu0
    %8068 = vmatprep.mubr.f32.mxu0 %v6209
    %8069 = vmatmul.mubr.f32.gmra.mrb[0].mxu0 %v6208
    %v8070 = vpop.f32.mrb[0].mxu0
    %v8071 = vadd.f32 %v6979, %v8070
    %v8072 = vpop.f32.mrb[0].mxu0
    %8073 = vmatprep.mubr.f32.mxu0 %v6214
    %8074 = vmatmul.mubr.f32.gmra.mrb[0].mxu0 %v6213
    %v8075 = vpop.f32.mrb[0].mxu0
    %v8076 = vadd.f32 %v6984, %v8075
    %v8077 = vpop.f32.mrb[0].mxu0
    %8078 = vmatprep.mubr.f32.mxu0 %v6219
    %8079 = vmatmul.mubr.f32.gmra.mrb[0].mxu0 %v6218
    %v8080 = vpop.f32.mrb[0].mxu0
    %v8081 = vadd.f32 %v6989, %v8080
    %v8082 = vpop.f32.mrb[0].mxu0
    %8083 = vmatprep.mubr.f32.mxu0 %v6224
    %8084 = vmatmul.mubr.f32.gmra.mrb[0].mxu0 %v6223
    %v8085 = vpop.f32.mrb[0].mxu0
    %v8086 = vadd.f32 %v6994, %v8085
    %v8087 = vpop.f32.mrb[0].mxu0
    %8088 = vmatprep.mubr.f32.mxu0 %v6229
    %8089 = vmatmul.mubr.f32.gmra.mrb[0].mxu0 %v6228
    %v8090 = vpop.f32.mrb[0].mxu0
    %v8091 = vadd.f32 %v6999, %v8090
    %v8092 = vpop.f32.mrb[0].mxu0
    %8093 = vmatprep.mubr.f32.mxu0 %v6234
    %8094 = vmatmul.mubr.f32.gmra.mrb[0].mxu0 %v6233
    %v8095 = vpop.f32.mrb[0].mxu0
    %v8096 = vadd.f32 %v7004, %v8095
    %v8097 = vpop.f32.mrb[0].mxu0
    %8098 = vmatprep.mubr.f32.mxu0 %v6239
    %8099 = vmatmul.mubr.f32.gmra.mrb[0].mxu0 %v6238
    %v8100 = vpop.f32.mrb[0].mxu0
    %v8101 = vadd.f32 %v7009, %v8100
    %v8102 = vpop.f32.mrb[0].mxu0
    %8103 = vmatprep.mubr.f32.mxu0 %v6244
    %8104 = vmatmul.mubr.f32.gmra.mrb[0].mxu0 %v6243
    %v8105 = vpop.f32.mrb[0].mxu0
    %v8106 = vadd.f32 %v7014, %v8105
    %v8107 = vpop.f32.mrb[0].mxu0
    %8108 = vmatprep.mubr.f32.mxu0 %v6249
    %8109 = vmatmul.mubr.f32.gmra.mrb[0].mxu0 %v6248
    %v8110 = vpop.f32.mrb[0].mxu0
    %v8111 = vadd.f32 %v7019, %v8110
    %v8112 = vpop.f32.mrb[0].mxu0
    %8113 = vmatprep.mubr.f32.mxu0 %v6254
    %8114 = vmatmul.mubr.f32.gmra.mrb[0].mxu0 %v6253
    %v8115 = vpop.f32.mrb[0].mxu0
    %v8116 = vadd.f32 %v7024, %v8115
    %v8117 = vpop.f32.mrb[0].mxu0
    %8118 = vmatprep.mubr.f32.mxu0 %v6259
    %8119 = vmatmul.mubr.f32.gmra.mrb[0].mxu0 %v6258
    %v8120 = vpop.f32.mrb[0].mxu0
    %v8121 = vadd.f32 %v7029, %v8120
    %v8122 = vpop.f32.mrb[0].mxu0
    %8123 = vmatprep.mubr.f32.mxu0 %v6264
    %8124 = vmatmul.mubr.f32.gmra.mrb[0].mxu0 %v6263
    %v8125 = vpop.f32.mrb[0].mxu0
    %v8126 = vadd.f32 %v7034, %v8125
    %v8127 = vpop.f32.mrb[0].mxu0
    %8128 = vmatprep.mubr.f32.mxu0 %v6269
    %8129 = vmatmul.mubr.f32.gmra.mrb[0].mxu0 %v6268
    %v8130 = vpop.f32.mrb[0].mxu0
    %v8131 = vadd.f32 %v7039, %v8130
    %v8132 = vpop.f32.mrb[0].mxu0
    %8133 = vmatprep.mubr.f32.mxu0 %v6274
    %8134 = vmatmul.mubr.f32.gmra.mrb[0].mxu0 %v6273
    %v8135 = vpop.f32.mrb[0].mxu0
    %v8136 = vadd.f32 %v7044, %v8135
    %v8137 = vpop.f32.mrb[0].mxu0
    %8138 = vmatprep.mubr.f32.mxu0 %v6279
    %8139 = vmatmul.mubr.f32.gmra.mrb[0].mxu0 %v6278
    %v8140 = vpop.f32.mrb[0].mxu0
    %v8141 = vadd.f32 %v7049, %v8140
    %v8142 = vpop.f32.mrb[0].mxu0
    %8143 = vmatprep.mubr.f32.mxu0 %v6284
    %8144 = vmatmul.mubr.f32.gmra.mrb[0].mxu0 %v6283
    %v8145 = vpop.f32.mrb[0].mxu0
    %v8146 = vadd.f32 %v7054, %v8145
    %v8147 = vpop.f32.mrb[0].mxu0
    %8148 = vmatprep.mubr.f32.mxu0 %v6289
    %8149 = vmatmul.mubr.f32.gmra.mrb[0].mxu0 %v6288
    %v8150 = vpop.f32.mrb[0].mxu0
    %v8151 = vadd.f32 %v7059, %v8150
    %v8152 = vpop.f32.mrb[0].mxu0
    %8153 = vmatprep.mubr.f32.mxu0 %v6294
    %8154 = vmatmul.mubr.f32.gmra.mrb[0].mxu0 %v6293
    %v8155 = vpop.f32.mrb[0].mxu0
    %v8156 = vadd.f32 %v7064, %v8155
    %v8157 = vpop.f32.mrb[0].mxu0
    %8158 = vmatprep.mubr.f32.mxu0 %v6299
    %8159 = vmatmul.mubr.f32.gmra.mrb[0].mxu0 %v6298
    %v8160 = vpop.f32.mrb[0].mxu0
    %v8161 = vadd.f32 %v7069, %v8160
    %v8162 = vpop.f32.mrb[0].mxu0
    %8163 = vmatprep.mubr.f32.mxu0 %v6304
    %8164 = vmatmul.mubr.f32.gmra.mrb[0].mxu0 %v6303
    %v8165 = vpop.f32.mrb[0].mxu0
    %v8166 = vadd.f32 %v7074, %v8165
    %v8167 = vpop.f32.mrb[0].mxu0
    %8168 = vmatprep.mubr.f32.mxu0 %v6309
    %8169 = vmatmul.mubr.f32.gmra.mrb[0].mxu0 %v6308
    %v8170 = vpop.f32.mrb[0].mxu0
    %v8171 = vadd.f32 %v7079, %v8170
    %v8172 = vpop.f32.mrb[0].mxu0
    %8173 = vmatprep.mubr.f32.mxu0 %v6314
    %8174 = vmatmul.mubr.f32.gmra.mrb[0].mxu0 %v6313
    %v8175 = vpop.f32.mrb[0].mxu0
    %v8176 = vadd.f32 %v7084, %v8175
    %v8177 = vpop.f32.mrb[0].mxu0
    %8178 = vmatprep.mubr.f32.mxu0 %v6319
    %8179 = vmatmul.mubr.f32.gmra.mrb[0].mxu0 %v6318
    %v8180 = vpop.f32.mrb[0].mxu0
    %v8181 = vadd.f32 %v7089, %v8180
    %v8182 = vpop.f32.mrb[0].mxu0
    %8183 = vmatprep.mubr.f32.mxu0 %v6324
    %8184 = vmatmul.mubr.f32.gmra.mrb[0].mxu0 %v6323
    %v8185 = vpop.f32.mrb[0].mxu0
    %v8186 = vadd.f32 %v7094, %v8185
    %v8187 = vpop.f32.mrb[0].mxu0
    %8188 = vmatprep.mubr.f32.mxu0 %v6329
    %8189 = vmatmul.mubr.f32.gmra.mrb[0].mxu0 %v6328
    %v8190 = vpop.f32.mrb[0].mxu0
    %v8191 = vadd.f32 %v7099, %v8190
    %v8192 = vpop.f32.mrb[0].mxu0
    %8193 = vmatprep.mubr.f32.mxu0 %v6334
    %8194 = vmatmul.mubr.f32.gmra.mrb[0].mxu0 %v6333
    %v8195 = vpop.f32.mrb[0].mxu0
    %v8196 = vadd.f32 %v7104, %v8195
    %v8197 = vpop.f32.mrb[0].mxu0
    %8198 = vmatprep.mubr.f32.mxu0 %v6339
    %8199 = vmatmul.mubr.f32.gmra.mrb[0].mxu0 %v6338
    %v8200 = vpop.f32.mrb[0].mxu0
    %v8201 = vadd.f32 %v7109, %v8200
    %v8202 = vpop.f32.mrb[0].mxu0
    %8203 = vmatprep.mubr.f32.mxu0 %v6344
    %8204 = vmatmul.mubr.f32.gmra.mrb[0].mxu0 %v6343
    %v8205 = vpop.f32.mrb[0].mxu0
    %v8206 = vadd.f32 %v7114, %v8205
    %v8207 = vpop.f32.mrb[0].mxu0
    %8208 = vmatprep.mubr.f32.mxu0 %v6349
    %8209 = vmatmul.mubr.f32.gmra.mrb[0].mxu0 %v6348
    %v8210 = vpop.f32.mrb[0].mxu0
    %v8211 = vadd.f32 %v7119, %v8210
    %v8212 = vpop.f32.mrb[0].mxu0
    %8213 = vmatprep.mubr.f32.mxu0 %v6354
    %8214 = vmatmul.mubr.f32.gmra.mrb[0].mxu0 %v6353
    %v8215 = vpop.f32.mrb[0].mxu0
    %v8216 = vadd.f32 %v7124, %v8215
    %v8217 = vpop.f32.mrb[0].mxu0
    %8218 = vmatprep.mubr.f32.mxu0 %v6359
    %8219 = vmatmul.mubr.f32.gmra.mrb[0].mxu0 %v6358
    %v8220 = vpop.f32.mrb[0].mxu0
    %v8221 = vadd.f32 %v7129, %v8220
    %v8222 = vpop.f32.mrb[0].mxu0
    %8223 = vmatprep.mubr.f32.mxu0 %v6364
    %8224 = vmatmul.mubr.f32.gmra.mrb[0].mxu0 %v6363
    %v8225 = vpop.f32.mrb[0].mxu0
    %v8226 = vadd.f32 %v7134, %v8225
    %v8227 = vpop.f32.mrb[0].mxu0
    %8228 = vdwg.mxu0
    %8229 = vmatprep.subr.mxu0 0.0
    %8230 = vmatpush1.msra.mxu0 %v5689
    %8231 = vmatprep.subr.mxu0 0.0
    %8232 = vmatpush1.msra.mxu0 %v5690
    %8233 = vmatprep.subr.mxu0 0.0
    %8234 = vmatpush1.msra.mxu0 %v5691
    %8235 = vmatprep.subr.mxu0 0.0
    %8236 = vmatpush1.msra.mxu0 %v5692
    %8237 = vmatprep.subr.mxu0 0.0
    %8238 = vmatpush1.msra.mxu0 %v5693
    %8239 = vmatprep.subr.mxu0 0.0
    %8240 = vmatpush1.msra.mxu0 %v5694
    %8241 = vmatprep.subr.mxu0 0.0
    %8242 = vmatpush1.msra.mxu0 %v5695
    %8243 = vmatprep.subr.mxu0 0.0
    %8244 = vmatpush1.msra.mxu0 %v5696
    %8245 = vmatprep.subr.mxu0 0.0
    %8246 = vmatpush1.msra.mxu0 %v5697
    %8247 = vmatprep.subr.mxu0 0.0
    %8248 = vmatpush1.msra.mxu0 %v5698
    %8249 = vmatprep.subr.mxu0 0.0
    %8250 = vmatpush1.msra.mxu0 %v5699
    %8251 = vmatprep.subr.mxu0 0.0
    %8252 = vmatpush1.msra.mxu0 %v5700
    %8253 = vmatprep.subr.mxu0 0.0
    %8254 = vmatpush1.msra.mxu0 %v5701
    %8255 = vmatprep.subr.mxu0 0.0
    %8256 = vmatpush1.msra.mxu0 %v5702
    %8257 = vmatprep.subr.mxu0 0.0
    %8258 = vmatpush1.msra.mxu0 %v5703
    %8259 = vmatprep.subr.mxu0 0.0
    %8260 = vmatpush1.msra.mxu0 %v5704
    %8261 = vmatprep.subr.mxu0 0.0
    %8262 = vmatpush1.msra.mxu0 %v5705
    %8263 = vmatprep.subr.mxu0 0.0
    %8264 = vmatpush1.msra.mxu0 %v5706
    %8265 = vmatprep.subr.mxu0 0.0
    %8266 = vmatpush1.msra.mxu0 %v5707
    %8267 = vmatprep.subr.mxu0 0.0
    %8268 = vmatpush1.msra.mxu0 %v5708
    %8269 = vmatprep.subr.mxu0 0.0
    %8270 = vmatpush1.msra.mxu0 %v5709
    %8271 = vmatprep.subr.mxu0 0.0
    %8272 = vmatpush1.msra.mxu0 %v5710
    %8273 = vmatprep.subr.mxu0 0.0
    %8274 = vmatpush1.msra.mxu0 %v5711
    %8275 = vmatprep.subr.mxu0 0.0
    %8276 = vmatpush1.msra.mxu0 %v5712
    %8277 = vmatprep.subr.mxu0 0.0
    %8278 = vmatpush1.msra.mxu0 %v5713
    %8279 = vmatprep.subr.mxu0 0.0
    %8280 = vmatpush1.msra.mxu0 %v5714
    %8281 = vmatprep.subr.mxu0 0.0
    %8282 = vmatpush1.msra.mxu0 %v5715
    %8283 = vmatprep.subr.mxu0 0.0
    %8284 = vmatpush1.msra.mxu0 %v5716
    %8285 = vmatprep.subr.mxu0 0.0
    %8286 = vmatpush1.msra.mxu0 %v5717
    %8287 = vmatprep.subr.mxu0 0.0
    %8288 = vmatpush1.msra.mxu0 %v5718
    %8289 = vmatprep.subr.mxu0 0.0
    %8290 = vmatpush1.msra.mxu0 %v5719
    %8291 = vmatprep.subr.mxu0 0.0
    %8292 = vmatpush1.msra.mxu0 %v5720
    %8293 = vmatprep.mubr.f32.mxu0 %v5731
    %8294 = vmatmul.mubr.f32.gmra.mrb[0].mxu0 %v5730
    %v8295 = vpop.f32.mrb[0].mxu0
    %v8296 = vadd.f32 %v7591, %v8295
    %v8297 = vpop.f32.mrb[0].mxu0
    %8298 = vmatprep.mubr.f32.mxu0 %v5736
    %8299 = vmatmul.mubr.f32.gmra.mrb[0].mxu0 %v5735
    %v8300 = vpop.f32.mrb[0].mxu0
    %v8301 = vadd.f32 %v7596, %v8300
    %v8302 = vpop.f32.mrb[0].mxu0
    %8303 = vmatprep.mubr.f32.mxu0 %v5741
    %8304 = vmatmul.mubr.f32.gmra.mrb[0].mxu0 %v5740
    %v8305 = vpop.f32.mrb[0].mxu0
    %v8306 = vadd.f32 %v7601, %v8305
    %v8307 = vpop.f32.mrb[0].mxu0
    %8308 = vmatprep.mubr.f32.mxu0 %v5746
    %8309 = vmatmul.mubr.f32.gmra.mrb[0].mxu0 %v5745
    %v8310 = vpop.f32.mrb[0].mxu0
    %v8311 = vadd.f32 %v7606, %v8310
    %v8312 = vpop.f32.mrb[0].mxu0
    %8313 = vmatprep.mubr.f32.mxu0 %v5751
    %8314 = vmatmul.mubr.f32.gmra.mrb[0].mxu0 %v5750
    %v8315 = vpop.f32.mrb[0].mxu0
    %v8316 = vadd.f32 %v7611, %v8315
    %v8317 = vpop.f32.mrb[0].mxu0
    %8318 = vmatprep.mubr.f32.mxu0 %v5756
    %8319 = vmatmul.mubr.f32.gmra.mrb[0].mxu0 %v5755
    %v8320 = vpop.f32.mrb[0].mxu0
    %v8321 = vadd.f32 %v7616, %v8320
    %v8322 = vpop.f32.mrb[0].mxu0
    %8323 = vmatprep.mubr.f32.mxu0 %v5761
    %8324 = vmatmul.mubr.f32.gmra.mrb[0].mxu0 %v5760
    %v8325 = vpop.f32.mrb[0].mxu0
    %v8326 = vadd.f32 %v7621, %v8325
    %v8327 = vpop.f32.mrb[0].mxu0
    %8328 = vmatprep.mubr.f32.mxu0 %v5766
    %8329 = vmatmul.mubr.f32.gmra.mrb[0].mxu0 %v5765
    %v8330 = vpop.f32.mrb[0].mxu0
    %v8331 = vadd.f32 %v7626, %v8330
    %v8332 = vpop.f32.mrb[0].mxu0
    %8333 = vmatprep.mubr.f32.mxu0 %v5771
    %8334 = vmatmul.mubr.f32.gmra.mrb[0].mxu0 %v5770
    %v8335 = vpop.f32.mrb[0].mxu0
    %v8336 = vadd.f32 %v7631, %v8335
    %v8337 = vpop.f32.mrb[0].mxu0
    %8338 = vmatprep.mubr.f32.mxu0 %v5776
    %8339 = vmatmul.mubr.f32.gmra.mrb[0].mxu0 %v5775
    %v8340 = vpop.f32.mrb[0].mxu0
    %v8341 = vadd.f32 %v7636, %v8340
    %v8342 = vpop.f32.mrb[0].mxu0
    %8343 = vmatprep.mubr.f32.mxu0 %v5781
    %8344 = vmatmul.mubr.f32.gmra.mrb[0].mxu0 %v5780
    %v8345 = vpop.f32.mrb[0].mxu0
    %v8346 = vadd.f32 %v7641, %v8345
    %v8347 = vpop.f32.mrb[0].mxu0
    %8348 = vmatprep.mubr.f32.mxu0 %v5786
    %8349 = vmatmul.mubr.f32.gmra.mrb[0].mxu0 %v5785
    %v8350 = vpop.f32.mrb[0].mxu0
    %v8351 = vadd.f32 %v7646, %v8350
    %v8352 = vpop.f32.mrb[0].mxu0
    %8353 = vmatprep.mubr.f32.mxu0 %v5791
    %8354 = vmatmul.mubr.f32.gmra.mrb[0].mxu0 %v5790
    %v8355 = vpop.f32.mrb[0].mxu0
    %v8356 = vadd.f32 %v7651, %v8355
    %v8357 = vpop.f32.mrb[0].mxu0
    %8358 = vmatprep.mubr.f32.mxu0 %v5796
    %8359 = vmatmul.mubr.f32.gmra.mrb[0].mxu0 %v5795
    %v8360 = vpop.f32.mrb[0].mxu0
    %v8361 = vadd.f32 %v7656, %v8360
    %v8362 = vpop.f32.mrb[0].mxu0
    %8363 = vmatprep.mubr.f32.mxu0 %v5801
    %8364 = vmatmul.mubr.f32.gmra.mrb[0].mxu0 %v5800
    %v8365 = vpop.f32.mrb[0].mxu0
    %v8366 = vadd.f32 %v7661, %v8365
    %v8367 = vpop.f32.mrb[0].mxu0
    %8368 = vmatprep.mubr.f32.mxu0 %v5806
    %8369 = vmatmul.mubr.f32.gmra.mrb[0].mxu0 %v5805
    %v8370 = vpop.f32.mrb[0].mxu0
    %v8371 = vadd.f32 %v7666, %v8370
    %v8372 = vpop.f32.mrb[0].mxu0
    %8373 = vmatprep.mubr.f32.mxu0 %v5811
    %8374 = vmatmul.mubr.f32.gmra.mrb[0].mxu0 %v5810
    %v8375 = vpop.f32.mrb[0].mxu0
    %v8376 = vadd.f32 %v7671, %v8375
    %v8377 = vpop.f32.mrb[0].mxu0
    %8378 = vmatprep.mubr.f32.mxu0 %v5816
    %8379 = vmatmul.mubr.f32.gmra.mrb[0].mxu0 %v5815
    %v8380 = vpop.f32.mrb[0].mxu0
    %v8381 = vadd.f32 %v7676, %v8380
    %v8382 = vpop.f32.mrb[0].mxu0
    %8383 = vmatprep.mubr.f32.mxu0 %v5821
    %8384 = vmatmul.mubr.f32.gmra.mrb[0].mxu0 %v5820
    %v8385 = vpop.f32.mrb[0].mxu0
    %v8386 = vadd.f32 %v7681, %v8385
    %v8387 = vpop.f32.mrb[0].mxu0
    %8388 = vmatprep.mubr.f32.mxu0 %v5826
    %8389 = vmatmul.mubr.f32.gmra.mrb[0].mxu0 %v5825
    %v8390 = vpop.f32.mrb[0].mxu0
    %v8391 = vadd.f32 %v7686, %v8390
    %v8392 = vpop.f32.mrb[0].mxu0
    %8393 = vmatprep.mubr.f32.mxu0 %v5831
    %8394 = vmatmul.mubr.f32.gmra.mrb[0].mxu0 %v5830
    %v8395 = vpop.f32.mrb[0].mxu0
    %v8396 = vadd.f32 %v7691, %v8395
    %v8397 = vpop.f32.mrb[0].mxu0
    %8398 = vmatprep.mubr.f32.mxu0 %v5836
    %8399 = vmatmul.mubr.f32.gmra.mrb[0].mxu0 %v5835
    %v8400 = vpop.f32.mrb[0].mxu0
    %v8401 = vadd.f32 %v7696, %v8400
    %v8402 = vpop.f32.mrb[0].mxu0
    %8403 = vmatprep.mubr.f32.mxu0 %v5841
    %8404 = vmatmul.mubr.f32.gmra.mrb[0].mxu0 %v5840
    %v8405 = vpop.f32.mrb[0].mxu0
    %v8406 = vadd.f32 %v7701, %v8405
    %v8407 = vpop.f32.mrb[0].mxu0
    %8408 = vmatprep.mubr.f32.mxu0 %v5846
    %8409 = vmatmul.mubr.f32.gmra.mrb[0].mxu0 %v5845
    %v8410 = vpop.f32.mrb[0].mxu0
    %v8411 = vadd.f32 %v7706, %v8410
    %v8412 = vpop.f32.mrb[0].mxu0
    %8413 = vmatprep.mubr.f32.mxu0 %v5851
    %8414 = vmatmul.mubr.f32.gmra.mrb[0].mxu0 %v5850
    %v8415 = vpop.f32.mrb[0].mxu0
    %v8416 = vadd.f32 %v7711, %v8415
    %v8417 = vpop.f32.mrb[0].mxu0
    %8418 = vmatprep.mubr.f32.mxu0 %v5856
    %8419 = vmatmul.mubr.f32.gmra.mrb[0].mxu0 %v5855
    %v8420 = vpop.f32.mrb[0].mxu0
    %v8421 = vadd.f32 %v7716, %v8420
    %v8422 = vpop.f32.mrb[0].mxu0
    %8423 = vmatprep.mubr.f32.mxu0 %v5861
    %8424 = vmatmul.mubr.f32.gmra.mrb[0].mxu0 %v5860
    %v8425 = vpop.f32.mrb[0].mxu0
    %v8426 = vadd.f32 %v7721, %v8425
    %v8427 = vpop.f32.mrb[0].mxu0
    %8428 = vmatprep.mubr.f32.mxu0 %v5866
    %8429 = vmatmul.mubr.f32.gmra.mrb[0].mxu0 %v5865
    %v8430 = vpop.f32.mrb[0].mxu0
    %v8431 = vadd.f32 %v7726, %v8430
    %v8432 = vpop.f32.mrb[0].mxu0
    %8433 = vmatprep.mubr.f32.mxu0 %v5871
    %8434 = vmatmul.mubr.f32.gmra.mrb[0].mxu0 %v5870
    %v8435 = vpop.f32.mrb[0].mxu0
    %v8436 = vadd.f32 %v7731, %v8435
    %v8437 = vpop.f32.mrb[0].mxu0
    %8438 = vmatprep.mubr.f32.mxu0 %v5876
    %8439 = vmatmul.mubr.f32.gmra.mrb[0].mxu0 %v5875
    %v8440 = vpop.f32.mrb[0].mxu0
    %v8441 = vadd.f32 %v7736, %v8440
    %v8442 = vpop.f32.mrb[0].mxu0
    %8443 = vmatprep.mubr.f32.mxu0 %v5881
    %8444 = vmatmul.mubr.f32.gmra.mrb[0].mxu0 %v5880
    %v8445 = vpop.f32.mrb[0].mxu0
    %v8446 = vadd.f32 %v7741, %v8445
    %v8447 = vpop.f32.mrb[0].mxu0
    %8448 = vmatprep.mubr.f32.mxu0 %v5886
    %8449 = vmatmul.mubr.f32.gmra.mrb[0].mxu0 %v5885
    %v8450 = vpop.f32.mrb[0].mxu0
    %v8451 = vadd.f32 %v7746, %v8450
    %v8452 = vpop.f32.mrb[0].mxu0
    %8453 = vmatprep.mubr.f32.mxu0 %v5891
    %8454 = vmatmul.mubr.f32.gmra.mrb[0].mxu0 %v5890
    %v8455 = vpop.f32.mrb[0].mxu0
    %v8456 = vadd.f32 %v7751, %v8455
    %v8457 = vpop.f32.mrb[0].mxu0
    %8458 = vmatprep.mubr.f32.mxu0 %v5896
    %8459 = vmatmul.mubr.f32.gmra.mrb[0].mxu0 %v5895
    %v8460 = vpop.f32.mrb[0].mxu0
    %v8461 = vadd.f32 %v7756, %v8460
    %v8462 = vpop.f32.mrb[0].mxu0
    %8463 = vmatprep.mubr.f32.mxu0 %v5901
    %8464 = vmatmul.mubr.f32.gmra.mrb[0].mxu0 %v5900
    %v8465 = vpop.f32.mrb[0].mxu0
    %v8466 = vadd.f32 %v7761, %v8465
    %v8467 = vpop.f32.mrb[0].mxu0
    %8468 = vmatprep.mubr.f32.mxu0 %v5906
    %8469 = vmatmul.mubr.f32.gmra.mrb[0].mxu0 %v5905
    %v8470 = vpop.f32.mrb[0].mxu0
    %v8471 = vadd.f32 %v7766, %v8470
    %v8472 = vpop.f32.mrb[0].mxu0
    %8473 = vmatprep.mubr.f32.mxu0 %v5911
    %8474 = vmatmul.mubr.f32.gmra.mrb[0].mxu0 %v5910
    %v8475 = vpop.f32.mrb[0].mxu0
    %v8476 = vadd.f32 %v7771, %v8475
    %v8477 = vpop.f32.mrb[0].mxu0
    %8478 = vmatprep.mubr.f32.mxu0 %v5916
    %8479 = vmatmul.mubr.f32.gmra.mrb[0].mxu0 %v5915
    %v8480 = vpop.f32.mrb[0].mxu0
    %v8481 = vadd.f32 %v7776, %v8480
    %v8482 = vpop.f32.mrb[0].mxu0
    %8483 = vmatprep.mubr.f32.mxu0 %v5921
    %8484 = vmatmul.mubr.f32.gmra.mrb[0].mxu0 %v5920
    %v8485 = vpop.f32.mrb[0].mxu0
    %v8486 = vadd.f32 %v7781, %v8485
    %v8487 = vpop.f32.mrb[0].mxu0
    %8488 = vmatprep.mubr.f32.mxu0 %v5926
    %8489 = vmatmul.mubr.f32.gmra.mrb[0].mxu0 %v5925
    %v8490 = vpop.f32.mrb[0].mxu0
    %v8491 = vadd.f32 %v7786, %v8490
    %v8492 = vpop.f32.mrb[0].mxu0
    %8493 = vmatprep.mubr.f32.mxu0 %v5931
    %8494 = vmatmul.mubr.f32.gmra.mrb[0].mxu0 %v5930
    %v8495 = vpop.f32.mrb[0].mxu0
    %v8496 = vadd.f32 %v7791, %v8495
    %v8497 = vpop.f32.mrb[0].mxu0
    %8498 = vmatprep.mubr.f32.mxu0 %v5936
    %8499 = vmatmul.mubr.f32.gmra.mrb[0].mxu0 %v5935
    %v8500 = vpop.f32.mrb[0].mxu0
    %v8501 = vadd.f32 %v7796, %v8500
    %v8502 = vpop.f32.mrb[0].mxu0
    %8503 = vmatprep.mubr.f32.mxu0 %v5941
    %8504 = vmatmul.mubr.f32.gmra.mrb[0].mxu0 %v5940
    %v8505 = vpop.f32.mrb[0].mxu0
    %v8506 = vadd.f32 %v7801, %v8505
    %v8507 = vpop.f32.mrb[0].mxu0
    %8508 = vmatprep.mubr.f32.mxu0 %v5946
    %8509 = vmatmul.mubr.f32.gmra.mrb[0].mxu0 %v5945
    %v8510 = vpop.f32.mrb[0].mxu0
    %v8511 = vadd.f32 %v7806, %v8510
    %v8512 = vpop.f32.mrb[0].mxu0
    %8513 = vmatprep.mubr.f32.mxu0 %v5951
    %8514 = vmatmul.mubr.f32.gmra.mrb[0].mxu0 %v5950
    %v8515 = vpop.f32.mrb[0].mxu0
    %v8516 = vadd.f32 %v7811, %v8515
    %v8517 = vpop.f32.mrb[0].mxu0
    %8518 = vmatprep.mubr.f32.mxu0 %v5956
    %8519 = vmatmul.mubr.f32.gmra.mrb[0].mxu0 %v5955
    %v8520 = vpop.f32.mrb[0].mxu0
    %v8521 = vadd.f32 %v7816, %v8520
    %v8522 = vpop.f32.mrb[0].mxu0
    %8523 = vmatprep.mubr.f32.mxu0 %v5961
    %8524 = vmatmul.mubr.f32.gmra.mrb[0].mxu0 %v5960
    %v8525 = vpop.f32.mrb[0].mxu0
    %v8526 = vadd.f32 %v7821, %v8525
    %v8527 = vpop.f32.mrb[0].mxu0
    %8528 = vmatprep.mubr.f32.mxu0 %v5966
    %8529 = vmatmul.mubr.f32.gmra.mrb[0].mxu0 %v5965
    %v8530 = vpop.f32.mrb[0].mxu0
    %v8531 = vadd.f32 %v7826, %v8530
    %v8532 = vpop.f32.mrb[0].mxu0
    %8533 = vmatprep.mubr.f32.mxu0 %v5971
    %8534 = vmatmul.mubr.f32.gmra.mrb[0].mxu0 %v5970
    %v8535 = vpop.f32.mrb[0].mxu0
    %v8536 = vadd.f32 %v7831, %v8535
    %v8537 = vpop.f32.mrb[0].mxu0
    %8538 = vmatprep.mubr.f32.mxu0 %v5976
    %8539 = vmatmul.mubr.f32.gmra.mrb[0].mxu0 %v5975
    %v8540 = vpop.f32.mrb[0].mxu0
    %v8541 = vadd.f32 %v7836, %v8540
    %v8542 = vpop.f32.mrb[0].mxu0
    %8543 = vmatprep.mubr.f32.mxu0 %v5981
    %8544 = vmatmul.mubr.f32.gmra.mrb[0].mxu0 %v5980
    %v8545 = vpop.f32.mrb[0].mxu0
    %v8546 = vadd.f32 %v7841, %v8545
    %v8547 = vpop.f32.mrb[0].mxu0
    %8548 = vmatprep.mubr.f32.mxu0 %v5986
    %8549 = vmatmul.mubr.f32.gmra.mrb[0].mxu0 %v5985
    %v8550 = vpop.f32.mrb[0].mxu0
    %v8551 = vadd.f32 %v7846, %v8550
    %v8552 = vpop.f32.mrb[0].mxu0
    %8553 = vmatprep.mubr.f32.mxu0 %v5991
    %8554 = vmatmul.mubr.f32.gmra.mrb[0].mxu0 %v5990
    %v8555 = vpop.f32.mrb[0].mxu0
    %v8556 = vadd.f32 %v7851, %v8555
    %v8557 = vpop.f32.mrb[0].mxu0
    %8558 = vmatprep.mubr.f32.mxu0 %v5996
    %8559 = vmatmul.mubr.f32.gmra.mrb[0].mxu0 %v5995
    %v8560 = vpop.f32.mrb[0].mxu0
    %v8561 = vadd.f32 %v7856, %v8560
    %v8562 = vpop.f32.mrb[0].mxu0
    %8563 = vmatprep.mubr.f32.mxu0 %v6001
    %8564 = vmatmul.mubr.f32.gmra.mrb[0].mxu0 %v6000
    %v8565 = vpop.f32.mrb[0].mxu0
    %v8566 = vadd.f32 %v7861, %v8565
    %v8567 = vpop.f32.mrb[0].mxu0
    %8568 = vmatprep.mubr.f32.mxu0 %v6006
    %8569 = vmatmul.mubr.f32.gmra.mrb[0].mxu0 %v6005
    %v8570 = vpop.f32.mrb[0].mxu0
    %v8571 = vadd.f32 %v7866, %v8570
    %v8572 = vpop.f32.mrb[0].mxu0
    %8573 = vmatprep.mubr.f32.mxu0 %v6011
    %8574 = vmatmul.mubr.f32.gmra.mrb[0].mxu0 %v6010
    %v8575 = vpop.f32.mrb[0].mxu0
    %v8576 = vadd.f32 %v7871, %v8575
    %v8577 = vpop.f32.mrb[0].mxu0
    %8578 = vmatprep.mubr.f32.mxu0 %v6016
    %8579 = vmatmul.mubr.f32.gmra.mrb[0].mxu0 %v6015
    %v8580 = vpop.f32.mrb[0].mxu0
    %v8581 = vadd.f32 %v7876, %v8580
    %v8582 = vpop.f32.mrb[0].mxu0
    %8583 = vmatprep.mubr.f32.mxu0 %v6021
    %8584 = vmatmul.mubr.f32.gmra.mrb[0].mxu0 %v6020
    %v8585 = vpop.f32.mrb[0].mxu0
    %v8586 = vadd.f32 %v7881, %v8585
    %v8587 = vpop.f32.mrb[0].mxu0
    %8588 = vmatprep.mubr.f32.mxu0 %v6026
    %8589 = vmatmul.mubr.f32.gmra.mrb[0].mxu0 %v6025
    %v8590 = vpop.f32.mrb[0].mxu0
    %v8591 = vadd.f32 %v7886, %v8590
    %v8592 = vpop.f32.mrb[0].mxu0
    %8593 = vmatprep.mubr.f32.mxu0 %v6031
    %8594 = vmatmul.mubr.f32.gmra.mrb[0].mxu0 %v6030
    %v8595 = vpop.f32.mrb[0].mxu0
    %v8596 = vadd.f32 %v7891, %v8595
    %v8597 = vpop.f32.mrb[0].mxu0
    %8598 = vmatprep.mubr.f32.mxu0 %v6036
    %8599 = vmatmul.mubr.f32.gmra.mrb[0].mxu0 %v6035
    %v8600 = vpop.f32.mrb[0].mxu0
    %v8601 = vadd.f32 %v7896, %v8600
    %v8602 = vpop.f32.mrb[0].mxu0
    %8603 = vmatprep.mubr.f32.mxu0 %v6041
    %8604 = vmatmul.mubr.f32.gmra.mrb[0].mxu0 %v6040
    %v8605 = vpop.f32.mrb[0].mxu0
    %v8606 = vadd.f32 %v7901, %v8605
    %v8607 = vpop.f32.mrb[0].mxu0
    %8608 = vmatprep.mubr.f32.mxu0 %v6046
    %8609 = vmatmul.mubr.f32.gmra.mrb[0].mxu0 %v6045
    %v8610 = vpop.f32.mrb[0].mxu0
    %v8611 = vadd.f32 %v7906, %v8610
    %v8612 = vpop.f32.mrb[0].mxu0
    %8613 = vmatprep.mubr.f32.mxu0 %v6051
    %8614 = vmatmul.mubr.f32.gmra.mrb[0].mxu0 %v6050
    %v8615 = vpop.f32.mrb[0].mxu0
    %v8616 = vadd.f32 %v7911, %v8615
    %v8617 = vpop.f32.mrb[0].mxu0
    %8618 = vmatprep.mubr.f32.mxu0 %v6056
    %8619 = vmatmul.mubr.f32.gmra.mrb[0].mxu0 %v6055
    %v8620 = vpop.f32.mrb[0].mxu0
    %v8621 = vadd.f32 %v7916, %v8620
    %v8622 = vpop.f32.mrb[0].mxu0
    %8623 = vmatprep.mubr.f32.mxu0 %v6061
    %8624 = vmatmul.mubr.f32.gmra.mrb[0].mxu0 %v6060
    %v8625 = vpop.f32.mrb[0].mxu0
    %v8626 = vadd.f32 %v7921, %v8625
    %v8627 = vpop.f32.mrb[0].mxu0
    %8628 = vmatprep.mubr.f32.mxu0 %v6066
    %8629 = vmatmul.mubr.f32.gmra.mrb[0].mxu0 %v6065
    %v8630 = vpop.f32.mrb[0].mxu0
    %v8631 = vadd.f32 %v7926, %v8630
    %v8632 = vpop.f32.mrb[0].mxu0
    %8633 = vmatprep.mubr.f32.mxu0 %v6071
    %8634 = vmatmul.mubr.f32.gmra.mrb[0].mxu0 %v6070
    %v8635 = vpop.f32.mrb[0].mxu0
    %v8636 = vadd.f32 %v7931, %v8635
    %v8637 = vpop.f32.mrb[0].mxu0
    %8638 = vmatprep.mubr.f32.mxu0 %v6076
    %8639 = vmatmul.mubr.f32.gmra.mrb[0].mxu0 %v6075
    %v8640 = vpop.f32.mrb[0].mxu0
    %v8641 = vadd.f32 %v7936, %v8640
    %v8642 = vpop.f32.mrb[0].mxu0
    %8643 = vmatprep.mubr.f32.mxu0 %v6081
    %8644 = vmatmul.mubr.f32.gmra.mrb[0].mxu0 %v6080
    %v8645 = vpop.f32.mrb[0].mxu0
    %v8646 = vadd.f32 %v7941, %v8645
    %v8647 = vpop.f32.mrb[0].mxu0
    %8648 = vmatprep.mubr.f32.mxu0 %v6086
    %8649 = vmatmul.mubr.f32.gmra.mrb[0].mxu0 %v6085
    %v8650 = vpop.f32.mrb[0].mxu0
    %v8651 = vadd.f32 %v7946, %v8650
    %v8652 = vpop.f32.mrb[0].mxu0
    %8653 = vmatprep.mubr.f32.mxu0 %v6091
    %8654 = vmatmul.mubr.f32.gmra.mrb[0].mxu0 %v6090
    %v8655 = vpop.f32.mrb[0].mxu0
    %v8656 = vadd.f32 %v7951, %v8655
    %v8657 = vpop.f32.mrb[0].mxu0
    %8658 = vmatprep.mubr.f32.mxu0 %v6096
    %8659 = vmatmul.mubr.f32.gmra.mrb[0].mxu0 %v6095
    %v8660 = vpop.f32.mrb[0].mxu0
    %v8661 = vadd.f32 %v7956, %v8660
    %v8662 = vpop.f32.mrb[0].mxu0
    %8663 = vmatprep.mubr.f32.mxu0 %v6101
    %8664 = vmatmul.mubr.f32.gmra.mrb[0].mxu0 %v6100
    %v8665 = vpop.f32.mrb[0].mxu0
    %v8666 = vadd.f32 %v7961, %v8665
    %v8667 = vpop.f32.mrb[0].mxu0
    %8668 = vmatprep.mubr.f32.mxu0 %v6106
    %8669 = vmatmul.mubr.f32.gmra.mrb[0].mxu0 %v6105
    %v8670 = vpop.f32.mrb[0].mxu0
    %v8671 = vadd.f32 %v7966, %v8670
    %v8672 = vpop.f32.mrb[0].mxu0
    %8673 = vmatprep.mubr.f32.mxu0 %v6111
    %8674 = vmatmul.mubr.f32.gmra.mrb[0].mxu0 %v6110
    %v8675 = vpop.f32.mrb[0].mxu0
    %v8676 = vadd.f32 %v7971, %v8675
    %v8677 = vpop.f32.mrb[0].mxu0
    %8678 = vmatprep.mubr.f32.mxu0 %v6116
    %8679 = vmatmul.mubr.f32.gmra.mrb[0].mxu0 %v6115
    %v8680 = vpop.f32.mrb[0].mxu0
    %v8681 = vadd.f32 %v7976, %v8680
    %v8682 = vpop.f32.mrb[0].mxu0
    %8683 = vmatprep.mubr.f32.mxu0 %v6121
    %8684 = vmatmul.mubr.f32.gmra.mrb[0].mxu0 %v6120
    %v8685 = vpop.f32.mrb[0].mxu0
    %v8686 = vadd.f32 %v7981, %v8685
    %v8687 = vpop.f32.mrb[0].mxu0
    %8688 = vmatprep.mubr.f32.mxu0 %v6126
    %8689 = vmatmul.mubr.f32.gmra.mrb[0].mxu0 %v6125
    %v8690 = vpop.f32.mrb[0].mxu0
    %v8691 = vadd.f32 %v7986, %v8690
    %v8692 = vpop.f32.mrb[0].mxu0
    %8693 = vmatprep.mubr.f32.mxu0 %v6131
    %8694 = vmatmul.mubr.f32.gmra.mrb[0].mxu0 %v6130
    %v8695 = vpop.f32.mrb[0].mxu0
    %v8696 = vadd.f32 %v7991, %v8695
    %v8697 = vpop.f32.mrb[0].mxu0
    %8698 = vmatprep.mubr.f32.mxu0 %v6136
    %8699 = vmatmul.mubr.f32.gmra.mrb[0].mxu0 %v6135
    %v8700 = vpop.f32.mrb[0].mxu0
    %v8701 = vadd.f32 %v7996, %v8700
    %v8702 = vpop.f32.mrb[0].mxu0
    %8703 = vmatprep.mubr.f32.mxu0 %v6141
    %8704 = vmatmul.mubr.f32.gmra.mrb[0].mxu0 %v6140
    %v8705 = vpop.f32.mrb[0].mxu0
    %v8706 = vadd.f32 %v8001, %v8705
    %v8707 = vpop.f32.mrb[0].mxu0
    %8708 = vmatprep.mubr.f32.mxu0 %v6146
    %8709 = vmatmul.mubr.f32.gmra.mrb[0].mxu0 %v6145
    %v8710 = vpop.f32.mrb[0].mxu0
    %v8711 = vadd.f32 %v8006, %v8710
    %v8712 = vpop.f32.mrb[0].mxu0
    %8713 = vmatprep.mubr.f32.mxu0 %v6151
    %8714 = vmatmul.mubr.f32.gmra.mrb[0].mxu0 %v6150
    %v8715 = vpop.f32.mrb[0].mxu0
    %v8716 = vadd.f32 %v8011, %v8715
    %v8717 = vpop.f32.mrb[0].mxu0
    %8718 = vmatprep.mubr.f32.mxu0 %v6156
    %8719 = vmatmul.mubr.f32.gmra.mrb[0].mxu0 %v6155
    %v8720 = vpop.f32.mrb[0].mxu0
    %v8721 = vadd.f32 %v8016, %v8720
    %v8722 = vpop.f32.mrb[0].mxu0
    %8723 = vmatprep.mubr.f32.mxu0 %v6161
    %8724 = vmatmul.mubr.f32.gmra.mrb[0].mxu0 %v6160
    %v8725 = vpop.f32.mrb[0].mxu0
    %v8726 = vadd.f32 %v8021, %v8725
    %v8727 = vpop.f32.mrb[0].mxu0
    %8728 = vmatprep.mubr.f32.mxu0 %v6166
    %8729 = vmatmul.mubr.f32.gmra.mrb[0].mxu0 %v6165
    %v8730 = vpop.f32.mrb[0].mxu0
    %v8731 = vadd.f32 %v8026, %v8730
    %v8732 = vpop.f32.mrb[0].mxu0
    %8733 = vmatprep.mubr.f32.mxu0 %v6171
    %8734 = vmatmul.mubr.f32.gmra.mrb[0].mxu0 %v6170
    %v8735 = vpop.f32.mrb[0].mxu0
    %v8736 = vadd.f32 %v8031, %v8735
    %v8737 = vpop.f32.mrb[0].mxu0
    %8738 = vmatprep.mubr.f32.mxu0 %v6176
    %8739 = vmatmul.mubr.f32.gmra.mrb[0].mxu0 %v6175
    %v8740 = vpop.f32.mrb[0].mxu0
    %v8741 = vadd.f32 %v8036, %v8740
    %v8742 = vpop.f32.mrb[0].mxu0
    %8743 = vmatprep.mubr.f32.mxu0 %v6181
    %8744 = vmatmul.mubr.f32.gmra.mrb[0].mxu0 %v6180
    %v8745 = vpop.f32.mrb[0].mxu0
    %v8746 = vadd.f32 %v8041, %v8745
    %v8747 = vpop.f32.mrb[0].mxu0
    %8748 = vmatprep.mubr.f32.mxu0 %v6186
    %8749 = vmatmul.mubr.f32.gmra.mrb[0].mxu0 %v6185
    %v8750 = vpop.f32.mrb[0].mxu0
    %v8751 = vadd.f32 %v8046, %v8750
    %v8752 = vpop.f32.mrb[0].mxu0
    %8753 = vmatprep.mubr.f32.mxu0 %v6191
    %8754 = vmatmul.mubr.f32.gmra.mrb[0].mxu0 %v6190
    %v8755 = vpop.f32.mrb[0].mxu0
    %v8756 = vadd.f32 %v8051, %v8755
    %v8757 = vpop.f32.mrb[0].mxu0
    %8758 = vmatprep.mubr.f32.mxu0 %v6196
    %8759 = vmatmul.mubr.f32.gmra.mrb[0].mxu0 %v6195
    %v8760 = vpop.f32.mrb[0].mxu0
    %v8761 = vadd.f32 %v8056, %v8760
    %v8762 = vpop.f32.mrb[0].mxu0
    %8763 = vmatprep.mubr.f32.mxu0 %v6201
    %8764 = vmatmul.mubr.f32.gmra.mrb[0].mxu0 %v6200
    %v8765 = vpop.f32.mrb[0].mxu0
    %v8766 = vadd.f32 %v8061, %v8765
    %v8767 = vpop.f32.mrb[0].mxu0
    %8768 = vmatprep.mubr.f32.mxu0 %v6206
    %8769 = vmatmul.mubr.f32.gmra.mrb[0].mxu0 %v6205
    %v8770 = vpop.f32.mrb[0].mxu0
    %v8771 = vadd.f32 %v8066, %v8770
    %v8772 = vpop.f32.mrb[0].mxu0
    %8773 = vmatprep.mubr.f32.mxu0 %v6211
    %8774 = vmatmul.mubr.f32.gmra.mrb[0].mxu0 %v6210
    %v8775 = vpop.f32.mrb[0].mxu0
    %v8776 = vadd.f32 %v8071, %v8775
    %v8777 = vpop.f32.mrb[0].mxu0
    %8778 = vmatprep.mubr.f32.mxu0 %v6216
    %8779 = vmatmul.mubr.f32.gmra.mrb[0].mxu0 %v6215
    %v8780 = vpop.f32.mrb[0].mxu0
    %v8781 = vadd.f32 %v8076, %v8780
    %v8782 = vpop.f32.mrb[0].mxu0
    %8783 = vmatprep.mubr.f32.mxu0 %v6221
    %8784 = vmatmul.mubr.f32.gmra.mrb[0].mxu0 %v6220
    %v8785 = vpop.f32.mrb[0].mxu0
    %v8786 = vadd.f32 %v8081, %v8785
    %v8787 = vpop.f32.mrb[0].mxu0
    %8788 = vmatprep.mubr.f32.mxu0 %v6226
    %8789 = vmatmul.mubr.f32.gmra.mrb[0].mxu0 %v6225
    %v8790 = vpop.f32.mrb[0].mxu0
    %v8791 = vadd.f32 %v8086, %v8790
    %v8792 = vpop.f32.mrb[0].mxu0
    %8793 = vmatprep.mubr.f32.mxu0 %v6231
    %8794 = vmatmul.mubr.f32.gmra.mrb[0].mxu0 %v6230
    %v8795 = vpop.f32.mrb[0].mxu0
    %v8796 = vadd.f32 %v8091, %v8795
    %v8797 = vpop.f32.mrb[0].mxu0
    %8798 = vmatprep.mubr.f32.mxu0 %v6236
    %8799 = vmatmul.mubr.f32.gmra.mrb[0].mxu0 %v6235
    %v8800 = vpop.f32.mrb[0].mxu0
    %v8801 = vadd.f32 %v8096, %v8800
    %v8802 = vpop.f32.mrb[0].mxu0
    %8803 = vmatprep.mubr.f32.mxu0 %v6241
    %8804 = vmatmul.mubr.f32.gmra.mrb[0].mxu0 %v6240
    %v8805 = vpop.f32.mrb[0].mxu0
    %v8806 = vadd.f32 %v8101, %v8805
    %v8807 = vpop.f32.mrb[0].mxu0
    %8808 = vmatprep.mubr.f32.mxu0 %v6246
    %8809 = vmatmul.mubr.f32.gmra.mrb[0].mxu0 %v6245
    %v8810 = vpop.f32.mrb[0].mxu0
    %v8811 = vadd.f32 %v8106, %v8810
    %v8812 = vpop.f32.mrb[0].mxu0
    %8813 = vmatprep.mubr.f32.mxu0 %v6251
    %8814 = vmatmul.mubr.f32.gmra.mrb[0].mxu0 %v6250
    %v8815 = vpop.f32.mrb[0].mxu0
    %v8816 = vadd.f32 %v8111, %v8815
    %v8817 = vpop.f32.mrb[0].mxu0
    %8818 = vmatprep.mubr.f32.mxu0 %v6256
    %8819 = vmatmul.mubr.f32.gmra.mrb[0].mxu0 %v6255
    %v8820 = vpop.f32.mrb[0].mxu0
    %v8821 = vadd.f32 %v8116, %v8820
    %v8822 = vpop.f32.mrb[0].mxu0
    %8823 = vmatprep.mubr.f32.mxu0 %v6261
    %8824 = vmatmul.mubr.f32.gmra.mrb[0].mxu0 %v6260
    %v8825 = vpop.f32.mrb[0].mxu0
    %v8826 = vadd.f32 %v8121, %v8825
    %v8827 = vpop.f32.mrb[0].mxu0
    %8828 = vmatprep.mubr.f32.mxu0 %v6266
    %8829 = vmatmul.mubr.f32.gmra.mrb[0].mxu0 %v6265
    %v8830 = vpop.f32.mrb[0].mxu0
    %v8831 = vadd.f32 %v8126, %v8830
    %v8832 = vpop.f32.mrb[0].mxu0
    %8833 = vmatprep.mubr.f32.mxu0 %v6271
    %8834 = vmatmul.mubr.f32.gmra.mrb[0].mxu0 %v6270
    %v8835 = vpop.f32.mrb[0].mxu0
    %v8836 = vadd.f32 %v8131, %v8835
    %v8837 = vpop.f32.mrb[0].mxu0
    %8838 = vmatprep.mubr.f32.mxu0 %v6276
    %8839 = vmatmul.mubr.f32.gmra.mrb[0].mxu0 %v6275
    %v8840 = vpop.f32.mrb[0].mxu0
    %v8841 = vadd.f32 %v8136, %v8840
    %v8842 = vpop.f32.mrb[0].mxu0
    %8843 = vmatprep.mubr.f32.mxu0 %v6281
    %8844 = vmatmul.mubr.f32.gmra.mrb[0].mxu0 %v6280
    %v8845 = vpop.f32.mrb[0].mxu0
    %v8846 = vadd.f32 %v8141, %v8845
    %v8847 = vpop.f32.mrb[0].mxu0
    %8848 = vmatprep.mubr.f32.mxu0 %v6286
    %8849 = vmatmul.mubr.f32.gmra.mrb[0].mxu0 %v6285
    %v8850 = vpop.f32.mrb[0].mxu0
    %v8851 = vadd.f32 %v8146, %v8850
    %v8852 = vpop.f32.mrb[0].mxu0
    %8853 = vmatprep.mubr.f32.mxu0 %v6291
    %8854 = vmatmul.mubr.f32.gmra.mrb[0].mxu0 %v6290
    %v8855 = vpop.f32.mrb[0].mxu0
    %v8856 = vadd.f32 %v8151, %v8855
    %v8857 = vpop.f32.mrb[0].mxu0
    %8858 = vmatprep.mubr.f32.mxu0 %v6296
    %8859 = vmatmul.mubr.f32.gmra.mrb[0].mxu0 %v6295
    %v8860 = vpop.f32.mrb[0].mxu0
    %v8861 = vadd.f32 %v8156, %v8860
    %v8862 = vpop.f32.mrb[0].mxu0
    %8863 = vmatprep.mubr.f32.mxu0 %v6301
    %8864 = vmatmul.mubr.f32.gmra.mrb[0].mxu0 %v6300
    %v8865 = vpop.f32.mrb[0].mxu0
    %v8866 = vadd.f32 %v8161, %v8865
    %v8867 = vpop.f32.mrb[0].mxu0
    %8868 = vmatprep.mubr.f32.mxu0 %v6306
    %8869 = vmatmul.mubr.f32.gmra.mrb[0].mxu0 %v6305
    %v8870 = vpop.f32.mrb[0].mxu0
    %v8871 = vadd.f32 %v8166, %v8870
    %v8872 = vpop.f32.mrb[0].mxu0
    %8873 = vmatprep.mubr.f32.mxu0 %v6311
    %8874 = vmatmul.mubr.f32.gmra.mrb[0].mxu0 %v6310
    %v8875 = vpop.f32.mrb[0].mxu0
    %v8876 = vadd.f32 %v8171, %v8875
    %v8877 = vpop.f32.mrb[0].mxu0
    %8878 = vmatprep.mubr.f32.mxu0 %v6316
    %8879 = vmatmul.mubr.f32.gmra.mrb[0].mxu0 %v6315
    %v8880 = vpop.f32.mrb[0].mxu0
    %v8881 = vadd.f32 %v8176, %v8880
    %v8882 = vpop.f32.mrb[0].mxu0
    %8883 = vmatprep.mubr.f32.mxu0 %v6321
    %8884 = vmatmul.mubr.f32.gmra.mrb[0].mxu0 %v6320
    %v8885 = vpop.f32.mrb[0].mxu0
    %v8886 = vadd.f32 %v8181, %v8885
    %v8887 = vpop.f32.mrb[0].mxu0
    %8888 = vmatprep.mubr.f32.mxu0 %v6326
    %8889 = vmatmul.mubr.f32.gmra.mrb[0].mxu0 %v6325
    %v8890 = vpop.f32.mrb[0].mxu0
    %v8891 = vadd.f32 %v8186, %v8890
    %v8892 = vpop.f32.mrb[0].mxu0
    %8893 = vmatprep.mubr.f32.mxu0 %v6331
    %8894 = vmatmul.mubr.f32.gmra.mrb[0].mxu0 %v6330
    %v8895 = vpop.f32.mrb[0].mxu0
    %v8896 = vadd.f32 %v8191, %v8895
    %v8897 = vpop.f32.mrb[0].mxu0
    %8898 = vmatprep.mubr.f32.mxu0 %v6336
    %8899 = vmatmul.mubr.f32.gmra.mrb[0].mxu0 %v6335
    %v8900 = vpop.f32.mrb[0].mxu0
    %v8901 = vadd.f32 %v8196, %v8900
    %v8902 = vpop.f32.mrb[0].mxu0
    %8903 = vmatprep.mubr.f32.mxu0 %v6341
    %8904 = vmatmul.mubr.f32.gmra.mrb[0].mxu0 %v6340
    %v8905 = vpop.f32.mrb[0].mxu0
    %v8906 = vadd.f32 %v8201, %v8905
    %v8907 = vpop.f32.mrb[0].mxu0
    %8908 = vmatprep.mubr.f32.mxu0 %v6346
    %8909 = vmatmul.mubr.f32.gmra.mrb[0].mxu0 %v6345
    %v8910 = vpop.f32.mrb[0].mxu0
    %v8911 = vadd.f32 %v8206, %v8910
    %v8912 = vpop.f32.mrb[0].mxu0
    %8913 = vmatprep.mubr.f32.mxu0 %v6351
    %8914 = vmatmul.mubr.f32.gmra.mrb[0].mxu0 %v6350
    %v8915 = vpop.f32.mrb[0].mxu0
    %v8916 = vadd.f32 %v8211, %v8915
    %v8917 = vpop.f32.mrb[0].mxu0
    %8918 = vmatprep.mubr.f32.mxu0 %v6356
    %8919 = vmatmul.mubr.f32.gmra.mrb[0].mxu0 %v6355
    %v8920 = vpop.f32.mrb[0].mxu0
    %v8921 = vadd.f32 %v8216, %v8920
    %v8922 = vpop.f32.mrb[0].mxu0
    %8923 = vmatprep.mubr.f32.mxu0 %v6361
    %8924 = vmatmul.mubr.f32.gmra.mrb[0].mxu0 %v6360
    %v8925 = vpop.f32.mrb[0].mxu0
    %v8926 = vadd.f32 %v8221, %v8925
    %v8927 = vpop.f32.mrb[0].mxu0
    %8928 = vmatprep.mubr.f32.mxu0 %v6366
    %8929 = vmatmul.mubr.f32.gmra.mrb[0].mxu0 %v6365
    %v8930 = vpop.f32.mrb[0].mxu0
    %v8931 = vadd.f32 %v8226, %v8930
    %v8932 = vpop.f32.mrb[0].mxu0
    %8933 = vdwg.mxu0
    %8934 = vmatprep.subr.mxu0 0.0
    %8935 = vmatpush1.msra.mxu0 %v5721
    %8936 = vmatprep.subr.mxu0 0.0
    %8937 = vmatpush1.msra.mxu0 %v5722
    %8938 = vmatprep.subr.mxu0 0.0
    %8939 = vmatpush1.msra.mxu0 %v5723
    %8940 = vmatprep.subr.mxu0 0.0
    %8941 = vmatpush1.msra.mxu0 %v5724
    %8942 = vmatprep.subr.mxu0 0.0
    %8943 = vmatpush1.msra.mxu0 %v5725
    %8944 = vmatprep.subr.mxu0 0.0
    %8945 = vmatpush1.msra.mxu0 %v5726
    %8946 = vmatprep.subr.mxu0 0.0
    %8947 = vmatpush1.msra.mxu0 %v7522
    %8948 = vmatprep.subr.mxu0 0.0
    %8949 = vmatpush1.msra.mxu0 0.0
    %8950 = vmatprep.subr.mxu0 0.0
    %8951 = vmatpush1.msra.mxu0 0.0
    %8952 = vmatprep.subr.mxu0 0.0
    %8953 = vmatpush1.msra.mxu0 0.0
    %8954 = vmatprep.subr.mxu0 0.0
    %8955 = vmatpush1.msra.mxu0 0.0
    %8956 = vmatprep.subr.mxu0 0.0
    %8957 = vmatpush1.msra.mxu0 0.0
    %8958 = vmatprep.subr.mxu0 0.0
    %8959 = vmatpush1.msra.mxu0 0.0
    %8960 = vmatprep.subr.mxu0 0.0
    %8961 = vmatpush1.msra.mxu0 0.0
    %8962 = vmatprep.subr.mxu0 0.0
    %8963 = vmatpush1.msra.mxu0 0.0
    %8964 = vmatprep.subr.mxu0 0.0
    %8965 = vmatpush1.msra.mxu0 0.0
    %8966 = vmatprep.subr.mxu0 0.0
    %8967 = vmatpush1.msra.mxu0 0.0
    %8968 = vmatprep.subr.mxu0 0.0
    %8969 = vmatpush1.msra.mxu0 0.0
    %8970 = vmatprep.subr.mxu0 0.0
    %8971 = vmatpush1.msra.mxu0 0.0
    %8972 = vmatprep.subr.mxu0 0.0
    %8973 = vmatpush1.msra.mxu0 0.0
    %8974 = vmatprep.subr.mxu0 0.0
    %8975 = vmatpush1.msra.mxu0 0.0
    %8976 = vmatprep.subr.mxu0 0.0
    %8977 = vmatpush1.msra.mxu0 0.0
    %8978 = vmatprep.subr.mxu0 0.0
    %8979 = vmatpush1.msra.mxu0 0.0
    %8980 = vmatprep.subr.mxu0 0.0
    %8981 = vmatpush1.msra.mxu0 0.0
    %8982 = vmatprep.subr.mxu0 0.0
    %8983 = vmatpush1.msra.mxu0 0.0
    %8984 = vmatprep.subr.mxu0 0.0
    %8985 = vmatpush1.msra.mxu0 0.0
    %8986 = vmatprep.subr.mxu0 0.0
    %8987 = vmatpush1.msra.mxu0 0.0
    %8988 = vmatprep.subr.mxu0 0.0
    %8989 = vmatpush1.msra.mxu0 0.0
    %8990 = vmatprep.subr.mxu0 0.0
    %8991 = vmatpush1.msra.mxu0 0.0
    %8992 = vmatprep.subr.mxu0 0.0
    %8993 = vmatpush1.msra.mxu0 0.0
    %8994 = vmatprep.subr.mxu0 0.0
    %8995 = vmatpush1.msra.mxu0 0.0
    %8996 = vmatprep.subr.mxu0 0.0
    %8997 = vmatpush1.msra.mxu0 0.0
    %8998 = vmatprep.mubr.f32.mxu0 0.0
    %8999 = vmatmul.mubr.f32.gmra.mrb[0].mxu0 %v7138
    %v9000 = vpop.f32.mrb[0].mxu0
    %v9001 = vadd.f32 %v8296, %v9000
    %v9002 = vpop.f32.mrb[0].mxu0
    %9003 = vmatprep.mubr.f32.mxu0 0.0
    %9004 = vmatmul.mubr.f32.gmra.mrb[0].mxu0 %v7141
    %v9005 = vpop.f32.mrb[0].mxu0
    %v9006 = vadd.f32 %v8301, %v9005
    %v9007 = vpop.f32.mrb[0].mxu0
    %9008 = vmatprep.mubr.f32.mxu0 0.0
    %9009 = vmatmul.mubr.f32.gmra.mrb[0].mxu0 %v7144
    %v9010 = vpop.f32.mrb[0].mxu0
    %v9011 = vadd.f32 %v8306, %v9010
    %v9012 = vpop.f32.mrb[0].mxu0
    %9013 = vmatprep.mubr.f32.mxu0 0.0
    %9014 = vmatmul.mubr.f32.gmra.mrb[0].mxu0 %v7147
    %v9015 = vpop.f32.mrb[0].mxu0
    %v9016 = vadd.f32 %v8311, %v9015
    %v9017 = vpop.f32.mrb[0].mxu0
    %9018 = vmatprep.mubr.f32.mxu0 0.0
    %9019 = vmatmul.mubr.f32.gmra.mrb[0].mxu0 %v7150
    %v9020 = vpop.f32.mrb[0].mxu0
    %v9021 = vadd.f32 %v8316, %v9020
    %v9022 = vpop.f32.mrb[0].mxu0
    %9023 = vmatprep.mubr.f32.mxu0 0.0
    %9024 = vmatmul.mubr.f32.gmra.mrb[0].mxu0 %v7153
    %v9025 = vpop.f32.mrb[0].mxu0
    %v9026 = vadd.f32 %v8321, %v9025
    %v9027 = vpop.f32.mrb[0].mxu0
    %9028 = vmatprep.mubr.f32.mxu0 0.0
    %9029 = vmatmul.mubr.f32.gmra.mrb[0].mxu0 %v7156
    %v9030 = vpop.f32.mrb[0].mxu0
    %v9031 = vadd.f32 %v8326, %v9030
    %v9032 = vpop.f32.mrb[0].mxu0
    %9033 = vmatprep.mubr.f32.mxu0 0.0
    %9034 = vmatmul.mubr.f32.gmra.mrb[0].mxu0 %v7159
    %v9035 = vpop.f32.mrb[0].mxu0
    %v9036 = vadd.f32 %v8331, %v9035
    %v9037 = vpop.f32.mrb[0].mxu0
    %9038 = vmatprep.mubr.f32.mxu0 0.0
    %9039 = vmatmul.mubr.f32.gmra.mrb[0].mxu0 %v7162
    %v9040 = vpop.f32.mrb[0].mxu0
    %v9041 = vadd.f32 %v8336, %v9040
    %v9042 = vpop.f32.mrb[0].mxu0
    %9043 = vmatprep.mubr.f32.mxu0 0.0
    %9044 = vmatmul.mubr.f32.gmra.mrb[0].mxu0 %v7165
    %v9045 = vpop.f32.mrb[0].mxu0
    %v9046 = vadd.f32 %v8341, %v9045
    %v9047 = vpop.f32.mrb[0].mxu0
    %9048 = vmatprep.mubr.f32.mxu0 0.0
    %9049 = vmatmul.mubr.f32.gmra.mrb[0].mxu0 %v7168
    %v9050 = vpop.f32.mrb[0].mxu0
    %v9051 = vadd.f32 %v8346, %v9050
    %v9052 = vpop.f32.mrb[0].mxu0
    %9053 = vmatprep.mubr.f32.mxu0 0.0
    %9054 = vmatmul.mubr.f32.gmra.mrb[0].mxu0 %v7171
    %v9055 = vpop.f32.mrb[0].mxu0
    %v9056 = vadd.f32 %v8351, %v9055
    %v9057 = vpop.f32.mrb[0].mxu0
    %9058 = vmatprep.mubr.f32.mxu0 0.0
    %9059 = vmatmul.mubr.f32.gmra.mrb[0].mxu0 %v7174
    %v9060 = vpop.f32.mrb[0].mxu0
    %v9061 = vadd.f32 %v8356, %v9060
    %v9062 = vpop.f32.mrb[0].mxu0
    %9063 = vmatprep.mubr.f32.mxu0 0.0
    %9064 = vmatmul.mubr.f32.gmra.mrb[0].mxu0 %v7177
    %v9065 = vpop.f32.mrb[0].mxu0
    %v9066 = vadd.f32 %v8361, %v9065
    %v9067 = vpop.f32.mrb[0].mxu0
    %9068 = vmatprep.mubr.f32.mxu0 0.0
    %9069 = vmatmul.mubr.f32.gmra.mrb[0].mxu0 %v7180
    %v9070 = vpop.f32.mrb[0].mxu0
    %v9071 = vadd.f32 %v8366, %v9070
    %v9072 = vpop.f32.mrb[0].mxu0
    %9073 = vmatprep.mubr.f32.mxu0 0.0
    %9074 = vmatmul.mubr.f32.gmra.mrb[0].mxu0 %v7183
    %v9075 = vpop.f32.mrb[0].mxu0
    %v9076 = vadd.f32 %v8371, %v9075
    %v9077 = vpop.f32.mrb[0].mxu0
    %9078 = vmatprep.mubr.f32.mxu0 0.0
    %9079 = vmatmul.mubr.f32.gmra.mrb[0].mxu0 %v7186
    %v9080 = vpop.f32.mrb[0].mxu0
    %v9081 = vadd.f32 %v8376, %v9080
    %v9082 = vpop.f32.mrb[0].mxu0
    %9083 = vmatprep.mubr.f32.mxu0 0.0
    %9084 = vmatmul.mubr.f32.gmra.mrb[0].mxu0 %v7189
    %v9085 = vpop.f32.mrb[0].mxu0
    %v9086 = vadd.f32 %v8381, %v9085
    %v9087 = vpop.f32.mrb[0].mxu0
    %9088 = vmatprep.mubr.f32.mxu0 0.0
    %9089 = vmatmul.mubr.f32.gmra.mrb[0].mxu0 %v7192
    %v9090 = vpop.f32.mrb[0].mxu0
    %v9091 = vadd.f32 %v8386, %v9090
    %v9092 = vpop.f32.mrb[0].mxu0
    %9093 = vmatprep.mubr.f32.mxu0 0.0
    %9094 = vmatmul.mubr.f32.gmra.mrb[0].mxu0 %v7195
    %v9095 = vpop.f32.mrb[0].mxu0
    %v9096 = vadd.f32 %v8391, %v9095
    %v9097 = vpop.f32.mrb[0].mxu0
    %9098 = vmatprep.mubr.f32.mxu0 0.0
    %9099 = vmatmul.mubr.f32.gmra.mrb[0].mxu0 %v7198
    %v9100 = vpop.f32.mrb[0].mxu0
    %v9101 = vadd.f32 %v8396, %v9100
    %v9102 = vpop.f32.mrb[0].mxu0
    %9103 = vmatprep.mubr.f32.mxu0 0.0
    %9104 = vmatmul.mubr.f32.gmra.mrb[0].mxu0 %v7201
    %v9105 = vpop.f32.mrb[0].mxu0
    %v9106 = vadd.f32 %v8401, %v9105
    %v9107 = vpop.f32.mrb[0].mxu0
    %9108 = vmatprep.mubr.f32.mxu0 0.0
    %9109 = vmatmul.mubr.f32.gmra.mrb[0].mxu0 %v7204
    %v9110 = vpop.f32.mrb[0].mxu0
    %v9111 = vadd.f32 %v8406, %v9110
    %v9112 = vpop.f32.mrb[0].mxu0
    %9113 = vmatprep.mubr.f32.mxu0 0.0
    %9114 = vmatmul.mubr.f32.gmra.mrb[0].mxu0 %v7207
    %v9115 = vpop.f32.mrb[0].mxu0
    %v9116 = vadd.f32 %v8411, %v9115
    %v9117 = vpop.f32.mrb[0].mxu0
    %9118 = vmatprep.mubr.f32.mxu0 0.0
    %9119 = vmatmul.mubr.f32.gmra.mrb[0].mxu0 %v7210
    %v9120 = vpop.f32.mrb[0].mxu0
    %v9121 = vadd.f32 %v8416, %v9120
    %v9122 = vpop.f32.mrb[0].mxu0
    %9123 = vmatprep.mubr.f32.mxu0 0.0
    %9124 = vmatmul.mubr.f32.gmra.mrb[0].mxu0 %v7213
    %v9125 = vpop.f32.mrb[0].mxu0
    %v9126 = vadd.f32 %v8421, %v9125
    %v9127 = vpop.f32.mrb[0].mxu0
    %9128 = vmatprep.mubr.f32.mxu0 0.0
    %9129 = vmatmul.mubr.f32.gmra.mrb[0].mxu0 %v7216
    %v9130 = vpop.f32.mrb[0].mxu0
    %v9131 = vadd.f32 %v8426, %v9130
    %v9132 = vpop.f32.mrb[0].mxu0
    %9133 = vmatprep.mubr.f32.mxu0 0.0
    %9134 = vmatmul.mubr.f32.gmra.mrb[0].mxu0 %v7219
    %v9135 = vpop.f32.mrb[0].mxu0
    %v9136 = vadd.f32 %v8431, %v9135
    %v9137 = vpop.f32.mrb[0].mxu0
    %9138 = vmatprep.mubr.f32.mxu0 0.0
    %9139 = vmatmul.mubr.f32.gmra.mrb[0].mxu0 %v7222
    %v9140 = vpop.f32.mrb[0].mxu0
    %v9141 = vadd.f32 %v8436, %v9140
    %v9142 = vpop.f32.mrb[0].mxu0
    %9143 = vmatprep.mubr.f32.mxu0 0.0
    %9144 = vmatmul.mubr.f32.gmra.mrb[0].mxu0 %v7225
    %v9145 = vpop.f32.mrb[0].mxu0
    %v9146 = vadd.f32 %v8441, %v9145
    %v9147 = vpop.f32.mrb[0].mxu0
    %9148 = vmatprep.mubr.f32.mxu0 0.0
    %9149 = vmatmul.mubr.f32.gmra.mrb[0].mxu0 %v7228
    %v9150 = vpop.f32.mrb[0].mxu0
    %v9151 = vadd.f32 %v8446, %v9150
    %v9152 = vpop.f32.mrb[0].mxu0
    %9153 = vmatprep.mubr.f32.mxu0 0.0
    %9154 = vmatmul.mubr.f32.gmra.mrb[0].mxu0 %v7231
    %v9155 = vpop.f32.mrb[0].mxu0
    %v9156 = vadd.f32 %v8451, %v9155
    %v9157 = vpop.f32.mrb[0].mxu0
    %9158 = vmatprep.mubr.f32.mxu0 0.0
    %9159 = vmatmul.mubr.f32.gmra.mrb[0].mxu0 %v7234
    %v9160 = vpop.f32.mrb[0].mxu0
    %v9161 = vadd.f32 %v8456, %v9160
    %v9162 = vpop.f32.mrb[0].mxu0
    %9163 = vmatprep.mubr.f32.mxu0 0.0
    %9164 = vmatmul.mubr.f32.gmra.mrb[0].mxu0 %v7237
    %v9165 = vpop.f32.mrb[0].mxu0
    %v9166 = vadd.f32 %v8461, %v9165
    %v9167 = vpop.f32.mrb[0].mxu0
    %9168 = vmatprep.mubr.f32.mxu0 0.0
    %9169 = vmatmul.mubr.f32.gmra.mrb[0].mxu0 %v7240
    %v9170 = vpop.f32.mrb[0].mxu0
    %v9171 = vadd.f32 %v8466, %v9170
    %v9172 = vpop.f32.mrb[0].mxu0
    %9173 = vmatprep.mubr.f32.mxu0 0.0
    %9174 = vmatmul.mubr.f32.gmra.mrb[0].mxu0 %v7243
    %v9175 = vpop.f32.mrb[0].mxu0
    %v9176 = vadd.f32 %v8471, %v9175
    %v9177 = vpop.f32.mrb[0].mxu0
    %9178 = vmatprep.mubr.f32.mxu0 0.0
    %9179 = vmatmul.mubr.f32.gmra.mrb[0].mxu0 %v7246
    %v9180 = vpop.f32.mrb[0].mxu0
    %v9181 = vadd.f32 %v8476, %v9180
    %v9182 = vpop.f32.mrb[0].mxu0
    %9183 = vmatprep.mubr.f32.mxu0 0.0
    %9184 = vmatmul.mubr.f32.gmra.mrb[0].mxu0 %v7249
    %v9185 = vpop.f32.mrb[0].mxu0
    %v9186 = vadd.f32 %v8481, %v9185
    %v9187 = vpop.f32.mrb[0].mxu0
    %9188 = vmatprep.mubr.f32.mxu0 0.0
    %9189 = vmatmul.mubr.f32.gmra.mrb[0].mxu0 %v7252
    %v9190 = vpop.f32.mrb[0].mxu0
    %v9191 = vadd.f32 %v8486, %v9190
    %v9192 = vpop.f32.mrb[0].mxu0
    %9193 = vmatprep.mubr.f32.mxu0 0.0
    %9194 = vmatmul.mubr.f32.gmra.mrb[0].mxu0 %v7255
    %v9195 = vpop.f32.mrb[0].mxu0
    %v9196 = vadd.f32 %v8491, %v9195
    %v9197 = vpop.f32.mrb[0].mxu0
    %9198 = vmatprep.mubr.f32.mxu0 0.0
    %9199 = vmatmul.mubr.f32.gmra.mrb[0].mxu0 %v7258
    %v9200 = vpop.f32.mrb[0].mxu0
    %v9201 = vadd.f32 %v8496, %v9200
    %v9202 = vpop.f32.mrb[0].mxu0
    %9203 = vmatprep.mubr.f32.mxu0 0.0
    %9204 = vmatmul.mubr.f32.gmra.mrb[0].mxu0 %v7261
    %v9205 = vpop.f32.mrb[0].mxu0
    %v9206 = vadd.f32 %v8501, %v9205
    %v9207 = vpop.f32.mrb[0].mxu0
    %9208 = vmatprep.mubr.f32.mxu0 0.0
    %9209 = vmatmul.mubr.f32.gmra.mrb[0].mxu0 %v7264
    %v9210 = vpop.f32.mrb[0].mxu0
    %v9211 = vadd.f32 %v8506, %v9210
    %v9212 = vpop.f32.mrb[0].mxu0
    %9213 = vmatprep.mubr.f32.mxu0 0.0
    %9214 = vmatmul.mubr.f32.gmra.mrb[0].mxu0 %v7267
    %v9215 = vpop.f32.mrb[0].mxu0
    %v9216 = vadd.f32 %v8511, %v9215
    %v9217 = vpop.f32.mrb[0].mxu0
    %9218 = vmatprep.mubr.f32.mxu0 0.0
    %9219 = vmatmul.mubr.f32.gmra.mrb[0].mxu0 %v7270
    %v9220 = vpop.f32.mrb[0].mxu0
    %v9221 = vadd.f32 %v8516, %v9220
    %v9222 = vpop.f32.mrb[0].mxu0
    %9223 = vmatprep.mubr.f32.mxu0 0.0
    %9224 = vmatmul.mubr.f32.gmra.mrb[0].mxu0 %v7273
    %v9225 = vpop.f32.mrb[0].mxu0
    %v9226 = vadd.f32 %v8521, %v9225
    %v9227 = vpop.f32.mrb[0].mxu0
    %9228 = vmatprep.mubr.f32.mxu0 0.0
    %9229 = vmatmul.mubr.f32.gmra.mrb[0].mxu0 %v7276
    %v9230 = vpop.f32.mrb[0].mxu0
    %v9231 = vadd.f32 %v8526, %v9230
    %v9232 = vpop.f32.mrb[0].mxu0
    %9233 = vmatprep.mubr.f32.mxu0 0.0
    %9234 = vmatmul.mubr.f32.gmra.mrb[0].mxu0 %v7279
    %v9235 = vpop.f32.mrb[0].mxu0
    %v9236 = vadd.f32 %v8531, %v9235
    %v9237 = vpop.f32.mrb[0].mxu0
    %9238 = vmatprep.mubr.f32.mxu0 0.0
    %9239 = vmatmul.mubr.f32.gmra.mrb[0].mxu0 %v7282
    %v9240 = vpop.f32.mrb[0].mxu0
    %v9241 = vadd.f32 %v8536, %v9240
    %v9242 = vpop.f32.mrb[0].mxu0
    %9243 = vmatprep.mubr.f32.mxu0 0.0
    %9244 = vmatmul.mubr.f32.gmra.mrb[0].mxu0 %v7285
    %v9245 = vpop.f32.mrb[0].mxu0
    %v9246 = vadd.f32 %v8541, %v9245
    %v9247 = vpop.f32.mrb[0].mxu0
    %9248 = vmatprep.mubr.f32.mxu0 0.0
    %9249 = vmatmul.mubr.f32.gmra.mrb[0].mxu0 %v7288
    %v9250 = vpop.f32.mrb[0].mxu0
    %v9251 = vadd.f32 %v8546, %v9250
    %v9252 = vpop.f32.mrb[0].mxu0
    %9253 = vmatprep.mubr.f32.mxu0 0.0
    %9254 = vmatmul.mubr.f32.gmra.mrb[0].mxu0 %v7291
    %v9255 = vpop.f32.mrb[0].mxu0
    %v9256 = vadd.f32 %v8551, %v9255
    %v9257 = vpop.f32.mrb[0].mxu0
    %9258 = vmatprep.mubr.f32.mxu0 0.0
    %9259 = vmatmul.mubr.f32.gmra.mrb[0].mxu0 %v7294
    %v9260 = vpop.f32.mrb[0].mxu0
    %v9261 = vadd.f32 %v8556, %v9260
    %v9262 = vpop.f32.mrb[0].mxu0
    %9263 = vmatprep.mubr.f32.mxu0 0.0
    %9264 = vmatmul.mubr.f32.gmra.mrb[0].mxu0 %v7297
    %v9265 = vpop.f32.mrb[0].mxu0
    %v9266 = vadd.f32 %v8561, %v9265
    %v9267 = vpop.f32.mrb[0].mxu0
    %9268 = vmatprep.mubr.f32.mxu0 0.0
    %9269 = vmatmul.mubr.f32.gmra.mrb[0].mxu0 %v7300
    %v9270 = vpop.f32.mrb[0].mxu0
    %v9271 = vadd.f32 %v8566, %v9270
    %v9272 = vpop.f32.mrb[0].mxu0
    %9273 = vmatprep.mubr.f32.mxu0 0.0
    %9274 = vmatmul.mubr.f32.gmra.mrb[0].mxu0 %v7303
    %v9275 = vpop.f32.mrb[0].mxu0
    %v9276 = vadd.f32 %v8571, %v9275
    %v9277 = vpop.f32.mrb[0].mxu0
    %9278 = vmatprep.mubr.f32.mxu0 0.0
    %9279 = vmatmul.mubr.f32.gmra.mrb[0].mxu0 %v7306
    %v9280 = vpop.f32.mrb[0].mxu0
    %v9281 = vadd.f32 %v8576, %v9280
    %v9282 = vpop.f32.mrb[0].mxu0
    %9283 = vmatprep.mubr.f32.mxu0 0.0
    %9284 = vmatmul.mubr.f32.gmra.mrb[0].mxu0 %v7309
    %v9285 = vpop.f32.mrb[0].mxu0
    %v9286 = vadd.f32 %v8581, %v9285
    %v9287 = vpop.f32.mrb[0].mxu0
    %9288 = vmatprep.mubr.f32.mxu0 0.0
    %9289 = vmatmul.mubr.f32.gmra.mrb[0].mxu0 %v7312
    %v9290 = vpop.f32.mrb[0].mxu0
    %v9291 = vadd.f32 %v8586, %v9290
    %v9292 = vpop.f32.mrb[0].mxu0
    %9293 = vmatprep.mubr.f32.mxu0 0.0
    %9294 = vmatmul.mubr.f32.gmra.mrb[0].mxu0 %v7315
    %v9295 = vpop.f32.mrb[0].mxu0
    %v9296 = vadd.f32 %v8591, %v9295
    %v9297 = vpop.f32.mrb[0].mxu0
    %9298 = vmatprep.mubr.f32.mxu0 0.0
    %9299 = vmatmul.mubr.f32.gmra.mrb[0].mxu0 %v7318
    %v9300 = vpop.f32.mrb[0].mxu0
    %v9301 = vadd.f32 %v8596, %v9300
    %v9302 = vpop.f32.mrb[0].mxu0
    %9303 = vmatprep.mubr.f32.mxu0 0.0
    %9304 = vmatmul.mubr.f32.gmra.mrb[0].mxu0 %v7321
    %v9305 = vpop.f32.mrb[0].mxu0
    %v9306 = vadd.f32 %v8601, %v9305
    %v9307 = vpop.f32.mrb[0].mxu0
    %9308 = vmatprep.mubr.f32.mxu0 0.0
    %9309 = vmatmul.mubr.f32.gmra.mrb[0].mxu0 %v7324
    %v9310 = vpop.f32.mrb[0].mxu0
    %v9311 = vadd.f32 %v8606, %v9310
    %v9312 = vpop.f32.mrb[0].mxu0
    %9313 = vmatprep.mubr.f32.mxu0 0.0
    %9314 = vmatmul.mubr.f32.gmra.mrb[0].mxu0 %v7327
    %v9315 = vpop.f32.mrb[0].mxu0
    %v9316 = vadd.f32 %v8611, %v9315
    %v9317 = vpop.f32.mrb[0].mxu0
    %9318 = vmatprep.mubr.f32.mxu0 0.0
    %9319 = vmatmul.mubr.f32.gmra.mrb[0].mxu0 %v7330
    %v9320 = vpop.f32.mrb[0].mxu0
    %v9321 = vadd.f32 %v8616, %v9320
    %v9322 = vpop.f32.mrb[0].mxu0
    %9323 = vmatprep.mubr.f32.mxu0 0.0
    %9324 = vmatmul.mubr.f32.gmra.mrb[0].mxu0 %v7333
    %v9325 = vpop.f32.mrb[0].mxu0
    %v9326 = vadd.f32 %v8621, %v9325
    %v9327 = vpop.f32.mrb[0].mxu0
    %9328 = vmatprep.mubr.f32.mxu0 0.0
    %9329 = vmatmul.mubr.f32.gmra.mrb[0].mxu0 %v7336
    %v9330 = vpop.f32.mrb[0].mxu0
    %v9331 = vadd.f32 %v8626, %v9330
    %v9332 = vpop.f32.mrb[0].mxu0
    %9333 = vmatprep.mubr.f32.mxu0 0.0
    %9334 = vmatmul.mubr.f32.gmra.mrb[0].mxu0 %v7339
    %v9335 = vpop.f32.mrb[0].mxu0
    %v9336 = vadd.f32 %v8631, %v9335
    %v9337 = vpop.f32.mrb[0].mxu0
    %9338 = vmatprep.mubr.f32.mxu0 0.0
    %9339 = vmatmul.mubr.f32.gmra.mrb[0].mxu0 %v7342
    %v9340 = vpop.f32.mrb[0].mxu0
    %v9341 = vadd.f32 %v8636, %v9340
    %v9342 = vpop.f32.mrb[0].mxu0
    %9343 = vmatprep.mubr.f32.mxu0 0.0
    %9344 = vmatmul.mubr.f32.gmra.mrb[0].mxu0 %v7345
    %v9345 = vpop.f32.mrb[0].mxu0
    %v9346 = vadd.f32 %v8641, %v9345
    %v9347 = vpop.f32.mrb[0].mxu0
    %9348 = vmatprep.mubr.f32.mxu0 0.0
    %9349 = vmatmul.mubr.f32.gmra.mrb[0].mxu0 %v7348
    %v9350 = vpop.f32.mrb[0].mxu0
    %v9351 = vadd.f32 %v8646, %v9350
    %v9352 = vpop.f32.mrb[0].mxu0
    %9353 = vmatprep.mubr.f32.mxu0 0.0
    %9354 = vmatmul.mubr.f32.gmra.mrb[0].mxu0 %v7351
    %v9355 = vpop.f32.mrb[0].mxu0
    %v9356 = vadd.f32 %v8651, %v9355
    %v9357 = vpop.f32.mrb[0].mxu0
    %9358 = vmatprep.mubr.f32.mxu0 0.0
    %9359 = vmatmul.mubr.f32.gmra.mrb[0].mxu0 %v7354
    %v9360 = vpop.f32.mrb[0].mxu0
    %v9361 = vadd.f32 %v8656, %v9360
    %v9362 = vpop.f32.mrb[0].mxu0
    %9363 = vmatprep.mubr.f32.mxu0 0.0
    %9364 = vmatmul.mubr.f32.gmra.mrb[0].mxu0 %v7357
    %v9365 = vpop.f32.mrb[0].mxu0
    %v9366 = vadd.f32 %v8661, %v9365
    %v9367 = vpop.f32.mrb[0].mxu0
    %9368 = vmatprep.mubr.f32.mxu0 0.0
    %9369 = vmatmul.mubr.f32.gmra.mrb[0].mxu0 %v7360
    %v9370 = vpop.f32.mrb[0].mxu0
    %v9371 = vadd.f32 %v8666, %v9370
    %v9372 = vpop.f32.mrb[0].mxu0
    %9373 = vmatprep.mubr.f32.mxu0 0.0
    %9374 = vmatmul.mubr.f32.gmra.mrb[0].mxu0 %v7363
    %v9375 = vpop.f32.mrb[0].mxu0
    %v9376 = vadd.f32 %v8671, %v9375
    %v9377 = vpop.f32.mrb[0].mxu0
    %9378 = vmatprep.mubr.f32.mxu0 0.0
    %9379 = vmatmul.mubr.f32.gmra.mrb[0].mxu0 %v7366
    %v9380 = vpop.f32.mrb[0].mxu0
    %v9381 = vadd.f32 %v8676, %v9380
    %v9382 = vpop.f32.mrb[0].mxu0
    %9383 = vmatprep.mubr.f32.mxu0 0.0
    %9384 = vmatmul.mubr.f32.gmra.mrb[0].mxu0 %v7369
    %v9385 = vpop.f32.mrb[0].mxu0
    %v9386 = vadd.f32 %v8681, %v9385
    %v9387 = vpop.f32.mrb[0].mxu0
    %9388 = vmatprep.mubr.f32.mxu0 0.0
    %9389 = vmatmul.mubr.f32.gmra.mrb[0].mxu0 %v7372
    %v9390 = vpop.f32.mrb[0].mxu0
    %v9391 = vadd.f32 %v8686, %v9390
    %v9392 = vpop.f32.mrb[0].mxu0
    %9393 = vmatprep.mubr.f32.mxu0 0.0
    %9394 = vmatmul.mubr.f32.gmra.mrb[0].mxu0 %v7375
    %v9395 = vpop.f32.mrb[0].mxu0
    %v9396 = vadd.f32 %v8691, %v9395
    %v9397 = vpop.f32.mrb[0].mxu0
    %9398 = vmatprep.mubr.f32.mxu0 0.0
    %9399 = vmatmul.mubr.f32.gmra.mrb[0].mxu0 %v7378
    %v9400 = vpop.f32.mrb[0].mxu0
    %v9401 = vadd.f32 %v8696, %v9400
    %v9402 = vpop.f32.mrb[0].mxu0
    %9403 = vmatprep.mubr.f32.mxu0 0.0
    %9404 = vmatmul.mubr.f32.gmra.mrb[0].mxu0 %v7381
    %v9405 = vpop.f32.mrb[0].mxu0
    %v9406 = vadd.f32 %v8701, %v9405
    %v9407 = vpop.f32.mrb[0].mxu0
    %9408 = vmatprep.mubr.f32.mxu0 0.0
    %9409 = vmatmul.mubr.f32.gmra.mrb[0].mxu0 %v7384
    %v9410 = vpop.f32.mrb[0].mxu0
    %v9411 = vadd.f32 %v8706, %v9410
    %v9412 = vpop.f32.mrb[0].mxu0
    %9413 = vmatprep.mubr.f32.mxu0 0.0
    %9414 = vmatmul.mubr.f32.gmra.mrb[0].mxu0 %v7387
    %v9415 = vpop.f32.mrb[0].mxu0
    %v9416 = vadd.f32 %v8711, %v9415
    %v9417 = vpop.f32.mrb[0].mxu0
    %9418 = vmatprep.mubr.f32.mxu0 0.0
    %9419 = vmatmul.mubr.f32.gmra.mrb[0].mxu0 %v7390
    %v9420 = vpop.f32.mrb[0].mxu0
    %v9421 = vadd.f32 %v8716, %v9420
    %v9422 = vpop.f32.mrb[0].mxu0
    %9423 = vmatprep.mubr.f32.mxu0 0.0
    %9424 = vmatmul.mubr.f32.gmra.mrb[0].mxu0 %v7393
    %v9425 = vpop.f32.mrb[0].mxu0
    %v9426 = vadd.f32 %v8721, %v9425
    %v9427 = vpop.f32.mrb[0].mxu0
    %9428 = vmatprep.mubr.f32.mxu0 0.0
    %9429 = vmatmul.mubr.f32.gmra.mrb[0].mxu0 %v7396
    %v9430 = vpop.f32.mrb[0].mxu0
    %v9431 = vadd.f32 %v8726, %v9430
    %v9432 = vpop.f32.mrb[0].mxu0
    %9433 = vmatprep.mubr.f32.mxu0 0.0
    %9434 = vmatmul.mubr.f32.gmra.mrb[0].mxu0 %v7399
    %v9435 = vpop.f32.mrb[0].mxu0
    %v9436 = vadd.f32 %v8731, %v9435
    %v9437 = vpop.f32.mrb[0].mxu0
    %9438 = vmatprep.mubr.f32.mxu0 0.0
    %9439 = vmatmul.mubr.f32.gmra.mrb[0].mxu0 %v7402
    %v9440 = vpop.f32.mrb[0].mxu0
    %v9441 = vadd.f32 %v8736, %v9440
    %v9442 = vpop.f32.mrb[0].mxu0
    %9443 = vmatprep.mubr.f32.mxu0 0.0
    %9444 = vmatmul.mubr.f32.gmra.mrb[0].mxu0 %v7405
    %v9445 = vpop.f32.mrb[0].mxu0
    %v9446 = vadd.f32 %v8741, %v9445
    %v9447 = vpop.f32.mrb[0].mxu0
    %9448 = vmatprep.mubr.f32.mxu0 0.0
    %9449 = vmatmul.mubr.f32.gmra.mrb[0].mxu0 %v7408
    %v9450 = vpop.f32.mrb[0].mxu0
    %v9451 = vadd.f32 %v8746, %v9450
    %v9452 = vpop.f32.mrb[0].mxu0
    %9453 = vmatprep.mubr.f32.mxu0 0.0
    %9454 = vmatmul.mubr.f32.gmra.mrb[0].mxu0 %v7411
    %v9455 = vpop.f32.mrb[0].mxu0
    %v9456 = vadd.f32 %v8751, %v9455
    %v9457 = vpop.f32.mrb[0].mxu0
    %9458 = vmatprep.mubr.f32.mxu0 0.0
    %9459 = vmatmul.mubr.f32.gmra.mrb[0].mxu0 %v7414
    %v9460 = vpop.f32.mrb[0].mxu0
    %v9461 = vadd.f32 %v8756, %v9460
    %v9462 = vpop.f32.mrb[0].mxu0
    %9463 = vmatprep.mubr.f32.mxu0 0.0
    %9464 = vmatmul.mubr.f32.gmra.mrb[0].mxu0 %v7417
    %v9465 = vpop.f32.mrb[0].mxu0
    %v9466 = vadd.f32 %v8761, %v9465
    %v9467 = vpop.f32.mrb[0].mxu0
    %9468 = vmatprep.mubr.f32.mxu0 0.0
    %9469 = vmatmul.mubr.f32.gmra.mrb[0].mxu0 %v7420
    %v9470 = vpop.f32.mrb[0].mxu0
    %v9471 = vadd.f32 %v8766, %v9470
    %v9472 = vpop.f32.mrb[0].mxu0
    %9473 = vmatprep.mubr.f32.mxu0 0.0
    %9474 = vmatmul.mubr.f32.gmra.mrb[0].mxu0 %v7423
    %v9475 = vpop.f32.mrb[0].mxu0
    %v9476 = vadd.f32 %v8771, %v9475
    %v9477 = vpop.f32.mrb[0].mxu0
    %9478 = vmatprep.mubr.f32.mxu0 0.0
    %9479 = vmatmul.mubr.f32.gmra.mrb[0].mxu0 %v7426
    %v9480 = vpop.f32.mrb[0].mxu0
    %v9481 = vadd.f32 %v8776, %v9480
    %v9482 = vpop.f32.mrb[0].mxu0
    %9483 = vmatprep.mubr.f32.mxu0 0.0
    %9484 = vmatmul.mubr.f32.gmra.mrb[0].mxu0 %v7429
    %v9485 = vpop.f32.mrb[0].mxu0
    %v9486 = vadd.f32 %v8781, %v9485
    %v9487 = vpop.f32.mrb[0].mxu0
    %9488 = vmatprep.mubr.f32.mxu0 0.0
    %9489 = vmatmul.mubr.f32.gmra.mrb[0].mxu0 %v7432
    %v9490 = vpop.f32.mrb[0].mxu0
    %v9491 = vadd.f32 %v8786, %v9490
    %v9492 = vpop.f32.mrb[0].mxu0
    %9493 = vmatprep.mubr.f32.mxu0 0.0
    %9494 = vmatmul.mubr.f32.gmra.mrb[0].mxu0 %v7435
    %v9495 = vpop.f32.mrb[0].mxu0
    %v9496 = vadd.f32 %v8791, %v9495
    %v9497 = vpop.f32.mrb[0].mxu0
    %9498 = vmatprep.mubr.f32.mxu0 0.0
    %9499 = vmatmul.mubr.f32.gmra.mrb[0].mxu0 %v7438
    %v9500 = vpop.f32.mrb[0].mxu0
    %v9501 = vadd.f32 %v8796, %v9500
    %v9502 = vpop.f32.mrb[0].mxu0
    %9503 = vmatprep.mubr.f32.mxu0 0.0
    %9504 = vmatmul.mubr.f32.gmra.mrb[0].mxu0 %v7441
    %v9505 = vpop.f32.mrb[0].mxu0
    %v9506 = vadd.f32 %v8801, %v9505
    %v9507 = vpop.f32.mrb[0].mxu0
    %9508 = vmatprep.mubr.f32.mxu0 0.0
    %9509 = vmatmul.mubr.f32.gmra.mrb[0].mxu0 %v7444
    %v9510 = vpop.f32.mrb[0].mxu0
    %v9511 = vadd.f32 %v8806, %v9510
    %v9512 = vpop.f32.mrb[0].mxu0
    %9513 = vmatprep.mubr.f32.mxu0 0.0
    %9514 = vmatmul.mubr.f32.gmra.mrb[0].mxu0 %v7447
    %v9515 = vpop.f32.mrb[0].mxu0
    %v9516 = vadd.f32 %v8811, %v9515
    %v9517 = vpop.f32.mrb[0].mxu0
    %9518 = vmatprep.mubr.f32.mxu0 0.0
    %9519 = vmatmul.mubr.f32.gmra.mrb[0].mxu0 %v7450
    %v9520 = vpop.f32.mrb[0].mxu0
    %v9521 = vadd.f32 %v8816, %v9520
    %v9522 = vpop.f32.mrb[0].mxu0
    %9523 = vmatprep.mubr.f32.mxu0 0.0
    %9524 = vmatmul.mubr.f32.gmra.mrb[0].mxu0 %v7453
    %v9525 = vpop.f32.mrb[0].mxu0
    %v9526 = vadd.f32 %v8821, %v9525
    %v9527 = vpop.f32.mrb[0].mxu0
    %9528 = vmatprep.mubr.f32.mxu0 0.0
    %9529 = vmatmul.mubr.f32.gmra.mrb[0].mxu0 %v7456
    %v9530 = vpop.f32.mrb[0].mxu0
    %v9531 = vadd.f32 %v8826, %v9530
    %v9532 = vpop.f32.mrb[0].mxu0
    %9533 = vmatprep.mubr.f32.mxu0 0.0
    %9534 = vmatmul.mubr.f32.gmra.mrb[0].mxu0 %v7459
    %v9535 = vpop.f32.mrb[0].mxu0
    %v9536 = vadd.f32 %v8831, %v9535
    %v9537 = vpop.f32.mrb[0].mxu0
    %9538 = vmatprep.mubr.f32.mxu0 0.0
    %9539 = vmatmul.mubr.f32.gmra.mrb[0].mxu0 %v7462
    %v9540 = vpop.f32.mrb[0].mxu0
    %v9541 = vadd.f32 %v8836, %v9540
    %v9542 = vpop.f32.mrb[0].mxu0
    %9543 = vmatprep.mubr.f32.mxu0 0.0
    %9544 = vmatmul.mubr.f32.gmra.mrb[0].mxu0 %v7465
    %v9545 = vpop.f32.mrb[0].mxu0
    %v9546 = vadd.f32 %v8841, %v9545
    %v9547 = vpop.f32.mrb[0].mxu0
    %9548 = vmatprep.mubr.f32.mxu0 0.0
    %9549 = vmatmul.mubr.f32.gmra.mrb[0].mxu0 %v7468
    %v9550 = vpop.f32.mrb[0].mxu0
    %v9551 = vadd.f32 %v8846, %v9550
    %v9552 = vpop.f32.mrb[0].mxu0
    %9553 = vmatprep.mubr.f32.mxu0 0.0
    %9554 = vmatmul.mubr.f32.gmra.mrb[0].mxu0 %v7471
    %v9555 = vpop.f32.mrb[0].mxu0
    %v9556 = vadd.f32 %v8851, %v9555
    %v9557 = vpop.f32.mrb[0].mxu0
    %9558 = vmatprep.mubr.f32.mxu0 0.0
    %9559 = vmatmul.mubr.f32.gmra.mrb[0].mxu0 %v7474
    %v9560 = vpop.f32.mrb[0].mxu0
    %v9561 = vadd.f32 %v8856, %v9560
    %v9562 = vpop.f32.mrb[0].mxu0
    %9563 = vmatprep.mubr.f32.mxu0 0.0
    %9564 = vmatmul.mubr.f32.gmra.mrb[0].mxu0 %v7477
    %v9565 = vpop.f32.mrb[0].mxu0
    %v9566 = vadd.f32 %v8861, %v9565
    %v9567 = vpop.f32.mrb[0].mxu0
    %9568 = vmatprep.mubr.f32.mxu0 0.0
    %9569 = vmatmul.mubr.f32.gmra.mrb[0].mxu0 %v7480
    %v9570 = vpop.f32.mrb[0].mxu0
    %v9571 = vadd.f32 %v8866, %v9570
    %v9572 = vpop.f32.mrb[0].mxu0
    %9573 = vmatprep.mubr.f32.mxu0 0.0
    %9574 = vmatmul.mubr.f32.gmra.mrb[0].mxu0 %v7483
    %v9575 = vpop.f32.mrb[0].mxu0
    %v9576 = vadd.f32 %v8871, %v9575
    %v9577 = vpop.f32.mrb[0].mxu0
    %9578 = vmatprep.mubr.f32.mxu0 0.0
    %9579 = vmatmul.mubr.f32.gmra.mrb[0].mxu0 %v7486
    %v9580 = vpop.f32.mrb[0].mxu0
    %v9581 = vadd.f32 %v8876, %v9580
    %v9582 = vpop.f32.mrb[0].mxu0
    %9583 = vmatprep.mubr.f32.mxu0 0.0
    %9584 = vmatmul.mubr.f32.gmra.mrb[0].mxu0 %v7489
    %v9585 = vpop.f32.mrb[0].mxu0
    %v9586 = vadd.f32 %v8881, %v9585
    %v9587 = vpop.f32.mrb[0].mxu0
    %9588 = vmatprep.mubr.f32.mxu0 0.0
    %9589 = vmatmul.mubr.f32.gmra.mrb[0].mxu0 %v7492
    %v9590 = vpop.f32.mrb[0].mxu0
    %v9591 = vadd.f32 %v8886, %v9590
    %v9592 = vpop.f32.mrb[0].mxu0
    %9593 = vmatprep.mubr.f32.mxu0 0.0
    %9594 = vmatmul.mubr.f32.gmra.mrb[0].mxu0 %v7495
    %v9595 = vpop.f32.mrb[0].mxu0
    %v9596 = vadd.f32 %v8891, %v9595
    %v9597 = vpop.f32.mrb[0].mxu0
    %9598 = vmatprep.mubr.f32.mxu0 0.0
    %9599 = vmatmul.mubr.f32.gmra.mrb[0].mxu0 %v7498
    %v9600 = vpop.f32.mrb[0].mxu0
    %v9601 = vadd.f32 %v8896, %v9600
    %v9602 = vpop.f32.mrb[0].mxu0
    %9603 = vmatprep.mubr.f32.mxu0 0.0
    %9604 = vmatmul.mubr.f32.gmra.mrb[0].mxu0 %v7501
    %v9605 = vpop.f32.mrb[0].mxu0
    %v9606 = vadd.f32 %v8901, %v9605
    %v9607 = vpop.f32.mrb[0].mxu0
    %9608 = vmatprep.mubr.f32.mxu0 0.0
    %9609 = vmatmul.mubr.f32.gmra.mrb[0].mxu0 %v7504
    %v9610 = vpop.f32.mrb[0].mxu0
    %v9611 = vadd.f32 %v8906, %v9610
    %v9612 = vpop.f32.mrb[0].mxu0
    %9613 = vmatprep.mubr.f32.mxu0 0.0
    %9614 = vmatmul.mubr.f32.gmra.mrb[0].mxu0 %v7507
    %v9615 = vpop.f32.mrb[0].mxu0
    %v9616 = vadd.f32 %v8911, %v9615
    %v9617 = vpop.f32.mrb[0].mxu0
    %9618 = vmatprep.mubr.f32.mxu0 0.0
    %9619 = vmatmul.mubr.f32.gmra.mrb[0].mxu0 %v7510
    %v9620 = vpop.f32.mrb[0].mxu0
    %v9621 = vadd.f32 %v8916, %v9620
    %v9622 = vpop.f32.mrb[0].mxu0
    %9623 = vmatprep.mubr.f32.mxu0 0.0
    %9624 = vmatmul.mubr.f32.gmra.mrb[0].mxu0 %v7513
    %v9625 = vpop.f32.mrb[0].mxu0
    %v9626 = vadd.f32 %v8921, %v9625
    %v9627 = vpop.f32.mrb[0].mxu0
    %9628 = vmatprep.mubr.f32.mxu0 0.0
    %9629 = vmatmul.mubr.f32.gmra.mrb[0].mxu0 %v7516
    %v9630 = vpop.f32.mrb[0].mxu0
    %v9631 = vadd.f32 %v8926, %v9630
    %v9632 = vpop.f32.mrb[0].mxu0
    %9633 = vmatprep.mubr.f32.mxu0 0.0
    %9634 = vmatmul.mubr.f32.gmra.mrb[0].mxu0 %v7519
    %v9635 = vpop.f32.mrb[0].mxu0
    %v9636 = vadd.f32 %v8931, %v9635
    %v9637 = vpop.f32.mrb[0].mxu0
    %9638 = vdwg.mxu0
    %v9639 = vmax.f32 %v9001, 0.0
    %v9640 = vmax.f32 %v9006, 0.0
    %v9641 = vmax.f32 %v9011, 0.0
    %v9642 = vmax.f32 %v9016, 0.0
    %v9643 = vmax.f32 %v9021, 0.0
    %v9644 = vmax.f32 %v9026, 0.0
    %v9645 = vmax.f32 %v9031, 0.0
    %v9646 = vmax.f32 %v9036, 0.0
    %v9647 = vmax.f32 %v9041, 0.0
    %v9648 = vmax.f32 %v9046, 0.0
    %v9649 = vmax.f32 %v9051, 0.0
    %v9650 = vmax.f32 %v9056, 0.0
    %v9651 = vmax.f32 %v9061, 0.0
    %v9652 = vmax.f32 %v9066, 0.0
    %v9653 = vmax.f32 %v9071, 0.0
    %v9654 = vmax.f32 %v9076, 0.0
    %v9655 = vmax.f32 %v9081, 0.0
    %v9656 = vmax.f32 %v9086, 0.0
    %v9657 = vmax.f32 %v9091, 0.0
    %v9658 = vmax.f32 %v9096, 0.0
    %v9659 = vmax.f32 %v9101, 0.0
    %v9660 = vmax.f32 %v9106, 0.0
    %v9661 = vmax.f32 %v9111, 0.0
    %v9662 = vmax.f32 %v9116, 0.0
    %v9663 = vmax.f32 %v9121, 0.0
    %v9664 = vmax.f32 %v9126, 0.0
    %v9665 = vmax.f32 %v9131, 0.0
    %v9666 = vmax.f32 %v9136, 0.0
    %v9667 = vmax.f32 %v9141, 0.0
    %v9668 = vmax.f32 %v9146, 0.0
    %v9669 = vmax.f32 %v9151, 0.0
    %v9670 = vmax.f32 %v9156, 0.0
    %v9671 = vmax.f32 %v9161, 0.0
    %v9672 = vmax.f32 %v9166, 0.0
    %v9673 = vmax.f32 %v9171, 0.0
    %v9674 = vmax.f32 %v9176, 0.0
    %v9675 = vmax.f32 %v9181, 0.0
    %v9676 = vmax.f32 %v9186, 0.0
    %v9677 = vmax.f32 %v9191, 0.0
    %v9678 = vmax.f32 %v9196, 0.0
    %v9679 = vmax.f32 %v9201, 0.0
    %v9680 = vmax.f32 %v9206, 0.0
    %v9681 = vmax.f32 %v9211, 0.0
    %v9682 = vmax.f32 %v9216, 0.0
    %v9683 = vmax.f32 %v9221, 0.0
    %v9684 = vmax.f32 %v9226, 0.0
    %v9685 = vmax.f32 %v9231, 0.0
    %v9686 = vmax.f32 %v9236, 0.0
    %v9687 = vmax.f32 %v9241, 0.0
    %v9688 = vmax.f32 %v9246, 0.0
    %v9689 = vmax.f32 %v9251, 0.0
    %v9690 = vmax.f32 %v9256, 0.0
    %v9691 = vmax.f32 %v9261, 0.0
    %v9692 = vmax.f32 %v9266, 0.0
    %v9693 = vmax.f32 %v9271, 0.0
    %v9694 = vmax.f32 %v9276, 0.0
    %v9695 = vmax.f32 %v9281, 0.0
    %v9696 = vmax.f32 %v9286, 0.0
    %v9697 = vmax.f32 %v9291, 0.0
    %v9698 = vmax.f32 %v9296, 0.0
    %v9699 = vmax.f32 %v9301, 0.0
    %v9700 = vmax.f32 %v9306, 0.0
    %v9701 = vmax.f32 %v9311, 0.0
    %v9702 = vmax.f32 %v9316, 0.0
    %v9703 = vmax.f32 %v9321, 0.0
    %v9704 = vmax.f32 %v9326, 0.0
    %v9705 = vmax.f32 %v9331, 0.0
    %v9706 = vmax.f32 %v9336, 0.0
    %v9707 = vmax.f32 %v9341, 0.0
    %v9708 = vmax.f32 %v9346, 0.0
    %v9709 = vmax.f32 %v9351, 0.0
    %v9710 = vmax.f32 %v9356, 0.0
    %v9711 = vmax.f32 %v9361, 0.0
    %v9712 = vmax.f32 %v9366, 0.0
    %v9713 = vmax.f32 %v9371, 0.0
    %v9714 = vmax.f32 %v9376, 0.0
    %v9715 = vmax.f32 %v9381, 0.0
    %v9716 = vmax.f32 %v9386, 0.0
    %v9717 = vmax.f32 %v9391, 0.0
    %v9718 = vmax.f32 %v9396, 0.0
    %v9719 = vmax.f32 %v9401, 0.0
    %v9720 = vmax.f32 %v9406, 0.0
    %v9721 = vmax.f32 %v9411, 0.0
    %v9722 = vmax.f32 %v9416, 0.0
    %v9723 = vmax.f32 %v9421, 0.0
    %v9724 = vmax.f32 %v9426, 0.0
    %v9725 = vmax.f32 %v9431, 0.0
    %v9726 = vmax.f32 %v9436, 0.0
    %v9727 = vmax.f32 %v9441, 0.0
    %v9728 = vmax.f32 %v9446, 0.0
    %v9729 = vmax.f32 %v9451, 0.0
    %v9730 = vmax.f32 %v9456, 0.0
    %v9731 = vmax.f32 %v9461, 0.0
    %v9732 = vmax.f32 %v9466, 0.0
    %v9733 = vmax.f32 %v9471, 0.0
    %v9734 = vmax.f32 %v9476, 0.0
    %v9735 = vmax.f32 %v9481, 0.0
    %v9736 = vmax.f32 %v9486, 0.0
    %v9737 = vmax.f32 %v9491, 0.0
    %v9738 = vmax.f32 %v9496, 0.0
    %v9739 = vmax.f32 %v9501, 0.0
    %v9740 = vmax.f32 %v9506, 0.0
    %v9741 = vmax.f32 %v9511, 0.0
    %v9742 = vmax.f32 %v9516, 0.0
    %v9743 = vmax.f32 %v9521, 0.0
    %v9744 = vmax.f32 %v9526, 0.0
    %v9745 = vmax.f32 %v9531, 0.0
    %v9746 = vmax.f32 %v9536, 0.0
    %v9747 = vmax.f32 %v9541, 0.0
    %v9748 = vmax.f32 %v9546, 0.0
    %v9749 = vmax.f32 %v9551, 0.0
    %v9750 = vmax.f32 %v9556, 0.0
    %v9751 = vmax.f32 %v9561, 0.0
    %v9752 = vmax.f32 %v9566, 0.0
    %v9753 = vmax.f32 %v9571, 0.0
    %v9754 = vmax.f32 %v9576, 0.0
    %v9755 = vmax.f32 %v9581, 0.0
    %v9756 = vmax.f32 %v9586, 0.0
    %v9757 = vmax.f32 %v9591, 0.0
    %v9758 = vmax.f32 %v9596, 0.0
    %v9759 = vmax.f32 %v9601, 0.0
    %v9760 = vmax.f32 %v9606, 0.0
    %v9761 = vmax.f32 %v9611, 0.0
    %v9762 = vmax.f32 %v9616, 0.0
    %v9763 = vmax.f32 %v9621, 0.0
    %v9764 = vmax.f32 %v9626, 0.0
    %v9765 = vmax.f32 %v9631, 0.0
    %v9766 = vmax.f32 %v9636, 0.0
    %9767 = vst [vmem:[#allocation3] sm:$0xff] %v9639
    %9768 = vst [vmem:[#allocation3 + $0x8] sm:$0xff] %v9640
    %9769 = vst [vmem:[#allocation3 + $0x10] sm:$0xff] %v9641
    %9770 = vst [vmem:[#allocation3 + $0x18] sm:$0xff] %v9642
    %9771 = vst [vmem:[#allocation3 + $0x20] sm:$0xff] %v9643
    %9772 = vst [vmem:[#allocation3 + $0x28] sm:$0xff] %v9644
    %9773 = vst [vmem:[#allocation3 + $0x30] sm:$0xff] %v9645
    %9774 = vst [vmem:[#allocation3 + $0x38] sm:$0xff] %v9646
    %9775 = vst [vmem:[#allocation3 + $0x40] sm:$0xff] %v9647
    %9776 = vst [vmem:[#allocation3 + $0x48] sm:$0xff] %v9648
    %9777 = vst [vmem:[#allocation3 + $0x50] sm:$0xff] %v9649
    %9778 = vst [vmem:[#allocation3 + $0x58] sm:$0xff] %v9650
    %9779 = vst [vmem:[#allocation3 + $0x60] sm:$0xff] %v9651
    %9780 = vst [vmem:[#allocation3 + $0x68] sm:$0xff] %v9652
    %9781 = vst [vmem:[#allocation3 + $0x70] sm:$0xff] %v9653
    %9782 = vst [vmem:[#allocation3 + $0x78] sm:$0xff] %v9654
    %9783 = vst [vmem:[#allocation3 + $0x80] sm:$0xff] %v9655
    %9784 = vst [vmem:[#allocation3 + $0x88] sm:$0xff] %v9656
    %9785 = vst [vmem:[#allocation3 + $0x90] sm:$0xff] %v9657
    %9786 = vst [vmem:[#allocation3 + $0x98] sm:$0xff] %v9658
    %9787 = vst [vmem:[#allocation3 + $0xa0] sm:$0xff] %v9659
    %9788 = vst [vmem:[#allocation3 + $0xa8] sm:$0xff] %v9660
    %9789 = vst [vmem:[#allocation3 + $0xb0] sm:$0xff] %v9661
    %9790 = vst [vmem:[#allocation3 + $0xb8] sm:$0xff] %v9662
    %9791 = vst [vmem:[#allocation3 + $0xc0] sm:$0xff] %v9663
    %9792 = vst [vmem:[#allocation3 + $0xc8] sm:$0xff] %v9664
    %9793 = vst [vmem:[#allocation3 + $0xd0] sm:$0xff] %v9665
    %9794 = vst [vmem:[#allocation3 + $0xd8] sm:$0xff] %v9666
    %9795 = vst [vmem:[#allocation3 + $0xe0] sm:$0xff] %v9667
    %9796 = vst [vmem:[#allocation3 + $0xe8] sm:$0xff] %v9668
    %9797 = vst [vmem:[#allocation3 + $0xf0] sm:$0xff] %v9669
    %9798 = vst [vmem:[#allocation3 + $0xf8] sm:$0xff] %v9670
    %9799 = vst [vmem:[#allocation3 + $0x100] sm:$0xff] %v9671
    %9800 = vst [vmem:[#allocation3 + $0x108] sm:$0xff] %v9672
    %9801 = vst [vmem:[#allocation3 + $0x110] sm:$0xff] %v9673
    %9802 = vst [vmem:[#allocation3 + $0x118] sm:$0xff] %v9674
    %9803 = vst [vmem:[#allocation3 + $0x120] sm:$0xff] %v9675
    %9804 = vst [vmem:[#allocation3 + $0x128] sm:$0xff] %v9676
    %9805 = vst [vmem:[#allocation3 + $0x130] sm:$0xff] %v9677
    %9806 = vst [vmem:[#allocation3 + $0x138] sm:$0xff] %v9678
    %9807 = vst [vmem:[#allocation3 + $0x140] sm:$0xff] %v9679
    %9808 = vst [vmem:[#allocation3 + $0x148] sm:$0xff] %v9680
    %9809 = vst [vmem:[#allocation3 + $0x150] sm:$0xff] %v9681
    %9810 = vst [vmem:[#allocation3 + $0x158] sm:$0xff] %v9682
    %9811 = vst [vmem:[#allocation3 + $0x160] sm:$0xff] %v9683
    %9812 = vst [vmem:[#allocation3 + $0x168] sm:$0xff] %v9684
    %9813 = vst [vmem:[#allocation3 + $0x170] sm:$0xff] %v9685
    %9814 = vst [vmem:[#allocation3 + $0x178] sm:$0xff] %v9686
    %9815 = vst [vmem:[#allocation3 + $0x180] sm:$0xff] %v9687
    %9816 = vst [vmem:[#allocation3 + $0x188] sm:$0xff] %v9688
    %9817 = vst [vmem:[#allocation3 + $0x190] sm:$0xff] %v9689
    %9818 = vst [vmem:[#allocation3 + $0x198] sm:$0xff] %v9690
    %9819 = vst [vmem:[#allocation3 + $0x1a0] sm:$0xff] %v9691
    %9820 = vst [vmem:[#allocation3 + $0x1a8] sm:$0xff] %v9692
    %9821 = vst [vmem:[#allocation3 + $0x1b0] sm:$0xff] %v9693
    %9822 = vst [vmem:[#allocation3 + $0x1b8] sm:$0xff] %v9694
    %9823 = vst [vmem:[#allocation3 + $0x1c0] sm:$0xff] %v9695
    %9824 = vst [vmem:[#allocation3 + $0x1c8] sm:$0xff] %v9696
    %9825 = vst [vmem:[#allocation3 + $0x1d0] sm:$0xff] %v9697
    %9826 = vst [vmem:[#allocation3 + $0x1d8] sm:$0xff] %v9698
    %9827 = vst [vmem:[#allocation3 + $0x1e0] sm:$0xff] %v9699
    %9828 = vst [vmem:[#allocation3 + $0x1e8] sm:$0xff] %v9700
    %9829 = vst [vmem:[#allocation3 + $0x1f0] sm:$0xff] %v9701
    %9830 = vst [vmem:[#allocation3 + $0x1f8] sm:$0xff] %v9702
    %9831 = vst [vmem:[#allocation3 + $0x200] sm:$0xff] %v9703
    %9832 = vst [vmem:[#allocation3 + $0x208] sm:$0xff] %v9704
    %9833 = vst [vmem:[#allocation3 + $0x210] sm:$0xff] %v9705
    %9834 = vst [vmem:[#allocation3 + $0x218] sm:$0xff] %v9706
    %9835 = vst [vmem:[#allocation3 + $0x220] sm:$0xff] %v9707
    %9836 = vst [vmem:[#allocation3 + $0x228] sm:$0xff] %v9708
    %9837 = vst [vmem:[#allocation3 + $0x230] sm:$0xff] %v9709
    %9838 = vst [vmem:[#allocation3 + $0x238] sm:$0xff] %v9710
    %9839 = vst [vmem:[#allocation3 + $0x240] sm:$0xff] %v9711
    %9840 = vst [vmem:[#allocation3 + $0x248] sm:$0xff] %v9712
    %9841 = vst [vmem:[#allocation3 + $0x250] sm:$0xff] %v9713
    %9842 = vst [vmem:[#allocation3 + $0x258] sm:$0xff] %v9714
    %9843 = vst [vmem:[#allocation3 + $0x260] sm:$0xff] %v9715
    %9844 = vst [vmem:[#allocation3 + $0x268] sm:$0xff] %v9716
    %9845 = vst [vmem:[#allocation3 + $0x270] sm:$0xff] %v9717
    %9846 = vst [vmem:[#allocation3 + $0x278] sm:$0xff] %v9718
    %9847 = vst [vmem:[#allocation3 + $0x280] sm:$0xff] %v9719
    %9848 = vst [vmem:[#allocation3 + $0x288] sm:$0xff] %v9720
    %9849 = vst [vmem:[#allocation3 + $0x290] sm:$0xff] %v9721
    %9850 = vst [vmem:[#allocation3 + $0x298] sm:$0xff] %v9722
    %9851 = vst [vmem:[#allocation3 + $0x2a0] sm:$0xff] %v9723
    %9852 = vst [vmem:[#allocation3 + $0x2a8] sm:$0xff] %v9724
    %9853 = vst [vmem:[#allocation3 + $0x2b0] sm:$0xff] %v9725
    %9854 = vst [vmem:[#allocation3 + $0x2b8] sm:$0xff] %v9726
    %9855 = vst [vmem:[#allocation3 + $0x2c0] sm:$0xff] %v9727
    %9856 = vst [vmem:[#allocation3 + $0x2c8] sm:$0xff] %v9728
    %9857 = vst [vmem:[#allocation3 + $0x2d0] sm:$0xff] %v9729
    %9858 = vst [vmem:[#allocation3 + $0x2d8] sm:$0xff] %v9730
    %9859 = vst [vmem:[#allocation3 + $0x2e0] sm:$0xff] %v9731
    %9860 = vst [vmem:[#allocation3 + $0x2e8] sm:$0xff] %v9732
    %9861 = vst [vmem:[#allocation3 + $0x2f0] sm:$0xff] %v9733
    %9862 = vst [vmem:[#allocation3 + $0x2f8] sm:$0xff] %v9734
    %9863 = vst [vmem:[#allocation3 + $0x300] sm:$0xff] %v9735
    %9864 = vst [vmem:[#allocation3 + $0x308] sm:$0xff] %v9736
    %9865 = vst [vmem:[#allocation3 + $0x310] sm:$0xff] %v9737
    %9866 = vst [vmem:[#allocation3 + $0x318] sm:$0xff] %v9738
    %9867 = vst [vmem:[#allocation3 + $0x320] sm:$0xff] %v9739
    %9868 = vst [vmem:[#allocation3 + $0x328] sm:$0xff] %v9740
    %9869 = vst [vmem:[#allocation3 + $0x330] sm:$0xff] %v9741
    %9870 = vst [vmem:[#allocation3 + $0x338] sm:$0xff] %v9742
    %9871 = vst [vmem:[#allocation3 + $0x340] sm:$0xff] %v9743
    %9872 = vst [vmem:[#allocation3 + $0x348] sm:$0xff] %v9744
    %9873 = vst [vmem:[#allocation3 + $0x350] sm:$0xff] %v9745
    %9874 = vst [vmem:[#allocation3 + $0x358] sm:$0xff] %v9746
    %9875 = vst [vmem:[#allocation3 + $0x360] sm:$0xff] %v9747
    %9876 = vst [vmem:[#allocation3 + $0x368] sm:$0xff] %v9748
    %9877 = vst [vmem:[#allocation3 + $0x370] sm:$0xff] %v9749
    %9878 = vst [vmem:[#allocation3 + $0x378] sm:$0xff] %v9750
    %9879 = vst [vmem:[#allocation3 + $0x380] sm:$0xff] %v9751
    %9880 = vst [vmem:[#allocation3 + $0x388] sm:$0xff] %v9752
    %9881 = vst [vmem:[#allocation3 + $0x390] sm:$0xff] %v9753
    %9882 = vst [vmem:[#allocation3 + $0x398] sm:$0xff] %v9754
    %9883 = vst [vmem:[#allocation3 + $0x3a0] sm:$0xff] %v9755
    %9884 = vst [vmem:[#allocation3 + $0x3a8] sm:$0xff] %v9756
    %9885 = vst [vmem:[#allocation3 + $0x3b0] sm:$0xff] %v9757
    %9886 = vst [vmem:[#allocation3 + $0x3b8] sm:$0xff] %v9758
    %9887 = vst [vmem:[#allocation3 + $0x3c0] sm:$0xff] %v9759
    %9888 = vst [vmem:[#allocation3 + $0x3c8] sm:$0xff] %v9760
    %9889 = vst [vmem:[#allocation3 + $0x3d0] sm:$0xff] %v9761
    %9890 = vst [vmem:[#allocation3 + $0x3d8] sm:$0xff] %v9762
    %9891 = vst [vmem:[#allocation3 + $0x3e0] sm:$0xff] %v9763
    %9892 = vst [vmem:[#allocation3 + $0x3e8] sm:$0xff] %v9764
    %9893 = vst [vmem:[#allocation3 + $0x3f0] sm:$0xff] %v9765
    %9894 = vst [vmem:[#allocation3 + $0x3f8] sm:$0xff] %v9766
    %v9895 = vld [vmem:[#allocation3] ss:$2 sm:$0xff]
    %s9896 = scalar_lea.vmem [#allocation3], 16
    %v9897 = vld [vmem:[%s9896] ss:$2 sm:$0xff]
    %s9898 = scalar_lea.vmem [#allocation3], 32
    %v9899 = vld [vmem:[%s9898] ss:$2 sm:$0xff]
    %s9900 = scalar_lea.vmem [#allocation3], 48
    %v9901 = vld [vmem:[%s9900] ss:$2 sm:$0xff]
    %s9902 = scalar_lea.vmem [#allocation3], 64
    %v9903 = vld [vmem:[%s9902] ss:$2 sm:$0xff]
    %s9904 = scalar_lea.vmem [#allocation3], 80
    %v9905 = vld [vmem:[%s9904] ss:$2 sm:$0xff]
    %s9906 = scalar_lea.vmem [#allocation3], 96
    %v9907 = vld [vmem:[%s9906] ss:$2 sm:$0xff]
    %s9908 = scalar_lea.vmem [#allocation3], 112
    %v9909 = vld [vmem:[%s9908] ss:$2 sm:$0xff]
    %s9910 = scalar_lea.vmem [#allocation3], 128
    %v9911 = vld [vmem:[%s9910] ss:$2 sm:$0xff]
    %s9912 = scalar_lea.vmem [#allocation3], 144
    %v9913 = vld [vmem:[%s9912] ss:$2 sm:$0xff]
    %s9914 = scalar_lea.vmem [#allocation3], 160
    %v9915 = vld [vmem:[%s9914] ss:$2 sm:$0xff]
    %s9916 = scalar_lea.vmem [#allocation3], 176
    %v9917 = vld [vmem:[%s9916] ss:$2 sm:$0xff]
    %s9918 = scalar_lea.vmem [#allocation3], 192
    %v9919 = vld [vmem:[%s9918] ss:$2 sm:$0xff]
    %s9920 = scalar_lea.vmem [#allocation3], 208
    %v9921 = vld [vmem:[%s9920] ss:$2 sm:$0xff]
    %s9922 = scalar_lea.vmem [#allocation3], 224
    %v9923 = vld [vmem:[%s9922] ss:$2 sm:$0xff]
    %s9924 = scalar_lea.vmem [#allocation3], 240
    %v9925 = vld [vmem:[%s9924] ss:$2 sm:$0xff]
    %s9926 = scalar_lea.vmem [#allocation3], 256
    %v9927 = vld [vmem:[%s9926] ss:$2 sm:$0xff]
    %s9928 = scalar_lea.vmem [#allocation3], 272
    %v9929 = vld [vmem:[%s9928] ss:$2 sm:$0xff]
    %s9930 = scalar_lea.vmem [#allocation3], 288
    %v9931 = vld [vmem:[%s9930] ss:$2 sm:$0xff]
    %s9932 = scalar_lea.vmem [#allocation3], 304
    %v9933 = vld [vmem:[%s9932] ss:$2 sm:$0xff]
    %s9934 = scalar_lea.vmem [#allocation3], 320
    %v9935 = vld [vmem:[%s9934] ss:$2 sm:$0xff]
    %s9936 = scalar_lea.vmem [#allocation3], 336
    %v9937 = vld [vmem:[%s9936] ss:$2 sm:$0xff]
    %s9938 = scalar_lea.vmem [#allocation3], 352
    %v9939 = vld [vmem:[%s9938] ss:$2 sm:$0xff]
    %s9940 = scalar_lea.vmem [#allocation3], 368
    %v9941 = vld [vmem:[%s9940] ss:$2 sm:$0xff]
    %s9942 = scalar_lea.vmem [#allocation3], 384
    %v9943 = vld [vmem:[%s9942] ss:$2 sm:$0xff]
    %s9944 = scalar_lea.vmem [#allocation3], 400
    %v9945 = vld [vmem:[%s9944] ss:$2 sm:$0xff]
    %s9946 = scalar_lea.vmem [#allocation3], 416
    %v9947 = vld [vmem:[%s9946] ss:$2 sm:$0xff]
    %s9948 = scalar_lea.vmem [#allocation3], 432
    %v9949 = vld [vmem:[%s9948] ss:$2 sm:$0xff]
    %s9950 = scalar_lea.vmem [#allocation3], 448
    %v9951 = vld [vmem:[%s9950] ss:$2 sm:$0xff]
    %s9952 = scalar_lea.vmem [#allocation3], 464
    %v9953 = vld [vmem:[%s9952] ss:$2 sm:$0xff]
    %s9954 = scalar_lea.vmem [#allocation3], 480
    %v9955 = vld [vmem:[%s9954] ss:$2 sm:$0xff]
    %s9956 = scalar_lea.vmem [#allocation3], 496
    %v9957 = vld [vmem:[%s9956] ss:$2 sm:$0xff]
    %s9958 = scalar_lea.vmem [#allocation3], 512
    %v9959 = vld [vmem:[%s9958] ss:$2 sm:$0xff]
    %s9960 = scalar_lea.vmem [#allocation3], 528
    %v9961 = vld [vmem:[%s9960] ss:$2 sm:$0xff]
    %s9962 = scalar_lea.vmem [#allocation3], 544
    %v9963 = vld [vmem:[%s9962] ss:$2 sm:$0xff]
    %s9964 = scalar_lea.vmem [#allocation3], 560
    %v9965 = vld [vmem:[%s9964] ss:$2 sm:$0xff]
    %s9966 = scalar_lea.vmem [#allocation3], 576
    %v9967 = vld [vmem:[%s9966] ss:$2 sm:$0xff]
    %s9968 = scalar_lea.vmem [#allocation3], 592
    %v9969 = vld [vmem:[%s9968] ss:$2 sm:$0xff]
    %s9970 = scalar_lea.vmem [#allocation3], 608
    %v9971 = vld [vmem:[%s9970] ss:$2 sm:$0xff]
    %s9972 = scalar_lea.vmem [#allocation3], 624
    %v9973 = vld [vmem:[%s9972] ss:$2 sm:$0xff]
    %s9974 = scalar_lea.vmem [#allocation3], 640
    %v9975 = vld [vmem:[%s9974] ss:$2 sm:$0xff]
    %s9976 = scalar_lea.vmem [#allocation3], 656
    %v9977 = vld [vmem:[%s9976] ss:$2 sm:$0xff]
    %s9978 = scalar_lea.vmem [#allocation3], 672
    %v9979 = vld [vmem:[%s9978] ss:$2 sm:$0xff]
    %s9980 = scalar_lea.vmem [#allocation3], 688
    %v9981 = vld [vmem:[%s9980] ss:$2 sm:$0xff]
    %s9982 = scalar_lea.vmem [#allocation3], 704
    %v9983 = vld [vmem:[%s9982] ss:$2 sm:$0xff]
    %s9984 = scalar_lea.vmem [#allocation3], 720
    %v9985 = vld [vmem:[%s9984] ss:$2 sm:$0xff]
    %s9986 = scalar_lea.vmem [#allocation3], 736
    %v9987 = vld [vmem:[%s9986] ss:$2 sm:$0xff]
    %s9988 = scalar_lea.vmem [#allocation3], 752
    %v9989 = vld [vmem:[%s9988] ss:$2 sm:$0xff]
    %s9990 = scalar_lea.vmem [#allocation3], 768
    %v9991 = vld [vmem:[%s9990] ss:$2 sm:$0xff]
    %s9992 = scalar_lea.vmem [#allocation3], 784
    %v9993 = vld [vmem:[%s9992] ss:$2 sm:$0xff]
    %s9994 = scalar_lea.vmem [#allocation3], 800
    %v9995 = vld [vmem:[%s9994] ss:$2 sm:$0xff]
    %s9996 = scalar_lea.vmem [#allocation3], 816
    %v9997 = vld [vmem:[%s9996] ss:$2 sm:$0xff]
    %s9998 = scalar_lea.vmem [#allocation3], 832
    %v9999 = vld [vmem:[%s9998] ss:$2 sm:$0xff]
    %s10000 = scalar_lea.vmem [#allocation3], 848
    %v10001 = vld [vmem:[%s10000] ss:$2 sm:$0xff]
    %s10002 = scalar_lea.vmem [#allocation3], 864
    %v10003 = vld [vmem:[%s10002] ss:$2 sm:$0xff]
    %s10004 = scalar_lea.vmem [#allocation3], 880
    %v10005 = vld [vmem:[%s10004] ss:$2 sm:$0xff]
    %s10006 = scalar_lea.vmem [#allocation3], 896
    %v10007 = vld [vmem:[%s10006] ss:$2 sm:$0xff]
    %s10008 = scalar_lea.vmem [#allocation3], 912
    %v10009 = vld [vmem:[%s10008] ss:$2 sm:$0xff]
    %s10010 = scalar_lea.vmem [#allocation3], 928
    %v10011 = vld [vmem:[%s10010] ss:$2 sm:$0xff]
    %s10012 = scalar_lea.vmem [#allocation3], 944
    %v10013 = vld [vmem:[%s10012] ss:$2 sm:$0xff]
    %s10014 = scalar_lea.vmem [#allocation3], 960
    %v10015 = vld [vmem:[%s10014] ss:$2 sm:$0xff]
    %s10016 = scalar_lea.vmem [#allocation3], 976
    %v10017 = vld [vmem:[%s10016] ss:$2 sm:$0xff]
    %s10018 = scalar_lea.vmem [#allocation3], 992
    %v10019 = vld [vmem:[%s10018] ss:$2 sm:$0xff]
    %s10020 = scalar_lea.vmem [#allocation3], 1008
    %v10021 = vld [vmem:[%s10020] ss:$2 sm:$0xff]
    %s10022 = scalar_lea.vmem [#allocation3], 1
    %v10023 = vld [vmem:[%s10022] ss:$2 sm:$0xff]
    %s10024 = scalar_lea.vmem [#allocation3], 17
    %v10025 = vld [vmem:[%s10024] ss:$2 sm:$0xff]
    %s10026 = scalar_lea.vmem [#allocation3], 33
    %v10027 = vld [vmem:[%s10026] ss:$2 sm:$0xff]
    %s10028 = scalar_lea.vmem [#allocation3], 49
    %v10029 = vld [vmem:[%s10028] ss:$2 sm:$0xff]
    %s10030 = scalar_lea.vmem [#allocation3], 65
    %v10031 = vld [vmem:[%s10030] ss:$2 sm:$0xff]
    %s10032 = scalar_lea.vmem [#allocation3], 81
    %v10033 = vld [vmem:[%s10032] ss:$2 sm:$0xff]
    %s10034 = scalar_lea.vmem [#allocation3], 97
    %v10035 = vld [vmem:[%s10034] ss:$2 sm:$0xff]
    %s10036 = scalar_lea.vmem [#allocation3], 113
    %v10037 = vld [vmem:[%s10036] ss:$2 sm:$0xff]
    %s10038 = scalar_lea.vmem [#allocation3], 129
    %v10039 = vld [vmem:[%s10038] ss:$2 sm:$0xff]
    %s10040 = scalar_lea.vmem [#allocation3], 145
    %v10041 = vld [vmem:[%s10040] ss:$2 sm:$0xff]
    %s10042 = scalar_lea.vmem [#allocation3], 161
    %v10043 = vld [vmem:[%s10042] ss:$2 sm:$0xff]
    %s10044 = scalar_lea.vmem [#allocation3], 177
    %v10045 = vld [vmem:[%s10044] ss:$2 sm:$0xff]
    %s10046 = scalar_lea.vmem [#allocation3], 193
    %v10047 = vld [vmem:[%s10046] ss:$2 sm:$0xff]
    %s10048 = scalar_lea.vmem [#allocation3], 209
    %v10049 = vld [vmem:[%s10048] ss:$2 sm:$0xff]
    %s10050 = scalar_lea.vmem [#allocation3], 225
    %v10051 = vld [vmem:[%s10050] ss:$2 sm:$0xff]
    %s10052 = scalar_lea.vmem [#allocation3], 241
    %v10053 = vld [vmem:[%s10052] ss:$2 sm:$0xff]
    %s10054 = scalar_lea.vmem [#allocation3], 257
    %v10055 = vld [vmem:[%s10054] ss:$2 sm:$0xff]
    %s10056 = scalar_lea.vmem [#allocation3], 273
    %v10057 = vld [vmem:[%s10056] ss:$2 sm:$0xff]
    %s10058 = scalar_lea.vmem [#allocation3], 289
    %v10059 = vld [vmem:[%s10058] ss:$2 sm:$0xff]
    %s10060 = scalar_lea.vmem [#allocation3], 305
    %v10061 = vld [vmem:[%s10060] ss:$2 sm:$0xff]
    %s10062 = scalar_lea.vmem [#allocation3], 321
    %v10063 = vld [vmem:[%s10062] ss:$2 sm:$0xff]
    %s10064 = scalar_lea.vmem [#allocation3], 337
    %v10065 = vld [vmem:[%s10064] ss:$2 sm:$0xff]
    %s10066 = scalar_lea.vmem [#allocation3], 353
    %v10067 = vld [vmem:[%s10066] ss:$2 sm:$0xff]
    %s10068 = scalar_lea.vmem [#allocation3], 369
    %v10069 = vld [vmem:[%s10068] ss:$2 sm:$0xff]
    %s10070 = scalar_lea.vmem [#allocation3], 385
    %v10071 = vld [vmem:[%s10070] ss:$2 sm:$0xff]
    %s10072 = scalar_lea.vmem [#allocation3], 401
    %v10073 = vld [vmem:[%s10072] ss:$2 sm:$0xff]
    %s10074 = scalar_lea.vmem [#allocation3], 417
    %v10075 = vld [vmem:[%s10074] ss:$2 sm:$0xff]
    %s10076 = scalar_lea.vmem [#allocation3], 433
    %v10077 = vld [vmem:[%s10076] ss:$2 sm:$0xff]
    %s10078 = scalar_lea.vmem [#allocation3], 449
    %v10079 = vld [vmem:[%s10078] ss:$2 sm:$0xff]
    %s10080 = scalar_lea.vmem [#allocation3], 465
    %v10081 = vld [vmem:[%s10080] ss:$2 sm:$0xff]
    %s10082 = scalar_lea.vmem [#allocation3], 481
    %v10083 = vld [vmem:[%s10082] ss:$2 sm:$0xff]
    %s10084 = scalar_lea.vmem [#allocation3], 497
    %v10085 = vld [vmem:[%s10084] ss:$2 sm:$0xff]
    %s10086 = scalar_lea.vmem [#allocation3], 513
    %v10087 = vld [vmem:[%s10086] ss:$2 sm:$0xff]
    %s10088 = scalar_lea.vmem [#allocation3], 529
    %v10089 = vld [vmem:[%s10088] ss:$2 sm:$0xff]
    %s10090 = scalar_lea.vmem [#allocation3], 545
    %v10091 = vld [vmem:[%s10090] ss:$2 sm:$0xff]
    %s10092 = scalar_lea.vmem [#allocation3], 561
    %v10093 = vld [vmem:[%s10092] ss:$2 sm:$0xff]
    %s10094 = scalar_lea.vmem [#allocation3], 577
    %v10095 = vld [vmem:[%s10094] ss:$2 sm:$0xff]
    %s10096 = scalar_lea.vmem [#allocation3], 593
    %v10097 = vld [vmem:[%s10096] ss:$2 sm:$0xff]
    %s10098 = scalar_lea.vmem [#allocation3], 609
    %v10099 = vld [vmem:[%s10098] ss:$2 sm:$0xff]
    %s10100 = scalar_lea.vmem [#allocation3], 625
    %v10101 = vld [vmem:[%s10100] ss:$2 sm:$0xff]
    %s10102 = scalar_lea.vmem [#allocation3], 641
    %v10103 = vld [vmem:[%s10102] ss:$2 sm:$0xff]
    %s10104 = scalar_lea.vmem [#allocation3], 657
    %v10105 = vld [vmem:[%s10104] ss:$2 sm:$0xff]
    %s10106 = scalar_lea.vmem [#allocation3], 673
    %v10107 = vld [vmem:[%s10106] ss:$2 sm:$0xff]
    %s10108 = scalar_lea.vmem [#allocation3], 689
    %v10109 = vld [vmem:[%s10108] ss:$2 sm:$0xff]
    %s10110 = scalar_lea.vmem [#allocation3], 705
    %v10111 = vld [vmem:[%s10110] ss:$2 sm:$0xff]
    %s10112 = scalar_lea.vmem [#allocation3], 721
    %v10113 = vld [vmem:[%s10112] ss:$2 sm:$0xff]
    %s10114 = scalar_lea.vmem [#allocation3], 737
    %v10115 = vld [vmem:[%s10114] ss:$2 sm:$0xff]
    %s10116 = scalar_lea.vmem [#allocation3], 753
    %v10117 = vld [vmem:[%s10116] ss:$2 sm:$0xff]
    %s10118 = scalar_lea.vmem [#allocation3], 769
    %v10119 = vld [vmem:[%s10118] ss:$2 sm:$0xff]
    %s10120 = scalar_lea.vmem [#allocation3], 785
    %v10121 = vld [vmem:[%s10120] ss:$2 sm:$0xff]
    %s10122 = scalar_lea.vmem [#allocation3], 801
    %v10123 = vld [vmem:[%s10122] ss:$2 sm:$0xff]
    %s10124 = scalar_lea.vmem [#allocation3], 817
    %v10125 = vld [vmem:[%s10124] ss:$2 sm:$0xff]
    %s10126 = scalar_lea.vmem [#allocation3], 833
    %v10127 = vld [vmem:[%s10126] ss:$2 sm:$0xff]
    %s10128 = scalar_lea.vmem [#allocation3], 849
    %v10129 = vld [vmem:[%s10128] ss:$2 sm:$0xff]
    %s10130 = scalar_lea.vmem [#allocation3], 865
    %v10131 = vld [vmem:[%s10130] ss:$2 sm:$0xff]
    %s10132 = scalar_lea.vmem [#allocation3], 881
    %v10133 = vld [vmem:[%s10132] ss:$2 sm:$0xff]
    %s10134 = scalar_lea.vmem [#allocation3], 897
    %v10135 = vld [vmem:[%s10134] ss:$2 sm:$0xff]
    %s10136 = scalar_lea.vmem [#allocation3], 913
    %v10137 = vld [vmem:[%s10136] ss:$2 sm:$0xff]
    %s10138 = scalar_lea.vmem [#allocation3], 929
    %v10139 = vld [vmem:[%s10138] ss:$2 sm:$0xff]
    %s10140 = scalar_lea.vmem [#allocation3], 945
    %v10141 = vld [vmem:[%s10140] ss:$2 sm:$0xff]
    %s10142 = scalar_lea.vmem [#allocation3], 961
    %v10143 = vld [vmem:[%s10142] ss:$2 sm:$0xff]
    %s10144 = scalar_lea.vmem [#allocation3], 977
    %v10145 = vld [vmem:[%s10144] ss:$2 sm:$0xff]
    %s10146 = scalar_lea.vmem [#allocation3], 993
    %v10147 = vld [vmem:[%s10146] ss:$2 sm:$0xff]
    %s10148 = scalar_lea.vmem [#allocation3], 1009
    %v10149 = vld [vmem:[%s10148] ss:$2 sm:$0xff]
    %v10150 = vmax.f32 %v9895, %v10023
    %v10151 = vmax.f32 %v9897, %v10025
    %v10152 = vmax.f32 %v9899, %v10027
    %v10153 = vmax.f32 %v9901, %v10029
    %v10154 = vmax.f32 %v9903, %v10031
    %v10155 = vmax.f32 %v9905, %v10033
    %v10156 = vmax.f32 %v9907, %v10035
    %v10157 = vmax.f32 %v9909, %v10037
    %v10158 = vmax.f32 %v9911, %v10039
    %v10159 = vmax.f32 %v9913, %v10041
    %v10160 = vmax.f32 %v9915, %v10043
    %v10161 = vmax.f32 %v9917, %v10045
    %v10162 = vmax.f32 %v9919, %v10047
    %v10163 = vmax.f32 %v9921, %v10049
    %v10164 = vmax.f32 %v9923, %v10051
    %v10165 = vmax.f32 %v9925, %v10053
    %v10166 = vmax.f32 %v9927, %v10055
    %v10167 = vmax.f32 %v9929, %v10057
    %v10168 = vmax.f32 %v9931, %v10059
    %v10169 = vmax.f32 %v9933, %v10061
    %v10170 = vmax.f32 %v9935, %v10063
    %v10171 = vmax.f32 %v9937, %v10065
    %v10172 = vmax.f32 %v9939, %v10067
    %v10173 = vmax.f32 %v9941, %v10069
    %v10174 = vmax.f32 %v9943, %v10071
    %v10175 = vmax.f32 %v9945, %v10073
    %v10176 = vmax.f32 %v9947, %v10075
    %v10177 = vmax.f32 %v9949, %v10077
    %v10178 = vmax.f32 %v9951, %v10079
    %v10179 = vmax.f32 %v9953, %v10081
    %v10180 = vmax.f32 %v9955, %v10083
    %v10181 = vmax.f32 %v9957, %v10085
    %v10182 = vmax.f32 %v9959, %v10087
    %v10183 = vmax.f32 %v9961, %v10089
    %v10184 = vmax.f32 %v9963, %v10091
    %v10185 = vmax.f32 %v9965, %v10093
    %v10186 = vmax.f32 %v9967, %v10095
    %v10187 = vmax.f32 %v9969, %v10097
    %v10188 = vmax.f32 %v9971, %v10099
    %v10189 = vmax.f32 %v9973, %v10101
    %v10190 = vmax.f32 %v9975, %v10103
    %v10191 = vmax.f32 %v9977, %v10105
    %v10192 = vmax.f32 %v9979, %v10107
    %v10193 = vmax.f32 %v9981, %v10109
    %v10194 = vmax.f32 %v9983, %v10111
    %v10195 = vmax.f32 %v9985, %v10113
    %v10196 = vmax.f32 %v9987, %v10115
    %v10197 = vmax.f32 %v9989, %v10117
    %v10198 = vmax.f32 %v9991, %v10119
    %v10199 = vmax.f32 %v9993, %v10121
    %v10200 = vmax.f32 %v9995, %v10123
    %v10201 = vmax.f32 %v9997, %v10125
    %v10202 = vmax.f32 %v9999, %v10127
    %v10203 = vmax.f32 %v10001, %v10129
    %v10204 = vmax.f32 %v10003, %v10131
    %v10205 = vmax.f32 %v10005, %v10133
    %v10206 = vmax.f32 %v10007, %v10135
    %v10207 = vmax.f32 %v10009, %v10137
    %v10208 = vmax.f32 %v10011, %v10139
    %v10209 = vmax.f32 %v10013, %v10141
    %v10210 = vmax.f32 %v10015, %v10143
    %v10211 = vmax.f32 %v10017, %v10145
    %v10212 = vmax.f32 %v10019, %v10147
    %v10213 = vmax.f32 %v10021, %v10149
    %v10278 = vrot.slane %v10150, 4
    %v10279 = vrot.slane %v10151, 4
    %v10280 = vsel %vm5444, %v10278, %v10279
    %v10281 = vrot.slane %v10152, 4
    %v10282 = vsel %vm5444, %v10279, %v10281
    %v10283 = vrot.slane %v10153, 4
    %v10284 = vsel %vm5444, %v10281, %v10283
    %v10285 = vrot.slane %v10154, 4
    %v10286 = vsel %vm5444, %v10283, %v10285
    %v10287 = vrot.slane %v10155, 4
    %v10288 = vsel %vm5444, %v10285, %v10287
    %v10289 = vrot.slane %v10156, 4
    %v10290 = vsel %vm5444, %v10287, %v10289
    %v10291 = vrot.slane %v10157, 4
    %v10292 = vsel %vm5444, %v10289, %v10291
    %v10293 = vrot.slane %v10158, 4
    %v10294 = vsel %vm5444, %v10291, %v10293
    %v10295 = vrot.slane %v10159, 4
    %v10296 = vsel %vm5444, %v10293, %v10295
    %v10297 = vrot.slane %v10160, 4
    %v10298 = vsel %vm5444, %v10295, %v10297
    %v10299 = vrot.slane %v10161, 4
    %v10300 = vsel %vm5444, %v10297, %v10299
    %v10301 = vrot.slane %v10162, 4
    %v10302 = vsel %vm5444, %v10299, %v10301
    %v10303 = vrot.slane %v10163, 4
    %v10304 = vsel %vm5444, %v10301, %v10303
    %v10305 = vrot.slane %v10164, 4
    %v10306 = vsel %vm5444, %v10303, %v10305
    %v10307 = vrot.slane %v10165, 4
    %v10308 = vsel %vm5444, %v10305, %v10307
    %v10309 = vrot.slane %v10166, 4
    %v10310 = vsel %vm5444, %v10307, %v10309
    %v10311 = vrot.slane %v10167, 4
    %v10312 = vsel %vm5444, %v10309, %v10311
    %v10313 = vrot.slane %v10168, 4
    %v10314 = vsel %vm5444, %v10311, %v10313
    %v10315 = vrot.slane %v10169, 4
    %v10316 = vsel %vm5444, %v10313, %v10315
    %v10317 = vrot.slane %v10170, 4
    %v10318 = vsel %vm5444, %v10315, %v10317
    %v10319 = vrot.slane %v10171, 4
    %v10320 = vsel %vm5444, %v10317, %v10319
    %v10321 = vrot.slane %v10172, 4
    %v10322 = vsel %vm5444, %v10319, %v10321
    %v10323 = vrot.slane %v10173, 4
    %v10324 = vsel %vm5444, %v10321, %v10323
    %v10325 = vrot.slane %v10174, 4
    %v10326 = vsel %vm5444, %v10323, %v10325
    %v10327 = vrot.slane %v10175, 4
    %v10328 = vsel %vm5444, %v10325, %v10327
    %v10329 = vrot.slane %v10176, 4
    %v10330 = vsel %vm5444, %v10327, %v10329
    %v10331 = vrot.slane %v10177, 4
    %v10332 = vsel %vm5444, %v10329, %v10331
    %v10333 = vrot.slane %v10178, 4
    %v10334 = vsel %vm5444, %v10331, %v10333
    %v10335 = vrot.slane %v10179, 4
    %v10336 = vsel %vm5444, %v10333, %v10335
    %v10337 = vrot.slane %v10180, 4
    %v10338 = vsel %vm5444, %v10335, %v10337
    %v10339 = vrot.slane %v10181, 4
    %v10340 = vsel %vm5444, %v10337, %v10339
    %v10341 = vrot.slane %v10182, 4
    %v10342 = vsel %vm5444, %v10339, %v10341
    %v10343 = vrot.slane %v10183, 4
    %v10344 = vsel %vm5444, %v10341, %v10343
    %v10345 = vrot.slane %v10184, 4
    %v10346 = vsel %vm5444, %v10343, %v10345
    %v10347 = vrot.slane %v10185, 4
    %v10348 = vsel %vm5444, %v10345, %v10347
    %v10349 = vrot.slane %v10186, 4
    %v10350 = vsel %vm5444, %v10347, %v10349
    %v10351 = vrot.slane %v10187, 4
    %v10352 = vsel %vm5444, %v10349, %v10351
    %v10353 = vrot.slane %v10188, 4
    %v10354 = vsel %vm5444, %v10351, %v10353
    %v10355 = vrot.slane %v10189, 4
    %v10356 = vsel %vm5444, %v10353, %v10355
    %v10357 = vrot.slane %v10190, 4
    %v10358 = vsel %vm5444, %v10355, %v10357
    %v10359 = vrot.slane %v10191, 4
    %v10360 = vsel %vm5444, %v10357, %v10359
    %v10361 = vrot.slane %v10192, 4
    %v10362 = vsel %vm5444, %v10359, %v10361
    %v10363 = vrot.slane %v10193, 4
    %v10364 = vsel %vm5444, %v10361, %v10363
    %v10365 = vrot.slane %v10194, 4
    %v10366 = vsel %vm5444, %v10363, %v10365
    %v10367 = vrot.slane %v10195, 4
    %v10368 = vsel %vm5444, %v10365, %v10367
    %v10369 = vrot.slane %v10196, 4
    %v10370 = vsel %vm5444, %v10367, %v10369
    %v10371 = vrot.slane %v10197, 4
    %v10372 = vsel %vm5444, %v10369, %v10371
    %v10373 = vrot.slane %v10198, 4
    %v10374 = vsel %vm5444, %v10371, %v10373
    %v10375 = vrot.slane %v10199, 4
    %v10376 = vsel %vm5444, %v10373, %v10375
    %v10377 = vrot.slane %v10200, 4
    %v10378 = vsel %vm5444, %v10375, %v10377
    %v10379 = vrot.slane %v10201, 4
    %v10380 = vsel %vm5444, %v10377, %v10379
    %v10381 = vrot.slane %v10202, 4
    %v10382 = vsel %vm5444, %v10379, %v10381
    %v10383 = vrot.slane %v10203, 4
    %v10384 = vsel %vm5444, %v10381, %v10383
    %v10385 = vrot.slane %v10204, 4
    %v10386 = vsel %vm5444, %v10383, %v10385
    %v10387 = vrot.slane %v10205, 4
    %v10388 = vsel %vm5444, %v10385, %v10387
    %v10389 = vrot.slane %v10206, 4
    %v10390 = vsel %vm5444, %v10387, %v10389
    %v10391 = vrot.slane %v10207, 4
    %v10392 = vsel %vm5444, %v10389, %v10391
    %v10393 = vrot.slane %v10208, 4
    %v10394 = vsel %vm5444, %v10391, %v10393
    %v10395 = vrot.slane %v10209, 4
    %v10396 = vsel %vm5444, %v10393, %v10395
    %v10397 = vrot.slane %v10210, 4
    %v10398 = vsel %vm5444, %v10395, %v10397
    %v10399 = vrot.slane %v10211, 4
    %v10400 = vsel %vm5444, %v10397, %v10399
    %v10401 = vrot.slane %v10212, 4
    %v10402 = vsel %vm5444, %v10399, %v10401
    %v10403 = vrot.slane %v10213, 4
    %v10404 = vsel %vm5444, %v10401, %v10403
    %v10469 = vmax.f32 %v10150, %v10280
    %v10470 = vmax.f32 %v10151, %v10282
    %v10471 = vmax.f32 %v10152, %v10284
    %v10472 = vmax.f32 %v10153, %v10286
    %v10473 = vmax.f32 %v10154, %v10288
    %v10474 = vmax.f32 %v10155, %v10290
    %v10475 = vmax.f32 %v10156, %v10292
    %v10476 = vmax.f32 %v10157, %v10294
    %v10477 = vmax.f32 %v10158, %v10296
    %v10478 = vmax.f32 %v10159, %v10298
    %v10479 = vmax.f32 %v10160, %v10300
    %v10480 = vmax.f32 %v10161, %v10302
    %v10481 = vmax.f32 %v10162, %v10304
    %v10482 = vmax.f32 %v10163, %v10306
    %v10483 = vmax.f32 %v10164, %v10308
    %v10484 = vmax.f32 %v10165, %v10310
    %v10485 = vmax.f32 %v10166, %v10312
    %v10486 = vmax.f32 %v10167, %v10314
    %v10487 = vmax.f32 %v10168, %v10316
    %v10488 = vmax.f32 %v10169, %v10318
    %v10489 = vmax.f32 %v10170, %v10320
    %v10490 = vmax.f32 %v10171, %v10322
    %v10491 = vmax.f32 %v10172, %v10324
    %v10492 = vmax.f32 %v10173, %v10326
    %v10493 = vmax.f32 %v10174, %v10328
    %v10494 = vmax.f32 %v10175, %v10330
    %v10495 = vmax.f32 %v10176, %v10332
    %v10496 = vmax.f32 %v10177, %v10334
    %v10497 = vmax.f32 %v10178, %v10336
    %v10498 = vmax.f32 %v10179, %v10338
    %v10499 = vmax.f32 %v10180, %v10340
    %v10500 = vmax.f32 %v10181, %v10342
    %v10501 = vmax.f32 %v10182, %v10344
    %v10502 = vmax.f32 %v10183, %v10346
    %v10503 = vmax.f32 %v10184, %v10348
    %v10504 = vmax.f32 %v10185, %v10350
    %v10505 = vmax.f32 %v10186, %v10352
    %v10506 = vmax.f32 %v10187, %v10354
    %v10507 = vmax.f32 %v10188, %v10356
    %v10508 = vmax.f32 %v10189, %v10358
    %v10509 = vmax.f32 %v10190, %v10360
    %v10510 = vmax.f32 %v10191, %v10362
    %v10511 = vmax.f32 %v10192, %v10364
    %v10512 = vmax.f32 %v10193, %v10366
    %v10513 = vmax.f32 %v10194, %v10368
    %v10514 = vmax.f32 %v10195, %v10370
    %v10515 = vmax.f32 %v10196, %v10372
    %v10516 = vmax.f32 %v10197, %v10374
    %v10517 = vmax.f32 %v10198, %v10376
    %v10518 = vmax.f32 %v10199, %v10378
    %v10519 = vmax.f32 %v10200, %v10380
    %v10520 = vmax.f32 %v10201, %v10382
    %v10521 = vmax.f32 %v10202, %v10384
    %v10522 = vmax.f32 %v10203, %v10386
    %v10523 = vmax.f32 %v10204, %v10388
    %v10524 = vmax.f32 %v10205, %v10390
    %v10525 = vmax.f32 %v10206, %v10392
    %v10526 = vmax.f32 %v10207, %v10394
    %v10527 = vmax.f32 %v10208, %v10396
    %v10528 = vmax.f32 %v10209, %v10398
    %v10529 = vmax.f32 %v10210, %v10400
    %v10530 = vmax.f32 %v10211, %v10402
    %v10531 = vmax.f32 %v10212, %v10404
    %v10532 = vmax.f32 %v10213, %v10403
    %v10533 = vld [vmem:[%s4] sm:$0xff]
    %v10534 = vld [vmem:[%s4 + $0x8] sm:$0xff]
    %v10535 = vld [vmem:[%s4 + $0x10] sm:$0xff]
    %v10536 = vld [vmem:[%s4 + $0x18] sm:$0xff]
    %v10537 = vld [vmem:[%s4 + $0x20] sm:$0xff]
    %v10538 = vld [vmem:[%s4 + $0x28] sm:$0xff]
    %v10539 = vld [vmem:[%s4 + $0x30] sm:$0xff]
    %v10540 = vld [vmem:[%s4 + $0x38] sm:$0xff]
    %v10541 = vld [vmem:[%s4 + $0x40] sm:$0xff]
    %v10542 = vld [vmem:[%s4 + $0x48] sm:$0xff]
    %v10543 = vld [vmem:[%s4 + $0x50] sm:$0xff]
    %v10544 = vld [vmem:[%s4 + $0x58] sm:$0xff]
    %v10545 = vld [vmem:[%s4 + $0x60] sm:$0xff]
    %v10546 = vld [vmem:[%s4 + $0x68] sm:$0xff]
    %v10547 = vld [vmem:[%s4 + $0x70] sm:$0xff]
    %v10548 = vld [vmem:[%s4 + $0x78] sm:$0xff]
    %v10549 = vld [vmem:[%s4 + $0x80] sm:$0xff]
    %v10550 = vld [vmem:[%s4 + $0x88] sm:$0xff]
    %v10551 = vld [vmem:[%s4 + $0x90] sm:$0xff]
    %v10552 = vld [vmem:[%s4 + $0x98] sm:$0xff]
    %v10553 = vld [vmem:[%s4 + $0xa0] sm:$0xff]
    %v10554 = vld [vmem:[%s4 + $0xa8] sm:$0xff]
    %v10555 = vld [vmem:[%s4 + $0xb0] sm:$0xff]
    %v10556 = vld [vmem:[%s4 + $0xb8] sm:$0xff]
    %v10557 = vld [vmem:[%s4 + $0xc0] sm:$0xff]
    %v10558 = vld [vmem:[%s4 + $0xc8] sm:$0xff]
    %v10559 = vld [vmem:[%s4 + $0xd0] sm:$0xff]
    %v10560 = vld [vmem:[%s4 + $0xd8] sm:$0xff]
    %v10561 = vld [vmem:[%s4 + $0xe0] sm:$0xff]
    %v10562 = vld [vmem:[%s4 + $0xe8] sm:$0xff]
    %v10563 = vld [vmem:[%s4 + $0xf0] sm:$0xff]
    %v10564 = vld [vmem:[%s4 + $0xf8] sm:$0xff]
    %v10565 = vld [vmem:[%s5] sm:$0xff]
    %v10566 = vld [vmem:[%s5 + $0x8] sm:$0xff]
    %v10567 = vld [vmem:[%s5 + $0x10] sm:$0xff]
    %v10568 = vld [vmem:[%s5 + $0x18] sm:$0xff]
    %v10569 = vld [vmem:[%s5 + $0x20] sm:$0xff]
    %v10570 = vld [vmem:[%s5 + $0x28] sm:$0xff]
    %v10571 = vld [vmem:[%s5 + $0x30] sm:$0xff]
    %v10572 = vld [vmem:[%s5 + $0x38] sm:$0xff]
    %10574 = vset.pattern.permute.xlu0 0
    %10575 = vperm.xlu0 %10574, %v10565
    %v10576 = vpop.permute.xlu0 %10575
    %10579 = vset.pattern.permute.xlu0 0
    %10580 = vperm.xlu0 %10579, %v10566
    %v10581 = vpop.permute.xlu0 %10580
    %10584 = vset.pattern.permute.xlu0 0
    %10585 = vperm.xlu0 %10584, %v10567
    %v10586 = vpop.permute.xlu0 %10585
    %10589 = vset.pattern.permute.xlu0 0
    %10590 = vperm.xlu0 %10589, %v10568
    %v10591 = vpop.permute.xlu0 %10590
    %10594 = vset.pattern.permute.xlu0 0
    %10595 = vperm.xlu0 %10594, %v10569
    %v10596 = vpop.permute.xlu0 %10595
    %10599 = vset.pattern.permute.xlu0 0
    %10600 = vperm.xlu0 %10599, %v10570
    %v10601 = vpop.permute.xlu0 %10600
    %10604 = vset.pattern.permute.xlu0 0
    %10605 = vperm.xlu0 %10604, %v10571
    %v10606 = vpop.permute.xlu0 %10605
    %10609 = vset.pattern.permute.xlu0 0
    %10610 = vperm.xlu0 %10609, %v10572
    %v10611 = vpop.permute.xlu0 %10610
    %vm10613 = vcmask 1014784
    %v10615 = vsel %vm10613, %v10536, 0
    %v10618 = vsel %vm10613, %v10540, 0
    %v10621 = vsel %vm10613, %v10544, 0
    %v10624 = vsel %vm10613, %v10548, 0
    %v10627 = vsel %vm10613, %v10552, 0
    %v10630 = vsel %vm10613, %v10556, 0
    %v10633 = vsel %vm10613, %v10560, 0
    %v10636 = vsel %vm10613, %v10564, 0
    %v10639 = vsel %vm5444, %v10532, 0
    %10641 = vmatprep.subr.mxu0 0.0
    %10642 = vmatpush1.msra.mxu0 %v10469
    %10643 = vmatprep.subr.mxu0 0.0
    %10644 = vmatpush1.msra.mxu0 %v10470
    %10645 = vmatprep.subr.mxu0 0.0
    %10646 = vmatpush1.msra.mxu0 %v10471
    %10647 = vmatprep.subr.mxu0 0.0
    %10648 = vmatpush1.msra.mxu0 %v10472
    %10649 = vmatprep.subr.mxu0 0.0
    %10650 = vmatpush1.msra.mxu0 %v10473
    %10651 = vmatprep.subr.mxu0 0.0
    %10652 = vmatpush1.msra.mxu0 %v10474
    %10653 = vmatprep.subr.mxu0 0.0
    %10654 = vmatpush1.msra.mxu0 %v10475
    %10655 = vmatprep.subr.mxu0 0.0
    %10656 = vmatpush1.msra.mxu0 %v10476
    %10657 = vmatprep.subr.mxu0 0.0
    %10658 = vmatpush1.msra.mxu0 %v10477
    %10659 = vmatprep.subr.mxu0 0.0
    %10660 = vmatpush1.msra.mxu0 %v10478
    %10661 = vmatprep.subr.mxu0 0.0
    %10662 = vmatpush1.msra.mxu0 %v10479
    %10663 = vmatprep.subr.mxu0 0.0
    %10664 = vmatpush1.msra.mxu0 %v10480
    %10665 = vmatprep.subr.mxu0 0.0
    %10666 = vmatpush1.msra.mxu0 %v10481
    %10667 = vmatprep.subr.mxu0 0.0
    %10668 = vmatpush1.msra.mxu0 %v10482
    %10669 = vmatprep.subr.mxu0 0.0
    %10670 = vmatpush1.msra.mxu0 %v10483
    %10671 = vmatprep.subr.mxu0 0.0
    %10672 = vmatpush1.msra.mxu0 %v10484
    %10673 = vmatprep.subr.mxu0 0.0
    %10674 = vmatpush1.msra.mxu0 %v10485
    %10675 = vmatprep.subr.mxu0 0.0
    %10676 = vmatpush1.msra.mxu0 %v10486
    %10677 = vmatprep.subr.mxu0 0.0
    %10678 = vmatpush1.msra.mxu0 %v10487
    %10679 = vmatprep.subr.mxu0 0.0
    %10680 = vmatpush1.msra.mxu0 %v10488
    %10681 = vmatprep.subr.mxu0 0.0
    %10682 = vmatpush1.msra.mxu0 %v10489
    %10683 = vmatprep.subr.mxu0 0.0
    %10684 = vmatpush1.msra.mxu0 %v10490
    %10685 = vmatprep.subr.mxu0 0.0
    %10686 = vmatpush1.msra.mxu0 %v10491
    %10687 = vmatprep.subr.mxu0 0.0
    %10688 = vmatpush1.msra.mxu0 %v10492
    %10689 = vmatprep.subr.mxu0 0.0
    %10690 = vmatpush1.msra.mxu0 %v10493
    %10691 = vmatprep.subr.mxu0 0.0
    %10692 = vmatpush1.msra.mxu0 %v10494
    %10693 = vmatprep.subr.mxu0 0.0
    %10694 = vmatpush1.msra.mxu0 %v10495
    %10695 = vmatprep.subr.mxu0 0.0
    %10696 = vmatpush1.msra.mxu0 %v10496
    %10697 = vmatprep.subr.mxu0 0.0
    %10698 = vmatpush1.msra.mxu0 %v10497
    %10699 = vmatprep.subr.mxu0 0.0
    %10700 = vmatpush1.msra.mxu0 %v10498
    %10701 = vmatprep.subr.mxu0 0.0
    %10702 = vmatpush1.msra.mxu0 %v10499
    %10703 = vmatprep.subr.mxu0 0.0
    %10704 = vmatpush1.msra.mxu0 %v10500
    %10705 = vmatprep.mubr.f32.mxu0 %v10534
    %10706 = vmatmul.mubr.f32.gmra.mrb[0].mxu0 %v10533
    %v10707 = vpop.f32.mrb[0].mxu0
    %v10708 = vadd.f32 %v10576, %v10707
    %v10709 = vpop.f32.mrb[0].mxu0
    %10710 = vmatprep.mubr.f32.mxu0 %v10538
    %10711 = vmatmul.mubr.f32.gmra.mrb[0].mxu0 %v10537
    %v10712 = vpop.f32.mrb[0].mxu0
    %v10713 = vadd.f32 %v10581, %v10712
    %v10714 = vpop.f32.mrb[0].mxu0
    %10715 = vmatprep.mubr.f32.mxu0 %v10542
    %10716 = vmatmul.mubr.f32.gmra.mrb[0].mxu0 %v10541
    %v10717 = vpop.f32.mrb[0].mxu0
    %v10718 = vadd.f32 %v10586, %v10717
    %v10719 = vpop.f32.mrb[0].mxu0
    %10720 = vmatprep.mubr.f32.mxu0 %v10546
    %10721 = vmatmul.mubr.f32.gmra.mrb[0].mxu0 %v10545
    %v10722 = vpop.f32.mrb[0].mxu0
    %v10723 = vadd.f32 %v10591, %v10722
    %v10724 = vpop.f32.mrb[0].mxu0
    %10725 = vmatprep.mubr.f32.mxu0 %v10550
    %10726 = vmatmul.mubr.f32.gmra.mrb[0].mxu0 %v10549
    %v10727 = vpop.f32.mrb[0].mxu0
    %v10728 = vadd.f32 %v10596, %v10727
    %v10729 = vpop.f32.mrb[0].mxu0
    %10730 = vmatprep.mubr.f32.mxu0 %v10554
    %10731 = vmatmul.mubr.f32.gmra.mrb[0].mxu0 %v10553
    %v10732 = vpop.f32.mrb[0].mxu0
    %v10733 = vadd.f32 %v10601, %v10732
    %v10734 = vpop.f32.mrb[0].mxu0
    %10735 = vmatprep.mubr.f32.mxu0 %v10558
    %10736 = vmatmul.mubr.f32.gmra.mrb[0].mxu0 %v10557
    %v10737 = vpop.f32.mrb[0].mxu0
    %v10738 = vadd.f32 %v10606, %v10737
    %v10739 = vpop.f32.mrb[0].mxu0
    %10740 = vmatprep.mubr.f32.mxu0 %v10562
    %10741 = vmatmul.mubr.f32.gmra.mrb[0].mxu0 %v10561
    %v10742 = vpop.f32.mrb[0].mxu0
    %v10743 = vadd.f32 %v10611, %v10742
    %v10744 = vpop.f32.mrb[0].mxu0
    %10745 = vdwg.mxu0
    %10746 = vmatprep.subr.mxu0 0.0
    %10747 = vmatpush1.msra.mxu0 %v10501
    %10748 = vmatprep.subr.mxu0 0.0
    %10749 = vmatpush1.msra.mxu0 %v10502
    %10750 = vmatprep.subr.mxu0 0.0
    %10751 = vmatpush1.msra.mxu0 %v10503
    %10752 = vmatprep.subr.mxu0 0.0
    %10753 = vmatpush1.msra.mxu0 %v10504
    %10754 = vmatprep.subr.mxu0 0.0
    %10755 = vmatpush1.msra.mxu0 %v10505
    %10756 = vmatprep.subr.mxu0 0.0
    %10757 = vmatpush1.msra.mxu0 %v10506
    %10758 = vmatprep.subr.mxu0 0.0
    %10759 = vmatpush1.msra.mxu0 %v10507
    %10760 = vmatprep.subr.mxu0 0.0
    %10761 = vmatpush1.msra.mxu0 %v10508
    %10762 = vmatprep.subr.mxu0 0.0
    %10763 = vmatpush1.msra.mxu0 %v10509
    %10764 = vmatprep.subr.mxu0 0.0
    %10765 = vmatpush1.msra.mxu0 %v10510
    %10766 = vmatprep.subr.mxu0 0.0
    %10767 = vmatpush1.msra.mxu0 %v10511
    %10768 = vmatprep.subr.mxu0 0.0
    %10769 = vmatpush1.msra.mxu0 %v10512
    %10770 = vmatprep.subr.mxu0 0.0
    %10771 = vmatpush1.msra.mxu0 %v10513
    %10772 = vmatprep.subr.mxu0 0.0
    %10773 = vmatpush1.msra.mxu0 %v10514
    %10774 = vmatprep.subr.mxu0 0.0
    %10775 = vmatpush1.msra.mxu0 %v10515
    %10776 = vmatprep.subr.mxu0 0.0
    %10777 = vmatpush1.msra.mxu0 %v10516
    %10778 = vmatprep.subr.mxu0 0.0
    %10779 = vmatpush1.msra.mxu0 %v10517
    %10780 = vmatprep.subr.mxu0 0.0
    %10781 = vmatpush1.msra.mxu0 %v10518
    %10782 = vmatprep.subr.mxu0 0.0
    %10783 = vmatpush1.msra.mxu0 %v10519
    %10784 = vmatprep.subr.mxu0 0.0
    %10785 = vmatpush1.msra.mxu0 %v10520
    %10786 = vmatprep.subr.mxu0 0.0
    %10787 = vmatpush1.msra.mxu0 %v10521
    %10788 = vmatprep.subr.mxu0 0.0
    %10789 = vmatpush1.msra.mxu0 %v10522
    %10790 = vmatprep.subr.mxu0 0.0
    %10791 = vmatpush1.msra.mxu0 %v10523
    %10792 = vmatprep.subr.mxu0 0.0
    %10793 = vmatpush1.msra.mxu0 %v10524
    %10794 = vmatprep.subr.mxu0 0.0
    %10795 = vmatpush1.msra.mxu0 %v10525
    %10796 = vmatprep.subr.mxu0 0.0
    %10797 = vmatpush1.msra.mxu0 %v10526
    %10798 = vmatprep.subr.mxu0 0.0
    %10799 = vmatpush1.msra.mxu0 %v10527
    %10800 = vmatprep.subr.mxu0 0.0
    %10801 = vmatpush1.msra.mxu0 %v10528
    %10802 = vmatprep.subr.mxu0 0.0
    %10803 = vmatpush1.msra.mxu0 %v10529
    %10804 = vmatprep.subr.mxu0 0.0
    %10805 = vmatpush1.msra.mxu0 %v10530
    %10806 = vmatprep.subr.mxu0 0.0
    %10807 = vmatpush1.msra.mxu0 %v10531
    %10808 = vmatprep.subr.mxu0 0.0
    %10809 = vmatpush1.msra.mxu0 %v10639
    %10810 = vmatprep.mubr.f32.mxu0 %v10615
    %10811 = vmatmul.mubr.f32.gmra.mrb[0].mxu0 %v10535
    %v10812 = vpop.f32.mrb[0].mxu0
    %v10813 = vadd.f32 %v10708, %v10812
    %v10814 = vpop.f32.mrb[0].mxu0
    %10815 = vmatprep.mubr.f32.mxu0 %v10618
    %10816 = vmatmul.mubr.f32.gmra.mrb[0].mxu0 %v10539
    %v10817 = vpop.f32.mrb[0].mxu0
    %v10818 = vadd.f32 %v10713, %v10817
    %v10819 = vpop.f32.mrb[0].mxu0
    %10820 = vmatprep.mubr.f32.mxu0 %v10621
    %10821 = vmatmul.mubr.f32.gmra.mrb[0].mxu0 %v10543
    %v10822 = vpop.f32.mrb[0].mxu0
    %v10823 = vadd.f32 %v10718, %v10822
    %v10824 = vpop.f32.mrb[0].mxu0
    %10825 = vmatprep.mubr.f32.mxu0 %v10624
    %10826 = vmatmul.mubr.f32.gmra.mrb[0].mxu0 %v10547
    %v10827 = vpop.f32.mrb[0].mxu0
    %v10828 = vadd.f32 %v10723, %v10827
    %v10829 = vpop.f32.mrb[0].mxu0
    %10830 = vmatprep.mubr.f32.mxu0 %v10627
    %10831 = vmatmul.mubr.f32.gmra.mrb[0].mxu0 %v10551
    %v10832 = vpop.f32.mrb[0].mxu0
    %v10833 = vadd.f32 %v10728, %v10832
    %v10834 = vpop.f32.mrb[0].mxu0
    %10835 = vmatprep.mubr.f32.mxu0 %v10630
    %10836 = vmatmul.mubr.f32.gmra.mrb[0].mxu0 %v10555
    %v10837 = vpop.f32.mrb[0].mxu0
    %v10838 = vadd.f32 %v10733, %v10837
    %v10839 = vpop.f32.mrb[0].mxu0
    %10840 = vmatprep.mubr.f32.mxu0 %v10633
    %10841 = vmatmul.mubr.f32.gmra.mrb[0].mxu0 %v10559
    %v10842 = vpop.f32.mrb[0].mxu0
    %v10843 = vadd.f32 %v10738, %v10842
    %v10844 = vpop.f32.mrb[0].mxu0
    %10845 = vmatprep.mubr.f32.mxu0 %v10636
    %10846 = vmatmul.mubr.f32.gmra.mrb[0].mxu0 %v10563
    %v10847 = vpop.f32.mrb[0].mxu0
    %v10848 = vadd.f32 %v10743, %v10847
    %v10849 = vpop.f32.mrb[0].mxu0
    %10850 = vdwg.mxu0
    %v10851 = vmax.f32 %v10813, 0.0
    %v10852 = vmax.f32 %v10818, 0.0
    %v10853 = vmax.f32 %v10823, 0.0
    %v10854 = vmax.f32 %v10828, 0.0
    %v10855 = vmax.f32 %v10833, 0.0
    %v10856 = vmax.f32 %v10838, 0.0
    %v10857 = vmax.f32 %v10843, 0.0
    %v10858 = vmax.f32 %v10848, 0.0
    %v10859 = vld [vmem:[%s6] sm:$0x1]
    %s10860 = sld [smem:[#allocation4]]
    %v10861 = vstv %s10860
    %vm10862 = vcmask 523264
    %v10864 = vsel %vm10862, %v10859, 0
    %10866 = vmatprep.subr.mxu0 0.0
    %10867 = vmatpush1.msra.mxu0 %v10851
    %10868 = vmatprep.subr.mxu0 0.0
    %10869 = vmatpush1.msra.mxu0 %v10852
    %10870 = vmatprep.subr.mxu0 0.0
    %10871 = vmatpush1.msra.mxu0 %v10853
    %10872 = vmatprep.subr.mxu0 0.0
    %10873 = vmatpush1.msra.mxu0 %v10854
    %10874 = vmatprep.subr.mxu0 0.0
    %10875 = vmatpush1.msra.mxu0 %v10855
    %10876 = vmatprep.subr.mxu0 0.0
    %10877 = vmatpush1.msra.mxu0 %v10856
    %10878 = vmatprep.subr.mxu0 0.0
    %10879 = vmatpush1.msra.mxu0 %v10857
    %10880 = vmatprep.subr.mxu0 0.0
    %10881 = vmatpush1.msra.mxu0 %v10858
    %10882 = vmatprep.subr.mxu0 0.0
    %10883 = vmatpush1.msra.mxu0 0.0
    %10884 = vmatprep.subr.mxu0 0.0
    %10885 = vmatpush1.msra.mxu0 0.0
    %10886 = vmatprep.subr.mxu0 0.0
    %10887 = vmatpush1.msra.mxu0 0.0
    %10888 = vmatprep.subr.mxu0 0.0
    %10889 = vmatpush1.msra.mxu0 0.0
    %10890 = vmatprep.subr.mxu0 0.0
    %10891 = vmatpush1.msra.mxu0 0.0
    %10892 = vmatprep.subr.mxu0 0.0
    %10893 = vmatpush1.msra.mxu0 0.0
    %10894 = vmatprep.subr.mxu0 0.0
    %10895 = vmatpush1.msra.mxu0 0.0
    %10896 = vmatprep.subr.mxu0 0.0
    %10897 = vmatpush1.msra.mxu0 0.0
    %10898 = vmatprep.subr.mxu0 0.0
    %10899 = vmatpush1.msra.mxu0 0.0
    %10900 = vmatprep.subr.mxu0 0.0
    %10901 = vmatpush1.msra.mxu0 0.0
    %10902 = vmatprep.subr.mxu0 0.0
    %10903 = vmatpush1.msra.mxu0 0.0
    %10904 = vmatprep.subr.mxu0 0.0
    %10905 = vmatpush1.msra.mxu0 0.0
    %10906 = vmatprep.subr.mxu0 0.0
    %10907 = vmatpush1.msra.mxu0 0.0
    %10908 = vmatprep.subr.mxu0 0.0
    %10909 = vmatpush1.msra.mxu0 0.0
    %10910 = vmatprep.subr.mxu0 0.0
    %10911 = vmatpush1.msra.mxu0 0.0
    %10912 = vmatprep.subr.mxu0 0.0
    %10913 = vmatpush1.msra.mxu0 0.0
    %10914 = vmatprep.subr.mxu0 0.0
    %10915 = vmatpush1.msra.mxu0 0.0
    %10916 = vmatprep.subr.mxu0 0.0
    %10917 = vmatpush1.msra.mxu0 0.0
    %10918 = vmatprep.subr.mxu0 0.0
    %10919 = vmatpush1.msra.mxu0 0.0
    %10920 = vmatprep.subr.mxu0 0.0
    %10921 = vmatpush1.msra.mxu0 0.0
    %10922 = vmatprep.subr.mxu0 0.0
    %10923 = vmatpush1.msra.mxu0 0.0
    %10924 = vmatprep.subr.mxu0 0.0
    %10925 = vmatpush1.msra.mxu0 0.0
    %10926 = vmatprep.subr.mxu0 0.0
    %10927 = vmatpush1.msra.mxu0 0.0
    %10928 = vmatprep.subr.mxu0 0.0
    %10929 = vmatpush1.msra.mxu0 0.0
    %10930 = vmatprep.mubr.f32.mxu0 0.0
    %10931 = vmatmul.mubr.f32.gmra.mrb[0].mxu0 %v10864
    %v10932 = vpop.f32.mrb[0].mxu0
    %v10933 = vadd.f32 %v10861, %v10932
    %v10934 = vpop.f32.mrb[0].mxu0
    %10935 = vdwg.mxu0
    %v10936 = vtanh.pop %v10933
    %s10937 = sld [smem:[#allocation4 + $0x1]]
    %v10938 = vstv %s10937
    %v10939 = vmul.f32 %v10938, %v10936
    %s10940 = sld [smem:[#allocation4 + $0x2]]
    %v10941 = vstv %s10940
    %v10942 = vadd.f32 %v10939, %v10941
    %10943 = vst [vmem:[%s8] sm:$0x1] %v10942
    %v10944 = vsub.f32 1.0, %v10942
    %10945 = vst [vmem:[%s8 + $0x1] sm:$0x1] %v10944
    // Predicated region
    $region38: #{net_forward.1} parent=1 // pred_check
      _
    $region39: #{net_forward.1} parent=1 // pred_check_branch
      %10947 = sbr.rel (0) target = $region41
    $region40: #{net_forward.1} parent=1 // pred_region
      _
    $region41: #{net_forward.1} parent=1 // pred_fallthru
      _
    // Predicated region
    $region42: #{net_forward.1} parent=1 // pred_check
      _
    $region43: #{net_forward.1} parent=1 // pred_check_branch
      %10949 = sbr.rel (0) target = $region45
    $region44: #{net_forward.1} parent=1 // pred_region
      _
    $region45: #{net_forward.1} parent=1 // pred_fallthru
      _
    %10950 = vsyncpa [#allocation5], 1

</llo_original>
